<compile_context>
chip_gen: v6e
topology: v6e:2x2x1
jax: 0.10.0
libtpu: 0.0.40
codegen_flags: <defaults>
</compile_context>

<pallas_src>
import functools
import math

import jax
import jax.numpy as jnp
from jax.experimental import pallas as pl
from jax.experimental.pallas import tpu as pltpu


_SELU_SCALE = 1.0507009873554804934193349852946
_SELU_ALPHA = 1.6732632423543772848170429916717

_LANE = 128
_SUBLANE = 8
_GATE_ALIGN = 32      # per-gate pad -> 4 * Hg is a multiple of 128 lanes


def _round_up(x, m):
    return ((x + m - 1) // m) * m


# ----------------------------------------------------------------------------
# The fused kernel: entire forward pass, single invocation (no grid).
# ----------------------------------------------------------------------------
def _fused_kernel(x0_ref, k_ref, wih_ref, whh_ref, b_ref,
                  fc1w_ref, fc1b_ref, fc2w_ref, fc2wk_ref, fc2b_ref,
                  out_ref, bufA, bufB, xz,
                  *, num_layers, seq, bp, hg):
    """Layouts (Hg = packed per-gate width, Gp = 4*Hg, Fp = padded input dim):
      x0     : (S*Bp, Fp)      time-major input slab (k appended per step)
      k      : (Bp, 1)
      wih    : (3L, Fp, Gp)    bf16, gate-packed (i,f,o,g), zero padded
      whh    : (3L, Hg, Gp)    f32 (recurrent path kept exact)
      b      : (3L, 1,  Gp)    f32 (b_ih + b_hh)
      fc1_w  : (Hg, I) bf16    fc1_b: (1, I) f32
      fc2_w  : (S, I, N2p) bf16, per-timestep row blocks of fc2 weight
      fc2_wk : (1, N2p) f32    row of fc2 weight multiplying k
      fc2_b  : (1, N2p) f32
      out    : (Bp, N2p) f32
    """
    f32 = jnp.float32
    bf16 = jnp.bfloat16
    h3 = 3 * hg

    def run_lstm_layer(x_slab, layer, out_slab):
        # Hoisted input projection + bias for ALL timesteps: one bf16 MXU
        # matmul (S*Bp, kdim) x (kdim, 4*Hg) with f32 accumulation.
        kdim = x_slab.shape[1]
        w_ih = wih_ref[layer][:kdim, :]                       # (kdim, Gp) bf16
        xz[...] = (jnp.dot(x_slab.astype(bf16), w_ih,
                           preferred_element_type=f32) + b_ref[layer])
        w_hh = whh_ref[layer]                                 # (Hg, Gp) f32
        # NOTE: on v6e/v7x, weight-stationary MXU driving (matmul_push_rhs /
        # matmul_acc_lhs) would avoid re-staging W_hh each step; kept as a
        # plain dot here for portability.
        h = jnp.zeros((bp, hg), f32)
        c = jnp.zeros((bp, hg), f32)
        # Fully unrolled time loop (seq * 3L = 48 bodies at these sizes).
        # For much larger seq, switch to lax.fori_loop(..., unroll=k) with
        # pl.ds(t*bp, bp) reads to bound code size / vreg live ranges.
        for t in range(seq):
            z = xz[t * bp:(t + 1) * bp, :] + jnp.dot(
                h, w_hh, preferred_element_type=f32)          # (Bp, Gp)
            # Packed gates: [i | f | o] -> one sigmoid, [g] -> one tanh.
            # sigmoid = vrcp(1 + exp(-x)); clamp keeps exp finite for very
            # negative pre-activations.
            sig = pl.reciprocal(
                1.0 + jnp.exp(jnp.minimum(-z[:, :h3], 80.0)), approx=True)
            gg = jnp.tanh(z[:, h3:])
            gi = sig[:, 0 * hg:1 * hg]
            gf = sig[:, 1 * hg:2 * hg]
            go = sig[:, 2 * hg:3 * hg]
            c = gf * c + gi * gg
            h = go * jnp.tanh(c)
            out_slab[t * bp:(t + 1) * bp, :] = h

    # ---- stack 1: x0 -> bufA (= out0) ---------------------------------------
    run_lstm_layer(x0_ref[...], 0, bufA)
    for l in range(1, num_layers):
        run_lstm_layer(bufA[...], l, bufA)

    # ---- stack 2: bufA -> bufB, fused residual bufB += bufA (= out1) --------
    base = num_layers
    run_lstm_layer(bufA[...], base, bufB)
    for l in range(1, num_layers):
        run_lstm_layer(bufB[...], base + l, bufB)
    bufB[...] = bufB[...] + bufA[...]

    # ---- stack 3: bufB -> bufA, fused residual bufA += bufB (= out2) --------
    base = 2 * num_layers
    run_lstm_layer(bufB[...], base, bufA)
    for l in range(1, num_layers):
        run_lstm_layer(bufA[...], base + l, bufA)
    bufA[...] = bufA[...] + bufB[...]

    # ---- fc1 + SELU over the whole (S*Bp, Hg) slab (bf16 matmul, f32 acc) ---
    y = jnp.dot(bufA[...].astype(bf16), fc1w_ref[...],
                preferred_element_type=f32) + fc1b_ref[...]   # (S*Bp, I)
    # exp(min(y,0)) - 1 kept instead of expm1 for lowering portability.
    y = _SELU_SCALE * jnp.where(
        y > 0.0, y, _SELU_ALPHA * (jnp.exp(jnp.minimum(y, 0.0)) - 1.0))
    yb = y.astype(bf16)

    # ---- fc2, accumulated per timestep (avoids a time->batch transpose; the
    # review notes the single-matmul variant is a small win at seq=8) ---------
    acc = fc2b_ref[...] + k_ref[...] * fc2wk_ref[...]         # (Bp, N2p) f32
    for s in range(seq):
        acc = acc + jnp.dot(yb[s * bp:(s + 1) * bp, :], fc2w_ref[s],
                            preferred_element_type=f32)
    out_ref[...] = acc                                        # one HBM write


def _fused_call(x0, kpad, packed, *, num_layers, seq, bp, hg):
    args = [x0, kpad, packed["wih"], packed["whh"], packed["b"],
            packed["fc1_w"], packed["fc1_b"],
            packed["fc2_w"], packed["fc2_wk"], packed["fc2_b"]]
    n2p = packed["fc2_w"].shape[-1]

    def full_spec(a):
        nd = a.ndim
        return pl.BlockSpec(a.shape, lambda *_, _nd=nd: (0,) * _nd)

    kernel = functools.partial(_fused_kernel, num_layers=num_layers,
                               seq=seq, bp=bp, hg=hg)
    # NOTE: grid=() -> single TensorCore.  For production batch sizes on v7x,
    # add a leading "parallel" grid axis over batch blocks to use both TCs.
    return pl.pallas_call(
        kernel,
        out_shape=jax.ShapeDtypeStruct((bp, n2p), jnp.float32),
        in_specs=[full_spec(a) for a in args],
        out_specs=pl.BlockSpec((bp, n2p), lambda *_: (0, 0)),
        scratch_shapes=[
            pltpu.VMEM((seq * bp, hg), jnp.float32),        # bufA (layer slab)
            pltpu.VMEM((seq * bp, hg), jnp.float32),        # bufB (layer slab)
            pltpu.VMEM((seq * bp, 4 * hg), jnp.float32),    # hoisted X@W_ih+b
        ],
    )(*args)


# ----------------------------------------------------------------------------
# Parameter construction (deterministic, PyTorch-default-style uniform init)
# and packing into the kernel-friendly padded/packed layout.
# ----------------------------------------------------------------------------
def init_params(key, input_size, hidden_size, num_layers, seq_steps):
    H = hidden_size
    k_lstm = 1.0 / math.sqrt(H)

    def lstm_params(key, in_dim):
        ks = jax.random.split(key, 4)
        # gate order of the 4H columns: (i, f, g, o)  (PyTorch convention)
        w_ih = jax.random.uniform(ks[0], (in_dim, 4 * H), jnp.float32,
                                  -k_lstm, k_lstm)
        w_hh = jax.random.uniform(ks[1], (H, 4 * H), jnp.float32,
                                  -k_lstm, k_lstm)
        b_ih = jax.random.uniform(ks[2], (4 * H,), jnp.float32, -k_lstm, k_lstm)
        b_hh = jax.random.uniform(ks[3], (4 * H,), jnp.float32, -k_lstm, k_lstm)
        return (w_ih, w_hh, (b_ih + b_hh).reshape(1, 4 * H))

    keys = jax.random.split(key, 3 * num_layers + 4)
    params = {}
    ki = 0
    for name, first_in in (("lstm1", input_size + 1),
                           ("lstm2", H),
                           ("lstm3", H)):
        layers = []
        for l in range(num_layers):
            in_dim = first_in if l == 0 else H
            layers.append(lstm_params(keys[ki], in_dim))
            ki += 1
        params[name] = layers

    def linear_params(key, in_dim, out_dim):
        k = 1.0 / math.sqrt(in_dim)
        kw, kb = jax.random.split(key)
        w = jax.random.uniform(kw, (in_dim, out_dim), jnp.float32, -k, k)
        b = jax.random.uniform(kb, (out_dim,), jnp.float32, -k, k)
        return w, b.reshape(1, out_dim)

    params["fc1"] = linear_params(keys[ki], H, input_size); ki += 1
    params["fc2"] = linear_params(keys[ki],
                                  seq_steps * input_size + 1,
                                  seq_steps * input_size)
    return params


def pack_params(params, *, input_size, hidden_size, num_layers, seq_steps):
    """Pack weights into the gate-packed, stacked layout the kernel expects."""
    H = hidden_size
    Hg = _round_up(H, _GATE_ALIGN)          # packed per-gate width
    Gp = 4 * Hg                             # multiple of 128 lanes
    I = input_size
    S = seq_steps
    N2 = S * I
    N2p = _round_up(N2, _LANE)
    Fp = max(_round_up(I + 1, 16), Hg)      # common padded input dim

    perm = (0, 1, 3, 2)   # (i, f, g, o) -> (i, f, o, g): sigmoids contiguous

    def pad_w(w, rows_out):
        in_dim = w.shape[0]
        w4 = w.reshape(in_dim, 4, H)[:, perm, :]
        out = jnp.zeros((rows_out, 4, Hg), jnp.float32)
        out = out.at[:in_dim, :, :H].set(w4)
        return out.reshape(rows_out, Gp)

    def pad_b(b):
        b4 = b.reshape(4, H)[perm, :]
        return jnp.zeros((4, Hg), jnp.float32).at[:, :H].set(b4).reshape(1, Gp)

    wihs, whhs, bs = [], [], []
    for name in ("lstm1", "lstm2", "lstm3"):
        for (w_ih, w_hh, bias) in params[name]:
            wihs.append(pad_w(w_ih, Fp))
            whhs.append(pad_w(w_hh, Hg))
            bs.append(pad_b(bias))

    wih_all = jnp.stack(wihs).astype(jnp.bfloat16)      # (3L, Fp, Gp) bf16
    whh_all = jnp.stack(whhs)                           # (3L, Hg, Gp) f32
    b_all = jnp.stack(bs)                               # (3L, 1,  Gp) f32

    w1, b1 = params["fc1"]                              # (H, I), (1, I)
    fc1_w = (jnp.zeros((Hg, I), jnp.float32).at[:H, :].set(w1)
             .astype(jnp.bfloat16))
    fc1_b = b1

    w2, b2 = params["fc2"]                              # (N2+1, N2), (1, N2)
    fc2_main = w2[:N2, :].reshape(S, I, N2)             # s-major, i-minor rows
    fc2_w = (jnp.zeros((S, I, N2p), jnp.float32).at[:, :, :N2].set(fc2_main)
             .astype(jnp.bfloat16))
    fc2_wk = jnp.zeros((1, N2p), jnp.float32).at[:, :N2].set(w2[N2:N2 + 1, :])
    fc2_b = jnp.zeros((1, N2p), jnp.float32).at[:, :N2].set(b2)

    return {"wih": wih_all, "whh": whh_all, "b": b_all,
            "fc1_w": fc1_w, "fc1_b": fc1_b,
            "fc2_w": fc2_w, "fc2_wk": fc2_wk, "fc2_b": fc2_b}


# ----------------------------------------------------------------------------
# Full forward pass: tiny layout plumbing in JAX, all compute in one kernel.
# ----------------------------------------------------------------------------
def lstm_ff_out_forward(packed, x, *, input_size, hidden_size, seq_steps):
    del hidden_size  # encoded in the packed layout
    x = x.astype(jnp.float32)
    B = x.shape[0]
    S, I = seq_steps, input_size
    Bp = max(_SUBLANE, _round_up(B, _SUBLANE))
    num_layers = packed["wih"].shape[0] // 3
    Fp = packed["wih"].shape[1]
    Hg = packed["whh"].shape[1]

    k_values = x[:, 0]                                            # (B,)
    seq_x = x[:, 1:].reshape(B, S, I)                             # (B, S, I)
    inp = jnp.concatenate(
        [seq_x, jnp.broadcast_to(k_values[:, None, None], (B, S, 1))], axis=2)
    inp_t = jnp.transpose(inp, (1, 0, 2))                         # (S, B, I+1)

    x0 = jnp.zeros((S, Bp, Fp), jnp.float32).at[:, :B, :I + 1].set(inp_t)
    x0 = x0.reshape(S * Bp, Fp)
    kpad = jnp.zeros((Bp, 1), jnp.float32).at[:B, 0].set(k_values)

    n2p = packed["fc2_w"].shape[-1]
    out_p = _fused_call(x0, kpad, packed,
                        num_layers=num_layers, seq=S, bp=Bp, hg=Hg)
    assert out_p.shape == (Bp, n2p)
    return out_p[:B, :S * I]


# ----------------------------------------------------------------------------
# Pure-JAX (XLA) reference of the PyTorch module for a sanity check.
# ----------------------------------------------------------------------------
def _reference_forward(params, x, *, input_size, hidden_size, seq_steps):
    x = x.astype(jnp.float32)
    B = x.shape[0]
    S, I, H = seq_steps, input_size, hidden_size
    k_values = x[:, 0]
    seq_x = x[:, 1:].reshape(B, S, I)
    inp = jnp.concatenate(
        [seq_x, jnp.broadcast_to(k_values[:, None, None], (B, S, 1))], axis=2)

    def lstm_stack(layers, xs):                   # xs: (B, S, F)
        for (w_ih, w_hh, bias) in layers:
            h = jnp.zeros((B, H), jnp.float32)
            c = jnp.zeros((B, H), jnp.float32)
            outs = []
            for t in range(S):
                z = xs[:, t, :] @ w_ih + h @ w_hh + bias
                gi = jax.nn.sigmoid(z[:, 0 * H:1 * H])
                gf = jax.nn.sigmoid(z[:, 1 * H:2 * H])
                gg = jnp.tanh(z[:, 2 * H:3 * H])
                go = jax.nn.sigmoid(z[:, 3 * H:4 * H])
                c = gf * c + gi * gg
                h = go * jnp.tanh(c)
                outs.append(h)
            xs = jnp.stack(outs, axis=1)
        return xs

    out0 = lstm_stack(params["lstm1"], inp)
    out1 = lstm_stack(params["lstm2"], out0) + out0
    out2 = lstm_stack(params["lstm3"], out1) + out1
    w1, b1 = params["fc1"]
    y = out2.reshape(B * S, H) @ w1 + b1
    y = jax.nn.selu(y).reshape(B, S * I)
    w2, b2 = params["fc2"]
    return jnp.concatenate([y, k_values[:, None]], axis=1) @ w2 + b2


if __name__ == "__main__":
    batch = 2
    input_size = 4
    hidden_size = 32
    num_layers = 2
    seq_steps = 8

    key = jax.random.PRNGKey(0)
    pkey, xkey = jax.random.split(key)

    params = init_params(pkey, input_size, hidden_size, num_layers, seq_steps)
    packed = pack_params(params, input_size=input_size,
                         hidden_size=hidden_size,
                         num_layers=num_layers, seq_steps=seq_steps)

    # module input: (batch, 1 + seq_steps * input_size); column 0 = k_value
    x = jax.random.normal(xkey, (batch, 1 + seq_steps * input_size),
                          dtype=jnp.float32)

    fwd = jax.jit(functools.partial(lstm_ff_out_forward,
                                    input_size=input_size,
                                    hidden_size=hidden_size,
                                    seq_steps=seq_steps))
    out = fwd(packed, x)
    jax.block_until_ready(out)
    assert out.shape == (batch, seq_steps * input_size)

    # Tolerance check vs. the pure-JAX reference (bf16 non-recurrent matmuls
    # and approx-recip sigmoid introduce small, bounded drift).
    ref = jax.jit(functools.partial(_reference_forward,
                                    input_size=input_size,
                                    hidden_size=hidden_size,
                                    seq_steps=seq_steps))(params, x)
    err = float(jnp.max(jnp.abs(out - ref)))
    assert err < 7.5e-2, f"kernel/reference mismatch: max abs err {err}"
    print("KERNEL_OK")
</pallas_src>

<mosaic_0001>
module attributes {stable_mosaic.version = 11 : i64} {
  func.func @_fused_kernel(%arg0: memref<64x32xf32, #tpu.memory_space<vmem>>, %arg1: memref<8x1xf32, #tpu.memory_space<vmem>>, %arg2: memref<6x32x128xbf16, #tpu.memory_space<vmem>>, %arg3: memref<6x32x128xf32, #tpu.memory_space<vmem>>, %arg4: memref<6x1x128xf32, #tpu.memory_space<vmem>>, %arg5: memref<32x4xbf16, #tpu.memory_space<vmem>>, %arg6: memref<1x4xf32, #tpu.memory_space<vmem>>, %arg7: memref<8x4x128xbf16, #tpu.memory_space<vmem>>, %arg8: memref<1x128xf32, #tpu.memory_space<vmem>>, %arg9: memref<1x128xf32, #tpu.memory_space<vmem>>, %arg10: memref<8x128xf32, #tpu.memory_space<vmem>>, %arg11: memref<64x32xf32, #tpu.memory_space<vmem>>, %arg12: memref<64x32xf32, #tpu.memory_space<vmem>>, %arg13: memref<64x128xf32, #tpu.memory_space<vmem>>) attributes {dimension_semantics = [], scalar_prefetch = 0 : i64, scratch_operands = 3 : i64, tpu.core_type = #tpu.core_type<tc>} {
    %c0 = arith.constant 0 : index
    %c0_0 = arith.constant 0 : index
    %0 = vector.load %arg0[%c0, %c0_0] : memref<64x32xf32, #tpu.memory_space<vmem>>, vector<64x32xf32>
    %c0_1 = arith.constant 0 : index
    %c0_2 = arith.constant 0 : index
    %c0_3 = arith.constant 0 : index
    %1 = vector.load %arg2[%c0_1, %c0_2, %c0_3] : memref<6x32x128xbf16, #tpu.memory_space<vmem>>, vector<1x32x128xbf16>
    %2 = vector.shape_cast %1 : vector<1x32x128xbf16> to vector<32x128xbf16>
    %3 = arith.truncf %0 : vector<64x32xf32> to vector<64x32xbf16>
    %cst = arith.constant dense<0.000000e+00> : vector<64x128xf32>
    %4 = tpu.matmul %3, %2, %cst {dimension_numbers = #tpu.dot_dimension_numbers<[1], [0], [0], [1], [0, 0, 1, 1], [], []>} : vector<64x32xbf16>, vector<32x128xbf16>, vector<64x128xf32> -> vector<64x128xf32>
    %c0_4 = arith.constant 0 : index
    %c0_5 = arith.constant 0 : index
    %c0_6 = arith.constant 0 : index
    %5 = vector.load %arg4[%c0_4, %c0_5, %c0_6] : memref<6x1x128xf32, #tpu.memory_space<vmem>>, vector<1x1x128xf32>
    %6 = vector.shape_cast %5 : vector<1x1x128xf32> to vector<1x128xf32>
    %7 = vector.broadcast %6 : vector<1x128xf32> to vector<64x128xf32>
    %8 = arith.addf %4, %7 : vector<64x128xf32>
    %c0_7 = arith.constant 0 : index
    %c0_8 = arith.constant 0 : index
    %9 = vector.load %arg13[%c0_7, %c0_8] : memref<64x128xf32, #tpu.memory_space<vmem>>, vector<64x128xf32>
    tpu.vector_store %arg13[%c0_7, %c0_8], %8 {strides = array<i32>} : memref<64x128xf32, #tpu.memory_space<vmem>>, vector<64x128xf32>,
    %c0_9 = arith.constant 0 : index
    %c0_10 = arith.constant 0 : index
    %c0_11 = arith.constant 0 : index
    %10 = vector.load %arg3[%c0_9, %c0_10, %c0_11] : memref<6x32x128xf32, #tpu.memory_space<vmem>>, vector<1x32x128xf32>
    %11 = vector.shape_cast %10 : vector<1x32x128xf32> to vector<32x128xf32>
    %cst_12 = arith.constant 0.000000e+00 : f32
    %12 = vector.broadcast %cst_12 : f32 to vector<8x32xf32>
    %cst_13 = arith.constant 0.000000e+00 : f32
    %13 = vector.broadcast %cst_13 : f32 to vector<8x32xf32>
    %c0_14 = arith.constant 0 : index
    %c0_15 = arith.constant 0 : index
    %14 = vector.load %arg13[%c0_14, %c0_15] : memref<64x128xf32, #tpu.memory_space<vmem>>, vector<8x128xf32>
    %cst_16 = arith.constant dense<0.000000e+00> : vector<8x128xf32>
    %15 = tpu.matmul %12, %11, %cst_16 {dimension_numbers = #tpu.dot_dimension_numbers<[1], [0], [0], [1], [0, 0, 1, 1], [], []>} : vector<8x32xf32>, vector<32x128xf32>, vector<8x128xf32> -> vector<8x128xf32>
    %16 = arith.addf %14, %15 : vector<8x128xf32>
    %17 = vector.extract_strided_slice %16 {offsets = [0, 0], sizes = [8, 96], strides = [1, 1]} : vector<8x128xf32> to vector<8x96xf32>
    %cst_17 = arith.constant 0.000000e+00 : f32
    %18 = vector.broadcast %cst_17 : f32 to vector<8x96xf32>
    %19 = arith.subf %18, %17 : vector<8x96xf32>
    %cst_18 = arith.constant 8.000000e+01 : f32
    %20 = vector.broadcast %cst_18 : f32 to vector<8x96xf32>
    %21 = arith.minimumf %19, %20 : vector<8x96xf32>
    %22 = math.exp %21 : vector<8x96xf32>
    %cst_19 = arith.constant 1.000000e+00 : f32
    %23 = vector.broadcast %cst_19 : f32 to vector<8x96xf32>
    %24 = arith.addf %23, %22 : vector<8x96xf32>
    %25 = tpu.reciprocal %24 {approx = true} : vector<8x96xf32> -> vector<8x96xf32>
    %26 = vector.extract_strided_slice %16 {offsets = [0, 96], sizes = [8, 32], strides = [1, 1]} : vector<8x128xf32> to vector<8x32xf32>
    %27 = math.tanh %26 : vector<8x32xf32>
    %28 = vector.extract_strided_slice %25 {offsets = [0, 0], sizes = [8, 32], strides = [1, 1]} : vector<8x96xf32> to vector<8x32xf32>
    %29 = vector.extract_strided_slice %25 {offsets = [0, 32], sizes = [8, 32], strides = [1, 1]} : vector<8x96xf32> to vector<8x32xf32>
    %30 = vector.extract_strided_slice %25 {offsets = [0, 64], sizes = [8, 32], strides = [1, 1]} : vector<8x96xf32> to vector<8x32xf32>
    %31 = arith.mulf %29, %13 : vector<8x32xf32>
    %32 = arith.mulf %28, %27 : vector<8x32xf32>
    %33 = arith.addf %31, %32 : vector<8x32xf32>
    %34 = math.tanh %33 : vector<8x32xf32>
    %35 = arith.mulf %30, %34 : vector<8x32xf32>
    %c0_20 = arith.constant 0 : index
    %c0_21 = arith.constant 0 : index
    %36 = vector.load %arg11[%c0_20, %c0_21] : memref<64x32xf32, #tpu.memory_space<vmem>>, vector<8x32xf32>
    tpu.vector_store %arg11[%c0_20, %c0_21], %35 {strides = array<i32>} : memref<64x32xf32, #tpu.memory_space<vmem>>, vector<8x32xf32>,
    %c8 = arith.constant 8 : index
    %c0_22 = arith.constant 0 : index
    %37 = vector.load %arg13[%c8, %c0_22] : memref<64x128xf32, #tpu.memory_space<vmem>>, vector<8x128xf32>
    %cst_23 = arith.constant dense<0.000000e+00> : vector<8x128xf32>
    %38 = tpu.matmul %35, %11, %cst_23 {dimension_numbers = #tpu.dot_dimension_numbers<[1], [0], [0], [1], [0, 0, 1, 1], [], []>} : vector<8x32xf32>, vector<32x128xf32>, vector<8x128xf32> -> vector<8x128xf32>
    %39 = arith.addf %37, %38 : vector<8x128xf32>
    %40 = vector.extract_strided_slice %39 {offsets = [0, 0], sizes = [8, 96], strides = [1, 1]} : vector<8x128xf32> to vector<8x96xf32>
    %cst_24 = arith.constant 0.000000e+00 : f32
    %41 = vector.broadcast %cst_24 : f32 to vector<8x96xf32>
    %42 = arith.subf %41, %40 : vector<8x96xf32>
    %cst_25 = arith.constant 8.000000e+01 : f32
    %43 = vector.broadcast %cst_25 : f32 to vector<8x96xf32>
    %44 = arith.minimumf %42, %43 : vector<8x96xf32>
    %45 = math.exp %44 : vector<8x96xf32>
    %cst_26 = arith.constant 1.000000e+00 : f32
    %46 = vector.broadcast %cst_26 : f32 to vector<8x96xf32>
    %47 = arith.addf %46, %45 : vector<8x96xf32>
    %48 = tpu.reciprocal %47 {approx = true} : vector<8x96xf32> -> vector<8x96xf32>
    %49 = vector.extract_strided_slice %39 {offsets = [0, 96], sizes = [8, 32], strides = [1, 1]} : vector<8x128xf32> to vector<8x32xf32>
    %50 = math.tanh %49 : vector<8x32xf32>
    %51 = vector.extract_strided_slice %48 {offsets = [0, 0], sizes = [8, 32], strides = [1, 1]} : vector<8x96xf32> to vector<8x32xf32>
    %52 = vector.extract_strided_slice %48 {offsets = [0, 32], sizes = [8, 32], strides = [1, 1]} : vector<8x96xf32> to vector<8x32xf32>
    %53 = vector.extract_strided_slice %48 {offsets = [0, 64], sizes = [8, 32], strides = [1, 1]} : vector<8x96xf32> to vector<8x32xf32>
    %54 = arith.mulf %52, %33 : vector<8x32xf32>
    %55 = arith.mulf %51, %50 : vector<8x32xf32>
    %56 = arith.addf %54, %55 : vector<8x32xf32>
    %57 = math.tanh %56 : vector<8x32xf32>
    %58 = arith.mulf %53, %57 : vector<8x32xf32>
    %c8_27 = arith.constant 8 : index
    %c0_28 = arith.constant 0 : index
    %59 = vector.load %arg11[%c8_27, %c0_28] : memref<64x32xf32, #tpu.memory_space<vmem>>, vector<8x32xf32>
    tpu.vector_store %arg11[%c8_27, %c0_28], %58 {strides = array<i32>} : memref<64x32xf32, #tpu.memory_space<vmem>>, vector<8x32xf32>,
    %c16 = arith.constant 16 : index
    %c0_29 = arith.constant 0 : index
    %60 = vector.load %arg13[%c16, %c0_29] : memref<64x128xf32, #tpu.memory_space<vmem>>, vector<8x128xf32>
    %cst_30 = arith.constant dense<0.000000e+00> : vector<8x128xf32>
    %61 = tpu.matmul %58, %11, %cst_30 {dimension_numbers = #tpu.dot_dimension_numbers<[1], [0], [0], [1], [0, 0, 1, 1], [], []>} : vector<8x32xf32>, vector<32x128xf32>, vector<8x128xf32> -> vector<8x128xf32>
    %62 = arith.addf %60, %61 : vector<8x128xf32>
    %63 = vector.extract_strided_slice %62 {offsets = [0, 0], sizes = [8, 96], strides = [1, 1]} : vector<8x128xf32> to vector<8x96xf32>
    %cst_31 = arith.constant 0.000000e+00 : f32
    %64 = vector.broadcast %cst_31 : f32 to vector<8x96xf32>
    %65 = arith.subf %64, %63 : vector<8x96xf32>
    %cst_32 = arith.constant 8.000000e+01 : f32
    %66 = vector.broadcast %cst_32 : f32 to vector<8x96xf32>
    %67 = arith.minimumf %65, %66 : vector<8x96xf32>
    %68 = math.exp %67 : vector<8x96xf32>
    %cst_33 = arith.constant 1.000000e+00 : f32
    %69 = vector.broadcast %cst_33 : f32 to vector<8x96xf32>
    %70 = arith.addf %69, %68 : vector<8x96xf32>
    %71 = tpu.reciprocal %70 {approx = true} : vector<8x96xf32> -> vector<8x96xf32>
    %72 = vector.extract_strided_slice %62 {offsets = [0, 96], sizes = [8, 32], strides = [1, 1]} : vector<8x128xf32> to vector<8x32xf32>
    %73 = math.tanh %72 : vector<8x32xf32>
    %74 = vector.extract_strided_slice %71 {offsets = [0, 0], sizes = [8, 32], strides = [1, 1]} : vector<8x96xf32> to vector<8x32xf32>
    %75 = vector.extract_strided_slice %71 {offsets = [0, 32], sizes = [8, 32], strides = [1, 1]} : vector<8x96xf32> to vector<8x32xf32>
    %76 = vector.extract_strided_slice %71 {offsets = [0, 64], sizes = [8, 32], strides = [1, 1]} : vector<8x96xf32> to vector<8x32xf32>
    %77 = arith.mulf %75, %56 : vector<8x32xf32>
    %78 = arith.mulf %74, %73 : vector<8x32xf32>
    %79 = arith.addf %77, %78 : vector<8x32xf32>
    %80 = math.tanh %79 : vector<8x32xf32>
    %81 = arith.mulf %76, %80 : vector<8x32xf32>
    %c16_34 = arith.constant 16 : index
    %c0_35 = arith.constant 0 : index
    %82 = vector.load %arg11[%c16_34, %c0_35] : memref<64x32xf32, #tpu.memory_space<vmem>>, vector<8x32xf32>
    tpu.vector_store %arg11[%c16_34, %c0_35], %81 {strides = array<i32>} : memref<64x32xf32, #tpu.memory_space<vmem>>, vector<8x32xf32>,
    %c24 = arith.constant 24 : index
    %c0_36 = arith.constant 0 : index
    %83 = vector.load %arg13[%c24, %c0_36] : memref<64x128xf32, #tpu.memory_space<vmem>>, vector<8x128xf32>
    %cst_37 = arith.constant dense<0.000000e+00> : vector<8x128xf32>
    %84 = tpu.matmul %81, %11, %cst_37 {dimension_numbers = #tpu.dot_dimension_numbers<[1], [0], [0], [1], [0, 0, 1, 1], [], []>} : vector<8x32xf32>, vector<32x128xf32>, vector<8x128xf32> -> vector<8x128xf32>
    %85 = arith.addf %83, %84 : vector<8x128xf32>
    %86 = vector.extract_strided_slice %85 {offsets = [0, 0], sizes = [8, 96], strides = [1, 1]} : vector<8x128xf32> to vector<8x96xf32>
    %cst_38 = arith.constant 0.000000e+00 : f32
    %87 = vector.broadcast %cst_38 : f32 to vector<8x96xf32>
    %88 = arith.subf %87, %86 : vector<8x96xf32>
    %cst_39 = arith.constant 8.000000e+01 : f32
    %89 = vector.broadcast %cst_39 : f32 to vector<8x96xf32>
    %90 = arith.minimumf %88, %89 : vector<8x96xf32>
    %91 = math.exp %90 : vector<8x96xf32>
    %cst_40 = arith.constant 1.000000e+00 : f32
    %92 = vector.broadcast %cst_40 : f32 to vector<8x96xf32>
    %93 = arith.addf %92, %91 : vector<8x96xf32>
    %94 = tpu.reciprocal %93 {approx = true} : vector<8x96xf32> -> vector<8x96xf32>
    %95 = vector.extract_strided_slice %85 {offsets = [0, 96], sizes = [8, 32], strides = [1, 1]} : vector<8x128xf32> to vector<8x32xf32>
    %96 = math.tanh %95 : vector<8x32xf32>
    %97 = vector.extract_strided_slice %94 {offsets = [0, 0], sizes = [8, 32], strides = [1, 1]} : vector<8x96xf32> to vector<8x32xf32>
    %98 = vector.extract_strided_slice %94 {offsets = [0, 32], sizes = [8, 32], strides = [1, 1]} : vector<8x96xf32> to vector<8x32xf32>
    %99 = vector.extract_strided_slice %94 {offsets = [0, 64], sizes = [8, 32], strides = [1, 1]} : vector<8x96xf32> to vector<8x32xf32>
    %100 = arith.mulf %98, %79 : vector<8x32xf32>
    %101 = arith.mulf %97, %96 : vector<8x32xf32>
    %102 = arith.addf %100, %101 : vector<8x32xf32>
    %103 = math.tanh %102 : vector<8x32xf32>
    %104 = arith.mulf %99, %103 : vector<8x32xf32>
    %c24_41 = arith.constant 24 : index
    %c0_42 = arith.constant 0 : index
    %105 = vector.load %arg11[%c24_41, %c0_42] : memref<64x32xf32, #tpu.memory_space<vmem>>, vector<8x32xf32>
    tpu.vector_store %arg11[%c24_41, %c0_42], %104 {strides = array<i32>} : memref<64x32xf32, #tpu.memory_space<vmem>>, vector<8x32xf32>,
    %c32 = arith.constant 32 : index
    %c0_43 = arith.constant 0 : index
    %106 = vector.load %arg13[%c32, %c0_43] : memref<64x128xf32, #tpu.memory_space<vmem>>, vector<8x128xf32>
    %cst_44 = arith.constant dense<0.000000e+00> : vector<8x128xf32>
    %107 = tpu.matmul %104, %11, %cst_44 {dimension_numbers = #tpu.dot_dimension_numbers<[1], [0], [0], [1], [0, 0, 1, 1], [], []>} : vector<8x32xf32>, vector<32x128xf32>, vector<8x128xf32> -> vector<8x128xf32>
    %108 = arith.addf %106, %107 : vector<8x128xf32>
    %109 = vector.extract_strided_slice %108 {offsets = [0, 0], sizes = [8, 96], strides = [1, 1]} : vector<8x128xf32> to vector<8x96xf32>
    %cst_45 = arith.constant 0.000000e+00 : f32
    %110 = vector.broadcast %cst_45 : f32 to vector<8x96xf32>
    %111 = arith.subf %110, %109 : vector<8x96xf32>
    %cst_46 = arith.constant 8.000000e+01 : f32
    %112 = vector.broadcast %cst_46 : f32 to vector<8x96xf32>
    %113 = arith.minimumf %111, %112 : vector<8x96xf32>
    %114 = math.exp %113 : vector<8x96xf32>
    %cst_47 = arith.constant 1.000000e+00 : f32
    %115 = vector.broadcast %cst_47 : f32 to vector<8x96xf32>
    %116 = arith.addf %115, %114 : vector<8x96xf32>
    %117 = tpu.reciprocal %116 {approx = true} : vector<8x96xf32> -> vector<8x96xf32>
    %118 = vector.extract_strided_slice %108 {offsets = [0, 96], sizes = [8, 32], strides = [1, 1]} : vector<8x128xf32> to vector<8x32xf32>
    %119 = math.tanh %118 : vector<8x32xf32>
    %120 = vector.extract_strided_slice %117 {offsets = [0, 0], sizes = [8, 32], strides = [1, 1]} : vector<8x96xf32> to vector<8x32xf32>
    %121 = vector.extract_strided_slice %117 {offsets = [0, 32], sizes = [8, 32], strides = [1, 1]} : vector<8x96xf32> to vector<8x32xf32>
    %122 = vector.extract_strided_slice %117 {offsets = [0, 64], sizes = [8, 32], strides = [1, 1]} : vector<8x96xf32> to vector<8x32xf32>
    %123 = arith.mulf %121, %102 : vector<8x32xf32>
    %124 = arith.mulf %120, %119 : vector<8x32xf32>
    %125 = arith.addf %123, %124 : vector<8x32xf32>
    %126 = math.tanh %125 : vector<8x32xf32>
    %127 = arith.mulf %122, %126 : vector<8x32xf32>
    %c32_48 = arith.constant 32 : index
    %c0_49 = arith.constant 0 : index
    %128 = vector.load %arg11[%c32_48, %c0_49] : memref<64x32xf32, #tpu.memory_space<vmem>>, vector<8x32xf32>
    tpu.vector_store %arg11[%c32_48, %c0_49], %127 {strides = array<i32>} : memref<64x32xf32, #tpu.memory_space<vmem>>, vector<8x32xf32>,
    %c40 = arith.constant 40 : index
    %c0_50 = arith.constant 0 : index
    %129 = vector.load %arg13[%c40, %c0_50] : memref<64x128xf32, #tpu.memory_space<vmem>>, vector<8x128xf32>
    %cst_51 = arith.constant dense<0.000000e+00> : vector<8x128xf32>
    %130 = tpu.matmul %127, %11, %cst_51 {dimension_numbers = #tpu.dot_dimension_numbers<[1], [0], [0], [1], [0, 0, 1, 1], [], []>} : vector<8x32xf32>, vector<32x128xf32>, vector<8x128xf32> -> vector<8x128xf32>
    %131 = arith.addf %129, %130 : vector<8x128xf32>
    %132 = vector.extract_strided_slice %131 {offsets = [0, 0], sizes = [8, 96], strides = [1, 1]} : vector<8x128xf32> to vector<8x96xf32>
    %cst_52 = arith.constant 0.000000e+00 : f32
    %133 = vector.broadcast %cst_52 : f32 to vector<8x96xf32>
    %134 = arith.subf %133, %132 : vector<8x96xf32>
    %cst_53 = arith.constant 8.000000e+01 : f32
    %135 = vector.broadcast %cst_53 : f32 to vector<8x96xf32>
    %136 = arith.minimumf %134, %135 : vector<8x96xf32>
    %137 = math.exp %136 : vector<8x96xf32>
    %cst_54 = arith.constant 1.000000e+00 : f32
    %138 = vector.broadcast %cst_54 : f32 to vector<8x96xf32>
    %139 = arith.addf %138, %137 : vector<8x96xf32>
    %140 = tpu.reciprocal %139 {approx = true} : vector<8x96xf32> -> vector<8x96xf32>
    %141 = vector.extract_strided_slice %131 {offsets = [0, 96], sizes = [8, 32], strides = [1, 1]} : vector<8x128xf32> to vector<8x32xf32>
    %142 = math.tanh %141 : vector<8x32xf32>
    %143 = vector.extract_strided_slice %140 {offsets = [0, 0], sizes = [8, 32], strides = [1, 1]} : vector<8x96xf32> to vector<8x32xf32>
    %144 = vector.extract_strided_slice %140 {offsets = [0, 32], sizes = [8, 32], strides = [1, 1]} : vector<8x96xf32> to vector<8x32xf32>
    %145 = vector.extract_strided_slice %140 {offsets = [0, 64], sizes = [8, 32], strides = [1, 1]} : vector<8x96xf32> to vector<8x32xf32>
    %146 = arith.mulf %144, %125 : vector<8x32xf32>
    %147 = arith.mulf %143, %142 : vector<8x32xf32>
    %148 = arith.addf %146, %147 : vector<8x32xf32>
    %149 = math.tanh %148 : vector<8x32xf32>
    %150 = arith.mulf %145, %149 : vector<8x32xf32>
    %c40_55 = arith.constant 40 : index
    %c0_56 = arith.constant 0 : index
    %151 = vector.load %arg11[%c40_55, %c0_56] : memref<64x32xf32, #tpu.memory_space<vmem>>, vector<8x32xf32>
    tpu.vector_store %arg11[%c40_55, %c0_56], %150 {strides = array<i32>} : memref<64x32xf32, #tpu.memory_space<vmem>>, vector<8x32xf32>,
    %c48 = arith.constant 48 : index
    %c0_57 = arith.constant 0 : index
    %152 = vector.load %arg13[%c48, %c0_57] : memref<64x128xf32, #tpu.memory_space<vmem>>, vector<8x128xf32>
    %cst_58 = arith.constant dense<0.000000e+00> : vector<8x128xf32>
    %153 = tpu.matmul %150, %11, %cst_58 {dimension_numbers = #tpu.dot_dimension_numbers<[1], [0], [0], [1], [0, 0, 1, 1], [], []>} : vector<8x32xf32>, vector<32x128xf32>, vector<8x128xf32> -> vector<8x128xf32>
    %154 = arith.addf %152, %153 : vector<8x128xf32>
    %155 = vector.extract_strided_slice %154 {offsets = [0, 0], sizes = [8, 96], strides = [1, 1]} : vector<8x128xf32> to vector<8x96xf32>
    %cst_59 = arith.constant 0.000000e+00 : f32
    %156 = vector.broadcast %cst_59 : f32 to vector<8x96xf32>
    %157 = arith.subf %156, %155 : vector<8x96xf32>
    %cst_60 = arith.constant 8.000000e+01 : f32
    %158 = vector.broadcast %cst_60 : f32 to vector<8x96xf32>
    %159 = arith.minimumf %157, %158 : vector<8x96xf32>
    %160 = math.exp %159 : vector<8x96xf32>
    %cst_61 = arith.constant 1.000000e+00 : f32
    %161 = vector.broadcast %cst_61 : f32 to vector<8x96xf32>
    %162 = arith.addf %161, %160 : vector<8x96xf32>
    %163 = tpu.reciprocal %162 {approx = true} : vector<8x96xf32> -> vector<8x96xf32>
    %164 = vector.extract_strided_slice %154 {offsets = [0, 96], sizes = [8, 32], strides = [1, 1]} : vector<8x128xf32> to vector<8x32xf32>
    %165 = math.tanh %164 : vector<8x32xf32>
    %166 = vector.extract_strided_slice %163 {offsets = [0, 0], sizes = [8, 32], strides = [1, 1]} : vector<8x96xf32> to vector<8x32xf32>
    %167 = vector.extract_strided_slice %163 {offsets = [0, 32], sizes = [8, 32], strides = [1, 1]} : vector<8x96xf32> to vector<8x32xf32>
    %168 = vector.extract_strided_slice %163 {offsets = [0, 64], sizes = [8, 32], strides = [1, 1]} : vector<8x96xf32> to vector<8x32xf32>
    %169 = arith.mulf %167, %148 : vector<8x32xf32>
    %170 = arith.mulf %166, %165 : vector<8x32xf32>
    %171 = arith.addf %169, %170 : vector<8x32xf32>
    %172 = math.tanh %171 : vector<8x32xf32>
    %173 = arith.mulf %168, %172 : vector<8x32xf32>
    %c48_62 = arith.constant 48 : index
    %c0_63 = arith.constant 0 : index
    %174 = vector.load %arg11[%c48_62, %c0_63] : memref<64x32xf32, #tpu.memory_space<vmem>>, vector<8x32xf32>
    tpu.vector_store %arg11[%c48_62, %c0_63], %173 {strides = array<i32>} : memref<64x32xf32, #tpu.memory_space<vmem>>, vector<8x32xf32>,
    %c56 = arith.constant 56 : index
    %c0_64 = arith.constant 0 : index
    %175 = vector.load %arg13[%c56, %c0_64] : memref<64x128xf32, #tpu.memory_space<vmem>>, vector<8x128xf32>
    %cst_65 = arith.constant dense<0.000000e+00> : vector<8x128xf32>
    %176 = tpu.matmul %173, %11, %cst_65 {dimension_numbers = #tpu.dot_dimension_numbers<[1], [0], [0], [1], [0, 0, 1, 1], [], []>} : vector<8x32xf32>, vector<32x128xf32>, vector<8x128xf32> -> vector<8x128xf32>
    %177 = arith.addf %175, %176 : vector<8x128xf32>
    %178 = vector.extract_strided_slice %177 {offsets = [0, 0], sizes = [8, 96], strides = [1, 1]} : vector<8x128xf32> to vector<8x96xf32>
    %cst_66 = arith.constant 0.000000e+00 : f32
    %179 = vector.broadcast %cst_66 : f32 to vector<8x96xf32>
    %180 = arith.subf %179, %178 : vector<8x96xf32>
    %cst_67 = arith.constant 8.000000e+01 : f32
    %181 = vector.broadcast %cst_67 : f32 to vector<8x96xf32>
    %182 = arith.minimumf %180, %181 : vector<8x96xf32>
    %183 = math.exp %182 : vector<8x96xf32>
    %cst_68 = arith.constant 1.000000e+00 : f32
    %184 = vector.broadcast %cst_68 : f32 to vector<8x96xf32>
    %185 = arith.addf %184, %183 : vector<8x96xf32>
    %186 = tpu.reciprocal %185 {approx = true} : vector<8x96xf32> -> vector<8x96xf32>
    %187 = vector.extract_strided_slice %177 {offsets = [0, 96], sizes = [8, 32], strides = [1, 1]} : vector<8x128xf32> to vector<8x32xf32>
    %188 = math.tanh %187 : vector<8x32xf32>
    %189 = vector.extract_strided_slice %186 {offsets = [0, 0], sizes = [8, 32], strides = [1, 1]} : vector<8x96xf32> to vector<8x32xf32>
    %190 = vector.extract_strided_slice %186 {offsets = [0, 32], sizes = [8, 32], strides = [1, 1]} : vector<8x96xf32> to vector<8x32xf32>
    %191 = vector.extract_strided_slice %186 {offsets = [0, 64], sizes = [8, 32], strides = [1, 1]} : vector<8x96xf32> to vector<8x32xf32>
    %192 = arith.mulf %190, %171 : vector<8x32xf32>
    %193 = arith.mulf %189, %188 : vector<8x32xf32>
    %194 = arith.addf %192, %193 : vector<8x32xf32>
    %195 = math.tanh %194 : vector<8x32xf32>
    %196 = arith.mulf %191, %195 : vector<8x32xf32>
    %c56_69 = arith.constant 56 : index
    %c0_70 = arith.constant 0 : index
    %197 = vector.load %arg11[%c56_69, %c0_70] : memref<64x32xf32, #tpu.memory_space<vmem>>, vector<8x32xf32>
    tpu.vector_store %arg11[%c56_69, %c0_70], %196 {strides = array<i32>} : memref<64x32xf32, #tpu.memory_space<vmem>>, vector<8x32xf32>,
    %c0_71 = arith.constant 0 : index
    %c0_72 = arith.constant 0 : index
    %198 = vector.load %arg11[%c0_71, %c0_72] : memref<64x32xf32, #tpu.memory_space<vmem>>, vector<64x32xf32>
    %c1 = arith.constant 1 : index
    %c0_73 = arith.constant 0 : index
    %c0_74 = arith.constant 0 : index
    %199 = vector.load %arg2[%c1, %c0_73, %c0_74] : memref<6x32x128xbf16, #tpu.memory_space<vmem>>, vector<1x32x128xbf16>
    %200 = vector.shape_cast %199 : vector<1x32x128xbf16> to vector<32x128xbf16>
    %201 = arith.truncf %198 : vector<64x32xf32> to vector<64x32xbf16>
    %cst_75 = arith.constant dense<0.000000e+00> : vector<64x128xf32>
    %202 = tpu.matmul %201, %200, %cst_75 {dimension_numbers = #tpu.dot_dimension_numbers<[1], [0], [0], [1], [0, 0, 1, 1], [], []>} : vector<64x32xbf16>, vector<32x128xbf16>, vector<64x128xf32> -> vector<64x128xf32>
    %c1_76 = arith.constant 1 : index
    %c0_77 = arith.constant 0 : index
    %c0_78 = arith.constant 0 : index
    %203 = vector.load %arg4[%c1_76, %c0_77, %c0_78] : memref<6x1x128xf32, #tpu.memory_space<vmem>>, vector<1x1x128xf32>
    %204 = vector.shape_cast %203 : vector<1x1x128xf32> to vector<1x128xf32>
    %205 = vector.broadcast %204 : vector<1x128xf32> to vector<64x128xf32>
    %206 = arith.addf %202, %205 : vector<64x128xf32>
    %c0_79 = arith.constant 0 : index
    %c0_80 = arith.constant 0 : index
    %207 = vector.load %arg13[%c0_79, %c0_80] : memref<64x128xf32, #tpu.memory_space<vmem>>, vector<64x128xf32>
    tpu.vector_store %arg13[%c0_79, %c0_80], %206 {strides = array<i32>} : memref<64x128xf32, #tpu.memory_space<vmem>>, vector<64x128xf32>,
    %c1_81 = arith.constant 1 : index
    %c0_82 = arith.constant 0 : index
    %c0_83 = arith.constant 0 : index
    %208 = vector.load %arg3[%c1_81, %c0_82, %c0_83] : memref<6x32x128xf32, #tpu.memory_space<vmem>>, vector<1x32x128xf32>
    %209 = vector.shape_cast %208 : vector<1x32x128xf32> to vector<32x128xf32>
    %cst_84 = arith.constant 0.000000e+00 : f32
    %210 = vector.broadcast %cst_84 : f32 to vector<8x32xf32>
    %cst_85 = arith.constant 0.000000e+00 : f32
    %211 = vector.broadcast %cst_85 : f32 to vector<8x32xf32>
    %c0_86 = arith.constant 0 : index
    %c0_87 = arith.constant 0 : index
    %212 = vector.load %arg13[%c0_86, %c0_87] : memref<64x128xf32, #tpu.memory_space<vmem>>, vector<8x128xf32>
    %cst_88 = arith.constant dense<0.000000e+00> : vector<8x128xf32>
    %213 = tpu.matmul %210, %209, %cst_88 {dimension_numbers = #tpu.dot_dimension_numbers<[1], [0], [0], [1], [0, 0, 1, 1], [], []>} : vector<8x32xf32>, vector<32x128xf32>, vector<8x128xf32> -> vector<8x128xf32>
    %214 = arith.addf %212, %213 : vector<8x128xf32>
    %215 = vector.extract_strided_slice %214 {offsets = [0, 0], sizes = [8, 96], strides = [1, 1]} : vector<8x128xf32> to vector<8x96xf32>
    %cst_89 = arith.constant 0.000000e+00 : f32
    %216 = vector.broadcast %cst_89 : f32 to vector<8x96xf32>
    %217 = arith.subf %216, %215 : vector<8x96xf32>
    %cst_90 = arith.constant 8.000000e+01 : f32
    %218 = vector.broadcast %cst_90 : f32 to vector<8x96xf32>
    %219 = arith.minimumf %217, %218 : vector<8x96xf32>
    %220 = math.exp %219 : vector<8x96xf32>
    %cst_91 = arith.constant 1.000000e+00 : f32
    %221 = vector.broadcast %cst_91 : f32 to vector<8x96xf32>
    %222 = arith.addf %221, %220 : vector<8x96xf32>
    %223 = tpu.reciprocal %222 {approx = true} : vector<8x96xf32> -> vector<8x96xf32>
    %224 = vector.extract_strided_slice %214 {offsets = [0, 96], sizes = [8, 32], strides = [1, 1]} : vector<8x128xf32> to vector<8x32xf32>
    %225 = math.tanh %224 : vector<8x32xf32>
    %226 = vector.extract_strided_slice %223 {offsets = [0, 0], sizes = [8, 32], strides = [1, 1]} : vector<8x96xf32> to vector<8x32xf32>
    %227 = vector.extract_strided_slice %223 {offsets = [0, 32], sizes = [8, 32], strides = [1, 1]} : vector<8x96xf32> to vector<8x32xf32>
    %228 = vector.extract_strided_slice %223 {offsets = [0, 64], sizes = [8, 32], strides = [1, 1]} : vector<8x96xf32> to vector<8x32xf32>
    %229 = arith.mulf %227, %211 : vector<8x32xf32>
    %230 = arith.mulf %226, %225 : vector<8x32xf32>
    %231 = arith.addf %229, %230 : vector<8x32xf32>
    %232 = math.tanh %231 : vector<8x32xf32>
    %233 = arith.mulf %228, %232 : vector<8x32xf32>
    %c0_92 = arith.constant 0 : index
    %c0_93 = arith.constant 0 : index
    %234 = vector.load %arg11[%c0_92, %c0_93] : memref<64x32xf32, #tpu.memory_space<vmem>>, vector<8x32xf32>
    tpu.vector_store %arg11[%c0_92, %c0_93], %233 {strides = array<i32>} : memref<64x32xf32, #tpu.memory_space<vmem>>, vector<8x32xf32>,
    %c8_94 = arith.constant 8 : index
    %c0_95 = arith.constant 0 : index
    %235 = vector.load %arg13[%c8_94, %c0_95] : memref<64x128xf32, #tpu.memory_space<vmem>>, vector<8x128xf32>
    %cst_96 = arith.constant dense<0.000000e+00> : vector<8x128xf32>
    %236 = tpu.matmul %233, %209, %cst_96 {dimension_numbers = #tpu.dot_dimension_numbers<[1], [0], [0], [1], [0, 0, 1, 1], [], []>} : vector<8x32xf32>, vector<32x128xf32>, vector<8x128xf32> -> vector<8x128xf32>
    %237 = arith.addf %235, %236 : vector<8x128xf32>
    %238 = vector.extract_strided_slice %237 {offsets = [0, 0], sizes = [8, 96], strides = [1, 1]} : vector<8x128xf32> to vector<8x96xf32>
    %cst_97 = arith.constant 0.000000e+00 : f32
    %239 = vector.broadcast %cst_97 : f32 to vector<8x96xf32>
    %240 = arith.subf %239, %238 : vector<8x96xf32>
    %cst_98 = arith.constant 8.000000e+01 : f32
    %241 = vector.broadcast %cst_98 : f32 to vector<8x96xf32>
    %242 = arith.minimumf %240, %241 : vector<8x96xf32>
    %243 = math.exp %242 : vector<8x96xf32>
    %cst_99 = arith.constant 1.000000e+00 : f32
    %244 = vector.broadcast %cst_99 : f32 to vector<8x96xf32>
    %245 = arith.addf %244, %243 : vector<8x96xf32>
    %246 = tpu.reciprocal %245 {approx = true} : vector<8x96xf32> -> vector<8x96xf32>
    %247 = vector.extract_strided_slice %237 {offsets = [0, 96], sizes = [8, 32], strides = [1, 1]} : vector<8x128xf32> to vector<8x32xf32>
    %248 = math.tanh %247 : vector<8x32xf32>
    %249 = vector.extract_strided_slice %246 {offsets = [0, 0], sizes = [8, 32], strides = [1, 1]} : vector<8x96xf32> to vector<8x32xf32>
    %250 = vector.extract_strided_slice %246 {offsets = [0, 32], sizes = [8, 32], strides = [1, 1]} : vector<8x96xf32> to vector<8x32xf32>
    %251 = vector.extract_strided_slice %246 {offsets = [0, 64], sizes = [8, 32], strides = [1, 1]} : vector<8x96xf32> to vector<8x32xf32>
    %252 = arith.mulf %250, %231 : vector<8x32xf32>
    %253 = arith.mulf %249, %248 : vector<8x32xf32>
    %254 = arith.addf %252, %253 : vector<8x32xf32>
    %255 = math.tanh %254 : vector<8x32xf32>
    %256 = arith.mulf %251, %255 : vector<8x32xf32>
    %c8_100 = arith.constant 8 : index
    %c0_101 = arith.constant 0 : index
    %257 = vector.load %arg11[%c8_100, %c0_101] : memref<64x32xf32, #tpu.memory_space<vmem>>, vector<8x32xf32>
    tpu.vector_store %arg11[%c8_100, %c0_101], %256 {strides = array<i32>} : memref<64x32xf32, #tpu.memory_space<vmem>>, vector<8x32xf32>,
    %c16_102 = arith.constant 16 : index
    %c0_103 = arith.constant 0 : index
    %258 = vector.load %arg13[%c16_102, %c0_103] : memref<64x128xf32, #tpu.memory_space<vmem>>, vector<8x128xf32>
    %cst_104 = arith.constant dense<0.000000e+00> : vector<8x128xf32>
    %259 = tpu.matmul %256, %209, %cst_104 {dimension_numbers = #tpu.dot_dimension_numbers<[1], [0], [0], [1], [0, 0, 1, 1], [], []>} : vector<8x32xf32>, vector<32x128xf32>, vector<8x128xf32> -> vector<8x128xf32>
    %260 = arith.addf %258, %259 : vector<8x128xf32>
    %261 = vector.extract_strided_slice %260 {offsets = [0, 0], sizes = [8, 96], strides = [1, 1]} : vector<8x128xf32> to vector<8x96xf32>
    %cst_105 = arith.constant 0.000000e+00 : f32
    %262 = vector.broadcast %cst_105 : f32 to vector<8x96xf32>
    %263 = arith.subf %262, %261 : vector<8x96xf32>
    %cst_106 = arith.constant 8.000000e+01 : f32
    %264 = vector.broadcast %cst_106 : f32 to vector<8x96xf32>
    %265 = arith.minimumf %263, %264 : vector<8x96xf32>
    %266 = math.exp %265 : vector<8x96xf32>
    %cst_107 = arith.constant 1.000000e+00 : f32
    %267 = vector.broadcast %cst_107 : f32 to vector<8x96xf32>
    %268 = arith.addf %267, %266 : vector<8x96xf32>
    %269 = tpu.reciprocal %268 {approx = true} : vector<8x96xf32> -> vector<8x96xf32>
    %270 = vector.extract_strided_slice %260 {offsets = [0, 96], sizes = [8, 32], strides = [1, 1]} : vector<8x128xf32> to vector<8x32xf32>
    %271 = math.tanh %270 : vector<8x32xf32>
    %272 = vector.extract_strided_slice %269 {offsets = [0, 0], sizes = [8, 32], strides = [1, 1]} : vector<8x96xf32> to vector<8x32xf32>
    %273 = vector.extract_strided_slice %269 {offsets = [0, 32], sizes = [8, 32], strides = [1, 1]} : vector<8x96xf32> to vector<8x32xf32>
    %274 = vector.extract_strided_slice %269 {offsets = [0, 64], sizes = [8, 32], strides = [1, 1]} : vector<8x96xf32> to vector<8x32xf32>
    %275 = arith.mulf %273, %254 : vector<8x32xf32>
    %276 = arith.mulf %272, %271 : vector<8x32xf32>
    %277 = arith.addf %275, %276 : vector<8x32xf32>
    %278 = math.tanh %277 : vector<8x32xf32>
    %279 = arith.mulf %274, %278 : vector<8x32xf32>
    %c16_108 = arith.constant 16 : index
    %c0_109 = arith.constant 0 : index
    %280 = vector.load %arg11[%c16_108, %c0_109] : memref<64x32xf32, #tpu.memory_space<vmem>>, vector<8x32xf32>
    tpu.vector_store %arg11[%c16_108, %c0_109], %279 {strides = array<i32>} : memref<64x32xf32, #tpu.memory_space<vmem>>, vector<8x32xf32>,
    %c24_110 = arith.constant 24 : index
    %c0_111 = arith.constant 0 : index
    %281 = vector.load %arg13[%c24_110, %c0_111] : memref<64x128xf32, #tpu.memory_space<vmem>>, vector<8x128xf32>
    %cst_112 = arith.constant dense<0.000000e+00> : vector<8x128xf32>
    %282 = tpu.matmul %279, %209, %cst_112 {dimension_numbers = #tpu.dot_dimension_numbers<[1], [0], [0], [1], [0, 0, 1, 1], [], []>} : vector<8x32xf32>, vector<32x128xf32>, vector<8x128xf32> -> vector<8x128xf32>
    %283 = arith.addf %281, %282 : vector<8x128xf32>
    %284 = vector.extract_strided_slice %283 {offsets = [0, 0], sizes = [8, 96], strides = [1, 1]} : vector<8x128xf32> to vector<8x96xf32>
    %cst_113 = arith.constant 0.000000e+00 : f32
    %285 = vector.broadcast %cst_113 : f32 to vector<8x96xf32>
    %286 = arith.subf %285, %284 : vector<8x96xf32>
    %cst_114 = arith.constant 8.000000e+01 : f32
    %287 = vector.broadcast %cst_114 : f32 to vector<8x96xf32>
    %288 = arith.minimumf %286, %287 : vector<8x96xf32>
    %289 = math.exp %288 : vector<8x96xf32>
    %cst_115 = arith.constant 1.000000e+00 : f32
    %290 = vector.broadcast %cst_115 : f32 to vector<8x96xf32>
    %291 = arith.addf %290, %289 : vector<8x96xf32>
    %292 = tpu.reciprocal %291 {approx = true} : vector<8x96xf32> -> vector<8x96xf32>
    %293 = vector.extract_strided_slice %283 {offsets = [0, 96], sizes = [8, 32], strides = [1, 1]} : vector<8x128xf32> to vector<8x32xf32>
    %294 = math.tanh %293 : vector<8x32xf32>
    %295 = vector.extract_strided_slice %292 {offsets = [0, 0], sizes = [8, 32], strides = [1, 1]} : vector<8x96xf32> to vector<8x32xf32>
    %296 = vector.extract_strided_slice %292 {offsets = [0, 32], sizes = [8, 32], strides = [1, 1]} : vector<8x96xf32> to vector<8x32xf32>
    %297 = vector.extract_strided_slice %292 {offsets = [0, 64], sizes = [8, 32], strides = [1, 1]} : vector<8x96xf32> to vector<8x32xf32>
    %298 = arith.mulf %296, %277 : vector<8x32xf32>
    %299 = arith.mulf %295, %294 : vector<8x32xf32>
    %300 = arith.addf %298, %299 : vector<8x32xf32>
    %301 = math.tanh %300 : vector<8x32xf32>
    %302 = arith.mulf %297, %301 : vector<8x32xf32>
    %c24_116 = arith.constant 24 : index
    %c0_117 = arith.constant 0 : index
    %303 = vector.load %arg11[%c24_116, %c0_117] : memref<64x32xf32, #tpu.memory_space<vmem>>, vector<8x32xf32>
    tpu.vector_store %arg11[%c24_116, %c0_117], %302 {strides = array<i32>} : memref<64x32xf32, #tpu.memory_space<vmem>>, vector<8x32xf32>,
    %c32_118 = arith.constant 32 : index
    %c0_119 = arith.constant 0 : index
    %304 = vector.load %arg13[%c32_118, %c0_119] : memref<64x128xf32, #tpu.memory_space<vmem>>, vector<8x128xf32>
    %cst_120 = arith.constant dense<0.000000e+00> : vector<8x128xf32>
    %305 = tpu.matmul %302, %209, %cst_120 {dimension_numbers = #tpu.dot_dimension_numbers<[1], [0], [0], [1], [0, 0, 1, 1], [], []>} : vector<8x32xf32>, vector<32x128xf32>, vector<8x128xf32> -> vector<8x128xf32>
    %306 = arith.addf %304, %305 : vector<8x128xf32>
    %307 = vector.extract_strided_slice %306 {offsets = [0, 0], sizes = [8, 96], strides = [1, 1]} : vector<8x128xf32> to vector<8x96xf32>
    %cst_121 = arith.constant 0.000000e+00 : f32
    %308 = vector.broadcast %cst_121 : f32 to vector<8x96xf32>
    %309 = arith.subf %308, %307 : vector<8x96xf32>
    %cst_122 = arith.constant 8.000000e+01 : f32
    %310 = vector.broadcast %cst_122 : f32 to vector<8x96xf32>
    %311 = arith.minimumf %309, %310 : vector<8x96xf32>
    %312 = math.exp %311 : vector<8x96xf32>
    %cst_123 = arith.constant 1.000000e+00 : f32
    %313 = vector.broadcast %cst_123 : f32 to vector<8x96xf32>
    %314 = arith.addf %313, %312 : vector<8x96xf32>
    %315 = tpu.reciprocal %314 {approx = true} : vector<8x96xf32> -> vector<8x96xf32>
    %316 = vector.extract_strided_slice %306 {offsets = [0, 96], sizes = [8, 32], strides = [1, 1]} : vector<8x128xf32> to vector<8x32xf32>
    %317 = math.tanh %316 : vector<8x32xf32>
    %318 = vector.extract_strided_slice %315 {offsets = [0, 0], sizes = [8, 32], strides = [1, 1]} : vector<8x96xf32> to vector<8x32xf32>
    %319 = vector.extract_strided_slice %315 {offsets = [0, 32], sizes = [8, 32], strides = [1, 1]} : vector<8x96xf32> to vector<8x32xf32>
    %320 = vector.extract_strided_slice %315 {offsets = [0, 64], sizes = [8, 32], strides = [1, 1]} : vector<8x96xf32> to vector<8x32xf32>
    %321 = arith.mulf %319, %300 : vector<8x32xf32>
    %322 = arith.mulf %318, %317 : vector<8x32xf32>
    %323 = arith.addf %321, %322 : vector<8x32xf32>
    %324 = math.tanh %323 : vector<8x32xf32>
    %325 = arith.mulf %320, %324 : vector<8x32xf32>
    %c32_124 = arith.constant 32 : index
    %c0_125 = arith.constant 0 : index
    %326 = vector.load %arg11[%c32_124, %c0_125] : memref<64x32xf32, #tpu.memory_space<vmem>>, vector<8x32xf32>
    tpu.vector_store %arg11[%c32_124, %c0_125], %325 {strides = array<i32>} : memref<64x32xf32, #tpu.memory_space<vmem>>, vector<8x32xf32>,
    %c40_126 = arith.constant 40 : index
    %c0_127 = arith.constant 0 : index
    %327 = vector.load %arg13[%c40_126, %c0_127] : memref<64x128xf32, #tpu.memory_space<vmem>>, vector<8x128xf32>
    %cst_128 = arith.constant dense<0.000000e+00> : vector<8x128xf32>
    %328 = tpu.matmul %325, %209, %cst_128 {dimension_numbers = #tpu.dot_dimension_numbers<[1], [0], [0], [1], [0, 0, 1, 1], [], []>} : vector<8x32xf32>, vector<32x128xf32>, vector<8x128xf32> -> vector<8x128xf32>
    %329 = arith.addf %327, %328 : vector<8x128xf32>
    %330 = vector.extract_strided_slice %329 {offsets = [0, 0], sizes = [8, 96], strides = [1, 1]} : vector<8x128xf32> to vector<8x96xf32>
    %cst_129 = arith.constant 0.000000e+00 : f32
    %331 = vector.broadcast %cst_129 : f32 to vector<8x96xf32>
    %332 = arith.subf %331, %330 : vector<8x96xf32>
    %cst_130 = arith.constant 8.000000e+01 : f32
    %333 = vector.broadcast %cst_130 : f32 to vector<8x96xf32>
    %334 = arith.minimumf %332, %333 : vector<8x96xf32>
    %335 = math.exp %334 : vector<8x96xf32>
    %cst_131 = arith.constant 1.000000e+00 : f32
    %336 = vector.broadcast %cst_131 : f32 to vector<8x96xf32>
    %337 = arith.addf %336, %335 : vector<8x96xf32>
    %338 = tpu.reciprocal %337 {approx = true} : vector<8x96xf32> -> vector<8x96xf32>
    %339 = vector.extract_strided_slice %329 {offsets = [0, 96], sizes = [8, 32], strides = [1, 1]} : vector<8x128xf32> to vector<8x32xf32>
    %340 = math.tanh %339 : vector<8x32xf32>
    %341 = vector.extract_strided_slice %338 {offsets = [0, 0], sizes = [8, 32], strides = [1, 1]} : vector<8x96xf32> to vector<8x32xf32>
    %342 = vector.extract_strided_slice %338 {offsets = [0, 32], sizes = [8, 32], strides = [1, 1]} : vector<8x96xf32> to vector<8x32xf32>
    %343 = vector.extract_strided_slice %338 {offsets = [0, 64], sizes = [8, 32], strides = [1, 1]} : vector<8x96xf32> to vector<8x32xf32>
    %344 = arith.mulf %342, %323 : vector<8x32xf32>
    %345 = arith.mulf %341, %340 : vector<8x32xf32>
    %346 = arith.addf %344, %345 : vector<8x32xf32>
    %347 = math.tanh %346 : vector<8x32xf32>
    %348 = arith.mulf %343, %347 : vector<8x32xf32>
    %c40_132 = arith.constant 40 : index
    %c0_133 = arith.constant 0 : index
    %349 = vector.load %arg11[%c40_132, %c0_133] : memref<64x32xf32, #tpu.memory_space<vmem>>, vector<8x32xf32>
    tpu.vector_store %arg11[%c40_132, %c0_133], %348 {strides = array<i32>} : memref<64x32xf32, #tpu.memory_space<vmem>>, vector<8x32xf32>,
    %c48_134 = arith.constant 48 : index
    %c0_135 = arith.constant 0 : index
    %350 = vector.load %arg13[%c48_134, %c0_135] : memref<64x128xf32, #tpu.memory_space<vmem>>, vector<8x128xf32>
    %cst_136 = arith.constant dense<0.000000e+00> : vector<8x128xf32>
    %351 = tpu.matmul %348, %209, %cst_136 {dimension_numbers = #tpu.dot_dimension_numbers<[1], [0], [0], [1], [0, 0, 1, 1], [], []>} : vector<8x32xf32>, vector<32x128xf32>, vector<8x128xf32> -> vector<8x128xf32>
    %352 = arith.addf %350, %351 : vector<8x128xf32>
    %353 = vector.extract_strided_slice %352 {offsets = [0, 0], sizes = [8, 96], strides = [1, 1]} : vector<8x128xf32> to vector<8x96xf32>
    %cst_137 = arith.constant 0.000000e+00 : f32
    %354 = vector.broadcast %cst_137 : f32 to vector<8x96xf32>
    %355 = arith.subf %354, %353 : vector<8x96xf32>
    %cst_138 = arith.constant 8.000000e+01 : f32
    %356 = vector.broadcast %cst_138 : f32 to vector<8x96xf32>
    %357 = arith.minimumf %355, %356 : vector<8x96xf32>
    %358 = math.exp %357 : vector<8x96xf32>
    %cst_139 = arith.constant 1.000000e+00 : f32
    %359 = vector.broadcast %cst_139 : f32 to vector<8x96xf32>
    %360 = arith.addf %359, %358 : vector<8x96xf32>
    %361 = tpu.reciprocal %360 {approx = true} : vector<8x96xf32> -> vector<8x96xf32>
    %362 = vector.extract_strided_slice %352 {offsets = [0, 96], sizes = [8, 32], strides = [1, 1]} : vector<8x128xf32> to vector<8x32xf32>
    %363 = math.tanh %362 : vector<8x32xf32>
    %364 = vector.extract_strided_slice %361 {offsets = [0, 0], sizes = [8, 32], strides = [1, 1]} : vector<8x96xf32> to vector<8x32xf32>
    %365 = vector.extract_strided_slice %361 {offsets = [0, 32], sizes = [8, 32], strides = [1, 1]} : vector<8x96xf32> to vector<8x32xf32>
    %366 = vector.extract_strided_slice %361 {offsets = [0, 64], sizes = [8, 32], strides = [1, 1]} : vector<8x96xf32> to vector<8x32xf32>
    %367 = arith.mulf %365, %346 : vector<8x32xf32>
    %368 = arith.mulf %364, %363 : vector<8x32xf32>
    %369 = arith.addf %367, %368 : vector<8x32xf32>
    %370 = math.tanh %369 : vector<8x32xf32>
    %371 = arith.mulf %366, %370 : vector<8x32xf32>
    %c48_140 = arith.constant 48 : index
    %c0_141 = arith.constant 0 : index
    %372 = vector.load %arg11[%c48_140, %c0_141] : memref<64x32xf32, #tpu.memory_space<vmem>>, vector<8x32xf32>
    tpu.vector_store %arg11[%c48_140, %c0_141], %371 {strides = array<i32>} : memref<64x32xf32, #tpu.memory_space<vmem>>, vector<8x32xf32>,
    %c56_142 = arith.constant 56 : index
    %c0_143 = arith.constant 0 : index
    %373 = vector.load %arg13[%c56_142, %c0_143] : memref<64x128xf32, #tpu.memory_space<vmem>>, vector<8x128xf32>
    %cst_144 = arith.constant dense<0.000000e+00> : vector<8x128xf32>
    %374 = tpu.matmul %371, %209, %cst_144 {dimension_numbers = #tpu.dot_dimension_numbers<[1], [0], [0], [1], [0, 0, 1, 1], [], []>} : vector<8x32xf32>, vector<32x128xf32>, vector<8x128xf32> -> vector<8x128xf32>
    %375 = arith.addf %373, %374 : vector<8x128xf32>
    %376 = vector.extract_strided_slice %375 {offsets = [0, 0], sizes = [8, 96], strides = [1, 1]} : vector<8x128xf32> to vector<8x96xf32>
    %cst_145 = arith.constant 0.000000e+00 : f32
    %377 = vector.broadcast %cst_145 : f32 to vector<8x96xf32>
    %378 = arith.subf %377, %376 : vector<8x96xf32>
    %cst_146 = arith.constant 8.000000e+01 : f32
    %379 = vector.broadcast %cst_146 : f32 to vector<8x96xf32>
    %380 = arith.minimumf %378, %379 : vector<8x96xf32>
    %381 = math.exp %380 : vector<8x96xf32>
    %cst_147 = arith.constant 1.000000e+00 : f32
    %382 = vector.broadcast %cst_147 : f32 to vector<8x96xf32>
    %383 = arith.addf %382, %381 : vector<8x96xf32>
    %384 = tpu.reciprocal %383 {approx = true} : vector<8x96xf32> -> vector<8x96xf32>
    %385 = vector.extract_strided_slice %375 {offsets = [0, 96], sizes = [8, 32], strides = [1, 1]} : vector<8x128xf32> to vector<8x32xf32>
    %386 = math.tanh %385 : vector<8x32xf32>
    %387 = vector.extract_strided_slice %384 {offsets = [0, 0], sizes = [8, 32], strides = [1, 1]} : vector<8x96xf32> to vector<8x32xf32>
    %388 = vector.extract_strided_slice %384 {offsets = [0, 32], sizes = [8, 32], strides = [1, 1]} : vector<8x96xf32> to vector<8x32xf32>
    %389 = vector.extract_strided_slice %384 {offsets = [0, 64], sizes = [8, 32], strides = [1, 1]} : vector<8x96xf32> to vector<8x32xf32>
    %390 = arith.mulf %388, %369 : vector<8x32xf32>
    %391 = arith.mulf %387, %386 : vector<8x32xf32>
    %392 = arith.addf %390, %391 : vector<8x32xf32>
    %393 = math.tanh %392 : vector<8x32xf32>
    %394 = arith.mulf %389, %393 : vector<8x32xf32>
    %c56_148 = arith.constant 56 : index
    %c0_149 = arith.constant 0 : index
    %395 = vector.load %arg11[%c56_148, %c0_149] : memref<64x32xf32, #tpu.memory_space<vmem>>, vector<8x32xf32>
    tpu.vector_store %arg11[%c56_148, %c0_149], %394 {strides = array<i32>} : memref<64x32xf32, #tpu.memory_space<vmem>>, vector<8x32xf32>,
    %c0_150 = arith.constant 0 : index
    %c0_151 = arith.constant 0 : index
    %396 = vector.load %arg11[%c0_150, %c0_151] : memref<64x32xf32, #tpu.memory_space<vmem>>, vector<64x32xf32>
    %c2 = arith.constant 2 : index
    %c0_152 = arith.constant 0 : index
    %c0_153 = arith.constant 0 : index
    %397 = vector.load %arg2[%c2, %c0_152, %c0_153] : memref<6x32x128xbf16, #tpu.memory_space<vmem>>, vector<1x32x128xbf16>
    %398 = vector.shape_cast %397 : vector<1x32x128xbf16> to vector<32x128xbf16>
    %399 = arith.truncf %396 : vector<64x32xf32> to vector<64x32xbf16>
    %cst_154 = arith.constant dense<0.000000e+00> : vector<64x128xf32>
    %400 = tpu.matmul %399, %398, %cst_154 {dimension_numbers = #tpu.dot_dimension_numbers<[1], [0], [0], [1], [0, 0, 1, 1], [], []>} : vector<64x32xbf16>, vector<32x128xbf16>, vector<64x128xf32> -> vector<64x128xf32>
    %c2_155 = arith.constant 2 : index
    %c0_156 = arith.constant 0 : index
    %c0_157 = arith.constant 0 : index
    %401 = vector.load %arg4[%c2_155, %c0_156, %c0_157] : memref<6x1x128xf32, #tpu.memory_space<vmem>>, vector<1x1x128xf32>
    %402 = vector.shape_cast %401 : vector<1x1x128xf32> to vector<1x128xf32>
    %403 = vector.broadcast %402 : vector<1x128xf32> to vector<64x128xf32>
    %404 = arith.addf %400, %403 : vector<64x128xf32>
    %c0_158 = arith.constant 0 : index
    %c0_159 = arith.constant 0 : index
    %405 = vector.load %arg13[%c0_158, %c0_159] : memref<64x128xf32, #tpu.memory_space<vmem>>, vector<64x128xf32>
    tpu.vector_store %arg13[%c0_158, %c0_159], %404 {strides = array<i32>} : memref<64x128xf32, #tpu.memory_space<vmem>>, vector<64x128xf32>,
    %c2_160 = arith.constant 2 : index
    %c0_161 = arith.constant 0 : index
    %c0_162 = arith.constant 0 : index
    %406 = vector.load %arg3[%c2_160, %c0_161, %c0_162] : memref<6x32x128xf32, #tpu.memory_space<vmem>>, vector<1x32x128xf32>
    %407 = vector.shape_cast %406 : vector<1x32x128xf32> to vector<32x128xf32>
    %cst_163 = arith.constant 0.000000e+00 : f32
    %408 = vector.broadcast %cst_163 : f32 to vector<8x32xf32>
    %cst_164 = arith.constant 0.000000e+00 : f32
    %409 = vector.broadcast %cst_164 : f32 to vector<8x32xf32>
    %c0_165 = arith.constant 0 : index
    %c0_166 = arith.constant 0 : index
    %410 = vector.load %arg13[%c0_165, %c0_166] : memref<64x128xf32, #tpu.memory_space<vmem>>, vector<8x128xf32>
    %cst_167 = arith.constant dense<0.000000e+00> : vector<8x128xf32>
    %411 = tpu.matmul %408, %407, %cst_167 {dimension_numbers = #tpu.dot_dimension_numbers<[1], [0], [0], [1], [0, 0, 1, 1], [], []>} : vector<8x32xf32>, vector<32x128xf32>, vector<8x128xf32> -> vector<8x128xf32>
    %412 = arith.addf %410, %411 : vector<8x128xf32>
    %413 = vector.extract_strided_slice %412 {offsets = [0, 0], sizes = [8, 96], strides = [1, 1]} : vector<8x128xf32> to vector<8x96xf32>
    %cst_168 = arith.constant 0.000000e+00 : f32
    %414 = vector.broadcast %cst_168 : f32 to vector<8x96xf32>
    %415 = arith.subf %414, %413 : vector<8x96xf32>
    %cst_169 = arith.constant 8.000000e+01 : f32
    %416 = vector.broadcast %cst_169 : f32 to vector<8x96xf32>
    %417 = arith.minimumf %415, %416 : vector<8x96xf32>
    %418 = math.exp %417 : vector<8x96xf32>
    %cst_170 = arith.constant 1.000000e+00 : f32
    %419 = vector.broadcast %cst_170 : f32 to vector<8x96xf32>
    %420 = arith.addf %419, %418 : vector<8x96xf32>
    %421 = tpu.reciprocal %420 {approx = true} : vector<8x96xf32> -> vector<8x96xf32>
    %422 = vector.extract_strided_slice %412 {offsets = [0, 96], sizes = [8, 32], strides = [1, 1]} : vector<8x128xf32> to vector<8x32xf32>
    %423 = math.tanh %422 : vector<8x32xf32>
    %424 = vector.extract_strided_slice %421 {offsets = [0, 0], sizes = [8, 32], strides = [1, 1]} : vector<8x96xf32> to vector<8x32xf32>
    %425 = vector.extract_strided_slice %421 {offsets = [0, 32], sizes = [8, 32], strides = [1, 1]} : vector<8x96xf32> to vector<8x32xf32>
    %426 = vector.extract_strided_slice %421 {offsets = [0, 64], sizes = [8, 32], strides = [1, 1]} : vector<8x96xf32> to vector<8x32xf32>
    %427 = arith.mulf %425, %409 : vector<8x32xf32>
    %428 = arith.mulf %424, %423 : vector<8x32xf32>
    %429 = arith.addf %427, %428 : vector<8x32xf32>
    %430 = math.tanh %429 : vector<8x32xf32>
    %431 = arith.mulf %426, %430 : vector<8x32xf32>
    %c0_171 = arith.constant 0 : index
    %c0_172 = arith.constant 0 : index
    %432 = vector.load %arg12[%c0_171, %c0_172] : memref<64x32xf32, #tpu.memory_space<vmem>>, vector<8x32xf32>
    tpu.vector_store %arg12[%c0_171, %c0_172], %431 {strides = array<i32>} : memref<64x32xf32, #tpu.memory_space<vmem>>, vector<8x32xf32>,
    %c8_173 = arith.constant 8 : index
    %c0_174 = arith.constant 0 : index
    %433 = vector.load %arg13[%c8_173, %c0_174] : memref<64x128xf32, #tpu.memory_space<vmem>>, vector<8x128xf32>
    %cst_175 = arith.constant dense<0.000000e+00> : vector<8x128xf32>
    %434 = tpu.matmul %431, %407, %cst_175 {dimension_numbers = #tpu.dot_dimension_numbers<[1], [0], [0], [1], [0, 0, 1, 1], [], []>} : vector<8x32xf32>, vector<32x128xf32>, vector<8x128xf32> -> vector<8x128xf32>
    %435 = arith.addf %433, %434 : vector<8x128xf32>
    %436 = vector.extract_strided_slice %435 {offsets = [0, 0], sizes = [8, 96], strides = [1, 1]} : vector<8x128xf32> to vector<8x96xf32>
    %cst_176 = arith.constant 0.000000e+00 : f32
    %437 = vector.broadcast %cst_176 : f32 to vector<8x96xf32>
    %438 = arith.subf %437, %436 : vector<8x96xf32>
    %cst_177 = arith.constant 8.000000e+01 : f32
    %439 = vector.broadcast %cst_177 : f32 to vector<8x96xf32>
    %440 = arith.minimumf %438, %439 : vector<8x96xf32>
    %441 = math.exp %440 : vector<8x96xf32>
    %cst_178 = arith.constant 1.000000e+00 : f32
    %442 = vector.broadcast %cst_178 : f32 to vector<8x96xf32>
    %443 = arith.addf %442, %441 : vector<8x96xf32>
    %444 = tpu.reciprocal %443 {approx = true} : vector<8x96xf32> -> vector<8x96xf32>
    %445 = vector.extract_strided_slice %435 {offsets = [0, 96], sizes = [8, 32], strides = [1, 1]} : vector<8x128xf32> to vector<8x32xf32>
    %446 = math.tanh %445 : vector<8x32xf32>
    %447 = vector.extract_strided_slice %444 {offsets = [0, 0], sizes = [8, 32], strides = [1, 1]} : vector<8x96xf32> to vector<8x32xf32>
    %448 = vector.extract_strided_slice %444 {offsets = [0, 32], sizes = [8, 32], strides = [1, 1]} : vector<8x96xf32> to vector<8x32xf32>
    %449 = vector.extract_strided_slice %444 {offsets = [0, 64], sizes = [8, 32], strides = [1, 1]} : vector<8x96xf32> to vector<8x32xf32>
    %450 = arith.mulf %448, %429 : vector<8x32xf32>
    %451 = arith.mulf %447, %446 : vector<8x32xf32>
    %452 = arith.addf %450, %451 : vector<8x32xf32>
    %453 = math.tanh %452 : vector<8x32xf32>
    %454 = arith.mulf %449, %453 : vector<8x32xf32>
    %c8_179 = arith.constant 8 : index
    %c0_180 = arith.constant 0 : index
    %455 = vector.load %arg12[%c8_179, %c0_180] : memref<64x32xf32, #tpu.memory_space<vmem>>, vector<8x32xf32>
    tpu.vector_store %arg12[%c8_179, %c0_180], %454 {strides = array<i32>} : memref<64x32xf32, #tpu.memory_space<vmem>>, vector<8x32xf32>,
    %c16_181 = arith.constant 16 : index
    %c0_182 = arith.constant 0 : index
    %456 = vector.load %arg13[%c16_181, %c0_182] : memref<64x128xf32, #tpu.memory_space<vmem>>, vector<8x128xf32>
    %cst_183 = arith.constant dense<0.000000e+00> : vector<8x128xf32>
    %457 = tpu.matmul %454, %407, %cst_183 {dimension_numbers = #tpu.dot_dimension_numbers<[1], [0], [0], [1], [0, 0, 1, 1], [], []>} : vector<8x32xf32>, vector<32x128xf32>, vector<8x128xf32> -> vector<8x128xf32>
    %458 = arith.addf %456, %457 : vector<8x128xf32>
    %459 = vector.extract_strided_slice %458 {offsets = [0, 0], sizes = [8, 96], strides = [1, 1]} : vector<8x128xf32> to vector<8x96xf32>
    %cst_184 = arith.constant 0.000000e+00 : f32
    %460 = vector.broadcast %cst_184 : f32 to vector<8x96xf32>
    %461 = arith.subf %460, %459 : vector<8x96xf32>
    %cst_185 = arith.constant 8.000000e+01 : f32
    %462 = vector.broadcast %cst_185 : f32 to vector<8x96xf32>
    %463 = arith.minimumf %461, %462 : vector<8x96xf32>
    %464 = math.exp %463 : vector<8x96xf32>
    %cst_186 = arith.constant 1.000000e+00 : f32
    %465 = vector.broadcast %cst_186 : f32 to vector<8x96xf32>
    %466 = arith.addf %465, %464 : vector<8x96xf32>
    %467 = tpu.reciprocal %466 {approx = true} : vector<8x96xf32> -> vector<8x96xf32>
    %468 = vector.extract_strided_slice %458 {offsets = [0, 96], sizes = [8, 32], strides = [1, 1]} : vector<8x128xf32> to vector<8x32xf32>
    %469 = math.tanh %468 : vector<8x32xf32>
    %470 = vector.extract_strided_slice %467 {offsets = [0, 0], sizes = [8, 32], strides = [1, 1]} : vector<8x96xf32> to vector<8x32xf32>
    %471 = vector.extract_strided_slice %467 {offsets = [0, 32], sizes = [8, 32], strides = [1, 1]} : vector<8x96xf32> to vector<8x32xf32>
    %472 = vector.extract_strided_slice %467 {offsets = [0, 64], sizes = [8, 32], strides = [1, 1]} : vector<8x96xf32> to vector<8x32xf32>
    %473 = arith.mulf %471, %452 : vector<8x32xf32>
    %474 = arith.mulf %470, %469 : vector<8x32xf32>
    %475 = arith.addf %473, %474 : vector<8x32xf32>
    %476 = math.tanh %475 : vector<8x32xf32>
    %477 = arith.mulf %472, %476 : vector<8x32xf32>
    %c16_187 = arith.constant 16 : index
    %c0_188 = arith.constant 0 : index
    %478 = vector.load %arg12[%c16_187, %c0_188] : memref<64x32xf32, #tpu.memory_space<vmem>>, vector<8x32xf32>
    tpu.vector_store %arg12[%c16_187, %c0_188], %477 {strides = array<i32>} : memref<64x32xf32, #tpu.memory_space<vmem>>, vector<8x32xf32>,
    %c24_189 = arith.constant 24 : index
    %c0_190 = arith.constant 0 : index
    %479 = vector.load %arg13[%c24_189, %c0_190] : memref<64x128xf32, #tpu.memory_space<vmem>>, vector<8x128xf32>
    %cst_191 = arith.constant dense<0.000000e+00> : vector<8x128xf32>
    %480 = tpu.matmul %477, %407, %cst_191 {dimension_numbers = #tpu.dot_dimension_numbers<[1], [0], [0], [1], [0, 0, 1, 1], [], []>} : vector<8x32xf32>, vector<32x128xf32>, vector<8x128xf32> -> vector<8x128xf32>
    %481 = arith.addf %479, %480 : vector<8x128xf32>
    %482 = vector.extract_strided_slice %481 {offsets = [0, 0], sizes = [8, 96], strides = [1, 1]} : vector<8x128xf32> to vector<8x96xf32>
    %cst_192 = arith.constant 0.000000e+00 : f32
    %483 = vector.broadcast %cst_192 : f32 to vector<8x96xf32>
    %484 = arith.subf %483, %482 : vector<8x96xf32>
    %cst_193 = arith.constant 8.000000e+01 : f32
    %485 = vector.broadcast %cst_193 : f32 to vector<8x96xf32>
    %486 = arith.minimumf %484, %485 : vector<8x96xf32>
    %487 = math.exp %486 : vector<8x96xf32>
    %cst_194 = arith.constant 1.000000e+00 : f32
    %488 = vector.broadcast %cst_194 : f32 to vector<8x96xf32>
    %489 = arith.addf %488, %487 : vector<8x96xf32>
    %490 = tpu.reciprocal %489 {approx = true} : vector<8x96xf32> -> vector<8x96xf32>
    %491 = vector.extract_strided_slice %481 {offsets = [0, 96], sizes = [8, 32], strides = [1, 1]} : vector<8x128xf32> to vector<8x32xf32>
    %492 = math.tanh %491 : vector<8x32xf32>
    %493 = vector.extract_strided_slice %490 {offsets = [0, 0], sizes = [8, 32], strides = [1, 1]} : vector<8x96xf32> to vector<8x32xf32>
    %494 = vector.extract_strided_slice %490 {offsets = [0, 32], sizes = [8, 32], strides = [1, 1]} : vector<8x96xf32> to vector<8x32xf32>
    %495 = vector.extract_strided_slice %490 {offsets = [0, 64], sizes = [8, 32], strides = [1, 1]} : vector<8x96xf32> to vector<8x32xf32>
    %496 = arith.mulf %494, %475 : vector<8x32xf32>
    %497 = arith.mulf %493, %492 : vector<8x32xf32>
    %498 = arith.addf %496, %497 : vector<8x32xf32>
    %499 = math.tanh %498 : vector<8x32xf32>
    %500 = arith.mulf %495, %499 : vector<8x32xf32>
    %c24_195 = arith.constant 24 : index
    %c0_196 = arith.constant 0 : index
    %501 = vector.load %arg12[%c24_195, %c0_196] : memref<64x32xf32, #tpu.memory_space<vmem>>, vector<8x32xf32>
    tpu.vector_store %arg12[%c24_195, %c0_196], %500 {strides = array<i32>} : memref<64x32xf32, #tpu.memory_space<vmem>>, vector<8x32xf32>,
    %c32_197 = arith.constant 32 : index
    %c0_198 = arith.constant 0 : index
    %502 = vector.load %arg13[%c32_197, %c0_198] : memref<64x128xf32, #tpu.memory_space<vmem>>, vector<8x128xf32>
    %cst_199 = arith.constant dense<0.000000e+00> : vector<8x128xf32>
    %503 = tpu.matmul %500, %407, %cst_199 {dimension_numbers = #tpu.dot_dimension_numbers<[1], [0], [0], [1], [0, 0, 1, 1], [], []>} : vector<8x32xf32>, vector<32x128xf32>, vector<8x128xf32> -> vector<8x128xf32>
    %504 = arith.addf %502, %503 : vector<8x128xf32>
    %505 = vector.extract_strided_slice %504 {offsets = [0, 0], sizes = [8, 96], strides = [1, 1]} : vector<8x128xf32> to vector<8x96xf32>
    %cst_200 = arith.constant 0.000000e+00 : f32
    %506 = vector.broadcast %cst_200 : f32 to vector<8x96xf32>
    %507 = arith.subf %506, %505 : vector<8x96xf32>
    %cst_201 = arith.constant 8.000000e+01 : f32
    %508 = vector.broadcast %cst_201 : f32 to vector<8x96xf32>
    %509 = arith.minimumf %507, %508 : vector<8x96xf32>
    %510 = math.exp %509 : vector<8x96xf32>
    %cst_202 = arith.constant 1.000000e+00 : f32
    %511 = vector.broadcast %cst_202 : f32 to vector<8x96xf32>
    %512 = arith.addf %511, %510 : vector<8x96xf32>
    %513 = tpu.reciprocal %512 {approx = true} : vector<8x96xf32> -> vector<8x96xf32>
    %514 = vector.extract_strided_slice %504 {offsets = [0, 96], sizes = [8, 32], strides = [1, 1]} : vector<8x128xf32> to vector<8x32xf32>
    %515 = math.tanh %514 : vector<8x32xf32>
    %516 = vector.extract_strided_slice %513 {offsets = [0, 0], sizes = [8, 32], strides = [1, 1]} : vector<8x96xf32> to vector<8x32xf32>
    %517 = vector.extract_strided_slice %513 {offsets = [0, 32], sizes = [8, 32], strides = [1, 1]} : vector<8x96xf32> to vector<8x32xf32>
    %518 = vector.extract_strided_slice %513 {offsets = [0, 64], sizes = [8, 32], strides = [1, 1]} : vector<8x96xf32> to vector<8x32xf32>
    %519 = arith.mulf %517, %498 : vector<8x32xf32>
    %520 = arith.mulf %516, %515 : vector<8x32xf32>
    %521 = arith.addf %519, %520 : vector<8x32xf32>
    %522 = math.tanh %521 : vector<8x32xf32>
    %523 = arith.mulf %518, %522 : vector<8x32xf32>
    %c32_203 = arith.constant 32 : index
    %c0_204 = arith.constant 0 : index
    %524 = vector.load %arg12[%c32_203, %c0_204] : memref<64x32xf32, #tpu.memory_space<vmem>>, vector<8x32xf32>
    tpu.vector_store %arg12[%c32_203, %c0_204], %523 {strides = array<i32>} : memref<64x32xf32, #tpu.memory_space<vmem>>, vector<8x32xf32>,
    %c40_205 = arith.constant 40 : index
    %c0_206 = arith.constant 0 : index
    %525 = vector.load %arg13[%c40_205, %c0_206] : memref<64x128xf32, #tpu.memory_space<vmem>>, vector<8x128xf32>
    %cst_207 = arith.constant dense<0.000000e+00> : vector<8x128xf32>
    %526 = tpu.matmul %523, %407, %cst_207 {dimension_numbers = #tpu.dot_dimension_numbers<[1], [0], [0], [1], [0, 0, 1, 1], [], []>} : vector<8x32xf32>, vector<32x128xf32>, vector<8x128xf32> -> vector<8x128xf32>
    %527 = arith.addf %525, %526 : vector<8x128xf32>
    %528 = vector.extract_strided_slice %527 {offsets = [0, 0], sizes = [8, 96], strides = [1, 1]} : vector<8x128xf32> to vector<8x96xf32>
    %cst_208 = arith.constant 0.000000e+00 : f32
    %529 = vector.broadcast %cst_208 : f32 to vector<8x96xf32>
    %530 = arith.subf %529, %528 : vector<8x96xf32>
    %cst_209 = arith.constant 8.000000e+01 : f32
    %531 = vector.broadcast %cst_209 : f32 to vector<8x96xf32>
    %532 = arith.minimumf %530, %531 : vector<8x96xf32>
    %533 = math.exp %532 : vector<8x96xf32>
    %cst_210 = arith.constant 1.000000e+00 : f32
    %534 = vector.broadcast %cst_210 : f32 to vector<8x96xf32>
    %535 = arith.addf %534, %533 : vector<8x96xf32>
    %536 = tpu.reciprocal %535 {approx = true} : vector<8x96xf32> -> vector<8x96xf32>
    %537 = vector.extract_strided_slice %527 {offsets = [0, 96], sizes = [8, 32], strides = [1, 1]} : vector<8x128xf32> to vector<8x32xf32>
    %538 = math.tanh %537 : vector<8x32xf32>
    %539 = vector.extract_strided_slice %536 {offsets = [0, 0], sizes = [8, 32], strides = [1, 1]} : vector<8x96xf32> to vector<8x32xf32>
    %540 = vector.extract_strided_slice %536 {offsets = [0, 32], sizes = [8, 32], strides = [1, 1]} : vector<8x96xf32> to vector<8x32xf32>
    %541 = vector.extract_strided_slice %536 {offsets = [0, 64], sizes = [8, 32], strides = [1, 1]} : vector<8x96xf32> to vector<8x32xf32>
    %542 = arith.mulf %540, %521 : vector<8x32xf32>
    %543 = arith.mulf %539, %538 : vector<8x32xf32>
    %544 = arith.addf %542, %543 : vector<8x32xf32>
    %545 = math.tanh %544 : vector<8x32xf32>
    %546 = arith.mulf %541, %545 : vector<8x32xf32>
    %c40_211 = arith.constant 40 : index
    %c0_212 = arith.constant 0 : index
    %547 = vector.load %arg12[%c40_211, %c0_212] : memref<64x32xf32, #tpu.memory_space<vmem>>, vector<8x32xf32>
    tpu.vector_store %arg12[%c40_211, %c0_212], %546 {strides = array<i32>} : memref<64x32xf32, #tpu.memory_space<vmem>>, vector<8x32xf32>,
    %c48_213 = arith.constant 48 : index
    %c0_214 = arith.constant 0 : index
    %548 = vector.load %arg13[%c48_213, %c0_214] : memref<64x128xf32, #tpu.memory_space<vmem>>, vector<8x128xf32>
    %cst_215 = arith.constant dense<0.000000e+00> : vector<8x128xf32>
    %549 = tpu.matmul %546, %407, %cst_215 {dimension_numbers = #tpu.dot_dimension_numbers<[1], [0], [0], [1], [0, 0, 1, 1], [], []>} : vector<8x32xf32>, vector<32x128xf32>, vector<8x128xf32> -> vector<8x128xf32>
    %550 = arith.addf %548, %549 : vector<8x128xf32>
    %551 = vector.extract_strided_slice %550 {offsets = [0, 0], sizes = [8, 96], strides = [1, 1]} : vector<8x128xf32> to vector<8x96xf32>
    %cst_216 = arith.constant 0.000000e+00 : f32
    %552 = vector.broadcast %cst_216 : f32 to vector<8x96xf32>
    %553 = arith.subf %552, %551 : vector<8x96xf32>
    %cst_217 = arith.constant 8.000000e+01 : f32
    %554 = vector.broadcast %cst_217 : f32 to vector<8x96xf32>
    %555 = arith.minimumf %553, %554 : vector<8x96xf32>
    %556 = math.exp %555 : vector<8x96xf32>
    %cst_218 = arith.constant 1.000000e+00 : f32
    %557 = vector.broadcast %cst_218 : f32 to vector<8x96xf32>
    %558 = arith.addf %557, %556 : vector<8x96xf32>
    %559 = tpu.reciprocal %558 {approx = true} : vector<8x96xf32> -> vector<8x96xf32>
    %560 = vector.extract_strided_slice %550 {offsets = [0, 96], sizes = [8, 32], strides = [1, 1]} : vector<8x128xf32> to vector<8x32xf32>
    %561 = math.tanh %560 : vector<8x32xf32>
    %562 = vector.extract_strided_slice %559 {offsets = [0, 0], sizes = [8, 32], strides = [1, 1]} : vector<8x96xf32> to vector<8x32xf32>
    %563 = vector.extract_strided_slice %559 {offsets = [0, 32], sizes = [8, 32], strides = [1, 1]} : vector<8x96xf32> to vector<8x32xf32>
    %564 = vector.extract_strided_slice %559 {offsets = [0, 64], sizes = [8, 32], strides = [1, 1]} : vector<8x96xf32> to vector<8x32xf32>
    %565 = arith.mulf %563, %544 : vector<8x32xf32>
    %566 = arith.mulf %562, %561 : vector<8x32xf32>
    %567 = arith.addf %565, %566 : vector<8x32xf32>
    %568 = math.tanh %567 : vector<8x32xf32>
    %569 = arith.mulf %564, %568 : vector<8x32xf32>
    %c48_219 = arith.constant 48 : index
    %c0_220 = arith.constant 0 : index
    %570 = vector.load %arg12[%c48_219, %c0_220] : memref<64x32xf32, #tpu.memory_space<vmem>>, vector<8x32xf32>
    tpu.vector_store %arg12[%c48_219, %c0_220], %569 {strides = array<i32>} : memref<64x32xf32, #tpu.memory_space<vmem>>, vector<8x32xf32>,
    %c56_221 = arith.constant 56 : index
    %c0_222 = arith.constant 0 : index
    %571 = vector.load %arg13[%c56_221, %c0_222] : memref<64x128xf32, #tpu.memory_space<vmem>>, vector<8x128xf32>
    %cst_223 = arith.constant dense<0.000000e+00> : vector<8x128xf32>
    %572 = tpu.matmul %569, %407, %cst_223 {dimension_numbers = #tpu.dot_dimension_numbers<[1], [0], [0], [1], [0, 0, 1, 1], [], []>} : vector<8x32xf32>, vector<32x128xf32>, vector<8x128xf32> -> vector<8x128xf32>
    %573 = arith.addf %571, %572 : vector<8x128xf32>
    %574 = vector.extract_strided_slice %573 {offsets = [0, 0], sizes = [8, 96], strides = [1, 1]} : vector<8x128xf32> to vector<8x96xf32>
    %cst_224 = arith.constant 0.000000e+00 : f32
    %575 = vector.broadcast %cst_224 : f32 to vector<8x96xf32>
    %576 = arith.subf %575, %574 : vector<8x96xf32>
    %cst_225 = arith.constant 8.000000e+01 : f32
    %577 = vector.broadcast %cst_225 : f32 to vector<8x96xf32>
    %578 = arith.minimumf %576, %577 : vector<8x96xf32>
    %579 = math.exp %578 : vector<8x96xf32>
    %cst_226 = arith.constant 1.000000e+00 : f32
    %580 = vector.broadcast %cst_226 : f32 to vector<8x96xf32>
    %581 = arith.addf %580, %579 : vector<8x96xf32>
    %582 = tpu.reciprocal %581 {approx = true} : vector<8x96xf32> -> vector<8x96xf32>
    %583 = vector.extract_strided_slice %573 {offsets = [0, 96], sizes = [8, 32], strides = [1, 1]} : vector<8x128xf32> to vector<8x32xf32>
    %584 = math.tanh %583 : vector<8x32xf32>
    %585 = vector.extract_strided_slice %582 {offsets = [0, 0], sizes = [8, 32], strides = [1, 1]} : vector<8x96xf32> to vector<8x32xf32>
    %586 = vector.extract_strided_slice %582 {offsets = [0, 32], sizes = [8, 32], strides = [1, 1]} : vector<8x96xf32> to vector<8x32xf32>
    %587 = vector.extract_strided_slice %582 {offsets = [0, 64], sizes = [8, 32], strides = [1, 1]} : vector<8x96xf32> to vector<8x32xf32>
    %588 = arith.mulf %586, %567 : vector<8x32xf32>
    %589 = arith.mulf %585, %584 : vector<8x32xf32>
    %590 = arith.addf %588, %589 : vector<8x32xf32>
    %591 = math.tanh %590 : vector<8x32xf32>
    %592 = arith.mulf %587, %591 : vector<8x32xf32>
    %c56_227 = arith.constant 56 : index
    %c0_228 = arith.constant 0 : index
    %593 = vector.load %arg12[%c56_227, %c0_228] : memref<64x32xf32, #tpu.memory_space<vmem>>, vector<8x32xf32>
    tpu.vector_store %arg12[%c56_227, %c0_228], %592 {strides = array<i32>} : memref<64x32xf32, #tpu.memory_space<vmem>>, vector<8x32xf32>,
    %c0_229 = arith.constant 0 : index
    %c0_230 = arith.constant 0 : index
    %594 = vector.load %arg12[%c0_229, %c0_230] : memref<64x32xf32, #tpu.memory_space<vmem>>, vector<64x32xf32>
    %c3 = arith.constant 3 : index
    %c0_231 = arith.constant 0 : index
    %c0_232 = arith.constant 0 : index
    %595 = vector.load %arg2[%c3, %c0_231, %c0_232] : memref<6x32x128xbf16, #tpu.memory_space<vmem>>, vector<1x32x128xbf16>
    %596 = vector.shape_cast %595 : vector<1x32x128xbf16> to vector<32x128xbf16>
    %597 = arith.truncf %594 : vector<64x32xf32> to vector<64x32xbf16>
    %cst_233 = arith.constant dense<0.000000e+00> : vector<64x128xf32>
    %598 = tpu.matmul %597, %596, %cst_233 {dimension_numbers = #tpu.dot_dimension_numbers<[1], [0], [0], [1], [0, 0, 1, 1], [], []>} : vector<64x32xbf16>, vector<32x128xbf16>, vector<64x128xf32> -> vector<64x128xf32>
    %c3_234 = arith.constant 3 : index
    %c0_235 = arith.constant 0 : index
    %c0_236 = arith.constant 0 : index
    %599 = vector.load %arg4[%c3_234, %c0_235, %c0_236] : memref<6x1x128xf32, #tpu.memory_space<vmem>>, vector<1x1x128xf32>
    %600 = vector.shape_cast %599 : vector<1x1x128xf32> to vector<1x128xf32>
    %601 = vector.broadcast %600 : vector<1x128xf32> to vector<64x128xf32>
    %602 = arith.addf %598, %601 : vector<64x128xf32>
    %c0_237 = arith.constant 0 : index
    %c0_238 = arith.constant 0 : index
    %603 = vector.load %arg13[%c0_237, %c0_238] : memref<64x128xf32, #tpu.memory_space<vmem>>, vector<64x128xf32>
    tpu.vector_store %arg13[%c0_237, %c0_238], %602 {strides = array<i32>} : memref<64x128xf32, #tpu.memory_space<vmem>>, vector<64x128xf32>,
    %c3_239 = arith.constant 3 : index
    %c0_240 = arith.constant 0 : index
    %c0_241 = arith.constant 0 : index
    %604 = vector.load %arg3[%c3_239, %c0_240, %c0_241] : memref<6x32x128xf32, #tpu.memory_space<vmem>>, vector<1x32x128xf32>
    %605 = vector.shape_cast %604 : vector<1x32x128xf32> to vector<32x128xf32>
    %cst_242 = arith.constant 0.000000e+00 : f32
    %606 = vector.broadcast %cst_242 : f32 to vector<8x32xf32>
    %cst_243 = arith.constant 0.000000e+00 : f32
    %607 = vector.broadcast %cst_243 : f32 to vector<8x32xf32>
    %c0_244 = arith.constant 0 : index
    %c0_245 = arith.constant 0 : index
    %608 = vector.load %arg13[%c0_244, %c0_245] : memref<64x128xf32, #tpu.memory_space<vmem>>, vector<8x128xf32>
    %cst_246 = arith.constant dense<0.000000e+00> : vector<8x128xf32>
    %609 = tpu.matmul %606, %605, %cst_246 {dimension_numbers = #tpu.dot_dimension_numbers<[1], [0], [0], [1], [0, 0, 1, 1], [], []>} : vector<8x32xf32>, vector<32x128xf32>, vector<8x128xf32> -> vector<8x128xf32>
    %610 = arith.addf %608, %609 : vector<8x128xf32>
    %611 = vector.extract_strided_slice %610 {offsets = [0, 0], sizes = [8, 96], strides = [1, 1]} : vector<8x128xf32> to vector<8x96xf32>
    %cst_247 = arith.constant 0.000000e+00 : f32
    %612 = vector.broadcast %cst_247 : f32 to vector<8x96xf32>
    %613 = arith.subf %612, %611 : vector<8x96xf32>
    %cst_248 = arith.constant 8.000000e+01 : f32
    %614 = vector.broadcast %cst_248 : f32 to vector<8x96xf32>
    %615 = arith.minimumf %613, %614 : vector<8x96xf32>
    %616 = math.exp %615 : vector<8x96xf32>
    %cst_249 = arith.constant 1.000000e+00 : f32
    %617 = vector.broadcast %cst_249 : f32 to vector<8x96xf32>
    %618 = arith.addf %617, %616 : vector<8x96xf32>
    %619 = tpu.reciprocal %618 {approx = true} : vector<8x96xf32> -> vector<8x96xf32>
    %620 = vector.extract_strided_slice %610 {offsets = [0, 96], sizes = [8, 32], strides = [1, 1]} : vector<8x128xf32> to vector<8x32xf32>
    %621 = math.tanh %620 : vector<8x32xf32>
    %622 = vector.extract_strided_slice %619 {offsets = [0, 0], sizes = [8, 32], strides = [1, 1]} : vector<8x96xf32> to vector<8x32xf32>
    %623 = vector.extract_strided_slice %619 {offsets = [0, 32], sizes = [8, 32], strides = [1, 1]} : vector<8x96xf32> to vector<8x32xf32>
    %624 = vector.extract_strided_slice %619 {offsets = [0, 64], sizes = [8, 32], strides = [1, 1]} : vector<8x96xf32> to vector<8x32xf32>
    %625 = arith.mulf %623, %607 : vector<8x32xf32>
    %626 = arith.mulf %622, %621 : vector<8x32xf32>
    %627 = arith.addf %625, %626 : vector<8x32xf32>
    %628 = math.tanh %627 : vector<8x32xf32>
    %629 = arith.mulf %624, %628 : vector<8x32xf32>
    %c0_250 = arith.constant 0 : index
    %c0_251 = arith.constant 0 : index
    %630 = vector.load %arg12[%c0_250, %c0_251] : memref<64x32xf32, #tpu.memory_space<vmem>>, vector<8x32xf32>
    tpu.vector_store %arg12[%c0_250, %c0_251], %629 {strides = array<i32>} : memref<64x32xf32, #tpu.memory_space<vmem>>, vector<8x32xf32>,
    %c8_252 = arith.constant 8 : index
    %c0_253 = arith.constant 0 : index
    %631 = vector.load %arg13[%c8_252, %c0_253] : memref<64x128xf32, #tpu.memory_space<vmem>>, vector<8x128xf32>
    %cst_254 = arith.constant dense<0.000000e+00> : vector<8x128xf32>
    %632 = tpu.matmul %629, %605, %cst_254 {dimension_numbers = #tpu.dot_dimension_numbers<[1], [0], [0], [1], [0, 0, 1, 1], [], []>} : vector<8x32xf32>, vector<32x128xf32>, vector<8x128xf32> -> vector<8x128xf32>
    %633 = arith.addf %631, %632 : vector<8x128xf32>
    %634 = vector.extract_strided_slice %633 {offsets = [0, 0], sizes = [8, 96], strides = [1, 1]} : vector<8x128xf32> to vector<8x96xf32>
    %cst_255 = arith.constant 0.000000e+00 : f32
    %635 = vector.broadcast %cst_255 : f32 to vector<8x96xf32>
    %636 = arith.subf %635, %634 : vector<8x96xf32>
    %cst_256 = arith.constant 8.000000e+01 : f32
    %637 = vector.broadcast %cst_256 : f32 to vector<8x96xf32>
    %638 = arith.minimumf %636, %637 : vector<8x96xf32>
    %639 = math.exp %638 : vector<8x96xf32>
    %cst_257 = arith.constant 1.000000e+00 : f32
    %640 = vector.broadcast %cst_257 : f32 to vector<8x96xf32>
    %641 = arith.addf %640, %639 : vector<8x96xf32>
    %642 = tpu.reciprocal %641 {approx = true} : vector<8x96xf32> -> vector<8x96xf32>
    %643 = vector.extract_strided_slice %633 {offsets = [0, 96], sizes = [8, 32], strides = [1, 1]} : vector<8x128xf32> to vector<8x32xf32>
    %644 = math.tanh %643 : vector<8x32xf32>
    %645 = vector.extract_strided_slice %642 {offsets = [0, 0], sizes = [8, 32], strides = [1, 1]} : vector<8x96xf32> to vector<8x32xf32>
    %646 = vector.extract_strided_slice %642 {offsets = [0, 32], sizes = [8, 32], strides = [1, 1]} : vector<8x96xf32> to vector<8x32xf32>
    %647 = vector.extract_strided_slice %642 {offsets = [0, 64], sizes = [8, 32], strides = [1, 1]} : vector<8x96xf32> to vector<8x32xf32>
    %648 = arith.mulf %646, %627 : vector<8x32xf32>
    %649 = arith.mulf %645, %644 : vector<8x32xf32>
    %650 = arith.addf %648, %649 : vector<8x32xf32>
    %651 = math.tanh %650 : vector<8x32xf32>
    %652 = arith.mulf %647, %651 : vector<8x32xf32>
    %c8_258 = arith.constant 8 : index
    %c0_259 = arith.constant 0 : index
    %653 = vector.load %arg12[%c8_258, %c0_259] : memref<64x32xf32, #tpu.memory_space<vmem>>, vector<8x32xf32>
    tpu.vector_store %arg12[%c8_258, %c0_259], %652 {strides = array<i32>} : memref<64x32xf32, #tpu.memory_space<vmem>>, vector<8x32xf32>,
    %c16_260 = arith.constant 16 : index
    %c0_261 = arith.constant 0 : index
    %654 = vector.load %arg13[%c16_260, %c0_261] : memref<64x128xf32, #tpu.memory_space<vmem>>, vector<8x128xf32>
    %cst_262 = arith.constant dense<0.000000e+00> : vector<8x128xf32>
    %655 = tpu.matmul %652, %605, %cst_262 {dimension_numbers = #tpu.dot_dimension_numbers<[1], [0], [0], [1], [0, 0, 1, 1], [], []>} : vector<8x32xf32>, vector<32x128xf32>, vector<8x128xf32> -> vector<8x128xf32>
    %656 = arith.addf %654, %655 : vector<8x128xf32>
    %657 = vector.extract_strided_slice %656 {offsets = [0, 0], sizes = [8, 96], strides = [1, 1]} : vector<8x128xf32> to vector<8x96xf32>
    %cst_263 = arith.constant 0.000000e+00 : f32
    %658 = vector.broadcast %cst_263 : f32 to vector<8x96xf32>
    %659 = arith.subf %658, %657 : vector<8x96xf32>
    %cst_264 = arith.constant 8.000000e+01 : f32
    %660 = vector.broadcast %cst_264 : f32 to vector<8x96xf32>
    %661 = arith.minimumf %659, %660 : vector<8x96xf32>
    %662 = math.exp %661 : vector<8x96xf32>
    %cst_265 = arith.constant 1.000000e+00 : f32
    %663 = vector.broadcast %cst_265 : f32 to vector<8x96xf32>
    %664 = arith.addf %663, %662 : vector<8x96xf32>
    %665 = tpu.reciprocal %664 {approx = true} : vector<8x96xf32> -> vector<8x96xf32>
    %666 = vector.extract_strided_slice %656 {offsets = [0, 96], sizes = [8, 32], strides = [1, 1]} : vector<8x128xf32> to vector<8x32xf32>
    %667 = math.tanh %666 : vector<8x32xf32>
    %668 = vector.extract_strided_slice %665 {offsets = [0, 0], sizes = [8, 32], strides = [1, 1]} : vector<8x96xf32> to vector<8x32xf32>
    %669 = vector.extract_strided_slice %665 {offsets = [0, 32], sizes = [8, 32], strides = [1, 1]} : vector<8x96xf32> to vector<8x32xf32>
    %670 = vector.extract_strided_slice %665 {offsets = [0, 64], sizes = [8, 32], strides = [1, 1]} : vector<8x96xf32> to vector<8x32xf32>
    %671 = arith.mulf %669, %650 : vector<8x32xf32>
    %672 = arith.mulf %668, %667 : vector<8x32xf32>
    %673 = arith.addf %671, %672 : vector<8x32xf32>
    %674 = math.tanh %673 : vector<8x32xf32>
    %675 = arith.mulf %670, %674 : vector<8x32xf32>
    %c16_266 = arith.constant 16 : index
    %c0_267 = arith.constant 0 : index
    %676 = vector.load %arg12[%c16_266, %c0_267] : memref<64x32xf32, #tpu.memory_space<vmem>>, vector<8x32xf32>
    tpu.vector_store %arg12[%c16_266, %c0_267], %675 {strides = array<i32>} : memref<64x32xf32, #tpu.memory_space<vmem>>, vector<8x32xf32>,
    %c24_268 = arith.constant 24 : index
    %c0_269 = arith.constant 0 : index
    %677 = vector.load %arg13[%c24_268, %c0_269] : memref<64x128xf32, #tpu.memory_space<vmem>>, vector<8x128xf32>
    %cst_270 = arith.constant dense<0.000000e+00> : vector<8x128xf32>
    %678 = tpu.matmul %675, %605, %cst_270 {dimension_numbers = #tpu.dot_dimension_numbers<[1], [0], [0], [1], [0, 0, 1, 1], [], []>} : vector<8x32xf32>, vector<32x128xf32>, vector<8x128xf32> -> vector<8x128xf32>
    %679 = arith.addf %677, %678 : vector<8x128xf32>
    %680 = vector.extract_strided_slice %679 {offsets = [0, 0], sizes = [8, 96], strides = [1, 1]} : vector<8x128xf32> to vector<8x96xf32>
    %cst_271 = arith.constant 0.000000e+00 : f32
    %681 = vector.broadcast %cst_271 : f32 to vector<8x96xf32>
    %682 = arith.subf %681, %680 : vector<8x96xf32>
    %cst_272 = arith.constant 8.000000e+01 : f32
    %683 = vector.broadcast %cst_272 : f32 to vector<8x96xf32>
    %684 = arith.minimumf %682, %683 : vector<8x96xf32>
    %685 = math.exp %684 : vector<8x96xf32>
    %cst_273 = arith.constant 1.000000e+00 : f32
    %686 = vector.broadcast %cst_273 : f32 to vector<8x96xf32>
    %687 = arith.addf %686, %685 : vector<8x96xf32>
    %688 = tpu.reciprocal %687 {approx = true} : vector<8x96xf32> -> vector<8x96xf32>
    %689 = vector.extract_strided_slice %679 {offsets = [0, 96], sizes = [8, 32], strides = [1, 1]} : vector<8x128xf32> to vector<8x32xf32>
    %690 = math.tanh %689 : vector<8x32xf32>
    %691 = vector.extract_strided_slice %688 {offsets = [0, 0], sizes = [8, 32], strides = [1, 1]} : vector<8x96xf32> to vector<8x32xf32>
    %692 = vector.extract_strided_slice %688 {offsets = [0, 32], sizes = [8, 32], strides = [1, 1]} : vector<8x96xf32> to vector<8x32xf32>
    %693 = vector.extract_strided_slice %688 {offsets = [0, 64], sizes = [8, 32], strides = [1, 1]} : vector<8x96xf32> to vector<8x32xf32>
    %694 = arith.mulf %692, %673 : vector<8x32xf32>
    %695 = arith.mulf %691, %690 : vector<8x32xf32>
    %696 = arith.addf %694, %695 : vector<8x32xf32>
    %697 = math.tanh %696 : vector<8x32xf32>
    %698 = arith.mulf %693, %697 : vector<8x32xf32>
    %c24_274 = arith.constant 24 : index
    %c0_275 = arith.constant 0 : index
    %699 = vector.load %arg12[%c24_274, %c0_275] : memref<64x32xf32, #tpu.memory_space<vmem>>, vector<8x32xf32>
    tpu.vector_store %arg12[%c24_274, %c0_275], %698 {strides = array<i32>} : memref<64x32xf32, #tpu.memory_space<vmem>>, vector<8x32xf32>,
    %c32_276 = arith.constant 32 : index
    %c0_277 = arith.constant 0 : index
    %700 = vector.load %arg13[%c32_276, %c0_277] : memref<64x128xf32, #tpu.memory_space<vmem>>, vector<8x128xf32>
    %cst_278 = arith.constant dense<0.000000e+00> : vector<8x128xf32>
    %701 = tpu.matmul %698, %605, %cst_278 {dimension_numbers = #tpu.dot_dimension_numbers<[1], [0], [0], [1], [0, 0, 1, 1], [], []>} : vector<8x32xf32>, vector<32x128xf32>, vector<8x128xf32> -> vector<8x128xf32>
    %702 = arith.addf %700, %701 : vector<8x128xf32>
    %703 = vector.extract_strided_slice %702 {offsets = [0, 0], sizes = [8, 96], strides = [1, 1]} : vector<8x128xf32> to vector<8x96xf32>
    %cst_279 = arith.constant 0.000000e+00 : f32
    %704 = vector.broadcast %cst_279 : f32 to vector<8x96xf32>
    %705 = arith.subf %704, %703 : vector<8x96xf32>
    %cst_280 = arith.constant 8.000000e+01 : f32
    %706 = vector.broadcast %cst_280 : f32 to vector<8x96xf32>
    %707 = arith.minimumf %705, %706 : vector<8x96xf32>
    %708 = math.exp %707 : vector<8x96xf32>
    %cst_281 = arith.constant 1.000000e+00 : f32
    %709 = vector.broadcast %cst_281 : f32 to vector<8x96xf32>
    %710 = arith.addf %709, %708 : vector<8x96xf32>
    %711 = tpu.reciprocal %710 {approx = true} : vector<8x96xf32> -> vector<8x96xf32>
    %712 = vector.extract_strided_slice %702 {offsets = [0, 96], sizes = [8, 32], strides = [1, 1]} : vector<8x128xf32> to vector<8x32xf32>
    %713 = math.tanh %712 : vector<8x32xf32>
    %714 = vector.extract_strided_slice %711 {offsets = [0, 0], sizes = [8, 32], strides = [1, 1]} : vector<8x96xf32> to vector<8x32xf32>
    %715 = vector.extract_strided_slice %711 {offsets = [0, 32], sizes = [8, 32], strides = [1, 1]} : vector<8x96xf32> to vector<8x32xf32>
    %716 = vector.extract_strided_slice %711 {offsets = [0, 64], sizes = [8, 32], strides = [1, 1]} : vector<8x96xf32> to vector<8x32xf32>
    %717 = arith.mulf %715, %696 : vector<8x32xf32>
    %718 = arith.mulf %714, %713 : vector<8x32xf32>
    %719 = arith.addf %717, %718 : vector<8x32xf32>
    %720 = math.tanh %719 : vector<8x32xf32>
    %721 = arith.mulf %716, %720 : vector<8x32xf32>
    %c32_282 = arith.constant 32 : index
    %c0_283 = arith.constant 0 : index
    %722 = vector.load %arg12[%c32_282, %c0_283] : memref<64x32xf32, #tpu.memory_space<vmem>>, vector<8x32xf32>
    tpu.vector_store %arg12[%c32_282, %c0_283], %721 {strides = array<i32>} : memref<64x32xf32, #tpu.memory_space<vmem>>, vector<8x32xf32>,
    %c40_284 = arith.constant 40 : index
    %c0_285 = arith.constant 0 : index
    %723 = vector.load %arg13[%c40_284, %c0_285] : memref<64x128xf32, #tpu.memory_space<vmem>>, vector<8x128xf32>
    %cst_286 = arith.constant dense<0.000000e+00> : vector<8x128xf32>
    %724 = tpu.matmul %721, %605, %cst_286 {dimension_numbers = #tpu.dot_dimension_numbers<[1], [0], [0], [1], [0, 0, 1, 1], [], []>} : vector<8x32xf32>, vector<32x128xf32>, vector<8x128xf32> -> vector<8x128xf32>
    %725 = arith.addf %723, %724 : vector<8x128xf32>
    %726 = vector.extract_strided_slice %725 {offsets = [0, 0], sizes = [8, 96], strides = [1, 1]} : vector<8x128xf32> to vector<8x96xf32>
    %cst_287 = arith.constant 0.000000e+00 : f32
    %727 = vector.broadcast %cst_287 : f32 to vector<8x96xf32>
    %728 = arith.subf %727, %726 : vector<8x96xf32>
    %cst_288 = arith.constant 8.000000e+01 : f32
    %729 = vector.broadcast %cst_288 : f32 to vector<8x96xf32>
    %730 = arith.minimumf %728, %729 : vector<8x96xf32>
    %731 = math.exp %730 : vector<8x96xf32>
    %cst_289 = arith.constant 1.000000e+00 : f32
    %732 = vector.broadcast %cst_289 : f32 to vector<8x96xf32>
    %733 = arith.addf %732, %731 : vector<8x96xf32>
    %734 = tpu.reciprocal %733 {approx = true} : vector<8x96xf32> -> vector<8x96xf32>
    %735 = vector.extract_strided_slice %725 {offsets = [0, 96], sizes = [8, 32], strides = [1, 1]} : vector<8x128xf32> to vector<8x32xf32>
    %736 = math.tanh %735 : vector<8x32xf32>
    %737 = vector.extract_strided_slice %734 {offsets = [0, 0], sizes = [8, 32], strides = [1, 1]} : vector<8x96xf32> to vector<8x32xf32>
    %738 = vector.extract_strided_slice %734 {offsets = [0, 32], sizes = [8, 32], strides = [1, 1]} : vector<8x96xf32> to vector<8x32xf32>
    %739 = vector.extract_strided_slice %734 {offsets = [0, 64], sizes = [8, 32], strides = [1, 1]} : vector<8x96xf32> to vector<8x32xf32>
    %740 = arith.mulf %738, %719 : vector<8x32xf32>
    %741 = arith.mulf %737, %736 : vector<8x32xf32>
    %742 = arith.addf %740, %741 : vector<8x32xf32>
    %743 = math.tanh %742 : vector<8x32xf32>
    %744 = arith.mulf %739, %743 : vector<8x32xf32>
    %c40_290 = arith.constant 40 : index
    %c0_291 = arith.constant 0 : index
    %745 = vector.load %arg12[%c40_290, %c0_291] : memref<64x32xf32, #tpu.memory_space<vmem>>, vector<8x32xf32>
    tpu.vector_store %arg12[%c40_290, %c0_291], %744 {strides = array<i32>} : memref<64x32xf32, #tpu.memory_space<vmem>>, vector<8x32xf32>,
    %c48_292 = arith.constant 48 : index
    %c0_293 = arith.constant 0 : index
    %746 = vector.load %arg13[%c48_292, %c0_293] : memref<64x128xf32, #tpu.memory_space<vmem>>, vector<8x128xf32>
    %cst_294 = arith.constant dense<0.000000e+00> : vector<8x128xf32>
    %747 = tpu.matmul %744, %605, %cst_294 {dimension_numbers = #tpu.dot_dimension_numbers<[1], [0], [0], [1], [0, 0, 1, 1], [], []>} : vector<8x32xf32>, vector<32x128xf32>, vector<8x128xf32> -> vector<8x128xf32>
    %748 = arith.addf %746, %747 : vector<8x128xf32>
    %749 = vector.extract_strided_slice %748 {offsets = [0, 0], sizes = [8, 96], strides = [1, 1]} : vector<8x128xf32> to vector<8x96xf32>
    %cst_295 = arith.constant 0.000000e+00 : f32
    %750 = vector.broadcast %cst_295 : f32 to vector<8x96xf32>
    %751 = arith.subf %750, %749 : vector<8x96xf32>
    %cst_296 = arith.constant 8.000000e+01 : f32
    %752 = vector.broadcast %cst_296 : f32 to vector<8x96xf32>
    %753 = arith.minimumf %751, %752 : vector<8x96xf32>
    %754 = math.exp %753 : vector<8x96xf32>
    %cst_297 = arith.constant 1.000000e+00 : f32
    %755 = vector.broadcast %cst_297 : f32 to vector<8x96xf32>
    %756 = arith.addf %755, %754 : vector<8x96xf32>
    %757 = tpu.reciprocal %756 {approx = true} : vector<8x96xf32> -> vector<8x96xf32>
    %758 = vector.extract_strided_slice %748 {offsets = [0, 96], sizes = [8, 32], strides = [1, 1]} : vector<8x128xf32> to vector<8x32xf32>
    %759 = math.tanh %758 : vector<8x32xf32>
    %760 = vector.extract_strided_slice %757 {offsets = [0, 0], sizes = [8, 32], strides = [1, 1]} : vector<8x96xf32> to vector<8x32xf32>
    %761 = vector.extract_strided_slice %757 {offsets = [0, 32], sizes = [8, 32], strides = [1, 1]} : vector<8x96xf32> to vector<8x32xf32>
    %762 = vector.extract_strided_slice %757 {offsets = [0, 64], sizes = [8, 32], strides = [1, 1]} : vector<8x96xf32> to vector<8x32xf32>
    %763 = arith.mulf %761, %742 : vector<8x32xf32>
    %764 = arith.mulf %760, %759 : vector<8x32xf32>
    %765 = arith.addf %763, %764 : vector<8x32xf32>
    %766 = math.tanh %765 : vector<8x32xf32>
    %767 = arith.mulf %762, %766 : vector<8x32xf32>
    %c48_298 = arith.constant 48 : index
    %c0_299 = arith.constant 0 : index
    %768 = vector.load %arg12[%c48_298, %c0_299] : memref<64x32xf32, #tpu.memory_space<vmem>>, vector<8x32xf32>
    tpu.vector_store %arg12[%c48_298, %c0_299], %767 {strides = array<i32>} : memref<64x32xf32, #tpu.memory_space<vmem>>, vector<8x32xf32>,
    %c56_300 = arith.constant 56 : index
    %c0_301 = arith.constant 0 : index
    %769 = vector.load %arg13[%c56_300, %c0_301] : memref<64x128xf32, #tpu.memory_space<vmem>>, vector<8x128xf32>
    %cst_302 = arith.constant dense<0.000000e+00> : vector<8x128xf32>
    %770 = tpu.matmul %767, %605, %cst_302 {dimension_numbers = #tpu.dot_dimension_numbers<[1], [0], [0], [1], [0, 0, 1, 1], [], []>} : vector<8x32xf32>, vector<32x128xf32>, vector<8x128xf32> -> vector<8x128xf32>
    %771 = arith.addf %769, %770 : vector<8x128xf32>
    %772 = vector.extract_strided_slice %771 {offsets = [0, 0], sizes = [8, 96], strides = [1, 1]} : vector<8x128xf32> to vector<8x96xf32>
    %cst_303 = arith.constant 0.000000e+00 : f32
    %773 = vector.broadcast %cst_303 : f32 to vector<8x96xf32>
    %774 = arith.subf %773, %772 : vector<8x96xf32>
    %cst_304 = arith.constant 8.000000e+01 : f32
    %775 = vector.broadcast %cst_304 : f32 to vector<8x96xf32>
    %776 = arith.minimumf %774, %775 : vector<8x96xf32>
    %777 = math.exp %776 : vector<8x96xf32>
    %cst_305 = arith.constant 1.000000e+00 : f32
    %778 = vector.broadcast %cst_305 : f32 to vector<8x96xf32>
    %779 = arith.addf %778, %777 : vector<8x96xf32>
    %780 = tpu.reciprocal %779 {approx = true} : vector<8x96xf32> -> vector<8x96xf32>
    %781 = vector.extract_strided_slice %771 {offsets = [0, 96], sizes = [8, 32], strides = [1, 1]} : vector<8x128xf32> to vector<8x32xf32>
    %782 = math.tanh %781 : vector<8x32xf32>
    %783 = vector.extract_strided_slice %780 {offsets = [0, 0], sizes = [8, 32], strides = [1, 1]} : vector<8x96xf32> to vector<8x32xf32>
    %784 = vector.extract_strided_slice %780 {offsets = [0, 32], sizes = [8, 32], strides = [1, 1]} : vector<8x96xf32> to vector<8x32xf32>
    %785 = vector.extract_strided_slice %780 {offsets = [0, 64], sizes = [8, 32], strides = [1, 1]} : vector<8x96xf32> to vector<8x32xf32>
    %786 = arith.mulf %784, %765 : vector<8x32xf32>
    %787 = arith.mulf %783, %782 : vector<8x32xf32>
    %788 = arith.addf %786, %787 : vector<8x32xf32>
    %789 = math.tanh %788 : vector<8x32xf32>
    %790 = arith.mulf %785, %789 : vector<8x32xf32>
    %c56_306 = arith.constant 56 : index
    %c0_307 = arith.constant 0 : index
    %791 = vector.load %arg12[%c56_306, %c0_307] : memref<64x32xf32, #tpu.memory_space<vmem>>, vector<8x32xf32>
    tpu.vector_store %arg12[%c56_306, %c0_307], %790 {strides = array<i32>} : memref<64x32xf32, #tpu.memory_space<vmem>>, vector<8x32xf32>,
    %c0_308 = arith.constant 0 : index
    %c0_309 = arith.constant 0 : index
    %792 = vector.load %arg12[%c0_308, %c0_309] : memref<64x32xf32, #tpu.memory_space<vmem>>, vector<64x32xf32>
    %c0_310 = arith.constant 0 : index
    %c0_311 = arith.constant 0 : index
    %793 = vector.load %arg11[%c0_310, %c0_311] : memref<64x32xf32, #tpu.memory_space<vmem>>, vector<64x32xf32>
    %794 = arith.addf %792, %793 : vector<64x32xf32>
    %c0_312 = arith.constant 0 : index
    %c0_313 = arith.constant 0 : index
    %795 = vector.load %arg12[%c0_312, %c0_313] : memref<64x32xf32, #tpu.memory_space<vmem>>, vector<64x32xf32>
    tpu.vector_store %arg12[%c0_312, %c0_313], %794 {strides = array<i32>} : memref<64x32xf32, #tpu.memory_space<vmem>>, vector<64x32xf32>,
    %c0_314 = arith.constant 0 : index
    %c0_315 = arith.constant 0 : index
    %796 = vector.load %arg12[%c0_314, %c0_315] : memref<64x32xf32, #tpu.memory_space<vmem>>, vector<64x32xf32>
    %c4 = arith.constant 4 : index
    %c0_316 = arith.constant 0 : index
    %c0_317 = arith.constant 0 : index
    %797 = vector.load %arg2[%c4, %c0_316, %c0_317] : memref<6x32x128xbf16, #tpu.memory_space<vmem>>, vector<1x32x128xbf16>
    %798 = vector.shape_cast %797 : vector<1x32x128xbf16> to vector<32x128xbf16>
    %799 = arith.truncf %796 : vector<64x32xf32> to vector<64x32xbf16>
    %cst_318 = arith.constant dense<0.000000e+00> : vector<64x128xf32>
    %800 = tpu.matmul %799, %798, %cst_318 {dimension_numbers = #tpu.dot_dimension_numbers<[1], [0], [0], [1], [0, 0, 1, 1], [], []>} : vector<64x32xbf16>, vector<32x128xbf16>, vector<64x128xf32> -> vector<64x128xf32>
    %c4_319 = arith.constant 4 : index
    %c0_320 = arith.constant 0 : index
    %c0_321 = arith.constant 0 : index
    %801 = vector.load %arg4[%c4_319, %c0_320, %c0_321] : memref<6x1x128xf32, #tpu.memory_space<vmem>>, vector<1x1x128xf32>
    %802 = vector.shape_cast %801 : vector<1x1x128xf32> to vector<1x128xf32>
    %803 = vector.broadcast %802 : vector<1x128xf32> to vector<64x128xf32>
    %804 = arith.addf %800, %803 : vector<64x128xf32>
    %c0_322 = arith.constant 0 : index
    %c0_323 = arith.constant 0 : index
    %805 = vector.load %arg13[%c0_322, %c0_323] : memref<64x128xf32, #tpu.memory_space<vmem>>, vector<64x128xf32>
    tpu.vector_store %arg13[%c0_322, %c0_323], %804 {strides = array<i32>} : memref<64x128xf32, #tpu.memory_space<vmem>>, vector<64x128xf32>,
    %c4_324 = arith.constant 4 : index
    %c0_325 = arith.constant 0 : index
    %c0_326 = arith.constant 0 : index
    %806 = vector.load %arg3[%c4_324, %c0_325, %c0_326] : memref<6x32x128xf32, #tpu.memory_space<vmem>>, vector<1x32x128xf32>
    %807 = vector.shape_cast %806 : vector<1x32x128xf32> to vector<32x128xf32>
    %cst_327 = arith.constant 0.000000e+00 : f32
    %808 = vector.broadcast %cst_327 : f32 to vector<8x32xf32>
    %cst_328 = arith.constant 0.000000e+00 : f32
    %809 = vector.broadcast %cst_328 : f32 to vector<8x32xf32>
    %c0_329 = arith.constant 0 : index
    %c0_330 = arith.constant 0 : index
    %810 = vector.load %arg13[%c0_329, %c0_330] : memref<64x128xf32, #tpu.memory_space<vmem>>, vector<8x128xf32>
    %cst_331 = arith.constant dense<0.000000e+00> : vector<8x128xf32>
    %811 = tpu.matmul %808, %807, %cst_331 {dimension_numbers = #tpu.dot_dimension_numbers<[1], [0], [0], [1], [0, 0, 1, 1], [], []>} : vector<8x32xf32>, vector<32x128xf32>, vector<8x128xf32> -> vector<8x128xf32>
    %812 = arith.addf %810, %811 : vector<8x128xf32>
    %813 = vector.extract_strided_slice %812 {offsets = [0, 0], sizes = [8, 96], strides = [1, 1]} : vector<8x128xf32> to vector<8x96xf32>
    %cst_332 = arith.constant 0.000000e+00 : f32
    %814 = vector.broadcast %cst_332 : f32 to vector<8x96xf32>
    %815 = arith.subf %814, %813 : vector<8x96xf32>
    %cst_333 = arith.constant 8.000000e+01 : f32
    %816 = vector.broadcast %cst_333 : f32 to vector<8x96xf32>
    %817 = arith.minimumf %815, %816 : vector<8x96xf32>
    %818 = math.exp %817 : vector<8x96xf32>
    %cst_334 = arith.constant 1.000000e+00 : f32
    %819 = vector.broadcast %cst_334 : f32 to vector<8x96xf32>
    %820 = arith.addf %819, %818 : vector<8x96xf32>
    %821 = tpu.reciprocal %820 {approx = true} : vector<8x96xf32> -> vector<8x96xf32>
    %822 = vector.extract_strided_slice %812 {offsets = [0, 96], sizes = [8, 32], strides = [1, 1]} : vector<8x128xf32> to vector<8x32xf32>
    %823 = math.tanh %822 : vector<8x32xf32>
    %824 = vector.extract_strided_slice %821 {offsets = [0, 0], sizes = [8, 32], strides = [1, 1]} : vector<8x96xf32> to vector<8x32xf32>
    %825 = vector.extract_strided_slice %821 {offsets = [0, 32], sizes = [8, 32], strides = [1, 1]} : vector<8x96xf32> to vector<8x32xf32>
    %826 = vector.extract_strided_slice %821 {offsets = [0, 64], sizes = [8, 32], strides = [1, 1]} : vector<8x96xf32> to vector<8x32xf32>
    %827 = arith.mulf %825, %809 : vector<8x32xf32>
    %828 = arith.mulf %824, %823 : vector<8x32xf32>
    %829 = arith.addf %827, %828 : vector<8x32xf32>
    %830 = math.tanh %829 : vector<8x32xf32>
    %831 = arith.mulf %826, %830 : vector<8x32xf32>
    %c0_335 = arith.constant 0 : index
    %c0_336 = arith.constant 0 : index
    %832 = vector.load %arg11[%c0_335, %c0_336] : memref<64x32xf32, #tpu.memory_space<vmem>>, vector<8x32xf32>
    tpu.vector_store %arg11[%c0_335, %c0_336], %831 {strides = array<i32>} : memref<64x32xf32, #tpu.memory_space<vmem>>, vector<8x32xf32>,
    %c8_337 = arith.constant 8 : index
    %c0_338 = arith.constant 0 : index
    %833 = vector.load %arg13[%c8_337, %c0_338] : memref<64x128xf32, #tpu.memory_space<vmem>>, vector<8x128xf32>
    %cst_339 = arith.constant dense<0.000000e+00> : vector<8x128xf32>
    %834 = tpu.matmul %831, %807, %cst_339 {dimension_numbers = #tpu.dot_dimension_numbers<[1], [0], [0], [1], [0, 0, 1, 1], [], []>} : vector<8x32xf32>, vector<32x128xf32>, vector<8x128xf32> -> vector<8x128xf32>
    %835 = arith.addf %833, %834 : vector<8x128xf32>
    %836 = vector.extract_strided_slice %835 {offsets = [0, 0], sizes = [8, 96], strides = [1, 1]} : vector<8x128xf32> to vector<8x96xf32>
    %cst_340 = arith.constant 0.000000e+00 : f32
    %837 = vector.broadcast %cst_340 : f32 to vector<8x96xf32>
    %838 = arith.subf %837, %836 : vector<8x96xf32>
    %cst_341 = arith.constant 8.000000e+01 : f32
    %839 = vector.broadcast %cst_341 : f32 to vector<8x96xf32>
    %840 = arith.minimumf %838, %839 : vector<8x96xf32>
    %841 = math.exp %840 : vector<8x96xf32>
    %cst_342 = arith.constant 1.000000e+00 : f32
    %842 = vector.broadcast %cst_342 : f32 to vector<8x96xf32>
    %843 = arith.addf %842, %841 : vector<8x96xf32>
    %844 = tpu.reciprocal %843 {approx = true} : vector<8x96xf32> -> vector<8x96xf32>
    %845 = vector.extract_strided_slice %835 {offsets = [0, 96], sizes = [8, 32], strides = [1, 1]} : vector<8x128xf32> to vector<8x32xf32>
    %846 = math.tanh %845 : vector<8x32xf32>
    %847 = vector.extract_strided_slice %844 {offsets = [0, 0], sizes = [8, 32], strides = [1, 1]} : vector<8x96xf32> to vector<8x32xf32>
    %848 = vector.extract_strided_slice %844 {offsets = [0, 32], sizes = [8, 32], strides = [1, 1]} : vector<8x96xf32> to vector<8x32xf32>
    %849 = vector.extract_strided_slice %844 {offsets = [0, 64], sizes = [8, 32], strides = [1, 1]} : vector<8x96xf32> to vector<8x32xf32>
    %850 = arith.mulf %848, %829 : vector<8x32xf32>
    %851 = arith.mulf %847, %846 : vector<8x32xf32>
    %852 = arith.addf %850, %851 : vector<8x32xf32>
    %853 = math.tanh %852 : vector<8x32xf32>
    %854 = arith.mulf %849, %853 : vector<8x32xf32>
    %c8_343 = arith.constant 8 : index
    %c0_344 = arith.constant 0 : index
    %855 = vector.load %arg11[%c8_343, %c0_344] : memref<64x32xf32, #tpu.memory_space<vmem>>, vector<8x32xf32>
    tpu.vector_store %arg11[%c8_343, %c0_344], %854 {strides = array<i32>} : memref<64x32xf32, #tpu.memory_space<vmem>>, vector<8x32xf32>,
    %c16_345 = arith.constant 16 : index
    %c0_346 = arith.constant 0 : index
    %856 = vector.load %arg13[%c16_345, %c0_346] : memref<64x128xf32, #tpu.memory_space<vmem>>, vector<8x128xf32>
    %cst_347 = arith.constant dense<0.000000e+00> : vector<8x128xf32>
    %857 = tpu.matmul %854, %807, %cst_347 {dimension_numbers = #tpu.dot_dimension_numbers<[1], [0], [0], [1], [0, 0, 1, 1], [], []>} : vector<8x32xf32>, vector<32x128xf32>, vector<8x128xf32> -> vector<8x128xf32>
    %858 = arith.addf %856, %857 : vector<8x128xf32>
    %859 = vector.extract_strided_slice %858 {offsets = [0, 0], sizes = [8, 96], strides = [1, 1]} : vector<8x128xf32> to vector<8x96xf32>
    %cst_348 = arith.constant 0.000000e+00 : f32
    %860 = vector.broadcast %cst_348 : f32 to vector<8x96xf32>
    %861 = arith.subf %860, %859 : vector<8x96xf32>
    %cst_349 = arith.constant 8.000000e+01 : f32
    %862 = vector.broadcast %cst_349 : f32 to vector<8x96xf32>
    %863 = arith.minimumf %861, %862 : vector<8x96xf32>
    %864 = math.exp %863 : vector<8x96xf32>
    %cst_350 = arith.constant 1.000000e+00 : f32
    %865 = vector.broadcast %cst_350 : f32 to vector<8x96xf32>
    %866 = arith.addf %865, %864 : vector<8x96xf32>
    %867 = tpu.reciprocal %866 {approx = true} : vector<8x96xf32> -> vector<8x96xf32>
    %868 = vector.extract_strided_slice %858 {offsets = [0, 96], sizes = [8, 32], strides = [1, 1]} : vector<8x128xf32> to vector<8x32xf32>
    %869 = math.tanh %868 : vector<8x32xf32>
    %870 = vector.extract_strided_slice %867 {offsets = [0, 0], sizes = [8, 32], strides = [1, 1]} : vector<8x96xf32> to vector<8x32xf32>
    %871 = vector.extract_strided_slice %867 {offsets = [0, 32], sizes = [8, 32], strides = [1, 1]} : vector<8x96xf32> to vector<8x32xf32>
    %872 = vector.extract_strided_slice %867 {offsets = [0, 64], sizes = [8, 32], strides = [1, 1]} : vector<8x96xf32> to vector<8x32xf32>
    %873 = arith.mulf %871, %852 : vector<8x32xf32>
    %874 = arith.mulf %870, %869 : vector<8x32xf32>
    %875 = arith.addf %873, %874 : vector<8x32xf32>
    %876 = math.tanh %875 : vector<8x32xf32>
    %877 = arith.mulf %872, %876 : vector<8x32xf32>
    %c16_351 = arith.constant 16 : index
    %c0_352 = arith.constant 0 : index
    %878 = vector.load %arg11[%c16_351, %c0_352] : memref<64x32xf32, #tpu.memory_space<vmem>>, vector<8x32xf32>
    tpu.vector_store %arg11[%c16_351, %c0_352], %877 {strides = array<i32>} : memref<64x32xf32, #tpu.memory_space<vmem>>, vector<8x32xf32>,
    %c24_353 = arith.constant 24 : index
    %c0_354 = arith.constant 0 : index
    %879 = vector.load %arg13[%c24_353, %c0_354] : memref<64x128xf32, #tpu.memory_space<vmem>>, vector<8x128xf32>
    %cst_355 = arith.constant dense<0.000000e+00> : vector<8x128xf32>
    %880 = tpu.matmul %877, %807, %cst_355 {dimension_numbers = #tpu.dot_dimension_numbers<[1], [0], [0], [1], [0, 0, 1, 1], [], []>} : vector<8x32xf32>, vector<32x128xf32>, vector<8x128xf32> -> vector<8x128xf32>
    %881 = arith.addf %879, %880 : vector<8x128xf32>
    %882 = vector.extract_strided_slice %881 {offsets = [0, 0], sizes = [8, 96], strides = [1, 1]} : vector<8x128xf32> to vector<8x96xf32>
    %cst_356 = arith.constant 0.000000e+00 : f32
    %883 = vector.broadcast %cst_356 : f32 to vector<8x96xf32>
    %884 = arith.subf %883, %882 : vector<8x96xf32>
    %cst_357 = arith.constant 8.000000e+01 : f32
    %885 = vector.broadcast %cst_357 : f32 to vector<8x96xf32>
    %886 = arith.minimumf %884, %885 : vector<8x96xf32>
    %887 = math.exp %886 : vector<8x96xf32>
    %cst_358 = arith.constant 1.000000e+00 : f32
    %888 = vector.broadcast %cst_358 : f32 to vector<8x96xf32>
    %889 = arith.addf %888, %887 : vector<8x96xf32>
    %890 = tpu.reciprocal %889 {approx = true} : vector<8x96xf32> -> vector<8x96xf32>
    %891 = vector.extract_strided_slice %881 {offsets = [0, 96], sizes = [8, 32], strides = [1, 1]} : vector<8x128xf32> to vector<8x32xf32>
    %892 = math.tanh %891 : vector<8x32xf32>
    %893 = vector.extract_strided_slice %890 {offsets = [0, 0], sizes = [8, 32], strides = [1, 1]} : vector<8x96xf32> to vector<8x32xf32>
    %894 = vector.extract_strided_slice %890 {offsets = [0, 32], sizes = [8, 32], strides = [1, 1]} : vector<8x96xf32> to vector<8x32xf32>
    %895 = vector.extract_strided_slice %890 {offsets = [0, 64], sizes = [8, 32], strides = [1, 1]} : vector<8x96xf32> to vector<8x32xf32>
    %896 = arith.mulf %894, %875 : vector<8x32xf32>
    %897 = arith.mulf %893, %892 : vector<8x32xf32>
    %898 = arith.addf %896, %897 : vector<8x32xf32>
    %899 = math.tanh %898 : vector<8x32xf32>
    %900 = arith.mulf %895, %899 : vector<8x32xf32>
    %c24_359 = arith.constant 24 : index
    %c0_360 = arith.constant 0 : index
    %901 = vector.load %arg11[%c24_359, %c0_360] : memref<64x32xf32, #tpu.memory_space<vmem>>, vector<8x32xf32>
    tpu.vector_store %arg11[%c24_359, %c0_360], %900 {strides = array<i32>} : memref<64x32xf32, #tpu.memory_space<vmem>>, vector<8x32xf32>,
    %c32_361 = arith.constant 32 : index
    %c0_362 = arith.constant 0 : index
    %902 = vector.load %arg13[%c32_361, %c0_362] : memref<64x128xf32, #tpu.memory_space<vmem>>, vector<8x128xf32>
    %cst_363 = arith.constant dense<0.000000e+00> : vector<8x128xf32>
    %903 = tpu.matmul %900, %807, %cst_363 {dimension_numbers = #tpu.dot_dimension_numbers<[1], [0], [0], [1], [0, 0, 1, 1], [], []>} : vector<8x32xf32>, vector<32x128xf32>, vector<8x128xf32> -> vector<8x128xf32>
    %904 = arith.addf %902, %903 : vector<8x128xf32>
    %905 = vector.extract_strided_slice %904 {offsets = [0, 0], sizes = [8, 96], strides = [1, 1]} : vector<8x128xf32> to vector<8x96xf32>
    %cst_364 = arith.constant 0.000000e+00 : f32
    %906 = vector.broadcast %cst_364 : f32 to vector<8x96xf32>
    %907 = arith.subf %906, %905 : vector<8x96xf32>
    %cst_365 = arith.constant 8.000000e+01 : f32
    %908 = vector.broadcast %cst_365 : f32 to vector<8x96xf32>
    %909 = arith.minimumf %907, %908 : vector<8x96xf32>
    %910 = math.exp %909 : vector<8x96xf32>
    %cst_366 = arith.constant 1.000000e+00 : f32
    %911 = vector.broadcast %cst_366 : f32 to vector<8x96xf32>
    %912 = arith.addf %911, %910 : vector<8x96xf32>
    %913 = tpu.reciprocal %912 {approx = true} : vector<8x96xf32> -> vector<8x96xf32>
    %914 = vector.extract_strided_slice %904 {offsets = [0, 96], sizes = [8, 32], strides = [1, 1]} : vector<8x128xf32> to vector<8x32xf32>
    %915 = math.tanh %914 : vector<8x32xf32>
    %916 = vector.extract_strided_slice %913 {offsets = [0, 0], sizes = [8, 32], strides = [1, 1]} : vector<8x96xf32> to vector<8x32xf32>
    %917 = vector.extract_strided_slice %913 {offsets = [0, 32], sizes = [8, 32], strides = [1, 1]} : vector<8x96xf32> to vector<8x32xf32>
    %918 = vector.extract_strided_slice %913 {offsets = [0, 64], sizes = [8, 32], strides = [1, 1]} : vector<8x96xf32> to vector<8x32xf32>
    %919 = arith.mulf %917, %898 : vector<8x32xf32>
    %920 = arith.mulf %916, %915 : vector<8x32xf32>
    %921 = arith.addf %919, %920 : vector<8x32xf32>
    %922 = math.tanh %921 : vector<8x32xf32>
    %923 = arith.mulf %918, %922 : vector<8x32xf32>
    %c32_367 = arith.constant 32 : index
    %c0_368 = arith.constant 0 : index
    %924 = vector.load %arg11[%c32_367, %c0_368] : memref<64x32xf32, #tpu.memory_space<vmem>>, vector<8x32xf32>
    tpu.vector_store %arg11[%c32_367, %c0_368], %923 {strides = array<i32>} : memref<64x32xf32, #tpu.memory_space<vmem>>, vector<8x32xf32>,
    %c40_369 = arith.constant 40 : index
    %c0_370 = arith.constant 0 : index
    %925 = vector.load %arg13[%c40_369, %c0_370] : memref<64x128xf32, #tpu.memory_space<vmem>>, vector<8x128xf32>
    %cst_371 = arith.constant dense<0.000000e+00> : vector<8x128xf32>
    %926 = tpu.matmul %923, %807, %cst_371 {dimension_numbers = #tpu.dot_dimension_numbers<[1], [0], [0], [1], [0, 0, 1, 1], [], []>} : vector<8x32xf32>, vector<32x128xf32>, vector<8x128xf32> -> vector<8x128xf32>
    %927 = arith.addf %925, %926 : vector<8x128xf32>
    %928 = vector.extract_strided_slice %927 {offsets = [0, 0], sizes = [8, 96], strides = [1, 1]} : vector<8x128xf32> to vector<8x96xf32>
    %cst_372 = arith.constant 0.000000e+00 : f32
    %929 = vector.broadcast %cst_372 : f32 to vector<8x96xf32>
    %930 = arith.subf %929, %928 : vector<8x96xf32>
    %cst_373 = arith.constant 8.000000e+01 : f32
    %931 = vector.broadcast %cst_373 : f32 to vector<8x96xf32>
    %932 = arith.minimumf %930, %931 : vector<8x96xf32>
    %933 = math.exp %932 : vector<8x96xf32>
    %cst_374 = arith.constant 1.000000e+00 : f32
    %934 = vector.broadcast %cst_374 : f32 to vector<8x96xf32>
    %935 = arith.addf %934, %933 : vector<8x96xf32>
    %936 = tpu.reciprocal %935 {approx = true} : vector<8x96xf32> -> vector<8x96xf32>
    %937 = vector.extract_strided_slice %927 {offsets = [0, 96], sizes = [8, 32], strides = [1, 1]} : vector<8x128xf32> to vector<8x32xf32>
    %938 = math.tanh %937 : vector<8x32xf32>
    %939 = vector.extract_strided_slice %936 {offsets = [0, 0], sizes = [8, 32], strides = [1, 1]} : vector<8x96xf32> to vector<8x32xf32>
    %940 = vector.extract_strided_slice %936 {offsets = [0, 32], sizes = [8, 32], strides = [1, 1]} : vector<8x96xf32> to vector<8x32xf32>
    %941 = vector.extract_strided_slice %936 {offsets = [0, 64], sizes = [8, 32], strides = [1, 1]} : vector<8x96xf32> to vector<8x32xf32>
    %942 = arith.mulf %940, %921 : vector<8x32xf32>
    %943 = arith.mulf %939, %938 : vector<8x32xf32>
    %944 = arith.addf %942, %943 : vector<8x32xf32>
    %945 = math.tanh %944 : vector<8x32xf32>
    %946 = arith.mulf %941, %945 : vector<8x32xf32>
    %c40_375 = arith.constant 40 : index
    %c0_376 = arith.constant 0 : index
    %947 = vector.load %arg11[%c40_375, %c0_376] : memref<64x32xf32, #tpu.memory_space<vmem>>, vector<8x32xf32>
    tpu.vector_store %arg11[%c40_375, %c0_376], %946 {strides = array<i32>} : memref<64x32xf32, #tpu.memory_space<vmem>>, vector<8x32xf32>,
    %c48_377 = arith.constant 48 : index
    %c0_378 = arith.constant 0 : index
    %948 = vector.load %arg13[%c48_377, %c0_378] : memref<64x128xf32, #tpu.memory_space<vmem>>, vector<8x128xf32>
    %cst_379 = arith.constant dense<0.000000e+00> : vector<8x128xf32>
    %949 = tpu.matmul %946, %807, %cst_379 {dimension_numbers = #tpu.dot_dimension_numbers<[1], [0], [0], [1], [0, 0, 1, 1], [], []>} : vector<8x32xf32>, vector<32x128xf32>, vector<8x128xf32> -> vector<8x128xf32>
    %950 = arith.addf %948, %949 : vector<8x128xf32>
    %951 = vector.extract_strided_slice %950 {offsets = [0, 0], sizes = [8, 96], strides = [1, 1]} : vector<8x128xf32> to vector<8x96xf32>
    %cst_380 = arith.constant 0.000000e+00 : f32
    %952 = vector.broadcast %cst_380 : f32 to vector<8x96xf32>
    %953 = arith.subf %952, %951 : vector<8x96xf32>
    %cst_381 = arith.constant 8.000000e+01 : f32
    %954 = vector.broadcast %cst_381 : f32 to vector<8x96xf32>
    %955 = arith.minimumf %953, %954 : vector<8x96xf32>
    %956 = math.exp %955 : vector<8x96xf32>
    %cst_382 = arith.constant 1.000000e+00 : f32
    %957 = vector.broadcast %cst_382 : f32 to vector<8x96xf32>
    %958 = arith.addf %957, %956 : vector<8x96xf32>
    %959 = tpu.reciprocal %958 {approx = true} : vector<8x96xf32> -> vector<8x96xf32>
    %960 = vector.extract_strided_slice %950 {offsets = [0, 96], sizes = [8, 32], strides = [1, 1]} : vector<8x128xf32> to vector<8x32xf32>
    %961 = math.tanh %960 : vector<8x32xf32>
    %962 = vector.extract_strided_slice %959 {offsets = [0, 0], sizes = [8, 32], strides = [1, 1]} : vector<8x96xf32> to vector<8x32xf32>
    %963 = vector.extract_strided_slice %959 {offsets = [0, 32], sizes = [8, 32], strides = [1, 1]} : vector<8x96xf32> to vector<8x32xf32>
    %964 = vector.extract_strided_slice %959 {offsets = [0, 64], sizes = [8, 32], strides = [1, 1]} : vector<8x96xf32> to vector<8x32xf32>
    %965 = arith.mulf %963, %944 : vector<8x32xf32>
    %966 = arith.mulf %962, %961 : vector<8x32xf32>
    %967 = arith.addf %965, %966 : vector<8x32xf32>
    %968 = math.tanh %967 : vector<8x32xf32>
    %969 = arith.mulf %964, %968 : vector<8x32xf32>
    %c48_383 = arith.constant 48 : index
    %c0_384 = arith.constant 0 : index
    %970 = vector.load %arg11[%c48_383, %c0_384] : memref<64x32xf32, #tpu.memory_space<vmem>>, vector<8x32xf32>
    tpu.vector_store %arg11[%c48_383, %c0_384], %969 {strides = array<i32>} : memref<64x32xf32, #tpu.memory_space<vmem>>, vector<8x32xf32>,
    %c56_385 = arith.constant 56 : index
    %c0_386 = arith.constant 0 : index
    %971 = vector.load %arg13[%c56_385, %c0_386] : memref<64x128xf32, #tpu.memory_space<vmem>>, vector<8x128xf32>
    %cst_387 = arith.constant dense<0.000000e+00> : vector<8x128xf32>
    %972 = tpu.matmul %969, %807, %cst_387 {dimension_numbers = #tpu.dot_dimension_numbers<[1], [0], [0], [1], [0, 0, 1, 1], [], []>} : vector<8x32xf32>, vector<32x128xf32>, vector<8x128xf32> -> vector<8x128xf32>
    %973 = arith.addf %971, %972 : vector<8x128xf32>
    %974 = vector.extract_strided_slice %973 {offsets = [0, 0], sizes = [8, 96], strides = [1, 1]} : vector<8x128xf32> to vector<8x96xf32>
    %cst_388 = arith.constant 0.000000e+00 : f32
    %975 = vector.broadcast %cst_388 : f32 to vector<8x96xf32>
    %976 = arith.subf %975, %974 : vector<8x96xf32>
    %cst_389 = arith.constant 8.000000e+01 : f32
    %977 = vector.broadcast %cst_389 : f32 to vector<8x96xf32>
    %978 = arith.minimumf %976, %977 : vector<8x96xf32>
    %979 = math.exp %978 : vector<8x96xf32>
    %cst_390 = arith.constant 1.000000e+00 : f32
    %980 = vector.broadcast %cst_390 : f32 to vector<8x96xf32>
    %981 = arith.addf %980, %979 : vector<8x96xf32>
    %982 = tpu.reciprocal %981 {approx = true} : vector<8x96xf32> -> vector<8x96xf32>
    %983 = vector.extract_strided_slice %973 {offsets = [0, 96], sizes = [8, 32], strides = [1, 1]} : vector<8x128xf32> to vector<8x32xf32>
    %984 = math.tanh %983 : vector<8x32xf32>
    %985 = vector.extract_strided_slice %982 {offsets = [0, 0], sizes = [8, 32], strides = [1, 1]} : vector<8x96xf32> to vector<8x32xf32>
    %986 = vector.extract_strided_slice %982 {offsets = [0, 32], sizes = [8, 32], strides = [1, 1]} : vector<8x96xf32> to vector<8x32xf32>
    %987 = vector.extract_strided_slice %982 {offsets = [0, 64], sizes = [8, 32], strides = [1, 1]} : vector<8x96xf32> to vector<8x32xf32>
    %988 = arith.mulf %986, %967 : vector<8x32xf32>
    %989 = arith.mulf %985, %984 : vector<8x32xf32>
    %990 = arith.addf %988, %989 : vector<8x32xf32>
    %991 = math.tanh %990 : vector<8x32xf32>
    %992 = arith.mulf %987, %991 : vector<8x32xf32>
    %c56_391 = arith.constant 56 : index
    %c0_392 = arith.constant 0 : index
    %993 = vector.load %arg11[%c56_391, %c0_392] : memref<64x32xf32, #tpu.memory_space<vmem>>, vector<8x32xf32>
    tpu.vector_store %arg11[%c56_391, %c0_392], %992 {strides = array<i32>} : memref<64x32xf32, #tpu.memory_space<vmem>>, vector<8x32xf32>,
    %c0_393 = arith.constant 0 : index
    %c0_394 = arith.constant 0 : index
    %994 = vector.load %arg11[%c0_393, %c0_394] : memref<64x32xf32, #tpu.memory_space<vmem>>, vector<64x32xf32>
    %c5 = arith.constant 5 : index
    %c0_395 = arith.constant 0 : index
    %c0_396 = arith.constant 0 : index
    %995 = vector.load %arg2[%c5, %c0_395, %c0_396] : memref<6x32x128xbf16, #tpu.memory_space<vmem>>, vector<1x32x128xbf16>
    %996 = vector.shape_cast %995 : vector<1x32x128xbf16> to vector<32x128xbf16>
    %997 = arith.truncf %994 : vector<64x32xf32> to vector<64x32xbf16>
    %cst_397 = arith.constant dense<0.000000e+00> : vector<64x128xf32>
    %998 = tpu.matmul %997, %996, %cst_397 {dimension_numbers = #tpu.dot_dimension_numbers<[1], [0], [0], [1], [0, 0, 1, 1], [], []>} : vector<64x32xbf16>, vector<32x128xbf16>, vector<64x128xf32> -> vector<64x128xf32>
    %c5_398 = arith.constant 5 : index
    %c0_399 = arith.constant 0 : index
    %c0_400 = arith.constant 0 : index
    %999 = vector.load %arg4[%c5_398, %c0_399, %c0_400] : memref<6x1x128xf32, #tpu.memory_space<vmem>>, vector<1x1x128xf32>
    %1000 = vector.shape_cast %999 : vector<1x1x128xf32> to vector<1x128xf32>
    %1001 = vector.broadcast %1000 : vector<1x128xf32> to vector<64x128xf32>
    %1002 = arith.addf %998, %1001 : vector<64x128xf32>
    %c0_401 = arith.constant 0 : index
    %c0_402 = arith.constant 0 : index
    %1003 = vector.load %arg13[%c0_401, %c0_402] : memref<64x128xf32, #tpu.memory_space<vmem>>, vector<64x128xf32>
    tpu.vector_store %arg13[%c0_401, %c0_402], %1002 {strides = array<i32>} : memref<64x128xf32, #tpu.memory_space<vmem>>, vector<64x128xf32>,
    %c5_403 = arith.constant 5 : index
    %c0_404 = arith.constant 0 : index
    %c0_405 = arith.constant 0 : index
    %1004 = vector.load %arg3[%c5_403, %c0_404, %c0_405] : memref<6x32x128xf32, #tpu.memory_space<vmem>>, vector<1x32x128xf32>
    %1005 = vector.shape_cast %1004 : vector<1x32x128xf32> to vector<32x128xf32>
    %cst_406 = arith.constant 0.000000e+00 : f32
    %1006 = vector.broadcast %cst_406 : f32 to vector<8x32xf32>
    %cst_407 = arith.constant 0.000000e+00 : f32
    %1007 = vector.broadcast %cst_407 : f32 to vector<8x32xf32>
    %c0_408 = arith.constant 0 : index
    %c0_409 = arith.constant 0 : index
    %1008 = vector.load %arg13[%c0_408, %c0_409] : memref<64x128xf32, #tpu.memory_space<vmem>>, vector<8x128xf32>
    %cst_410 = arith.constant dense<0.000000e+00> : vector<8x128xf32>
    %1009 = tpu.matmul %1006, %1005, %cst_410 {dimension_numbers = #tpu.dot_dimension_numbers<[1], [0], [0], [1], [0, 0, 1, 1], [], []>} : vector<8x32xf32>, vector<32x128xf32>, vector<8x128xf32> -> vector<8x128xf32>
    %1010 = arith.addf %1008, %1009 : vector<8x128xf32>
    %1011 = vector.extract_strided_slice %1010 {offsets = [0, 0], sizes = [8, 96], strides = [1, 1]} : vector<8x128xf32> to vector<8x96xf32>
    %cst_411 = arith.constant 0.000000e+00 : f32
    %1012 = vector.broadcast %cst_411 : f32 to vector<8x96xf32>
    %1013 = arith.subf %1012, %1011 : vector<8x96xf32>
    %cst_412 = arith.constant 8.000000e+01 : f32
    %1014 = vector.broadcast %cst_412 : f32 to vector<8x96xf32>
    %1015 = arith.minimumf %1013, %1014 : vector<8x96xf32>
    %1016 = math.exp %1015 : vector<8x96xf32>
    %cst_413 = arith.constant 1.000000e+00 : f32
    %1017 = vector.broadcast %cst_413 : f32 to vector<8x96xf32>
    %1018 = arith.addf %1017, %1016 : vector<8x96xf32>
    %1019 = tpu.reciprocal %1018 {approx = true} : vector<8x96xf32> -> vector<8x96xf32>
    %1020 = vector.extract_strided_slice %1010 {offsets = [0, 96], sizes = [8, 32], strides = [1, 1]} : vector<8x128xf32> to vector<8x32xf32>
    %1021 = math.tanh %1020 : vector<8x32xf32>
    %1022 = vector.extract_strided_slice %1019 {offsets = [0, 0], sizes = [8, 32], strides = [1, 1]} : vector<8x96xf32> to vector<8x32xf32>
    %1023 = vector.extract_strided_slice %1019 {offsets = [0, 32], sizes = [8, 32], strides = [1, 1]} : vector<8x96xf32> to vector<8x32xf32>
    %1024 = vector.extract_strided_slice %1019 {offsets = [0, 64], sizes = [8, 32], strides = [1, 1]} : vector<8x96xf32> to vector<8x32xf32>
    %1025 = arith.mulf %1023, %1007 : vector<8x32xf32>
    %1026 = arith.mulf %1022, %1021 : vector<8x32xf32>
    %1027 = arith.addf %1025, %1026 : vector<8x32xf32>
    %1028 = math.tanh %1027 : vector<8x32xf32>
    %1029 = arith.mulf %1024, %1028 : vector<8x32xf32>
    %c0_414 = arith.constant 0 : index
    %c0_415 = arith.constant 0 : index
    %1030 = vector.load %arg11[%c0_414, %c0_415] : memref<64x32xf32, #tpu.memory_space<vmem>>, vector<8x32xf32>
    tpu.vector_store %arg11[%c0_414, %c0_415], %1029 {strides = array<i32>} : memref<64x32xf32, #tpu.memory_space<vmem>>, vector<8x32xf32>,
    %c8_416 = arith.constant 8 : index
    %c0_417 = arith.constant 0 : index
    %1031 = vector.load %arg13[%c8_416, %c0_417] : memref<64x128xf32, #tpu.memory_space<vmem>>, vector<8x128xf32>
    %cst_418 = arith.constant dense<0.000000e+00> : vector<8x128xf32>
    %1032 = tpu.matmul %1029, %1005, %cst_418 {dimension_numbers = #tpu.dot_dimension_numbers<[1], [0], [0], [1], [0, 0, 1, 1], [], []>} : vector<8x32xf32>, vector<32x128xf32>, vector<8x128xf32> -> vector<8x128xf32>
    %1033 = arith.addf %1031, %1032 : vector<8x128xf32>
    %1034 = vector.extract_strided_slice %1033 {offsets = [0, 0], sizes = [8, 96], strides = [1, 1]} : vector<8x128xf32> to vector<8x96xf32>
    %cst_419 = arith.constant 0.000000e+00 : f32
    %1035 = vector.broadcast %cst_419 : f32 to vector<8x96xf32>
    %1036 = arith.subf %1035, %1034 : vector<8x96xf32>
    %cst_420 = arith.constant 8.000000e+01 : f32
    %1037 = vector.broadcast %cst_420 : f32 to vector<8x96xf32>
    %1038 = arith.minimumf %1036, %1037 : vector<8x96xf32>
    %1039 = math.exp %1038 : vector<8x96xf32>
    %cst_421 = arith.constant 1.000000e+00 : f32
    %1040 = vector.broadcast %cst_421 : f32 to vector<8x96xf32>
    %1041 = arith.addf %1040, %1039 : vector<8x96xf32>
    %1042 = tpu.reciprocal %1041 {approx = true} : vector<8x96xf32> -> vector<8x96xf32>
    %1043 = vector.extract_strided_slice %1033 {offsets = [0, 96], sizes = [8, 32], strides = [1, 1]} : vector<8x128xf32> to vector<8x32xf32>
    %1044 = math.tanh %1043 : vector<8x32xf32>
    %1045 = vector.extract_strided_slice %1042 {offsets = [0, 0], sizes = [8, 32], strides = [1, 1]} : vector<8x96xf32> to vector<8x32xf32>
    %1046 = vector.extract_strided_slice %1042 {offsets = [0, 32], sizes = [8, 32], strides = [1, 1]} : vector<8x96xf32> to vector<8x32xf32>
    %1047 = vector.extract_strided_slice %1042 {offsets = [0, 64], sizes = [8, 32], strides = [1, 1]} : vector<8x96xf32> to vector<8x32xf32>
    %1048 = arith.mulf %1046, %1027 : vector<8x32xf32>
    %1049 = arith.mulf %1045, %1044 : vector<8x32xf32>
    %1050 = arith.addf %1048, %1049 : vector<8x32xf32>
    %1051 = math.tanh %1050 : vector<8x32xf32>
    %1052 = arith.mulf %1047, %1051 : vector<8x32xf32>
    %c8_422 = arith.constant 8 : index
    %c0_423 = arith.constant 0 : index
    %1053 = vector.load %arg11[%c8_422, %c0_423] : memref<64x32xf32, #tpu.memory_space<vmem>>, vector<8x32xf32>
    tpu.vector_store %arg11[%c8_422, %c0_423], %1052 {strides = array<i32>} : memref<64x32xf32, #tpu.memory_space<vmem>>, vector<8x32xf32>,
    %c16_424 = arith.constant 16 : index
    %c0_425 = arith.constant 0 : index
    %1054 = vector.load %arg13[%c16_424, %c0_425] : memref<64x128xf32, #tpu.memory_space<vmem>>, vector<8x128xf32>
    %cst_426 = arith.constant dense<0.000000e+00> : vector<8x128xf32>
    %1055 = tpu.matmul %1052, %1005, %cst_426 {dimension_numbers = #tpu.dot_dimension_numbers<[1], [0], [0], [1], [0, 0, 1, 1], [], []>} : vector<8x32xf32>, vector<32x128xf32>, vector<8x128xf32> -> vector<8x128xf32>
    %1056 = arith.addf %1054, %1055 : vector<8x128xf32>
    %1057 = vector.extract_strided_slice %1056 {offsets = [0, 0], sizes = [8, 96], strides = [1, 1]} : vector<8x128xf32> to vector<8x96xf32>
    %cst_427 = arith.constant 0.000000e+00 : f32
    %1058 = vector.broadcast %cst_427 : f32 to vector<8x96xf32>
    %1059 = arith.subf %1058, %1057 : vector<8x96xf32>
    %cst_428 = arith.constant 8.000000e+01 : f32
    %1060 = vector.broadcast %cst_428 : f32 to vector<8x96xf32>
    %1061 = arith.minimumf %1059, %1060 : vector<8x96xf32>
    %1062 = math.exp %1061 : vector<8x96xf32>
    %cst_429 = arith.constant 1.000000e+00 : f32
    %1063 = vector.broadcast %cst_429 : f32 to vector<8x96xf32>
    %1064 = arith.addf %1063, %1062 : vector<8x96xf32>
    %1065 = tpu.reciprocal %1064 {approx = true} : vector<8x96xf32> -> vector<8x96xf32>
    %1066 = vector.extract_strided_slice %1056 {offsets = [0, 96], sizes = [8, 32], strides = [1, 1]} : vector<8x128xf32> to vector<8x32xf32>
    %1067 = math.tanh %1066 : vector<8x32xf32>
    %1068 = vector.extract_strided_slice %1065 {offsets = [0, 0], sizes = [8, 32], strides = [1, 1]} : vector<8x96xf32> to vector<8x32xf32>
    %1069 = vector.extract_strided_slice %1065 {offsets = [0, 32], sizes = [8, 32], strides = [1, 1]} : vector<8x96xf32> to vector<8x32xf32>
    %1070 = vector.extract_strided_slice %1065 {offsets = [0, 64], sizes = [8, 32], strides = [1, 1]} : vector<8x96xf32> to vector<8x32xf32>
    %1071 = arith.mulf %1069, %1050 : vector<8x32xf32>
    %1072 = arith.mulf %1068, %1067 : vector<8x32xf32>
    %1073 = arith.addf %1071, %1072 : vector<8x32xf32>
    %1074 = math.tanh %1073 : vector<8x32xf32>
    %1075 = arith.mulf %1070, %1074 : vector<8x32xf32>
    %c16_430 = arith.constant 16 : index
    %c0_431 = arith.constant 0 : index
    %1076 = vector.load %arg11[%c16_430, %c0_431] : memref<64x32xf32, #tpu.memory_space<vmem>>, vector<8x32xf32>
    tpu.vector_store %arg11[%c16_430, %c0_431], %1075 {strides = array<i32>} : memref<64x32xf32, #tpu.memory_space<vmem>>, vector<8x32xf32>,
    %c24_432 = arith.constant 24 : index
    %c0_433 = arith.constant 0 : index
    %1077 = vector.load %arg13[%c24_432, %c0_433] : memref<64x128xf32, #tpu.memory_space<vmem>>, vector<8x128xf32>
    %cst_434 = arith.constant dense<0.000000e+00> : vector<8x128xf32>
    %1078 = tpu.matmul %1075, %1005, %cst_434 {dimension_numbers = #tpu.dot_dimension_numbers<[1], [0], [0], [1], [0, 0, 1, 1], [], []>} : vector<8x32xf32>, vector<32x128xf32>, vector<8x128xf32> -> vector<8x128xf32>
    %1079 = arith.addf %1077, %1078 : vector<8x128xf32>
    %1080 = vector.extract_strided_slice %1079 {offsets = [0, 0], sizes = [8, 96], strides = [1, 1]} : vector<8x128xf32> to vector<8x96xf32>
    %cst_435 = arith.constant 0.000000e+00 : f32
    %1081 = vector.broadcast %cst_435 : f32 to vector<8x96xf32>
    %1082 = arith.subf %1081, %1080 : vector<8x96xf32>
    %cst_436 = arith.constant 8.000000e+01 : f32
    %1083 = vector.broadcast %cst_436 : f32 to vector<8x96xf32>
    %1084 = arith.minimumf %1082, %1083 : vector<8x96xf32>
    %1085 = math.exp %1084 : vector<8x96xf32>
    %cst_437 = arith.constant 1.000000e+00 : f32
    %1086 = vector.broadcast %cst_437 : f32 to vector<8x96xf32>
    %1087 = arith.addf %1086, %1085 : vector<8x96xf32>
    %1088 = tpu.reciprocal %1087 {approx = true} : vector<8x96xf32> -> vector<8x96xf32>
    %1089 = vector.extract_strided_slice %1079 {offsets = [0, 96], sizes = [8, 32], strides = [1, 1]} : vector<8x128xf32> to vector<8x32xf32>
    %1090 = math.tanh %1089 : vector<8x32xf32>
    %1091 = vector.extract_strided_slice %1088 {offsets = [0, 0], sizes = [8, 32], strides = [1, 1]} : vector<8x96xf32> to vector<8x32xf32>
    %1092 = vector.extract_strided_slice %1088 {offsets = [0, 32], sizes = [8, 32], strides = [1, 1]} : vector<8x96xf32> to vector<8x32xf32>
    %1093 = vector.extract_strided_slice %1088 {offsets = [0, 64], sizes = [8, 32], strides = [1, 1]} : vector<8x96xf32> to vector<8x32xf32>
    %1094 = arith.mulf %1092, %1073 : vector<8x32xf32>
    %1095 = arith.mulf %1091, %1090 : vector<8x32xf32>
    %1096 = arith.addf %1094, %1095 : vector<8x32xf32>
    %1097 = math.tanh %1096 : vector<8x32xf32>
    %1098 = arith.mulf %1093, %1097 : vector<8x32xf32>
    %c24_438 = arith.constant 24 : index
    %c0_439 = arith.constant 0 : index
    %1099 = vector.load %arg11[%c24_438, %c0_439] : memref<64x32xf32, #tpu.memory_space<vmem>>, vector<8x32xf32>
    tpu.vector_store %arg11[%c24_438, %c0_439], %1098 {strides = array<i32>} : memref<64x32xf32, #tpu.memory_space<vmem>>, vector<8x32xf32>,
    %c32_440 = arith.constant 32 : index
    %c0_441 = arith.constant 0 : index
    %1100 = vector.load %arg13[%c32_440, %c0_441] : memref<64x128xf32, #tpu.memory_space<vmem>>, vector<8x128xf32>
    %cst_442 = arith.constant dense<0.000000e+00> : vector<8x128xf32>
    %1101 = tpu.matmul %1098, %1005, %cst_442 {dimension_numbers = #tpu.dot_dimension_numbers<[1], [0], [0], [1], [0, 0, 1, 1], [], []>} : vector<8x32xf32>, vector<32x128xf32>, vector<8x128xf32> -> vector<8x128xf32>
    %1102 = arith.addf %1100, %1101 : vector<8x128xf32>
    %1103 = vector.extract_strided_slice %1102 {offsets = [0, 0], sizes = [8, 96], strides = [1, 1]} : vector<8x128xf32> to vector<8x96xf32>
    %cst_443 = arith.constant 0.000000e+00 : f32
    %1104 = vector.broadcast %cst_443 : f32 to vector<8x96xf32>
    %1105 = arith.subf %1104, %1103 : vector<8x96xf32>
    %cst_444 = arith.constant 8.000000e+01 : f32
    %1106 = vector.broadcast %cst_444 : f32 to vector<8x96xf32>
    %1107 = arith.minimumf %1105, %1106 : vector<8x96xf32>
    %1108 = math.exp %1107 : vector<8x96xf32>
    %cst_445 = arith.constant 1.000000e+00 : f32
    %1109 = vector.broadcast %cst_445 : f32 to vector<8x96xf32>
    %1110 = arith.addf %1109, %1108 : vector<8x96xf32>
    %1111 = tpu.reciprocal %1110 {approx = true} : vector<8x96xf32> -> vector<8x96xf32>
    %1112 = vector.extract_strided_slice %1102 {offsets = [0, 96], sizes = [8, 32], strides = [1, 1]} : vector<8x128xf32> to vector<8x32xf32>
    %1113 = math.tanh %1112 : vector<8x32xf32>
    %1114 = vector.extract_strided_slice %1111 {offsets = [0, 0], sizes = [8, 32], strides = [1, 1]} : vector<8x96xf32> to vector<8x32xf32>
    %1115 = vector.extract_strided_slice %1111 {offsets = [0, 32], sizes = [8, 32], strides = [1, 1]} : vector<8x96xf32> to vector<8x32xf32>
    %1116 = vector.extract_strided_slice %1111 {offsets = [0, 64], sizes = [8, 32], strides = [1, 1]} : vector<8x96xf32> to vector<8x32xf32>
    %1117 = arith.mulf %1115, %1096 : vector<8x32xf32>
    %1118 = arith.mulf %1114, %1113 : vector<8x32xf32>
    %1119 = arith.addf %1117, %1118 : vector<8x32xf32>
    %1120 = math.tanh %1119 : vector<8x32xf32>
    %1121 = arith.mulf %1116, %1120 : vector<8x32xf32>
    %c32_446 = arith.constant 32 : index
    %c0_447 = arith.constant 0 : index
    %1122 = vector.load %arg11[%c32_446, %c0_447] : memref<64x32xf32, #tpu.memory_space<vmem>>, vector<8x32xf32>
    tpu.vector_store %arg11[%c32_446, %c0_447], %1121 {strides = array<i32>} : memref<64x32xf32, #tpu.memory_space<vmem>>, vector<8x32xf32>,
    %c40_448 = arith.constant 40 : index
    %c0_449 = arith.constant 0 : index
    %1123 = vector.load %arg13[%c40_448, %c0_449] : memref<64x128xf32, #tpu.memory_space<vmem>>, vector<8x128xf32>
    %cst_450 = arith.constant dense<0.000000e+00> : vector<8x128xf32>
    %1124 = tpu.matmul %1121, %1005, %cst_450 {dimension_numbers = #tpu.dot_dimension_numbers<[1], [0], [0], [1], [0, 0, 1, 1], [], []>} : vector<8x32xf32>, vector<32x128xf32>, vector<8x128xf32> -> vector<8x128xf32>
    %1125 = arith.addf %1123, %1124 : vector<8x128xf32>
    %1126 = vector.extract_strided_slice %1125 {offsets = [0, 0], sizes = [8, 96], strides = [1, 1]} : vector<8x128xf32> to vector<8x96xf32>
    %cst_451 = arith.constant 0.000000e+00 : f32
    %1127 = vector.broadcast %cst_451 : f32 to vector<8x96xf32>
    %1128 = arith.subf %1127, %1126 : vector<8x96xf32>
    %cst_452 = arith.constant 8.000000e+01 : f32
    %1129 = vector.broadcast %cst_452 : f32 to vector<8x96xf32>
    %1130 = arith.minimumf %1128, %1129 : vector<8x96xf32>
    %1131 = math.exp %1130 : vector<8x96xf32>
    %cst_453 = arith.constant 1.000000e+00 : f32
    %1132 = vector.broadcast %cst_453 : f32 to vector<8x96xf32>
    %1133 = arith.addf %1132, %1131 : vector<8x96xf32>
    %1134 = tpu.reciprocal %1133 {approx = true} : vector<8x96xf32> -> vector<8x96xf32>
    %1135 = vector.extract_strided_slice %1125 {offsets = [0, 96], sizes = [8, 32], strides = [1, 1]} : vector<8x128xf32> to vector<8x32xf32>
    %1136 = math.tanh %1135 : vector<8x32xf32>
    %1137 = vector.extract_strided_slice %1134 {offsets = [0, 0], sizes = [8, 32], strides = [1, 1]} : vector<8x96xf32> to vector<8x32xf32>
    %1138 = vector.extract_strided_slice %1134 {offsets = [0, 32], sizes = [8, 32], strides = [1, 1]} : vector<8x96xf32> to vector<8x32xf32>
    %1139 = vector.extract_strided_slice %1134 {offsets = [0, 64], sizes = [8, 32], strides = [1, 1]} : vector<8x96xf32> to vector<8x32xf32>
    %1140 = arith.mulf %1138, %1119 : vector<8x32xf32>
    %1141 = arith.mulf %1137, %1136 : vector<8x32xf32>
    %1142 = arith.addf %1140, %1141 : vector<8x32xf32>
    %1143 = math.tanh %1142 : vector<8x32xf32>
    %1144 = arith.mulf %1139, %1143 : vector<8x32xf32>
    %c40_454 = arith.constant 40 : index
    %c0_455 = arith.constant 0 : index
    %1145 = vector.load %arg11[%c40_454, %c0_455] : memref<64x32xf32, #tpu.memory_space<vmem>>, vector<8x32xf32>
    tpu.vector_store %arg11[%c40_454, %c0_455], %1144 {strides = array<i32>} : memref<64x32xf32, #tpu.memory_space<vmem>>, vector<8x32xf32>,
    %c48_456 = arith.constant 48 : index
    %c0_457 = arith.constant 0 : index
    %1146 = vector.load %arg13[%c48_456, %c0_457] : memref<64x128xf32, #tpu.memory_space<vmem>>, vector<8x128xf32>
    %cst_458 = arith.constant dense<0.000000e+00> : vector<8x128xf32>
    %1147 = tpu.matmul %1144, %1005, %cst_458 {dimension_numbers = #tpu.dot_dimension_numbers<[1], [0], [0], [1], [0, 0, 1, 1], [], []>} : vector<8x32xf32>, vector<32x128xf32>, vector<8x128xf32> -> vector<8x128xf32>
    %1148 = arith.addf %1146, %1147 : vector<8x128xf32>
    %1149 = vector.extract_strided_slice %1148 {offsets = [0, 0], sizes = [8, 96], strides = [1, 1]} : vector<8x128xf32> to vector<8x96xf32>
    %cst_459 = arith.constant 0.000000e+00 : f32
    %1150 = vector.broadcast %cst_459 : f32 to vector<8x96xf32>
    %1151 = arith.subf %1150, %1149 : vector<8x96xf32>
    %cst_460 = arith.constant 8.000000e+01 : f32
    %1152 = vector.broadcast %cst_460 : f32 to vector<8x96xf32>
    %1153 = arith.minimumf %1151, %1152 : vector<8x96xf32>
    %1154 = math.exp %1153 : vector<8x96xf32>
    %cst_461 = arith.constant 1.000000e+00 : f32
    %1155 = vector.broadcast %cst_461 : f32 to vector<8x96xf32>
    %1156 = arith.addf %1155, %1154 : vector<8x96xf32>
    %1157 = tpu.reciprocal %1156 {approx = true} : vector<8x96xf32> -> vector<8x96xf32>
    %1158 = vector.extract_strided_slice %1148 {offsets = [0, 96], sizes = [8, 32], strides = [1, 1]} : vector<8x128xf32> to vector<8x32xf32>
    %1159 = math.tanh %1158 : vector<8x32xf32>
    %1160 = vector.extract_strided_slice %1157 {offsets = [0, 0], sizes = [8, 32], strides = [1, 1]} : vector<8x96xf32> to vector<8x32xf32>
    %1161 = vector.extract_strided_slice %1157 {offsets = [0, 32], sizes = [8, 32], strides = [1, 1]} : vector<8x96xf32> to vector<8x32xf32>
    %1162 = vector.extract_strided_slice %1157 {offsets = [0, 64], sizes = [8, 32], strides = [1, 1]} : vector<8x96xf32> to vector<8x32xf32>
    %1163 = arith.mulf %1161, %1142 : vector<8x32xf32>
    %1164 = arith.mulf %1160, %1159 : vector<8x32xf32>
    %1165 = arith.addf %1163, %1164 : vector<8x32xf32>
    %1166 = math.tanh %1165 : vector<8x32xf32>
    %1167 = arith.mulf %1162, %1166 : vector<8x32xf32>
    %c48_462 = arith.constant 48 : index
    %c0_463 = arith.constant 0 : index
    %1168 = vector.load %arg11[%c48_462, %c0_463] : memref<64x32xf32, #tpu.memory_space<vmem>>, vector<8x32xf32>
    tpu.vector_store %arg11[%c48_462, %c0_463], %1167 {strides = array<i32>} : memref<64x32xf32, #tpu.memory_space<vmem>>, vector<8x32xf32>,
    %c56_464 = arith.constant 56 : index
    %c0_465 = arith.constant 0 : index
    %1169 = vector.load %arg13[%c56_464, %c0_465] : memref<64x128xf32, #tpu.memory_space<vmem>>, vector<8x128xf32>
    %cst_466 = arith.constant dense<0.000000e+00> : vector<8x128xf32>
    %1170 = tpu.matmul %1167, %1005, %cst_466 {dimension_numbers = #tpu.dot_dimension_numbers<[1], [0], [0], [1], [0, 0, 1, 1], [], []>} : vector<8x32xf32>, vector<32x128xf32>, vector<8x128xf32> -> vector<8x128xf32>
    %1171 = arith.addf %1169, %1170 : vector<8x128xf32>
    %1172 = vector.extract_strided_slice %1171 {offsets = [0, 0], sizes = [8, 96], strides = [1, 1]} : vector<8x128xf32> to vector<8x96xf32>
    %cst_467 = arith.constant 0.000000e+00 : f32
    %1173 = vector.broadcast %cst_467 : f32 to vector<8x96xf32>
    %1174 = arith.subf %1173, %1172 : vector<8x96xf32>
    %cst_468 = arith.constant 8.000000e+01 : f32
    %1175 = vector.broadcast %cst_468 : f32 to vector<8x96xf32>
    %1176 = arith.minimumf %1174, %1175 : vector<8x96xf32>
    %1177 = math.exp %1176 : vector<8x96xf32>
    %cst_469 = arith.constant 1.000000e+00 : f32
    %1178 = vector.broadcast %cst_469 : f32 to vector<8x96xf32>
    %1179 = arith.addf %1178, %1177 : vector<8x96xf32>
    %1180 = tpu.reciprocal %1179 {approx = true} : vector<8x96xf32> -> vector<8x96xf32>
    %1181 = vector.extract_strided_slice %1171 {offsets = [0, 96], sizes = [8, 32], strides = [1, 1]} : vector<8x128xf32> to vector<8x32xf32>
    %1182 = math.tanh %1181 : vector<8x32xf32>
    %1183 = vector.extract_strided_slice %1180 {offsets = [0, 0], sizes = [8, 32], strides = [1, 1]} : vector<8x96xf32> to vector<8x32xf32>
    %1184 = vector.extract_strided_slice %1180 {offsets = [0, 32], sizes = [8, 32], strides = [1, 1]} : vector<8x96xf32> to vector<8x32xf32>
    %1185 = vector.extract_strided_slice %1180 {offsets = [0, 64], sizes = [8, 32], strides = [1, 1]} : vector<8x96xf32> to vector<8x32xf32>
    %1186 = arith.mulf %1184, %1165 : vector<8x32xf32>
    %1187 = arith.mulf %1183, %1182 : vector<8x32xf32>
    %1188 = arith.addf %1186, %1187 : vector<8x32xf32>
    %1189 = math.tanh %1188 : vector<8x32xf32>
    %1190 = arith.mulf %1185, %1189 : vector<8x32xf32>
    %c56_470 = arith.constant 56 : index
    %c0_471 = arith.constant 0 : index
    %1191 = vector.load %arg11[%c56_470, %c0_471] : memref<64x32xf32, #tpu.memory_space<vmem>>, vector<8x32xf32>
    tpu.vector_store %arg11[%c56_470, %c0_471], %1190 {strides = array<i32>} : memref<64x32xf32, #tpu.memory_space<vmem>>, vector<8x32xf32>,
    %c0_472 = arith.constant 0 : index
    %c0_473 = arith.constant 0 : index
    %1192 = vector.load %arg11[%c0_472, %c0_473] : memref<64x32xf32, #tpu.memory_space<vmem>>, vector<64x32xf32>
    %c0_474 = arith.constant 0 : index
    %c0_475 = arith.constant 0 : index
    %1193 = vector.load %arg12[%c0_474, %c0_475] : memref<64x32xf32, #tpu.memory_space<vmem>>, vector<64x32xf32>
    %1194 = arith.addf %1192, %1193 : vector<64x32xf32>
    %c0_476 = arith.constant 0 : index
    %c0_477 = arith.constant 0 : index
    %1195 = vector.load %arg11[%c0_476, %c0_477] : memref<64x32xf32, #tpu.memory_space<vmem>>, vector<64x32xf32>
    tpu.vector_store %arg11[%c0_476, %c0_477], %1194 {strides = array<i32>} : memref<64x32xf32, #tpu.memory_space<vmem>>, vector<64x32xf32>,
    %c0_478 = arith.constant 0 : index
    %c0_479 = arith.constant 0 : index
    %1196 = vector.load %arg11[%c0_478, %c0_479] : memref<64x32xf32, #tpu.memory_space<vmem>>, vector<64x32xf32>
    %1197 = arith.truncf %1196 : vector<64x32xf32> to vector<64x32xbf16>
    %c0_480 = arith.constant 0 : index
    %c0_481 = arith.constant 0 : index
    %1198 = vector.load %arg5[%c0_480, %c0_481] : memref<32x4xbf16, #tpu.memory_space<vmem>>, vector<32x4xbf16>
    %cst_482 = arith.constant dense<0.000000e+00> : vector<64x4xf32>
    %1199 = tpu.matmul %1197, %1198, %cst_482 {dimension_numbers = #tpu.dot_dimension_numbers<[1], [0], [0], [1], [0, 0, 1, 1], [], []>} : vector<64x32xbf16>, vector<32x4xbf16>, vector<64x4xf32> -> vector<64x4xf32>
    %c0_483 = arith.constant 0 : index
    %c0_484 = arith.constant 0 : index
    %1200 = vector.load %arg6[%c0_483, %c0_484] : memref<1x4xf32, #tpu.memory_space<vmem>>, vector<1x4xf32>
    %1201 = vector.broadcast %1200 : vector<1x4xf32> to vector<64x4xf32>
    %1202 = arith.addf %1199, %1201 : vector<64x4xf32>
    %cst_485 = arith.constant 0.000000e+00 : f32
    %1203 = vector.broadcast %cst_485 : f32 to vector<64x4xf32>
    %1204 = arith.cmpf ogt, %1202, %1203 : vector<64x4xf32>
    %cst_486 = arith.constant 0.000000e+00 : f32
    %1205 = vector.broadcast %cst_486 : f32 to vector<64x4xf32>
    %1206 = arith.minimumf %1202, %1205 : vector<64x4xf32>
    %1207 = math.exp %1206 : vector<64x4xf32>
    %cst_487 = arith.constant 1.000000e+00 : f32
    %1208 = vector.broadcast %cst_487 : f32 to vector<64x4xf32>
    %1209 = arith.subf %1207, %1208 : vector<64x4xf32>
    %cst_488 = arith.constant 1.67326319 : f32
    %1210 = vector.broadcast %cst_488 : f32 to vector<64x4xf32>
    %1211 = arith.mulf %1210, %1209 : vector<64x4xf32>
    %1212 = arith.select %1204, %1202, %1211 : vector<64x4xi1>, vector<64x4xf32>
    %cst_489 = arith.constant 1.05070102 : f32
    %1213 = vector.broadcast %cst_489 : f32 to vector<64x4xf32>
    %1214 = arith.mulf %1213, %1212 : vector<64x4xf32>
    %1215 = arith.truncf %1214 : vector<64x4xf32> to vector<64x4xbf16>
    %c0_490 = arith.constant 0 : index
    %c0_491 = arith.constant 0 : index
    %1216 = vector.load %arg9[%c0_490, %c0_491] : memref<1x128xf32, #tpu.memory_space<vmem>>, vector<1x128xf32>
    %c0_492 = arith.constant 0 : index
    %c0_493 = arith.constant 0 : index
    %1217 = vector.load %arg1[%c0_492, %c0_493] : memref<8x1xf32, #tpu.memory_space<vmem>>, vector<8x1xf32>
    %c0_494 = arith.constant 0 : index
    %c0_495 = arith.constant 0 : index
    %1218 = vector.load %arg8[%c0_494, %c0_495] : memref<1x128xf32, #tpu.memory_space<vmem>>, vector<1x128xf32>
    %1219 = vector.broadcast %1217 : vector<8x1xf32> to vector<8x128xf32>
    %1220 = vector.broadcast %1218 : vector<1x128xf32> to vector<8x128xf32>
    %1221 = arith.mulf %1219, %1220 : vector<8x128xf32>
    %1222 = vector.broadcast %1216 : vector<1x128xf32> to vector<8x128xf32>
    %1223 = arith.addf %1222, %1221 : vector<8x128xf32>
    %1224 = vector.extract_strided_slice %1215 {offsets = [0, 0], sizes = [8, 4], strides = [1, 1]} : vector<64x4xbf16> to vector<8x4xbf16>
    %c0_496 = arith.constant 0 : index
    %c0_497 = arith.constant 0 : index
    %c0_498 = arith.constant 0 : index
    %1225 = vector.load %arg7[%c0_496, %c0_497, %c0_498] : memref<8x4x128xbf16, #tpu.memory_space<vmem>>, vector<1x4x128xbf16>
    %1226 = vector.shape_cast %1225 : vector<1x4x128xbf16> to vector<4x128xbf16>
    %cst_499 = arith.constant dense<0.000000e+00> : vector<8x128xf32>
    %1227 = tpu.matmul %1224, %1226, %cst_499 {dimension_numbers = #tpu.dot_dimension_numbers<[1], [0], [0], [1], [0, 0, 1, 1], [], []>} : vector<8x4xbf16>, vector<4x128xbf16>, vector<8x128xf32> -> vector<8x128xf32>
    %1228 = arith.addf %1223, %1227 : vector<8x128xf32>
    %1229 = vector.extract_strided_slice %1215 {offsets = [8, 0], sizes = [8, 4], strides = [1, 1]} : vector<64x4xbf16> to vector<8x4xbf16>
    %c1_500 = arith.constant 1 : index
    %c0_501 = arith.constant 0 : index
    %c0_502 = arith.constant 0 : index
    %1230 = vector.load %arg7[%c1_500, %c0_501, %c0_502] : memref<8x4x128xbf16, #tpu.memory_space<vmem>>, vector<1x4x128xbf16>
    %1231 = vector.shape_cast %1230 : vector<1x4x128xbf16> to vector<4x128xbf16>
    %cst_503 = arith.constant dense<0.000000e+00> : vector<8x128xf32>
    %1232 = tpu.matmul %1229, %1231, %cst_503 {dimension_numbers = #tpu.dot_dimension_numbers<[1], [0], [0], [1], [0, 0, 1, 1], [], []>} : vector<8x4xbf16>, vector<4x128xbf16>, vector<8x128xf32> -> vector<8x128xf32>
    %1233 = arith.addf %1228, %1232 : vector<8x128xf32>
    %1234 = vector.extract_strided_slice %1215 {offsets = [16, 0], sizes = [8, 4], strides = [1, 1]} : vector<64x4xbf16> to vector<8x4xbf16>
    %c2_504 = arith.constant 2 : index
    %c0_505 = arith.constant 0 : index
    %c0_506 = arith.constant 0 : index
    %1235 = vector.load %arg7[%c2_504, %c0_505, %c0_506] : memref<8x4x128xbf16, #tpu.memory_space<vmem>>, vector<1x4x128xbf16>
    %1236 = vector.shape_cast %1235 : vector<1x4x128xbf16> to vector<4x128xbf16>
    %cst_507 = arith.constant dense<0.000000e+00> : vector<8x128xf32>
    %1237 = tpu.matmul %1234, %1236, %cst_507 {dimension_numbers = #tpu.dot_dimension_numbers<[1], [0], [0], [1], [0, 0, 1, 1], [], []>} : vector<8x4xbf16>, vector<4x128xbf16>, vector<8x128xf32> -> vector<8x128xf32>
    %1238 = arith.addf %1233, %1237 : vector<8x128xf32>
    %1239 = vector.extract_strided_slice %1215 {offsets = [24, 0], sizes = [8, 4], strides = [1, 1]} : vector<64x4xbf16> to vector<8x4xbf16>
    %c3_508 = arith.constant 3 : index
    %c0_509 = arith.constant 0 : index
    %c0_510 = arith.constant 0 : index
    %1240 = vector.load %arg7[%c3_508, %c0_509, %c0_510] : memref<8x4x128xbf16, #tpu.memory_space<vmem>>, vector<1x4x128xbf16>
    %1241 = vector.shape_cast %1240 : vector<1x4x128xbf16> to vector<4x128xbf16>
    %cst_511 = arith.constant dense<0.000000e+00> : vector<8x128xf32>
    %1242 = tpu.matmul %1239, %1241, %cst_511 {dimension_numbers = #tpu.dot_dimension_numbers<[1], [0], [0], [1], [0, 0, 1, 1], [], []>} : vector<8x4xbf16>, vector<4x128xbf16>, vector<8x128xf32> -> vector<8x128xf32>
    %1243 = arith.addf %1238, %1242 : vector<8x128xf32>
    %1244 = vector.extract_strided_slice %1215 {offsets = [32, 0], sizes = [8, 4], strides = [1, 1]} : vector<64x4xbf16> to vector<8x4xbf16>
    %c4_512 = arith.constant 4 : index
    %c0_513 = arith.constant 0 : index
    %c0_514 = arith.constant 0 : index
    %1245 = vector.load %arg7[%c4_512, %c0_513, %c0_514] : memref<8x4x128xbf16, #tpu.memory_space<vmem>>, vector<1x4x128xbf16>
    %1246 = vector.shape_cast %1245 : vector<1x4x128xbf16> to vector<4x128xbf16>
    %cst_515 = arith.constant dense<0.000000e+00> : vector<8x128xf32>
    %1247 = tpu.matmul %1244, %1246, %cst_515 {dimension_numbers = #tpu.dot_dimension_numbers<[1], [0], [0], [1], [0, 0, 1, 1], [], []>} : vector<8x4xbf16>, vector<4x128xbf16>, vector<8x128xf32> -> vector<8x128xf32>
    %1248 = arith.addf %1243, %1247 : vector<8x128xf32>
    %1249 = vector.extract_strided_slice %1215 {offsets = [40, 0], sizes = [8, 4], strides = [1, 1]} : vector<64x4xbf16> to vector<8x4xbf16>
    %c5_516 = arith.constant 5 : index
    %c0_517 = arith.constant 0 : index
    %c0_518 = arith.constant 0 : index
    %1250 = vector.load %arg7[%c5_516, %c0_517, %c0_518] : memref<8x4x128xbf16, #tpu.memory_space<vmem>>, vector<1x4x128xbf16>
    %1251 = vector.shape_cast %1250 : vector<1x4x128xbf16> to vector<4x128xbf16>
    %cst_519 = arith.constant dense<0.000000e+00> : vector<8x128xf32>
    %1252 = tpu.matmul %1249, %1251, %cst_519 {dimension_numbers = #tpu.dot_dimension_numbers<[1], [0], [0], [1], [0, 0, 1, 1], [], []>} : vector<8x4xbf16>, vector<4x128xbf16>, vector<8x128xf32> -> vector<8x128xf32>
    %1253 = arith.addf %1248, %1252 : vector<8x128xf32>
    %1254 = vector.extract_strided_slice %1215 {offsets = [48, 0], sizes = [8, 4], strides = [1, 1]} : vector<64x4xbf16> to vector<8x4xbf16>
    %c6 = arith.constant 6 : index
    %c0_520 = arith.constant 0 : index
    %c0_521 = arith.constant 0 : index
    %1255 = vector.load %arg7[%c6, %c0_520, %c0_521] : memref<8x4x128xbf16, #tpu.memory_space<vmem>>, vector<1x4x128xbf16>
    %1256 = vector.shape_cast %1255 : vector<1x4x128xbf16> to vector<4x128xbf16>
    %cst_522 = arith.constant dense<0.000000e+00> : vector<8x128xf32>
    %1257 = tpu.matmul %1254, %1256, %cst_522 {dimension_numbers = #tpu.dot_dimension_numbers<[1], [0], [0], [1], [0, 0, 1, 1], [], []>} : vector<8x4xbf16>, vector<4x128xbf16>, vector<8x128xf32> -> vector<8x128xf32>
    %1258 = arith.addf %1253, %1257 : vector<8x128xf32>
    %1259 = vector.extract_strided_slice %1215 {offsets = [56, 0], sizes = [8, 4], strides = [1, 1]} : vector<64x4xbf16> to vector<8x4xbf16>
    %c7 = arith.constant 7 : index
    %c0_523 = arith.constant 0 : index
    %c0_524 = arith.constant 0 : index
    %1260 = vector.load %arg7[%c7, %c0_523, %c0_524] : memref<8x4x128xbf16, #tpu.memory_space<vmem>>, vector<1x4x128xbf16>
    %1261 = vector.shape_cast %1260 : vector<1x4x128xbf16> to vector<4x128xbf16>
    %cst_525 = arith.constant dense<0.000000e+00> : vector<8x128xf32>
    %1262 = tpu.matmul %1259, %1261, %cst_525 {dimension_numbers = #tpu.dot_dimension_numbers<[1], [0], [0], [1], [0, 0, 1, 1], [], []>} : vector<8x4xbf16>, vector<4x128xbf16>, vector<8x128xf32> -> vector<8x128xf32>
    %1263 = arith.addf %1258, %1262 : vector<8x128xf32>
    %c0_526 = arith.constant 0 : index
    %c0_527 = arith.constant 0 : index
    %1264 = vector.load %arg10[%c0_526, %c0_527] : memref<8x128xf32, #tpu.memory_space<vmem>>, vector<8x128xf32>
    tpu.vector_store %arg10[%c0_526, %c0_527], %1263 {strides = array<i32>} : memref<8x128xf32, #tpu.memory_space<vmem>>, vector<8x128xf32>,
    return
  }
}

</mosaic_0001>

<llo_original>
// kernel: lstm_ff_out_forward.1
$region0: #{lstm_ff_out_forward.1}
  #allocation0 [shape = 'u32[]', space=smem, size = 0x4, offset = 0x4, fixed_abs, tag = 'smem constant byte address 0x4 - core index']
  #allocation1 [shape = 'u32[144,128]{1,0:T(1,128)}', space=vmem, size = 0x12000, scoped, tag = 'internal scratch']
  #allocation2 [shape = 'f32[64,32]{1,0:T(8,128)}', space=vmem, size = 0x8000, scoped, tag = 'scratch operand']
  #allocation3 [shape = 'f32[64,32]{1,0:T(8,128)}', space=vmem, size = 0x8000, scoped, tag = 'scratch operand']
  #allocation4 [shape = 'f32[64,128]{1,0:T(8,128)}', space=vmem, size = 0x8000, scoped, tag = 'scratch operand']
  %s0 = inlined_call_operand.vmem [shape: f32[64,32], index: 0, kind: input, shape index: {}]
  %s1 = inlined_call_operand.vmem [shape: f32[8,1], index: 1, kind: input, shape index: {}]
  %s2 = inlined_call_operand.hbm [shape: bf16[6,32,128], index: 2, kind: input, shape index: {}]
  %s3 = inlined_call_operand.vmem [shape: f32[6,32,128], index: 3, kind: input, shape index: {}]
  %s4 = inlined_call_operand.vmem [shape: f32[6,1,128], index: 4, kind: input, shape index: {}]
  %s5 = inlined_call_operand.vmem [shape: bf16[32,4], index: 5, kind: input, shape index: {}]
  %s6 = inlined_call_operand.vmem [shape: f32[1,4], index: 6, kind: input, shape index: {}]
  %s7 = inlined_call_operand.vmem [shape: bf16[8,4,128], index: 7, kind: input, shape index: {}]
  %s8 = inlined_call_operand.vmem [shape: f32[1,128], index: 8, kind: input, shape index: {}]
  %s9 = inlined_call_operand.vmem [shape: f32[1,128], index: 9, kind: input, shape index: {}]
  %s10 = inlined_call_operand.vmem [shape: f32[8,128], index: 10, kind: output, shape index: {}]
  %s11 = sld [smem:[#allocation0]]
  $region54: #{lstm_ff_out_forward.1} parent=0
    _
  %s13 = ssub.s32 1, %s11
  %s14 = scalar_select 0, %s13, %s11
  $region1: #{lstm_ff_out_forward.1} parent=0
    #allocation5 [shape = 'u8[49152]{0}', space=vmem, size = 0xc000, scoped, tag = 'input window, operand 2, single buffered']
    #allocation6 [shape = 's32[1]{0}', space=sflag, size = 0x4, scoped, tag = 'scoped memory for lstm_ff_out_forward.1']
    %15 = vsyncpa [#allocation6], 0
    // Predicated region
    $region2: #{lstm_ff_out_forward.1} parent=1 // pred_check
      _
    $region3: #{lstm_ff_out_forward.1} parent=1 // pred_check_branch
      %17 = sbr.rel (0) target = $region5
    $region4: #{lstm_ff_out_forward.1} parent=1 // pred_region
      _
    $region5: #{lstm_ff_out_forward.1} parent=1 // pred_fallthru
      _
    // Predicated region
    $region6: #{lstm_ff_out_forward.1} parent=1 // pred_check
      _
    $region7: #{lstm_ff_out_forward.1} parent=1 // pred_check_branch
      %19 = sbr.rel (0) target = $region9
    $region8: #{lstm_ff_out_forward.1} parent=1 // pred_region
      _
    $region9: #{lstm_ff_out_forward.1} parent=1 // pred_fallthru
      _
    // Predicated region
    $region10: #{lstm_ff_out_forward.1} parent=1 // pred_check
      _
    $region11: #{lstm_ff_out_forward.1} parent=1 // pred_check_branch
      %21 = sbr.rel (0) target = $region13
    $region12: #{lstm_ff_out_forward.1} parent=1 // pred_region
      %s23 = ssub.s32 1536, 1536
      %24 = vsyncadd [#allocation6], %s23
      %s25 = sshll.u32 [#allocation5], 4
      %s26 = int_to_ptr.vmem [resolvable:$true] %s25
      %31 = dma.hbm_to_vmem [thread:$0]  %s2, 1536, %s26, [#allocation6], 64, 64, 4
    $region13: #{lstm_ff_out_forward.1} parent=1 // pred_fallthru
      _
    // Predicated region
    $region14: #{lstm_ff_out_forward.1} parent=1 // pred_check
      _
    $region15: #{lstm_ff_out_forward.1} parent=1 // pred_check_branch
      %33 = sbr.rel (0) target = $region17
    $region16: #{lstm_ff_out_forward.1} parent=1 // pred_region
      _
    $region17: #{lstm_ff_out_forward.1} parent=1 // pred_fallthru
      _
    // Predicated region
    $region18: #{lstm_ff_out_forward.1} parent=1 // pred_check
      _
    $region19: #{lstm_ff_out_forward.1} parent=1 // pred_check_branch
      %35 = sbr.rel (0) target = $region21
    $region20: #{lstm_ff_out_forward.1} parent=1 // pred_region
      _
    $region21: #{lstm_ff_out_forward.1} parent=1 // pred_fallthru
      _
    // Predicated region
    $region22: #{lstm_ff_out_forward.1} parent=1 // pred_check
      _
    $region23: #{lstm_ff_out_forward.1} parent=1 // pred_check_branch
      %37 = sbr.rel (0) target = $region25
    $region24: #{lstm_ff_out_forward.1} parent=1 // pred_region
      _
    $region25: #{lstm_ff_out_forward.1} parent=1 // pred_fallthru
      _
    // Predicated region
    $region26: #{lstm_ff_out_forward.1} parent=1 // pred_check
      _
    $region27: #{lstm_ff_out_forward.1} parent=1 // pred_check_branch
      %39 = sbr.rel (0) target = $region29
    $region28: #{lstm_ff_out_forward.1} parent=1 // pred_region
      _
    $region29: #{lstm_ff_out_forward.1} parent=1 // pred_fallthru
      _
    // Predicated region
    $region30: #{lstm_ff_out_forward.1} parent=1 // pred_check
      _
    $region31: #{lstm_ff_out_forward.1} parent=1 // pred_check_branch
      %41 = sbr.rel (0) target = $region33
    $region32: #{lstm_ff_out_forward.1} parent=1 // pred_region
      _
    $region33: #{lstm_ff_out_forward.1} parent=1 // pred_fallthru
      _
    // Predicated region
    $region34: #{lstm_ff_out_forward.1} parent=1 // pred_check
      _
    $region35: #{lstm_ff_out_forward.1} parent=1 // pred_check_branch
      %43 = sbr.rel (0) target = $region37
    $region36: #{lstm_ff_out_forward.1} parent=1 // pred_region
      _
    $region37: #{lstm_ff_out_forward.1} parent=1 // pred_fallthru
      _
    // Predicated region
    $region38: #{lstm_ff_out_forward.1} parent=1 // pred_check
      _
    $region39: #{lstm_ff_out_forward.1} parent=1 // pred_check_branch
      %45 = sbr.rel (0) target = $region41
    $region40: #{lstm_ff_out_forward.1} parent=1 // pred_region
      _
    $region41: #{lstm_ff_out_forward.1} parent=1 // pred_fallthru
      _
    // Predicated region
    $region42: #{lstm_ff_out_forward.1} parent=1 // pred_check
      _
    $region43: #{lstm_ff_out_forward.1} parent=1 // pred_check_branch
      %47 = sbr.rel (0) target = $region45
    $region44: #{lstm_ff_out_forward.1} parent=1 // pred_region
      %48 = dma.done [#allocation6], 1536
    $region45: #{lstm_ff_out_forward.1} parent=1 // pred_fallthru
      _
    %v50 = vld [vmem:[%s0] sm:$0xff]
    %v51 = vld [vmem:[%s0 + $0x8] sm:$0xff]
    %v52 = vld [vmem:[%s0 + $0x10] sm:$0xff]
    %v53 = vld [vmem:[%s0 + $0x18] sm:$0xff]
    %v54 = vld [vmem:[%s0 + $0x20] sm:$0xff]
    %v55 = vld [vmem:[%s0 + $0x28] sm:$0xff]
    %v56 = vld [vmem:[%s0 + $0x30] sm:$0xff]
    %v57 = vld [vmem:[%s0 + $0x38] sm:$0xff]
    %v58 = vld [vmem:[#allocation5] sm:$0xf]
    %v59 = vld [vmem:[#allocation5 + $0x4] sm:$0xf]
    %v60 = vld [vmem:[#allocation5 + $0x8] sm:$0xf]
    %v61 = vld [vmem:[#allocation5 + $0xc] sm:$0xf]
    %v62 = vpack.c.bf16 %v51, %v50
    %v63 = vpack.c.bf16 %v53, %v52
    %v64 = vpack.c.bf16 %v55, %v54
    %v65 = vpack.c.bf16 %v57, %v56
    %v66 = vld [vmem:[%s4] sm:$0x1]
    %v68 = vlaneseq
    %v69 = vshrl.u32 %v68, 7
    %v70 = vsub.s32 0, %v69
    %v71 = vrot.slane %v66, %v70
    %v77 = vunpack.c.l.b16 %v58
    %v78 = vunpack.c.l.b16 %v59
    %v79 = vunpack.c.l.b16 %v60
    %v80 = vunpack.c.l.b16 %v61
    %v81 = vpack.c.b16 %v78, %v77
    %v82 = vpack.c.b16 %v80, %v79
    %vm85 = vcmask 261120
    %v87 = vsel %vm85, %v62, 0
    %v90 = vsel %vm85, %v63, 0
    %v93 = vsel %vm85, %v64, 0
    %v96 = vsel %vm85, %v65, 0
    %98 = vmatprep.subr.bf16.mxu0 0
    %99 = vmatpush1.bf16.msra.mxu0 0
    %100 = vmatprep.subr.bf16.mxu0 0
    %101 = vmatpush1.bf16.msra.mxu0 0
    %102 = vmatprep.subr.bf16.mxu0 0
    %103 = vmatpush1.bf16.msra.mxu0 0
    %104 = vmatprep.subr.bf16.mxu0 0
    %105 = vmatpush1.bf16.msra.mxu0 0
    %106 = vmatprep.subr.bf16.mxu0 0
    %107 = vmatpush1.bf16.msra.mxu0 0
    %108 = vmatprep.subr.bf16.mxu0 0
    %109 = vmatpush1.bf16.msra.mxu0 0
    %110 = vmatprep.subr.bf16.mxu0 0
    %111 = vmatpush1.bf16.msra.mxu0 %v82
    %112 = vmatprep.subr.bf16.mxu0 0
    %113 = vmatpush1.bf16.msra.mxu0 %v81
    %114 = vmatprep.subr.bf16.mxu0 0
    %115 = vmatpush2.bf16.msra.mxu0 0
    %116 = vmatprep.subr.bf16.mxu0 0
    %117 = vmatpush2.bf16.msra.mxu0 0
    %118 = vmatprep.subr.bf16.mxu0 0
    %119 = vmatpush2.bf16.msra.mxu0 0
    %120 = vmatprep.subr.bf16.mxu0 0
    %121 = vmatpush2.bf16.msra.mxu0 0
    %122 = vmatprep.subr.bf16.mxu0 0
    %123 = vmatpush2.bf16.msra.mxu0 0
    %124 = vmatprep.subr.bf16.mxu0 0
    %125 = vmatpush2.bf16.msra.mxu0 0
    %126 = vmatprep.subr.bf16.mxu0 0
    %127 = vmatpush2.bf16.msra.mxu0 0
    %128 = vmatprep.subr.bf16.mxu0 0
    %129 = vmatpush2.bf16.msra.mxu0 0
    %130 = vmatprep.mubr.bf16.mxu0 0
    %131 = vmatmul.mubr.bf16.gmra.mxu0 %v87
    %v132 = vpop.f32.mrf.mxu0
    %v133 = vadd.f32 %v71, %v132
    %v134 = vpop.f32.mrf.mxu0
    %v135 = vpop.f32.mrf.mxu0
    %v136 = vadd.f32 %v71, %v135
    %v137 = vpop.f32.mrf.mxu0
    %138 = vmatprep.mubr.bf16.mxu0 0
    %139 = vmatmul.mubr.bf16.gmra.mxu0 %v90
    %v140 = vpop.f32.mrf.mxu0
    %v141 = vadd.f32 %v71, %v140
    %v142 = vpop.f32.mrf.mxu0
    %v143 = vpop.f32.mrf.mxu0
    %v144 = vadd.f32 %v71, %v143
    %v145 = vpop.f32.mrf.mxu0
    %146 = vmatprep.mubr.bf16.mxu0 0
    %147 = vmatmul.mubr.bf16.gmra.mxu0 %v93
    %v148 = vpop.f32.mrf.mxu0
    %v149 = vadd.f32 %v71, %v148
    %v150 = vpop.f32.mrf.mxu0
    %v151 = vpop.f32.mrf.mxu0
    %v152 = vadd.f32 %v71, %v151
    %v153 = vpop.f32.mrf.mxu0
    %154 = vmatprep.mubr.bf16.mxu0 0
    %155 = vmatmul.mubr.bf16.gmra.mxu0 %v96
    %v156 = vpop.f32.mrf.mxu0
    %v157 = vadd.f32 %v71, %v156
    %v158 = vpop.f32.mrf.mxu0
    %v159 = vpop.f32.mrf.mxu0
    %v160 = vadd.f32 %v71, %v159
    %v161 = vpop.f32.mrf.mxu0
    %162 = vdwg.mxu0
    %163 = vst [vmem:[#allocation4] sm:$0xff] %v133
    %164 = vst [vmem:[#allocation4 + $0x8] sm:$0xff] %v136
    %165 = vst [vmem:[#allocation4 + $0x10] sm:$0xff] %v141
    %166 = vst [vmem:[#allocation4 + $0x18] sm:$0xff] %v144
    %167 = vst [vmem:[#allocation4 + $0x20] sm:$0xff] %v149
    %168 = vst [vmem:[#allocation4 + $0x28] sm:$0xff] %v152
    %169 = vst [vmem:[#allocation4 + $0x30] sm:$0xff] %v157
    %170 = vst [vmem:[#allocation4 + $0x38] sm:$0xff] %v160
    %v171 = vld [vmem:[%s3] sm:$0xff]
    %v172 = vld [vmem:[%s3 + $0x8] sm:$0xff]
    %v173 = vld [vmem:[%s3 + $0x10] sm:$0xff]
    %v174 = vld [vmem:[%s3 + $0x18] sm:$0xff]
    %v175 = vld [vmem:[#allocation4] sm:$0xff]
    %v177 = vsel %vm85, 0.0, 0
    %179 = vmatprep.subr.mxu0 0.0
    %180 = vmatpush1.msra.mxu0 0.0
    %181 = vmatprep.subr.mxu0 0.0
    %182 = vmatpush1.msra.mxu0 0.0
    %183 = vmatprep.subr.mxu0 0.0
    %184 = vmatpush1.msra.mxu0 0.0
    %185 = vmatprep.subr.mxu0 0.0
    %186 = vmatpush1.msra.mxu0 0.0
    %187 = vmatprep.subr.mxu0 0.0
    %188 = vmatpush1.msra.mxu0 0.0
    %189 = vmatprep.subr.mxu0 0.0
    %190 = vmatpush1.msra.mxu0 0.0
    %191 = vmatprep.subr.mxu0 0.0
    %192 = vmatpush1.msra.mxu0 0.0
    %193 = vmatprep.subr.mxu0 0.0
    %194 = vmatpush1.msra.mxu0 0.0
    %195 = vmatprep.subr.mxu0 0.0
    %196 = vmatpush1.msra.mxu0 0.0
    %197 = vmatprep.subr.mxu0 0.0
    %198 = vmatpush1.msra.mxu0 0.0
    %199 = vmatprep.subr.mxu0 0.0
    %200 = vmatpush1.msra.mxu0 0.0
    %201 = vmatprep.subr.mxu0 0.0
    %202 = vmatpush1.msra.mxu0 0.0
    %203 = vmatprep.subr.mxu0 0.0
    %204 = vmatpush1.msra.mxu0 %v174
    %205 = vmatprep.subr.mxu0 0.0
    %206 = vmatpush1.msra.mxu0 %v173
    %207 = vmatprep.subr.mxu0 0.0
    %208 = vmatpush1.msra.mxu0 %v172
    %209 = vmatprep.subr.mxu0 0.0
    %210 = vmatpush1.msra.mxu0 %v171
    %211 = vmatprep.subr.mxu0 0.0
    %212 = vmatpush2.msra.mxu0 0.0
    %213 = vmatprep.subr.mxu0 0.0
    %214 = vmatpush2.msra.mxu0 0.0
    %215 = vmatprep.subr.mxu0 0.0
    %216 = vmatpush2.msra.mxu0 0.0
    %217 = vmatprep.subr.mxu0 0.0
    %218 = vmatpush2.msra.mxu0 0.0
    %219 = vmatprep.subr.mxu0 0.0
    %220 = vmatpush2.msra.mxu0 0.0
    %221 = vmatprep.subr.mxu0 0.0
    %222 = vmatpush2.msra.mxu0 0.0
    %223 = vmatprep.subr.mxu0 0.0
    %224 = vmatpush2.msra.mxu0 0.0
    %225 = vmatprep.subr.mxu0 0.0
    %226 = vmatpush2.msra.mxu0 0.0
    %227 = vmatprep.subr.mxu0 0.0
    %228 = vmatpush2.msra.mxu0 0.0
    %229 = vmatprep.subr.mxu0 0.0
    %230 = vmatpush2.msra.mxu0 0.0
    %231 = vmatprep.subr.mxu0 0.0
    %232 = vmatpush2.msra.mxu0 0.0
    %233 = vmatprep.subr.mxu0 0.0
    %234 = vmatpush2.msra.mxu0 0.0
    %235 = vmatprep.subr.mxu0 0.0
    %236 = vmatpush2.msra.mxu0 0.0
    %237 = vmatprep.subr.mxu0 0.0
    %238 = vmatpush2.msra.mxu0 0.0
    %239 = vmatprep.subr.mxu0 0.0
    %240 = vmatpush2.msra.mxu0 0.0
    %241 = vmatprep.subr.mxu0 0.0
    %242 = vmatpush2.msra.mxu0 0.0
    %243 = vmatprep.mubr.f32.mxu0 0.0
    %244 = vmatmul.mubr.f32.gmra.mxu0 %v177
    %v245 = vpop.f32.mrf.mxu0
    %v246 = vadd.f32 0.0, %v245
    %v247 = vpop.f32.mrf.mxu0
    %248 = vdwg.mxu0
    %v249 = vadd.f32 %v175, %v246
    %v250 = vsub.f32 0.0, %v249
    %v251 = vmin.f32 %v250, 80.0
    %v252 = vmul.f32 %v251, 1.442695
    %v253 = vpow.pop %v252
    %v254 = vadd.f32 %v253, 1.0
    %v255 = vrcp.pop %v254
    %v256 = vtanh.pop %v249
    %v257 = vmul.f32 %v255, 0.0
    %259 = vrot.lane.b32.xlu0 %v256, 32
    %v260 = vpop.permute.xlu0 %259
    %v262 = vmul.f32 %v255, %v260
    %264 = vrot.lane.b32.xlu0 %v262, 32
    %v265 = vpop.permute.xlu0 %264
    %v267 = vadd.f32 %v257, %v265
    %v268 = vtanh.pop %v267
    %270 = vrot.lane.b32.xlu0 %v268, 32
    %v271 = vpop.permute.xlu0 %270
    %v273 = vmul.f32 %v255, %v271
    %275 = vrot.lane.b32.xlu0 %v273, 64
    %v276 = vpop.permute.xlu0 %275
    %278 = vst.msk [vmem:[#allocation2] sm:$0xff] %vm85, %v276
    %v279 = vld [vmem:[#allocation4 + $0x8] sm:$0xff]
    %v280 = vsel %vm85, %v276, 0
    %282 = vmatprep.subr.mxu0 0.0
    %283 = vmatpush1.msra.mxu0 0.0
    %284 = vmatprep.subr.mxu0 0.0
    %285 = vmatpush1.msra.mxu0 0.0
    %286 = vmatprep.subr.mxu0 0.0
    %287 = vmatpush1.msra.mxu0 0.0
    %288 = vmatprep.subr.mxu0 0.0
    %289 = vmatpush1.msra.mxu0 0.0
    %290 = vmatprep.subr.mxu0 0.0
    %291 = vmatpush1.msra.mxu0 0.0
    %292 = vmatprep.subr.mxu0 0.0
    %293 = vmatpush1.msra.mxu0 0.0
    %294 = vmatprep.subr.mxu0 0.0
    %295 = vmatpush1.msra.mxu0 0.0
    %296 = vmatprep.subr.mxu0 0.0
    %297 = vmatpush1.msra.mxu0 0.0
    %298 = vmatprep.subr.mxu0 0.0
    %299 = vmatpush1.msra.mxu0 0.0
    %300 = vmatprep.subr.mxu0 0.0
    %301 = vmatpush1.msra.mxu0 0.0
    %302 = vmatprep.subr.mxu0 0.0
    %303 = vmatpush1.msra.mxu0 0.0
    %304 = vmatprep.subr.mxu0 0.0
    %305 = vmatpush1.msra.mxu0 0.0
    %306 = vmatprep.subr.mxu0 0.0
    %307 = vmatpush1.msra.mxu0 %v174
    %308 = vmatprep.subr.mxu0 0.0
    %309 = vmatpush1.msra.mxu0 %v173
    %310 = vmatprep.subr.mxu0 0.0
    %311 = vmatpush1.msra.mxu0 %v172
    %312 = vmatprep.subr.mxu0 0.0
    %313 = vmatpush1.msra.mxu0 %v171
    %314 = vmatprep.subr.mxu0 0.0
    %315 = vmatpush2.msra.mxu0 0.0
    %316 = vmatprep.subr.mxu0 0.0
    %317 = vmatpush2.msra.mxu0 0.0
    %318 = vmatprep.subr.mxu0 0.0
    %319 = vmatpush2.msra.mxu0 0.0
    %320 = vmatprep.subr.mxu0 0.0
    %321 = vmatpush2.msra.mxu0 0.0
    %322 = vmatprep.subr.mxu0 0.0
    %323 = vmatpush2.msra.mxu0 0.0
    %324 = vmatprep.subr.mxu0 0.0
    %325 = vmatpush2.msra.mxu0 0.0
    %326 = vmatprep.subr.mxu0 0.0
    %327 = vmatpush2.msra.mxu0 0.0
    %328 = vmatprep.subr.mxu0 0.0
    %329 = vmatpush2.msra.mxu0 0.0
    %330 = vmatprep.subr.mxu0 0.0
    %331 = vmatpush2.msra.mxu0 0.0
    %332 = vmatprep.subr.mxu0 0.0
    %333 = vmatpush2.msra.mxu0 0.0
    %334 = vmatprep.subr.mxu0 0.0
    %335 = vmatpush2.msra.mxu0 0.0
    %336 = vmatprep.subr.mxu0 0.0
    %337 = vmatpush2.msra.mxu0 0.0
    %338 = vmatprep.subr.mxu0 0.0
    %339 = vmatpush2.msra.mxu0 0.0
    %340 = vmatprep.subr.mxu0 0.0
    %341 = vmatpush2.msra.mxu0 0.0
    %342 = vmatprep.subr.mxu0 0.0
    %343 = vmatpush2.msra.mxu0 0.0
    %344 = vmatprep.subr.mxu0 0.0
    %345 = vmatpush2.msra.mxu0 0.0
    %346 = vmatprep.mubr.f32.mxu0 0.0
    %347 = vmatmul.mubr.f32.gmra.mxu0 %v280
    %v348 = vpop.f32.mrf.mxu0
    %v349 = vadd.f32 0.0, %v348
    %v350 = vpop.f32.mrf.mxu0
    %351 = vdwg.mxu0
    %v352 = vadd.f32 %v279, %v349
    %v353 = vsub.f32 0.0, %v352
    %v354 = vmin.f32 %v353, 80.0
    %v355 = vmul.f32 %v354, 1.442695
    %v356 = vpow.pop %v355
    %v357 = vadd.f32 %v356, 1.0
    %v358 = vrcp.pop %v357
    %v359 = vtanh.pop %v352
    %v360 = vmul.f32 %v358, %v267
    %362 = vrot.lane.b32.xlu0 %v359, 32
    %v363 = vpop.permute.xlu0 %362
    %v365 = vmul.f32 %v358, %v363
    %367 = vrot.lane.b32.xlu0 %v365, 32
    %v368 = vpop.permute.xlu0 %367
    %v370 = vadd.f32 %v360, %v368
    %v371 = vtanh.pop %v370
    %373 = vrot.lane.b32.xlu0 %v371, 32
    %v374 = vpop.permute.xlu0 %373
    %v376 = vmul.f32 %v358, %v374
    %378 = vrot.lane.b32.xlu0 %v376, 64
    %v379 = vpop.permute.xlu0 %378
    %381 = vst.msk [vmem:[#allocation2 + $0x8] sm:$0xff] %vm85, %v379
    %v382 = vld [vmem:[#allocation4 + $0x10] sm:$0xff]
    %v383 = vsel %vm85, %v379, 0
    %385 = vmatprep.subr.mxu0 0.0
    %386 = vmatpush1.msra.mxu0 0.0
    %387 = vmatprep.subr.mxu0 0.0
    %388 = vmatpush1.msra.mxu0 0.0
    %389 = vmatprep.subr.mxu0 0.0
    %390 = vmatpush1.msra.mxu0 0.0
    %391 = vmatprep.subr.mxu0 0.0
    %392 = vmatpush1.msra.mxu0 0.0
    %393 = vmatprep.subr.mxu0 0.0
    %394 = vmatpush1.msra.mxu0 0.0
    %395 = vmatprep.subr.mxu0 0.0
    %396 = vmatpush1.msra.mxu0 0.0
    %397 = vmatprep.subr.mxu0 0.0
    %398 = vmatpush1.msra.mxu0 0.0
    %399 = vmatprep.subr.mxu0 0.0
    %400 = vmatpush1.msra.mxu0 0.0
    %401 = vmatprep.subr.mxu0 0.0
    %402 = vmatpush1.msra.mxu0 0.0
    %403 = vmatprep.subr.mxu0 0.0
    %404 = vmatpush1.msra.mxu0 0.0
    %405 = vmatprep.subr.mxu0 0.0
    %406 = vmatpush1.msra.mxu0 0.0
    %407 = vmatprep.subr.mxu0 0.0
    %408 = vmatpush1.msra.mxu0 0.0
    %409 = vmatprep.subr.mxu0 0.0
    %410 = vmatpush1.msra.mxu0 %v174
    %411 = vmatprep.subr.mxu0 0.0
    %412 = vmatpush1.msra.mxu0 %v173
    %413 = vmatprep.subr.mxu0 0.0
    %414 = vmatpush1.msra.mxu0 %v172
    %415 = vmatprep.subr.mxu0 0.0
    %416 = vmatpush1.msra.mxu0 %v171
    %417 = vmatprep.subr.mxu0 0.0
    %418 = vmatpush2.msra.mxu0 0.0
    %419 = vmatprep.subr.mxu0 0.0
    %420 = vmatpush2.msra.mxu0 0.0
    %421 = vmatprep.subr.mxu0 0.0
    %422 = vmatpush2.msra.mxu0 0.0
    %423 = vmatprep.subr.mxu0 0.0
    %424 = vmatpush2.msra.mxu0 0.0
    %425 = vmatprep.subr.mxu0 0.0
    %426 = vmatpush2.msra.mxu0 0.0
    %427 = vmatprep.subr.mxu0 0.0
    %428 = vmatpush2.msra.mxu0 0.0
    %429 = vmatprep.subr.mxu0 0.0
    %430 = vmatpush2.msra.mxu0 0.0
    %431 = vmatprep.subr.mxu0 0.0
    %432 = vmatpush2.msra.mxu0 0.0
    %433 = vmatprep.subr.mxu0 0.0
    %434 = vmatpush2.msra.mxu0 0.0
    %435 = vmatprep.subr.mxu0 0.0
    %436 = vmatpush2.msra.mxu0 0.0
    %437 = vmatprep.subr.mxu0 0.0
    %438 = vmatpush2.msra.mxu0 0.0
    %439 = vmatprep.subr.mxu0 0.0
    %440 = vmatpush2.msra.mxu0 0.0
    %441 = vmatprep.subr.mxu0 0.0
    %442 = vmatpush2.msra.mxu0 0.0
    %443 = vmatprep.subr.mxu0 0.0
    %444 = vmatpush2.msra.mxu0 0.0
    %445 = vmatprep.subr.mxu0 0.0
    %446 = vmatpush2.msra.mxu0 0.0
    %447 = vmatprep.subr.mxu0 0.0
    %448 = vmatpush2.msra.mxu0 0.0
    %449 = vmatprep.mubr.f32.mxu0 0.0
    %450 = vmatmul.mubr.f32.gmra.mxu0 %v383
    %v451 = vpop.f32.mrf.mxu0
    %v452 = vadd.f32 0.0, %v451
    %v453 = vpop.f32.mrf.mxu0
    %454 = vdwg.mxu0
    %v455 = vadd.f32 %v382, %v452
    %v456 = vsub.f32 0.0, %v455
    %v457 = vmin.f32 %v456, 80.0
    %v458 = vmul.f32 %v457, 1.442695
    %v459 = vpow.pop %v458
    %v460 = vadd.f32 %v459, 1.0
    %v461 = vrcp.pop %v460
    %v462 = vtanh.pop %v455
    %v463 = vmul.f32 %v461, %v370
    %465 = vrot.lane.b32.xlu0 %v462, 32
    %v466 = vpop.permute.xlu0 %465
    %v468 = vmul.f32 %v461, %v466
    %470 = vrot.lane.b32.xlu0 %v468, 32
    %v471 = vpop.permute.xlu0 %470
    %v473 = vadd.f32 %v463, %v471
    %v474 = vtanh.pop %v473
    %476 = vrot.lane.b32.xlu0 %v474, 32
    %v477 = vpop.permute.xlu0 %476
    %v479 = vmul.f32 %v461, %v477
    %481 = vrot.lane.b32.xlu0 %v479, 64
    %v482 = vpop.permute.xlu0 %481
    %484 = vst.msk [vmem:[#allocation2 + $0x10] sm:$0xff] %vm85, %v482
    %v485 = vld [vmem:[#allocation4 + $0x18] sm:$0xff]
    %v486 = vsel %vm85, %v482, 0
    %488 = vmatprep.subr.mxu0 0.0
    %489 = vmatpush1.msra.mxu0 0.0
    %490 = vmatprep.subr.mxu0 0.0
    %491 = vmatpush1.msra.mxu0 0.0
    %492 = vmatprep.subr.mxu0 0.0
    %493 = vmatpush1.msra.mxu0 0.0
    %494 = vmatprep.subr.mxu0 0.0
    %495 = vmatpush1.msra.mxu0 0.0
    %496 = vmatprep.subr.mxu0 0.0
    %497 = vmatpush1.msra.mxu0 0.0
    %498 = vmatprep.subr.mxu0 0.0
    %499 = vmatpush1.msra.mxu0 0.0
    %500 = vmatprep.subr.mxu0 0.0
    %501 = vmatpush1.msra.mxu0 0.0
    %502 = vmatprep.subr.mxu0 0.0
    %503 = vmatpush1.msra.mxu0 0.0
    %504 = vmatprep.subr.mxu0 0.0
    %505 = vmatpush1.msra.mxu0 0.0
    %506 = vmatprep.subr.mxu0 0.0
    %507 = vmatpush1.msra.mxu0 0.0
    %508 = vmatprep.subr.mxu0 0.0
    %509 = vmatpush1.msra.mxu0 0.0
    %510 = vmatprep.subr.mxu0 0.0
    %511 = vmatpush1.msra.mxu0 0.0
    %512 = vmatprep.subr.mxu0 0.0
    %513 = vmatpush1.msra.mxu0 %v174
    %514 = vmatprep.subr.mxu0 0.0
    %515 = vmatpush1.msra.mxu0 %v173
    %516 = vmatprep.subr.mxu0 0.0
    %517 = vmatpush1.msra.mxu0 %v172
    %518 = vmatprep.subr.mxu0 0.0
    %519 = vmatpush1.msra.mxu0 %v171
    %520 = vmatprep.subr.mxu0 0.0
    %521 = vmatpush2.msra.mxu0 0.0
    %522 = vmatprep.subr.mxu0 0.0
    %523 = vmatpush2.msra.mxu0 0.0
    %524 = vmatprep.subr.mxu0 0.0
    %525 = vmatpush2.msra.mxu0 0.0
    %526 = vmatprep.subr.mxu0 0.0
    %527 = vmatpush2.msra.mxu0 0.0
    %528 = vmatprep.subr.mxu0 0.0
    %529 = vmatpush2.msra.mxu0 0.0
    %530 = vmatprep.subr.mxu0 0.0
    %531 = vmatpush2.msra.mxu0 0.0
    %532 = vmatprep.subr.mxu0 0.0
    %533 = vmatpush2.msra.mxu0 0.0
    %534 = vmatprep.subr.mxu0 0.0
    %535 = vmatpush2.msra.mxu0 0.0
    %536 = vmatprep.subr.mxu0 0.0
    %537 = vmatpush2.msra.mxu0 0.0
    %538 = vmatprep.subr.mxu0 0.0
    %539 = vmatpush2.msra.mxu0 0.0
    %540 = vmatprep.subr.mxu0 0.0
    %541 = vmatpush2.msra.mxu0 0.0
    %542 = vmatprep.subr.mxu0 0.0
    %543 = vmatpush2.msra.mxu0 0.0
    %544 = vmatprep.subr.mxu0 0.0
    %545 = vmatpush2.msra.mxu0 0.0
    %546 = vmatprep.subr.mxu0 0.0
    %547 = vmatpush2.msra.mxu0 0.0
    %548 = vmatprep.subr.mxu0 0.0
    %549 = vmatpush2.msra.mxu0 0.0
    %550 = vmatprep.subr.mxu0 0.0
    %551 = vmatpush2.msra.mxu0 0.0
    %552 = vmatprep.mubr.f32.mxu0 0.0
    %553 = vmatmul.mubr.f32.gmra.mxu0 %v486
    %v554 = vpop.f32.mrf.mxu0
    %v555 = vadd.f32 0.0, %v554
    %v556 = vpop.f32.mrf.mxu0
    %557 = vdwg.mxu0
    %v558 = vadd.f32 %v485, %v555
    %v559 = vsub.f32 0.0, %v558
    %v560 = vmin.f32 %v559, 80.0
    %v561 = vmul.f32 %v560, 1.442695
    %v562 = vpow.pop %v561
    %v563 = vadd.f32 %v562, 1.0
    %v564 = vrcp.pop %v563
    %v565 = vtanh.pop %v558
    %v566 = vmul.f32 %v564, %v473
    %568 = vrot.lane.b32.xlu0 %v565, 32
    %v569 = vpop.permute.xlu0 %568
    %v571 = vmul.f32 %v564, %v569
    %573 = vrot.lane.b32.xlu0 %v571, 32
    %v574 = vpop.permute.xlu0 %573
    %v576 = vadd.f32 %v566, %v574
    %v577 = vtanh.pop %v576
    %579 = vrot.lane.b32.xlu0 %v577, 32
    %v580 = vpop.permute.xlu0 %579
    %v582 = vmul.f32 %v564, %v580
    %584 = vrot.lane.b32.xlu0 %v582, 64
    %v585 = vpop.permute.xlu0 %584
    %587 = vst.msk [vmem:[#allocation2 + $0x18] sm:$0xff] %vm85, %v585
    %v588 = vld [vmem:[#allocation4 + $0x20] sm:$0xff]
    %v589 = vsel %vm85, %v585, 0
    %591 = vmatprep.subr.mxu0 0.0
    %592 = vmatpush1.msra.mxu0 0.0
    %593 = vmatprep.subr.mxu0 0.0
    %594 = vmatpush1.msra.mxu0 0.0
    %595 = vmatprep.subr.mxu0 0.0
    %596 = vmatpush1.msra.mxu0 0.0
    %597 = vmatprep.subr.mxu0 0.0
    %598 = vmatpush1.msra.mxu0 0.0
    %599 = vmatprep.subr.mxu0 0.0
    %600 = vmatpush1.msra.mxu0 0.0
    %601 = vmatprep.subr.mxu0 0.0
    %602 = vmatpush1.msra.mxu0 0.0
    %603 = vmatprep.subr.mxu0 0.0
    %604 = vmatpush1.msra.mxu0 0.0
    %605 = vmatprep.subr.mxu0 0.0
    %606 = vmatpush1.msra.mxu0 0.0
    %607 = vmatprep.subr.mxu0 0.0
    %608 = vmatpush1.msra.mxu0 0.0
    %609 = vmatprep.subr.mxu0 0.0
    %610 = vmatpush1.msra.mxu0 0.0
    %611 = vmatprep.subr.mxu0 0.0
    %612 = vmatpush1.msra.mxu0 0.0
    %613 = vmatprep.subr.mxu0 0.0
    %614 = vmatpush1.msra.mxu0 0.0
    %615 = vmatprep.subr.mxu0 0.0
    %616 = vmatpush1.msra.mxu0 %v174
    %617 = vmatprep.subr.mxu0 0.0
    %618 = vmatpush1.msra.mxu0 %v173
    %619 = vmatprep.subr.mxu0 0.0
    %620 = vmatpush1.msra.mxu0 %v172
    %621 = vmatprep.subr.mxu0 0.0
    %622 = vmatpush1.msra.mxu0 %v171
    %623 = vmatprep.subr.mxu0 0.0
    %624 = vmatpush2.msra.mxu0 0.0
    %625 = vmatprep.subr.mxu0 0.0
    %626 = vmatpush2.msra.mxu0 0.0
    %627 = vmatprep.subr.mxu0 0.0
    %628 = vmatpush2.msra.mxu0 0.0
    %629 = vmatprep.subr.mxu0 0.0
    %630 = vmatpush2.msra.mxu0 0.0
    %631 = vmatprep.subr.mxu0 0.0
    %632 = vmatpush2.msra.mxu0 0.0
    %633 = vmatprep.subr.mxu0 0.0
    %634 = vmatpush2.msra.mxu0 0.0
    %635 = vmatprep.subr.mxu0 0.0
    %636 = vmatpush2.msra.mxu0 0.0
    %637 = vmatprep.subr.mxu0 0.0
    %638 = vmatpush2.msra.mxu0 0.0
    %639 = vmatprep.subr.mxu0 0.0
    %640 = vmatpush2.msra.mxu0 0.0
    %641 = vmatprep.subr.mxu0 0.0
    %642 = vmatpush2.msra.mxu0 0.0
    %643 = vmatprep.subr.mxu0 0.0
    %644 = vmatpush2.msra.mxu0 0.0
    %645 = vmatprep.subr.mxu0 0.0
    %646 = vmatpush2.msra.mxu0 0.0
    %647 = vmatprep.subr.mxu0 0.0
    %648 = vmatpush2.msra.mxu0 0.0
    %649 = vmatprep.subr.mxu0 0.0
    %650 = vmatpush2.msra.mxu0 0.0
    %651 = vmatprep.subr.mxu0 0.0
    %652 = vmatpush2.msra.mxu0 0.0
    %653 = vmatprep.subr.mxu0 0.0
    %654 = vmatpush2.msra.mxu0 0.0
    %655 = vmatprep.mubr.f32.mxu0 0.0
    %656 = vmatmul.mubr.f32.gmra.mxu0 %v589
    %v657 = vpop.f32.mrf.mxu0
    %v658 = vadd.f32 0.0, %v657
    %v659 = vpop.f32.mrf.mxu0
    %660 = vdwg.mxu0
    %v661 = vadd.f32 %v588, %v658
    %v662 = vsub.f32 0.0, %v661
    %v663 = vmin.f32 %v662, 80.0
    %v664 = vmul.f32 %v663, 1.442695
    %v665 = vpow.pop %v664
    %v666 = vadd.f32 %v665, 1.0
    %v667 = vrcp.pop %v666
    %v668 = vtanh.pop %v661
    %v669 = vmul.f32 %v667, %v576
    %671 = vrot.lane.b32.xlu0 %v668, 32
    %v672 = vpop.permute.xlu0 %671
    %v674 = vmul.f32 %v667, %v672
    %676 = vrot.lane.b32.xlu0 %v674, 32
    %v677 = vpop.permute.xlu0 %676
    %v679 = vadd.f32 %v669, %v677
    %v680 = vtanh.pop %v679
    %682 = vrot.lane.b32.xlu0 %v680, 32
    %v683 = vpop.permute.xlu0 %682
    %v685 = vmul.f32 %v667, %v683
    %687 = vrot.lane.b32.xlu0 %v685, 64
    %v688 = vpop.permute.xlu0 %687
    %690 = vst.msk [vmem:[#allocation2 + $0x20] sm:$0xff] %vm85, %v688
    %v691 = vld [vmem:[#allocation4 + $0x28] sm:$0xff]
    %v692 = vsel %vm85, %v688, 0
    %694 = vmatprep.subr.mxu0 0.0
    %695 = vmatpush1.msra.mxu0 0.0
    %696 = vmatprep.subr.mxu0 0.0
    %697 = vmatpush1.msra.mxu0 0.0
    %698 = vmatprep.subr.mxu0 0.0
    %699 = vmatpush1.msra.mxu0 0.0
    %700 = vmatprep.subr.mxu0 0.0
    %701 = vmatpush1.msra.mxu0 0.0
    %702 = vmatprep.subr.mxu0 0.0
    %703 = vmatpush1.msra.mxu0 0.0
    %704 = vmatprep.subr.mxu0 0.0
    %705 = vmatpush1.msra.mxu0 0.0
    %706 = vmatprep.subr.mxu0 0.0
    %707 = vmatpush1.msra.mxu0 0.0
    %708 = vmatprep.subr.mxu0 0.0
    %709 = vmatpush1.msra.mxu0 0.0
    %710 = vmatprep.subr.mxu0 0.0
    %711 = vmatpush1.msra.mxu0 0.0
    %712 = vmatprep.subr.mxu0 0.0
    %713 = vmatpush1.msra.mxu0 0.0
    %714 = vmatprep.subr.mxu0 0.0
    %715 = vmatpush1.msra.mxu0 0.0
    %716 = vmatprep.subr.mxu0 0.0
    %717 = vmatpush1.msra.mxu0 0.0
    %718 = vmatprep.subr.mxu0 0.0
    %719 = vmatpush1.msra.mxu0 %v174
    %720 = vmatprep.subr.mxu0 0.0
    %721 = vmatpush1.msra.mxu0 %v173
    %722 = vmatprep.subr.mxu0 0.0
    %723 = vmatpush1.msra.mxu0 %v172
    %724 = vmatprep.subr.mxu0 0.0
    %725 = vmatpush1.msra.mxu0 %v171
    %726 = vmatprep.subr.mxu0 0.0
    %727 = vmatpush2.msra.mxu0 0.0
    %728 = vmatprep.subr.mxu0 0.0
    %729 = vmatpush2.msra.mxu0 0.0
    %730 = vmatprep.subr.mxu0 0.0
    %731 = vmatpush2.msra.mxu0 0.0
    %732 = vmatprep.subr.mxu0 0.0
    %733 = vmatpush2.msra.mxu0 0.0
    %734 = vmatprep.subr.mxu0 0.0
    %735 = vmatpush2.msra.mxu0 0.0
    %736 = vmatprep.subr.mxu0 0.0
    %737 = vmatpush2.msra.mxu0 0.0
    %738 = vmatprep.subr.mxu0 0.0
    %739 = vmatpush2.msra.mxu0 0.0
    %740 = vmatprep.subr.mxu0 0.0
    %741 = vmatpush2.msra.mxu0 0.0
    %742 = vmatprep.subr.mxu0 0.0
    %743 = vmatpush2.msra.mxu0 0.0
    %744 = vmatprep.subr.mxu0 0.0
    %745 = vmatpush2.msra.mxu0 0.0
    %746 = vmatprep.subr.mxu0 0.0
    %747 = vmatpush2.msra.mxu0 0.0
    %748 = vmatprep.subr.mxu0 0.0
    %749 = vmatpush2.msra.mxu0 0.0
    %750 = vmatprep.subr.mxu0 0.0
    %751 = vmatpush2.msra.mxu0 0.0
    %752 = vmatprep.subr.mxu0 0.0
    %753 = vmatpush2.msra.mxu0 0.0
    %754 = vmatprep.subr.mxu0 0.0
    %755 = vmatpush2.msra.mxu0 0.0
    %756 = vmatprep.subr.mxu0 0.0
    %757 = vmatpush2.msra.mxu0 0.0
    %758 = vmatprep.mubr.f32.mxu0 0.0
    %759 = vmatmul.mubr.f32.gmra.mxu0 %v692
    %v760 = vpop.f32.mrf.mxu0
    %v761 = vadd.f32 0.0, %v760
    %v762 = vpop.f32.mrf.mxu0
    %763 = vdwg.mxu0
    %v764 = vadd.f32 %v691, %v761
    %v765 = vsub.f32 0.0, %v764
    %v766 = vmin.f32 %v765, 80.0
    %v767 = vmul.f32 %v766, 1.442695
    %v768 = vpow.pop %v767
    %v769 = vadd.f32 %v768, 1.0
    %v770 = vrcp.pop %v769
    %v771 = vtanh.pop %v764
    %v772 = vmul.f32 %v770, %v679
    %774 = vrot.lane.b32.xlu0 %v771, 32
    %v775 = vpop.permute.xlu0 %774
    %v777 = vmul.f32 %v770, %v775
    %779 = vrot.lane.b32.xlu0 %v777, 32
    %v780 = vpop.permute.xlu0 %779
    %v782 = vadd.f32 %v772, %v780
    %v783 = vtanh.pop %v782
    %785 = vrot.lane.b32.xlu0 %v783, 32
    %v786 = vpop.permute.xlu0 %785
    %v788 = vmul.f32 %v770, %v786
    %790 = vrot.lane.b32.xlu0 %v788, 64
    %v791 = vpop.permute.xlu0 %790
    %793 = vst.msk [vmem:[#allocation2 + $0x28] sm:$0xff] %vm85, %v791
    %v794 = vld [vmem:[#allocation4 + $0x30] sm:$0xff]
    %v795 = vsel %vm85, %v791, 0
    %797 = vmatprep.subr.mxu0 0.0
    %798 = vmatpush1.msra.mxu0 0.0
    %799 = vmatprep.subr.mxu0 0.0
    %800 = vmatpush1.msra.mxu0 0.0
    %801 = vmatprep.subr.mxu0 0.0
    %802 = vmatpush1.msra.mxu0 0.0
    %803 = vmatprep.subr.mxu0 0.0
    %804 = vmatpush1.msra.mxu0 0.0
    %805 = vmatprep.subr.mxu0 0.0
    %806 = vmatpush1.msra.mxu0 0.0
    %807 = vmatprep.subr.mxu0 0.0
    %808 = vmatpush1.msra.mxu0 0.0
    %809 = vmatprep.subr.mxu0 0.0
    %810 = vmatpush1.msra.mxu0 0.0
    %811 = vmatprep.subr.mxu0 0.0
    %812 = vmatpush1.msra.mxu0 0.0
    %813 = vmatprep.subr.mxu0 0.0
    %814 = vmatpush1.msra.mxu0 0.0
    %815 = vmatprep.subr.mxu0 0.0
    %816 = vmatpush1.msra.mxu0 0.0
    %817 = vmatprep.subr.mxu0 0.0
    %818 = vmatpush1.msra.mxu0 0.0
    %819 = vmatprep.subr.mxu0 0.0
    %820 = vmatpush1.msra.mxu0 0.0
    %821 = vmatprep.subr.mxu0 0.0
    %822 = vmatpush1.msra.mxu0 %v174
    %823 = vmatprep.subr.mxu0 0.0
    %824 = vmatpush1.msra.mxu0 %v173
    %825 = vmatprep.subr.mxu0 0.0
    %826 = vmatpush1.msra.mxu0 %v172
    %827 = vmatprep.subr.mxu0 0.0
    %828 = vmatpush1.msra.mxu0 %v171
    %829 = vmatprep.subr.mxu0 0.0
    %830 = vmatpush2.msra.mxu0 0.0
    %831 = vmatprep.subr.mxu0 0.0
    %832 = vmatpush2.msra.mxu0 0.0
    %833 = vmatprep.subr.mxu0 0.0
    %834 = vmatpush2.msra.mxu0 0.0
    %835 = vmatprep.subr.mxu0 0.0
    %836 = vmatpush2.msra.mxu0 0.0
    %837 = vmatprep.subr.mxu0 0.0
    %838 = vmatpush2.msra.mxu0 0.0
    %839 = vmatprep.subr.mxu0 0.0
    %840 = vmatpush2.msra.mxu0 0.0
    %841 = vmatprep.subr.mxu0 0.0
    %842 = vmatpush2.msra.mxu0 0.0
    %843 = vmatprep.subr.mxu0 0.0
    %844 = vmatpush2.msra.mxu0 0.0
    %845 = vmatprep.subr.mxu0 0.0
    %846 = vmatpush2.msra.mxu0 0.0
    %847 = vmatprep.subr.mxu0 0.0
    %848 = vmatpush2.msra.mxu0 0.0
    %849 = vmatprep.subr.mxu0 0.0
    %850 = vmatpush2.msra.mxu0 0.0
    %851 = vmatprep.subr.mxu0 0.0
    %852 = vmatpush2.msra.mxu0 0.0
    %853 = vmatprep.subr.mxu0 0.0
    %854 = vmatpush2.msra.mxu0 0.0
    %855 = vmatprep.subr.mxu0 0.0
    %856 = vmatpush2.msra.mxu0 0.0
    %857 = vmatprep.subr.mxu0 0.0
    %858 = vmatpush2.msra.mxu0 0.0
    %859 = vmatprep.subr.mxu0 0.0
    %860 = vmatpush2.msra.mxu0 0.0
    %861 = vmatprep.mubr.f32.mxu0 0.0
    %862 = vmatmul.mubr.f32.gmra.mxu0 %v795
    %v863 = vpop.f32.mrf.mxu0
    %v864 = vadd.f32 0.0, %v863
    %v865 = vpop.f32.mrf.mxu0
    %866 = vdwg.mxu0
    %v867 = vadd.f32 %v794, %v864
    %v868 = vsub.f32 0.0, %v867
    %v869 = vmin.f32 %v868, 80.0
    %v870 = vmul.f32 %v869, 1.442695
    %v871 = vpow.pop %v870
    %v872 = vadd.f32 %v871, 1.0
    %v873 = vrcp.pop %v872
    %v874 = vtanh.pop %v867
    %v875 = vmul.f32 %v873, %v782
    %877 = vrot.lane.b32.xlu0 %v874, 32
    %v878 = vpop.permute.xlu0 %877
    %v880 = vmul.f32 %v873, %v878
    %882 = vrot.lane.b32.xlu0 %v880, 32
    %v883 = vpop.permute.xlu0 %882
    %v885 = vadd.f32 %v875, %v883
    %v886 = vtanh.pop %v885
    %888 = vrot.lane.b32.xlu0 %v886, 32
    %v889 = vpop.permute.xlu0 %888
    %v891 = vmul.f32 %v873, %v889
    %893 = vrot.lane.b32.xlu0 %v891, 64
    %v894 = vpop.permute.xlu0 %893
    %896 = vst.msk [vmem:[#allocation2 + $0x30] sm:$0xff] %vm85, %v894
    %v897 = vld [vmem:[#allocation4 + $0x38] sm:$0xff]
    %v898 = vsel %vm85, %v894, 0
    %900 = vmatprep.subr.mxu0 0.0
    %901 = vmatpush1.msra.mxu0 0.0
    %902 = vmatprep.subr.mxu0 0.0
    %903 = vmatpush1.msra.mxu0 0.0
    %904 = vmatprep.subr.mxu0 0.0
    %905 = vmatpush1.msra.mxu0 0.0
    %906 = vmatprep.subr.mxu0 0.0
    %907 = vmatpush1.msra.mxu0 0.0
    %908 = vmatprep.subr.mxu0 0.0
    %909 = vmatpush1.msra.mxu0 0.0
    %910 = vmatprep.subr.mxu0 0.0
    %911 = vmatpush1.msra.mxu0 0.0
    %912 = vmatprep.subr.mxu0 0.0
    %913 = vmatpush1.msra.mxu0 0.0
    %914 = vmatprep.subr.mxu0 0.0
    %915 = vmatpush1.msra.mxu0 0.0
    %916 = vmatprep.subr.mxu0 0.0
    %917 = vmatpush1.msra.mxu0 0.0
    %918 = vmatprep.subr.mxu0 0.0
    %919 = vmatpush1.msra.mxu0 0.0
    %920 = vmatprep.subr.mxu0 0.0
    %921 = vmatpush1.msra.mxu0 0.0
    %922 = vmatprep.subr.mxu0 0.0
    %923 = vmatpush1.msra.mxu0 0.0
    %924 = vmatprep.subr.mxu0 0.0
    %925 = vmatpush1.msra.mxu0 %v174
    %926 = vmatprep.subr.mxu0 0.0
    %927 = vmatpush1.msra.mxu0 %v173
    %928 = vmatprep.subr.mxu0 0.0
    %929 = vmatpush1.msra.mxu0 %v172
    %930 = vmatprep.subr.mxu0 0.0
    %931 = vmatpush1.msra.mxu0 %v171
    %932 = vmatprep.subr.mxu0 0.0
    %933 = vmatpush2.msra.mxu0 0.0
    %934 = vmatprep.subr.mxu0 0.0
    %935 = vmatpush2.msra.mxu0 0.0
    %936 = vmatprep.subr.mxu0 0.0
    %937 = vmatpush2.msra.mxu0 0.0
    %938 = vmatprep.subr.mxu0 0.0
    %939 = vmatpush2.msra.mxu0 0.0
    %940 = vmatprep.subr.mxu0 0.0
    %941 = vmatpush2.msra.mxu0 0.0
    %942 = vmatprep.subr.mxu0 0.0
    %943 = vmatpush2.msra.mxu0 0.0
    %944 = vmatprep.subr.mxu0 0.0
    %945 = vmatpush2.msra.mxu0 0.0
    %946 = vmatprep.subr.mxu0 0.0
    %947 = vmatpush2.msra.mxu0 0.0
    %948 = vmatprep.subr.mxu0 0.0
    %949 = vmatpush2.msra.mxu0 0.0
    %950 = vmatprep.subr.mxu0 0.0
    %951 = vmatpush2.msra.mxu0 0.0
    %952 = vmatprep.subr.mxu0 0.0
    %953 = vmatpush2.msra.mxu0 0.0
    %954 = vmatprep.subr.mxu0 0.0
    %955 = vmatpush2.msra.mxu0 0.0
    %956 = vmatprep.subr.mxu0 0.0
    %957 = vmatpush2.msra.mxu0 0.0
    %958 = vmatprep.subr.mxu0 0.0
    %959 = vmatpush2.msra.mxu0 0.0
    %960 = vmatprep.subr.mxu0 0.0
    %961 = vmatpush2.msra.mxu0 0.0
    %962 = vmatprep.subr.mxu0 0.0
    %963 = vmatpush2.msra.mxu0 0.0
    %964 = vmatprep.mubr.f32.mxu0 0.0
    %965 = vmatmul.mubr.f32.gmra.mxu0 %v898
    %v966 = vpop.f32.mrf.mxu0
    %v967 = vadd.f32 0.0, %v966
    %v968 = vpop.f32.mrf.mxu0
    %969 = vdwg.mxu0
    %v970 = vadd.f32 %v897, %v967
    %v971 = vsub.f32 0.0, %v970
    %v972 = vmin.f32 %v971, 80.0
    %v973 = vmul.f32 %v972, 1.442695
    %v974 = vpow.pop %v973
    %v975 = vadd.f32 %v974, 1.0
    %v976 = vrcp.pop %v975
    %v977 = vtanh.pop %v970
    %v978 = vmul.f32 %v976, %v885
    %980 = vrot.lane.b32.xlu0 %v977, 32
    %v981 = vpop.permute.xlu0 %980
    %v983 = vmul.f32 %v976, %v981
    %985 = vrot.lane.b32.xlu0 %v983, 32
    %v986 = vpop.permute.xlu0 %985
    %v988 = vadd.f32 %v978, %v986
    %v989 = vtanh.pop %v988
    %991 = vrot.lane.b32.xlu0 %v989, 32
    %v992 = vpop.permute.xlu0 %991
    %v994 = vmul.f32 %v976, %v992
    %996 = vrot.lane.b32.xlu0 %v994, 64
    %v997 = vpop.permute.xlu0 %996
    %999 = vst.msk [vmem:[#allocation2 + $0x38] sm:$0xff] %vm85, %v997
    %v1000 = vld [vmem:[#allocation2] sm:$0xff]
    %v1001 = vld [vmem:[#allocation2 + $0x8] sm:$0xff]
    %v1002 = vld [vmem:[#allocation2 + $0x10] sm:$0xff]
    %v1003 = vld [vmem:[#allocation2 + $0x18] sm:$0xff]
    %v1004 = vld [vmem:[#allocation2 + $0x20] sm:$0xff]
    %v1005 = vld [vmem:[#allocation2 + $0x28] sm:$0xff]
    %v1006 = vld [vmem:[#allocation2 + $0x30] sm:$0xff]
    %v1007 = vld [vmem:[#allocation2 + $0x38] sm:$0xff]
    %s1008 = scalar_lea.vmem [#allocation5], 16
    %v1009 = vld [vmem:[%s1008] sm:$0xf]
    %v1010 = vld [vmem:[%s1008 + $0x4] sm:$0xf]
    %v1011 = vld [vmem:[%s1008 + $0x8] sm:$0xf]
    %v1012 = vld [vmem:[%s1008 + $0xc] sm:$0xf]
    %v1013 = vpack.c.bf16 %v1001, %v1000
    %v1014 = vpack.c.bf16 %v1003, %v1002
    %v1015 = vpack.c.bf16 %v1005, %v1004
    %v1016 = vpack.c.bf16 %v1007, %v1006
    %s1017 = scalar_lea.vmem %s4, 1
    %v1018 = vld [vmem:[%s1017] sm:$0x1]
    %v1020 = vlaneseq
    %v1021 = vshrl.u32 %v1020, 7
    %v1022 = vsub.s32 0, %v1021
    %v1023 = vrot.slane %v1018, %v1022
    %v1029 = vunpack.c.l.b16 %v1009
    %v1030 = vunpack.c.l.b16 %v1010
    %v1031 = vunpack.c.l.b16 %v1011
    %v1032 = vunpack.c.l.b16 %v1012
    %v1033 = vpack.c.b16 %v1030, %v1029
    %v1034 = vpack.c.b16 %v1032, %v1031
    %v1038 = vsel %vm85, %v1013, 0
    %v1041 = vsel %vm85, %v1014, 0
    %v1044 = vsel %vm85, %v1015, 0
    %v1047 = vsel %vm85, %v1016, 0
    %1049 = vmatprep.subr.bf16.mxu0 0
    %1050 = vmatpush1.bf16.msra.mxu0 0
    %1051 = vmatprep.subr.bf16.mxu0 0
    %1052 = vmatpush1.bf16.msra.mxu0 0
    %1053 = vmatprep.subr.bf16.mxu0 0
    %1054 = vmatpush1.bf16.msra.mxu0 0
    %1055 = vmatprep.subr.bf16.mxu0 0
    %1056 = vmatpush1.bf16.msra.mxu0 0
    %1057 = vmatprep.subr.bf16.mxu0 0
    %1058 = vmatpush1.bf16.msra.mxu0 0
    %1059 = vmatprep.subr.bf16.mxu0 0
    %1060 = vmatpush1.bf16.msra.mxu0 0
    %1061 = vmatprep.subr.bf16.mxu0 0
    %1062 = vmatpush1.bf16.msra.mxu0 %v1034
    %1063 = vmatprep.subr.bf16.mxu0 0
    %1064 = vmatpush1.bf16.msra.mxu0 %v1033
    %1065 = vmatprep.subr.bf16.mxu0 0
    %1066 = vmatpush2.bf16.msra.mxu0 0
    %1067 = vmatprep.subr.bf16.mxu0 0
    %1068 = vmatpush2.bf16.msra.mxu0 0
    %1069 = vmatprep.subr.bf16.mxu0 0
    %1070 = vmatpush2.bf16.msra.mxu0 0
    %1071 = vmatprep.subr.bf16.mxu0 0
    %1072 = vmatpush2.bf16.msra.mxu0 0
    %1073 = vmatprep.subr.bf16.mxu0 0
    %1074 = vmatpush2.bf16.msra.mxu0 0
    %1075 = vmatprep.subr.bf16.mxu0 0
    %1076 = vmatpush2.bf16.msra.mxu0 0
    %1077 = vmatprep.subr.bf16.mxu0 0
    %1078 = vmatpush2.bf16.msra.mxu0 0
    %1079 = vmatprep.subr.bf16.mxu0 0
    %1080 = vmatpush2.bf16.msra.mxu0 0
    %1081 = vmatprep.mubr.bf16.mxu0 0
    %1082 = vmatmul.mubr.bf16.gmra.mxu0 %v1038
    %v1083 = vpop.f32.mrf.mxu0
    %v1084 = vadd.f32 %v1023, %v1083
    %v1085 = vpop.f32.mrf.mxu0
    %v1086 = vpop.f32.mrf.mxu0
    %v1087 = vadd.f32 %v1023, %v1086
    %v1088 = vpop.f32.mrf.mxu0
    %1089 = vmatprep.mubr.bf16.mxu0 0
    %1090 = vmatmul.mubr.bf16.gmra.mxu0 %v1041
    %v1091 = vpop.f32.mrf.mxu0
    %v1092 = vadd.f32 %v1023, %v1091
    %v1093 = vpop.f32.mrf.mxu0
    %v1094 = vpop.f32.mrf.mxu0
    %v1095 = vadd.f32 %v1023, %v1094
    %v1096 = vpop.f32.mrf.mxu0
    %1097 = vmatprep.mubr.bf16.mxu0 0
    %1098 = vmatmul.mubr.bf16.gmra.mxu0 %v1044
    %v1099 = vpop.f32.mrf.mxu0
    %v1100 = vadd.f32 %v1023, %v1099
    %v1101 = vpop.f32.mrf.mxu0
    %v1102 = vpop.f32.mrf.mxu0
    %v1103 = vadd.f32 %v1023, %v1102
    %v1104 = vpop.f32.mrf.mxu0
    %1105 = vmatprep.mubr.bf16.mxu0 0
    %1106 = vmatmul.mubr.bf16.gmra.mxu0 %v1047
    %v1107 = vpop.f32.mrf.mxu0
    %v1108 = vadd.f32 %v1023, %v1107
    %v1109 = vpop.f32.mrf.mxu0
    %v1110 = vpop.f32.mrf.mxu0
    %v1111 = vadd.f32 %v1023, %v1110
    %v1112 = vpop.f32.mrf.mxu0
    %1113 = vdwg.mxu0
    %1114 = vst [vmem:[#allocation4] sm:$0xff] %v1084
    %1115 = vst [vmem:[#allocation4 + $0x8] sm:$0xff] %v1087
    %1116 = vst [vmem:[#allocation4 + $0x10] sm:$0xff] %v1092
    %1117 = vst [vmem:[#allocation4 + $0x18] sm:$0xff] %v1095
    %1118 = vst [vmem:[#allocation4 + $0x20] sm:$0xff] %v1100
    %1119 = vst [vmem:[#allocation4 + $0x28] sm:$0xff] %v1103
    %1120 = vst [vmem:[#allocation4 + $0x30] sm:$0xff] %v1108
    %1121 = vst [vmem:[#allocation4 + $0x38] sm:$0xff] %v1111
    %s1122 = scalar_lea.vmem %s3, 32
    %v1123 = vld [vmem:[%s1122] sm:$0xff]
    %v1124 = vld [vmem:[%s1122 + $0x8] sm:$0xff]
    %v1125 = vld [vmem:[%s1122 + $0x10] sm:$0xff]
    %v1126 = vld [vmem:[%s1122 + $0x18] sm:$0xff]
    %v1127 = vld [vmem:[#allocation4] sm:$0xff]
    %1128 = vmatprep.subr.mxu0 0.0
    %1129 = vmatpush1.msra.mxu0 0.0
    %1130 = vmatprep.subr.mxu0 0.0
    %1131 = vmatpush1.msra.mxu0 0.0
    %1132 = vmatprep.subr.mxu0 0.0
    %1133 = vmatpush1.msra.mxu0 0.0
    %1134 = vmatprep.subr.mxu0 0.0
    %1135 = vmatpush1.msra.mxu0 0.0
    %1136 = vmatprep.subr.mxu0 0.0
    %1137 = vmatpush1.msra.mxu0 0.0
    %1138 = vmatprep.subr.mxu0 0.0
    %1139 = vmatpush1.msra.mxu0 0.0
    %1140 = vmatprep.subr.mxu0 0.0
    %1141 = vmatpush1.msra.mxu0 0.0
    %1142 = vmatprep.subr.mxu0 0.0
    %1143 = vmatpush1.msra.mxu0 0.0
    %1144 = vmatprep.subr.mxu0 0.0
    %1145 = vmatpush1.msra.mxu0 0.0
    %1146 = vmatprep.subr.mxu0 0.0
    %1147 = vmatpush1.msra.mxu0 0.0
    %1148 = vmatprep.subr.mxu0 0.0
    %1149 = vmatpush1.msra.mxu0 0.0
    %1150 = vmatprep.subr.mxu0 0.0
    %1151 = vmatpush1.msra.mxu0 0.0
    %1152 = vmatprep.subr.mxu0 0.0
    %1153 = vmatpush1.msra.mxu0 %v1126
    %1154 = vmatprep.subr.mxu0 0.0
    %1155 = vmatpush1.msra.mxu0 %v1125
    %1156 = vmatprep.subr.mxu0 0.0
    %1157 = vmatpush1.msra.mxu0 %v1124
    %1158 = vmatprep.subr.mxu0 0.0
    %1159 = vmatpush1.msra.mxu0 %v1123
    %1160 = vmatprep.subr.mxu0 0.0
    %1161 = vmatpush2.msra.mxu0 0.0
    %1162 = vmatprep.subr.mxu0 0.0
    %1163 = vmatpush2.msra.mxu0 0.0
    %1164 = vmatprep.subr.mxu0 0.0
    %1165 = vmatpush2.msra.mxu0 0.0
    %1166 = vmatprep.subr.mxu0 0.0
    %1167 = vmatpush2.msra.mxu0 0.0
    %1168 = vmatprep.subr.mxu0 0.0
    %1169 = vmatpush2.msra.mxu0 0.0
    %1170 = vmatprep.subr.mxu0 0.0
    %1171 = vmatpush2.msra.mxu0 0.0
    %1172 = vmatprep.subr.mxu0 0.0
    %1173 = vmatpush2.msra.mxu0 0.0
    %1174 = vmatprep.subr.mxu0 0.0
    %1175 = vmatpush2.msra.mxu0 0.0
    %1176 = vmatprep.subr.mxu0 0.0
    %1177 = vmatpush2.msra.mxu0 0.0
    %1178 = vmatprep.subr.mxu0 0.0
    %1179 = vmatpush2.msra.mxu0 0.0
    %1180 = vmatprep.subr.mxu0 0.0
    %1181 = vmatpush2.msra.mxu0 0.0
    %1182 = vmatprep.subr.mxu0 0.0
    %1183 = vmatpush2.msra.mxu0 0.0
    %1184 = vmatprep.subr.mxu0 0.0
    %1185 = vmatpush2.msra.mxu0 0.0
    %1186 = vmatprep.subr.mxu0 0.0
    %1187 = vmatpush2.msra.mxu0 0.0
    %1188 = vmatprep.subr.mxu0 0.0
    %1189 = vmatpush2.msra.mxu0 0.0
    %1190 = vmatprep.subr.mxu0 0.0
    %1191 = vmatpush2.msra.mxu0 0.0
    %1192 = vmatprep.mubr.f32.mxu0 0.0
    %1193 = vmatmul.mubr.f32.gmra.mxu0 %v177
    %v1194 = vpop.f32.mrf.mxu0
    %v1195 = vadd.f32 0.0, %v1194
    %v1196 = vpop.f32.mrf.mxu0
    %1197 = vdwg.mxu0
    %v1198 = vadd.f32 %v1127, %v1195
    %v1199 = vsub.f32 0.0, %v1198
    %v1200 = vmin.f32 %v1199, 80.0
    %v1201 = vmul.f32 %v1200, 1.442695
    %v1202 = vpow.pop %v1201
    %v1203 = vadd.f32 %v1202, 1.0
    %v1204 = vrcp.pop %v1203
    %v1205 = vtanh.pop %v1198
    %v1206 = vmul.f32 %v1204, 0.0
    %1208 = vrot.lane.b32.xlu0 %v1205, 32
    %v1209 = vpop.permute.xlu0 %1208
    %v1211 = vmul.f32 %v1204, %v1209
    %1213 = vrot.lane.b32.xlu0 %v1211, 32
    %v1214 = vpop.permute.xlu0 %1213
    %v1216 = vadd.f32 %v1206, %v1214
    %v1217 = vtanh.pop %v1216
    %1219 = vrot.lane.b32.xlu0 %v1217, 32
    %v1220 = vpop.permute.xlu0 %1219
    %v1222 = vmul.f32 %v1204, %v1220
    %1224 = vrot.lane.b32.xlu0 %v1222, 64
    %v1225 = vpop.permute.xlu0 %1224
    %1227 = vst.msk [vmem:[#allocation2] sm:$0xff] %vm85, %v1225
    %v1228 = vld [vmem:[#allocation4 + $0x8] sm:$0xff]
    %v1229 = vsel %vm85, %v1225, 0
    %1231 = vmatprep.subr.mxu0 0.0
    %1232 = vmatpush1.msra.mxu0 0.0
    %1233 = vmatprep.subr.mxu0 0.0
    %1234 = vmatpush1.msra.mxu0 0.0
    %1235 = vmatprep.subr.mxu0 0.0
    %1236 = vmatpush1.msra.mxu0 0.0
    %1237 = vmatprep.subr.mxu0 0.0
    %1238 = vmatpush1.msra.mxu0 0.0
    %1239 = vmatprep.subr.mxu0 0.0
    %1240 = vmatpush1.msra.mxu0 0.0
    %1241 = vmatprep.subr.mxu0 0.0
    %1242 = vmatpush1.msra.mxu0 0.0
    %1243 = vmatprep.subr.mxu0 0.0
    %1244 = vmatpush1.msra.mxu0 0.0
    %1245 = vmatprep.subr.mxu0 0.0
    %1246 = vmatpush1.msra.mxu0 0.0
    %1247 = vmatprep.subr.mxu0 0.0
    %1248 = vmatpush1.msra.mxu0 0.0
    %1249 = vmatprep.subr.mxu0 0.0
    %1250 = vmatpush1.msra.mxu0 0.0
    %1251 = vmatprep.subr.mxu0 0.0
    %1252 = vmatpush1.msra.mxu0 0.0
    %1253 = vmatprep.subr.mxu0 0.0
    %1254 = vmatpush1.msra.mxu0 0.0
    %1255 = vmatprep.subr.mxu0 0.0
    %1256 = vmatpush1.msra.mxu0 %v1126
    %1257 = vmatprep.subr.mxu0 0.0
    %1258 = vmatpush1.msra.mxu0 %v1125
    %1259 = vmatprep.subr.mxu0 0.0
    %1260 = vmatpush1.msra.mxu0 %v1124
    %1261 = vmatprep.subr.mxu0 0.0
    %1262 = vmatpush1.msra.mxu0 %v1123
    %1263 = vmatprep.subr.mxu0 0.0
    %1264 = vmatpush2.msra.mxu0 0.0
    %1265 = vmatprep.subr.mxu0 0.0
    %1266 = vmatpush2.msra.mxu0 0.0
    %1267 = vmatprep.subr.mxu0 0.0
    %1268 = vmatpush2.msra.mxu0 0.0
    %1269 = vmatprep.subr.mxu0 0.0
    %1270 = vmatpush2.msra.mxu0 0.0
    %1271 = vmatprep.subr.mxu0 0.0
    %1272 = vmatpush2.msra.mxu0 0.0
    %1273 = vmatprep.subr.mxu0 0.0
    %1274 = vmatpush2.msra.mxu0 0.0
    %1275 = vmatprep.subr.mxu0 0.0
    %1276 = vmatpush2.msra.mxu0 0.0
    %1277 = vmatprep.subr.mxu0 0.0
    %1278 = vmatpush2.msra.mxu0 0.0
    %1279 = vmatprep.subr.mxu0 0.0
    %1280 = vmatpush2.msra.mxu0 0.0
    %1281 = vmatprep.subr.mxu0 0.0
    %1282 = vmatpush2.msra.mxu0 0.0
    %1283 = vmatprep.subr.mxu0 0.0
    %1284 = vmatpush2.msra.mxu0 0.0
    %1285 = vmatprep.subr.mxu0 0.0
    %1286 = vmatpush2.msra.mxu0 0.0
    %1287 = vmatprep.subr.mxu0 0.0
    %1288 = vmatpush2.msra.mxu0 0.0
    %1289 = vmatprep.subr.mxu0 0.0
    %1290 = vmatpush2.msra.mxu0 0.0
    %1291 = vmatprep.subr.mxu0 0.0
    %1292 = vmatpush2.msra.mxu0 0.0
    %1293 = vmatprep.subr.mxu0 0.0
    %1294 = vmatpush2.msra.mxu0 0.0
    %1295 = vmatprep.mubr.f32.mxu0 0.0
    %1296 = vmatmul.mubr.f32.gmra.mxu0 %v1229
    %v1297 = vpop.f32.mrf.mxu0
    %v1298 = vadd.f32 0.0, %v1297
    %v1299 = vpop.f32.mrf.mxu0
    %1300 = vdwg.mxu0
    %v1301 = vadd.f32 %v1228, %v1298
    %v1302 = vsub.f32 0.0, %v1301
    %v1303 = vmin.f32 %v1302, 80.0
    %v1304 = vmul.f32 %v1303, 1.442695
    %v1305 = vpow.pop %v1304
    %v1306 = vadd.f32 %v1305, 1.0
    %v1307 = vrcp.pop %v1306
    %v1308 = vtanh.pop %v1301
    %v1309 = vmul.f32 %v1307, %v1216
    %1311 = vrot.lane.b32.xlu0 %v1308, 32
    %v1312 = vpop.permute.xlu0 %1311
    %v1314 = vmul.f32 %v1307, %v1312
    %1316 = vrot.lane.b32.xlu0 %v1314, 32
    %v1317 = vpop.permute.xlu0 %1316
    %v1319 = vadd.f32 %v1309, %v1317
    %v1320 = vtanh.pop %v1319
    %1322 = vrot.lane.b32.xlu0 %v1320, 32
    %v1323 = vpop.permute.xlu0 %1322
    %v1325 = vmul.f32 %v1307, %v1323
    %1327 = vrot.lane.b32.xlu0 %v1325, 64
    %v1328 = vpop.permute.xlu0 %1327
    %1330 = vst.msk [vmem:[#allocation2 + $0x8] sm:$0xff] %vm85, %v1328
    %v1331 = vld [vmem:[#allocation4 + $0x10] sm:$0xff]
    %v1332 = vsel %vm85, %v1328, 0
    %1334 = vmatprep.subr.mxu0 0.0
    %1335 = vmatpush1.msra.mxu0 0.0
    %1336 = vmatprep.subr.mxu0 0.0
    %1337 = vmatpush1.msra.mxu0 0.0
    %1338 = vmatprep.subr.mxu0 0.0
    %1339 = vmatpush1.msra.mxu0 0.0
    %1340 = vmatprep.subr.mxu0 0.0
    %1341 = vmatpush1.msra.mxu0 0.0
    %1342 = vmatprep.subr.mxu0 0.0
    %1343 = vmatpush1.msra.mxu0 0.0
    %1344 = vmatprep.subr.mxu0 0.0
    %1345 = vmatpush1.msra.mxu0 0.0
    %1346 = vmatprep.subr.mxu0 0.0
    %1347 = vmatpush1.msra.mxu0 0.0
    %1348 = vmatprep.subr.mxu0 0.0
    %1349 = vmatpush1.msra.mxu0 0.0
    %1350 = vmatprep.subr.mxu0 0.0
    %1351 = vmatpush1.msra.mxu0 0.0
    %1352 = vmatprep.subr.mxu0 0.0
    %1353 = vmatpush1.msra.mxu0 0.0
    %1354 = vmatprep.subr.mxu0 0.0
    %1355 = vmatpush1.msra.mxu0 0.0
    %1356 = vmatprep.subr.mxu0 0.0
    %1357 = vmatpush1.msra.mxu0 0.0
    %1358 = vmatprep.subr.mxu0 0.0
    %1359 = vmatpush1.msra.mxu0 %v1126
    %1360 = vmatprep.subr.mxu0 0.0
    %1361 = vmatpush1.msra.mxu0 %v1125
    %1362 = vmatprep.subr.mxu0 0.0
    %1363 = vmatpush1.msra.mxu0 %v1124
    %1364 = vmatprep.subr.mxu0 0.0
    %1365 = vmatpush1.msra.mxu0 %v1123
    %1366 = vmatprep.subr.mxu0 0.0
    %1367 = vmatpush2.msra.mxu0 0.0
    %1368 = vmatprep.subr.mxu0 0.0
    %1369 = vmatpush2.msra.mxu0 0.0
    %1370 = vmatprep.subr.mxu0 0.0
    %1371 = vmatpush2.msra.mxu0 0.0
    %1372 = vmatprep.subr.mxu0 0.0
    %1373 = vmatpush2.msra.mxu0 0.0
    %1374 = vmatprep.subr.mxu0 0.0
    %1375 = vmatpush2.msra.mxu0 0.0
    %1376 = vmatprep.subr.mxu0 0.0
    %1377 = vmatpush2.msra.mxu0 0.0
    %1378 = vmatprep.subr.mxu0 0.0
    %1379 = vmatpush2.msra.mxu0 0.0
    %1380 = vmatprep.subr.mxu0 0.0
    %1381 = vmatpush2.msra.mxu0 0.0
    %1382 = vmatprep.subr.mxu0 0.0
    %1383 = vmatpush2.msra.mxu0 0.0
    %1384 = vmatprep.subr.mxu0 0.0
    %1385 = vmatpush2.msra.mxu0 0.0
    %1386 = vmatprep.subr.mxu0 0.0
    %1387 = vmatpush2.msra.mxu0 0.0
    %1388 = vmatprep.subr.mxu0 0.0
    %1389 = vmatpush2.msra.mxu0 0.0
    %1390 = vmatprep.subr.mxu0 0.0
    %1391 = vmatpush2.msra.mxu0 0.0
    %1392 = vmatprep.subr.mxu0 0.0
    %1393 = vmatpush2.msra.mxu0 0.0
    %1394 = vmatprep.subr.mxu0 0.0
    %1395 = vmatpush2.msra.mxu0 0.0
    %1396 = vmatprep.subr.mxu0 0.0
    %1397 = vmatpush2.msra.mxu0 0.0
    %1398 = vmatprep.mubr.f32.mxu0 0.0
    %1399 = vmatmul.mubr.f32.gmra.mxu0 %v1332
    %v1400 = vpop.f32.mrf.mxu0
    %v1401 = vadd.f32 0.0, %v1400
    %v1402 = vpop.f32.mrf.mxu0
    %1403 = vdwg.mxu0
    %v1404 = vadd.f32 %v1331, %v1401
    %v1405 = vsub.f32 0.0, %v1404
    %v1406 = vmin.f32 %v1405, 80.0
    %v1407 = vmul.f32 %v1406, 1.442695
    %v1408 = vpow.pop %v1407
    %v1409 = vadd.f32 %v1408, 1.0
    %v1410 = vrcp.pop %v1409
    %v1411 = vtanh.pop %v1404
    %v1412 = vmul.f32 %v1410, %v1319
    %1414 = vrot.lane.b32.xlu0 %v1411, 32
    %v1415 = vpop.permute.xlu0 %1414
    %v1417 = vmul.f32 %v1410, %v1415
    %1419 = vrot.lane.b32.xlu0 %v1417, 32
    %v1420 = vpop.permute.xlu0 %1419
    %v1422 = vadd.f32 %v1412, %v1420
    %v1423 = vtanh.pop %v1422
    %1425 = vrot.lane.b32.xlu0 %v1423, 32
    %v1426 = vpop.permute.xlu0 %1425
    %v1428 = vmul.f32 %v1410, %v1426
    %1430 = vrot.lane.b32.xlu0 %v1428, 64
    %v1431 = vpop.permute.xlu0 %1430
    %1433 = vst.msk [vmem:[#allocation2 + $0x10] sm:$0xff] %vm85, %v1431
    %v1434 = vld [vmem:[#allocation4 + $0x18] sm:$0xff]
    %v1435 = vsel %vm85, %v1431, 0
    %1437 = vmatprep.subr.mxu0 0.0
    %1438 = vmatpush1.msra.mxu0 0.0
    %1439 = vmatprep.subr.mxu0 0.0
    %1440 = vmatpush1.msra.mxu0 0.0
    %1441 = vmatprep.subr.mxu0 0.0
    %1442 = vmatpush1.msra.mxu0 0.0
    %1443 = vmatprep.subr.mxu0 0.0
    %1444 = vmatpush1.msra.mxu0 0.0
    %1445 = vmatprep.subr.mxu0 0.0
    %1446 = vmatpush1.msra.mxu0 0.0
    %1447 = vmatprep.subr.mxu0 0.0
    %1448 = vmatpush1.msra.mxu0 0.0
    %1449 = vmatprep.subr.mxu0 0.0
    %1450 = vmatpush1.msra.mxu0 0.0
    %1451 = vmatprep.subr.mxu0 0.0
    %1452 = vmatpush1.msra.mxu0 0.0
    %1453 = vmatprep.subr.mxu0 0.0
    %1454 = vmatpush1.msra.mxu0 0.0
    %1455 = vmatprep.subr.mxu0 0.0
    %1456 = vmatpush1.msra.mxu0 0.0
    %1457 = vmatprep.subr.mxu0 0.0
    %1458 = vmatpush1.msra.mxu0 0.0
    %1459 = vmatprep.subr.mxu0 0.0
    %1460 = vmatpush1.msra.mxu0 0.0
    %1461 = vmatprep.subr.mxu0 0.0
    %1462 = vmatpush1.msra.mxu0 %v1126
    %1463 = vmatprep.subr.mxu0 0.0
    %1464 = vmatpush1.msra.mxu0 %v1125
    %1465 = vmatprep.subr.mxu0 0.0
    %1466 = vmatpush1.msra.mxu0 %v1124
    %1467 = vmatprep.subr.mxu0 0.0
    %1468 = vmatpush1.msra.mxu0 %v1123
    %1469 = vmatprep.subr.mxu0 0.0
    %1470 = vmatpush2.msra.mxu0 0.0
    %1471 = vmatprep.subr.mxu0 0.0
    %1472 = vmatpush2.msra.mxu0 0.0
    %1473 = vmatprep.subr.mxu0 0.0
    %1474 = vmatpush2.msra.mxu0 0.0
    %1475 = vmatprep.subr.mxu0 0.0
    %1476 = vmatpush2.msra.mxu0 0.0
    %1477 = vmatprep.subr.mxu0 0.0
    %1478 = vmatpush2.msra.mxu0 0.0
    %1479 = vmatprep.subr.mxu0 0.0
    %1480 = vmatpush2.msra.mxu0 0.0
    %1481 = vmatprep.subr.mxu0 0.0
    %1482 = vmatpush2.msra.mxu0 0.0
    %1483 = vmatprep.subr.mxu0 0.0
    %1484 = vmatpush2.msra.mxu0 0.0
    %1485 = vmatprep.subr.mxu0 0.0
    %1486 = vmatpush2.msra.mxu0 0.0
    %1487 = vmatprep.subr.mxu0 0.0
    %1488 = vmatpush2.msra.mxu0 0.0
    %1489 = vmatprep.subr.mxu0 0.0
    %1490 = vmatpush2.msra.mxu0 0.0
    %1491 = vmatprep.subr.mxu0 0.0
    %1492 = vmatpush2.msra.mxu0 0.0
    %1493 = vmatprep.subr.mxu0 0.0
    %1494 = vmatpush2.msra.mxu0 0.0
    %1495 = vmatprep.subr.mxu0 0.0
    %1496 = vmatpush2.msra.mxu0 0.0
    %1497 = vmatprep.subr.mxu0 0.0
    %1498 = vmatpush2.msra.mxu0 0.0
    %1499 = vmatprep.subr.mxu0 0.0
    %1500 = vmatpush2.msra.mxu0 0.0
    %1501 = vmatprep.mubr.f32.mxu0 0.0
    %1502 = vmatmul.mubr.f32.gmra.mxu0 %v1435
    %v1503 = vpop.f32.mrf.mxu0
    %v1504 = vadd.f32 0.0, %v1503
    %v1505 = vpop.f32.mrf.mxu0
    %1506 = vdwg.mxu0
    %v1507 = vadd.f32 %v1434, %v1504
    %v1508 = vsub.f32 0.0, %v1507
    %v1509 = vmin.f32 %v1508, 80.0
    %v1510 = vmul.f32 %v1509, 1.442695
    %v1511 = vpow.pop %v1510
    %v1512 = vadd.f32 %v1511, 1.0
    %v1513 = vrcp.pop %v1512
    %v1514 = vtanh.pop %v1507
    %v1515 = vmul.f32 %v1513, %v1422
    %1517 = vrot.lane.b32.xlu0 %v1514, 32
    %v1518 = vpop.permute.xlu0 %1517
    %v1520 = vmul.f32 %v1513, %v1518
    %1522 = vrot.lane.b32.xlu0 %v1520, 32
    %v1523 = vpop.permute.xlu0 %1522
    %v1525 = vadd.f32 %v1515, %v1523
    %v1526 = vtanh.pop %v1525
    %1528 = vrot.lane.b32.xlu0 %v1526, 32
    %v1529 = vpop.permute.xlu0 %1528
    %v1531 = vmul.f32 %v1513, %v1529
    %1533 = vrot.lane.b32.xlu0 %v1531, 64
    %v1534 = vpop.permute.xlu0 %1533
    %1536 = vst.msk [vmem:[#allocation2 + $0x18] sm:$0xff] %vm85, %v1534
    %v1537 = vld [vmem:[#allocation4 + $0x20] sm:$0xff]
    %v1538 = vsel %vm85, %v1534, 0
    %1540 = vmatprep.subr.mxu0 0.0
    %1541 = vmatpush1.msra.mxu0 0.0
    %1542 = vmatprep.subr.mxu0 0.0
    %1543 = vmatpush1.msra.mxu0 0.0
    %1544 = vmatprep.subr.mxu0 0.0
    %1545 = vmatpush1.msra.mxu0 0.0
    %1546 = vmatprep.subr.mxu0 0.0
    %1547 = vmatpush1.msra.mxu0 0.0
    %1548 = vmatprep.subr.mxu0 0.0
    %1549 = vmatpush1.msra.mxu0 0.0
    %1550 = vmatprep.subr.mxu0 0.0
    %1551 = vmatpush1.msra.mxu0 0.0
    %1552 = vmatprep.subr.mxu0 0.0
    %1553 = vmatpush1.msra.mxu0 0.0
    %1554 = vmatprep.subr.mxu0 0.0
    %1555 = vmatpush1.msra.mxu0 0.0
    %1556 = vmatprep.subr.mxu0 0.0
    %1557 = vmatpush1.msra.mxu0 0.0
    %1558 = vmatprep.subr.mxu0 0.0
    %1559 = vmatpush1.msra.mxu0 0.0
    %1560 = vmatprep.subr.mxu0 0.0
    %1561 = vmatpush1.msra.mxu0 0.0
    %1562 = vmatprep.subr.mxu0 0.0
    %1563 = vmatpush1.msra.mxu0 0.0
    %1564 = vmatprep.subr.mxu0 0.0
    %1565 = vmatpush1.msra.mxu0 %v1126
    %1566 = vmatprep.subr.mxu0 0.0
    %1567 = vmatpush1.msra.mxu0 %v1125
    %1568 = vmatprep.subr.mxu0 0.0
    %1569 = vmatpush1.msra.mxu0 %v1124
    %1570 = vmatprep.subr.mxu0 0.0
    %1571 = vmatpush1.msra.mxu0 %v1123
    %1572 = vmatprep.subr.mxu0 0.0
    %1573 = vmatpush2.msra.mxu0 0.0
    %1574 = vmatprep.subr.mxu0 0.0
    %1575 = vmatpush2.msra.mxu0 0.0
    %1576 = vmatprep.subr.mxu0 0.0
    %1577 = vmatpush2.msra.mxu0 0.0
    %1578 = vmatprep.subr.mxu0 0.0
    %1579 = vmatpush2.msra.mxu0 0.0
    %1580 = vmatprep.subr.mxu0 0.0
    %1581 = vmatpush2.msra.mxu0 0.0
    %1582 = vmatprep.subr.mxu0 0.0
    %1583 = vmatpush2.msra.mxu0 0.0
    %1584 = vmatprep.subr.mxu0 0.0
    %1585 = vmatpush2.msra.mxu0 0.0
    %1586 = vmatprep.subr.mxu0 0.0
    %1587 = vmatpush2.msra.mxu0 0.0
    %1588 = vmatprep.subr.mxu0 0.0
    %1589 = vmatpush2.msra.mxu0 0.0
    %1590 = vmatprep.subr.mxu0 0.0
    %1591 = vmatpush2.msra.mxu0 0.0
    %1592 = vmatprep.subr.mxu0 0.0
    %1593 = vmatpush2.msra.mxu0 0.0
    %1594 = vmatprep.subr.mxu0 0.0
    %1595 = vmatpush2.msra.mxu0 0.0
    %1596 = vmatprep.subr.mxu0 0.0
    %1597 = vmatpush2.msra.mxu0 0.0
    %1598 = vmatprep.subr.mxu0 0.0
    %1599 = vmatpush2.msra.mxu0 0.0
    %1600 = vmatprep.subr.mxu0 0.0
    %1601 = vmatpush2.msra.mxu0 0.0
    %1602 = vmatprep.subr.mxu0 0.0
    %1603 = vmatpush2.msra.mxu0 0.0
    %1604 = vmatprep.mubr.f32.mxu0 0.0
    %1605 = vmatmul.mubr.f32.gmra.mxu0 %v1538
    %v1606 = vpop.f32.mrf.mxu0
    %v1607 = vadd.f32 0.0, %v1606
    %v1608 = vpop.f32.mrf.mxu0
    %1609 = vdwg.mxu0
    %v1610 = vadd.f32 %v1537, %v1607
    %v1611 = vsub.f32 0.0, %v1610
    %v1612 = vmin.f32 %v1611, 80.0
    %v1613 = vmul.f32 %v1612, 1.442695
    %v1614 = vpow.pop %v1613
    %v1615 = vadd.f32 %v1614, 1.0
    %v1616 = vrcp.pop %v1615
    %v1617 = vtanh.pop %v1610
    %v1618 = vmul.f32 %v1616, %v1525
    %1620 = vrot.lane.b32.xlu0 %v1617, 32
    %v1621 = vpop.permute.xlu0 %1620
    %v1623 = vmul.f32 %v1616, %v1621
    %1625 = vrot.lane.b32.xlu0 %v1623, 32
    %v1626 = vpop.permute.xlu0 %1625
    %v1628 = vadd.f32 %v1618, %v1626
    %v1629 = vtanh.pop %v1628
    %1631 = vrot.lane.b32.xlu0 %v1629, 32
    %v1632 = vpop.permute.xlu0 %1631
    %v1634 = vmul.f32 %v1616, %v1632
    %1636 = vrot.lane.b32.xlu0 %v1634, 64
    %v1637 = vpop.permute.xlu0 %1636
    %1639 = vst.msk [vmem:[#allocation2 + $0x20] sm:$0xff] %vm85, %v1637
    %v1640 = vld [vmem:[#allocation4 + $0x28] sm:$0xff]
    %v1641 = vsel %vm85, %v1637, 0
    %1643 = vmatprep.subr.mxu0 0.0
    %1644 = vmatpush1.msra.mxu0 0.0
    %1645 = vmatprep.subr.mxu0 0.0
    %1646 = vmatpush1.msra.mxu0 0.0
    %1647 = vmatprep.subr.mxu0 0.0
    %1648 = vmatpush1.msra.mxu0 0.0
    %1649 = vmatprep.subr.mxu0 0.0
    %1650 = vmatpush1.msra.mxu0 0.0
    %1651 = vmatprep.subr.mxu0 0.0
    %1652 = vmatpush1.msra.mxu0 0.0
    %1653 = vmatprep.subr.mxu0 0.0
    %1654 = vmatpush1.msra.mxu0 0.0
    %1655 = vmatprep.subr.mxu0 0.0
    %1656 = vmatpush1.msra.mxu0 0.0
    %1657 = vmatprep.subr.mxu0 0.0
    %1658 = vmatpush1.msra.mxu0 0.0
    %1659 = vmatprep.subr.mxu0 0.0
    %1660 = vmatpush1.msra.mxu0 0.0
    %1661 = vmatprep.subr.mxu0 0.0
    %1662 = vmatpush1.msra.mxu0 0.0
    %1663 = vmatprep.subr.mxu0 0.0
    %1664 = vmatpush1.msra.mxu0 0.0
    %1665 = vmatprep.subr.mxu0 0.0
    %1666 = vmatpush1.msra.mxu0 0.0
    %1667 = vmatprep.subr.mxu0 0.0
    %1668 = vmatpush1.msra.mxu0 %v1126
    %1669 = vmatprep.subr.mxu0 0.0
    %1670 = vmatpush1.msra.mxu0 %v1125
    %1671 = vmatprep.subr.mxu0 0.0
    %1672 = vmatpush1.msra.mxu0 %v1124
    %1673 = vmatprep.subr.mxu0 0.0
    %1674 = vmatpush1.msra.mxu0 %v1123
    %1675 = vmatprep.subr.mxu0 0.0
    %1676 = vmatpush2.msra.mxu0 0.0
    %1677 = vmatprep.subr.mxu0 0.0
    %1678 = vmatpush2.msra.mxu0 0.0
    %1679 = vmatprep.subr.mxu0 0.0
    %1680 = vmatpush2.msra.mxu0 0.0
    %1681 = vmatprep.subr.mxu0 0.0
    %1682 = vmatpush2.msra.mxu0 0.0
    %1683 = vmatprep.subr.mxu0 0.0
    %1684 = vmatpush2.msra.mxu0 0.0
    %1685 = vmatprep.subr.mxu0 0.0
    %1686 = vmatpush2.msra.mxu0 0.0
    %1687 = vmatprep.subr.mxu0 0.0
    %1688 = vmatpush2.msra.mxu0 0.0
    %1689 = vmatprep.subr.mxu0 0.0
    %1690 = vmatpush2.msra.mxu0 0.0
    %1691 = vmatprep.subr.mxu0 0.0
    %1692 = vmatpush2.msra.mxu0 0.0
    %1693 = vmatprep.subr.mxu0 0.0
    %1694 = vmatpush2.msra.mxu0 0.0
    %1695 = vmatprep.subr.mxu0 0.0
    %1696 = vmatpush2.msra.mxu0 0.0
    %1697 = vmatprep.subr.mxu0 0.0
    %1698 = vmatpush2.msra.mxu0 0.0
    %1699 = vmatprep.subr.mxu0 0.0
    %1700 = vmatpush2.msra.mxu0 0.0
    %1701 = vmatprep.subr.mxu0 0.0
    %1702 = vmatpush2.msra.mxu0 0.0
    %1703 = vmatprep.subr.mxu0 0.0
    %1704 = vmatpush2.msra.mxu0 0.0
    %1705 = vmatprep.subr.mxu0 0.0
    %1706 = vmatpush2.msra.mxu0 0.0
    %1707 = vmatprep.mubr.f32.mxu0 0.0
    %1708 = vmatmul.mubr.f32.gmra.mxu0 %v1641
    %v1709 = vpop.f32.mrf.mxu0
    %v1710 = vadd.f32 0.0, %v1709
    %v1711 = vpop.f32.mrf.mxu0
    %1712 = vdwg.mxu0
    %v1713 = vadd.f32 %v1640, %v1710
    %v1714 = vsub.f32 0.0, %v1713
    %v1715 = vmin.f32 %v1714, 80.0
    %v1716 = vmul.f32 %v1715, 1.442695
    %v1717 = vpow.pop %v1716
    %v1718 = vadd.f32 %v1717, 1.0
    %v1719 = vrcp.pop %v1718
    %v1720 = vtanh.pop %v1713
    %v1721 = vmul.f32 %v1719, %v1628
    %1723 = vrot.lane.b32.xlu0 %v1720, 32
    %v1724 = vpop.permute.xlu0 %1723
    %v1726 = vmul.f32 %v1719, %v1724
    %1728 = vrot.lane.b32.xlu0 %v1726, 32
    %v1729 = vpop.permute.xlu0 %1728
    %v1731 = vadd.f32 %v1721, %v1729
    %v1732 = vtanh.pop %v1731
    %1734 = vrot.lane.b32.xlu0 %v1732, 32
    %v1735 = vpop.permute.xlu0 %1734
    %v1737 = vmul.f32 %v1719, %v1735
    %1739 = vrot.lane.b32.xlu0 %v1737, 64
    %v1740 = vpop.permute.xlu0 %1739
    %1742 = vst.msk [vmem:[#allocation2 + $0x28] sm:$0xff] %vm85, %v1740
    %v1743 = vld [vmem:[#allocation4 + $0x30] sm:$0xff]
    %v1744 = vsel %vm85, %v1740, 0
    %1746 = vmatprep.subr.mxu0 0.0
    %1747 = vmatpush1.msra.mxu0 0.0
    %1748 = vmatprep.subr.mxu0 0.0
    %1749 = vmatpush1.msra.mxu0 0.0
    %1750 = vmatprep.subr.mxu0 0.0
    %1751 = vmatpush1.msra.mxu0 0.0
    %1752 = vmatprep.subr.mxu0 0.0
    %1753 = vmatpush1.msra.mxu0 0.0
    %1754 = vmatprep.subr.mxu0 0.0
    %1755 = vmatpush1.msra.mxu0 0.0
    %1756 = vmatprep.subr.mxu0 0.0
    %1757 = vmatpush1.msra.mxu0 0.0
    %1758 = vmatprep.subr.mxu0 0.0
    %1759 = vmatpush1.msra.mxu0 0.0
    %1760 = vmatprep.subr.mxu0 0.0
    %1761 = vmatpush1.msra.mxu0 0.0
    %1762 = vmatprep.subr.mxu0 0.0
    %1763 = vmatpush1.msra.mxu0 0.0
    %1764 = vmatprep.subr.mxu0 0.0
    %1765 = vmatpush1.msra.mxu0 0.0
    %1766 = vmatprep.subr.mxu0 0.0
    %1767 = vmatpush1.msra.mxu0 0.0
    %1768 = vmatprep.subr.mxu0 0.0
    %1769 = vmatpush1.msra.mxu0 0.0
    %1770 = vmatprep.subr.mxu0 0.0
    %1771 = vmatpush1.msra.mxu0 %v1126
    %1772 = vmatprep.subr.mxu0 0.0
    %1773 = vmatpush1.msra.mxu0 %v1125
    %1774 = vmatprep.subr.mxu0 0.0
    %1775 = vmatpush1.msra.mxu0 %v1124
    %1776 = vmatprep.subr.mxu0 0.0
    %1777 = vmatpush1.msra.mxu0 %v1123
    %1778 = vmatprep.subr.mxu0 0.0
    %1779 = vmatpush2.msra.mxu0 0.0
    %1780 = vmatprep.subr.mxu0 0.0
    %1781 = vmatpush2.msra.mxu0 0.0
    %1782 = vmatprep.subr.mxu0 0.0
    %1783 = vmatpush2.msra.mxu0 0.0
    %1784 = vmatprep.subr.mxu0 0.0
    %1785 = vmatpush2.msra.mxu0 0.0
    %1786 = vmatprep.subr.mxu0 0.0
    %1787 = vmatpush2.msra.mxu0 0.0
    %1788 = vmatprep.subr.mxu0 0.0
    %1789 = vmatpush2.msra.mxu0 0.0
    %1790 = vmatprep.subr.mxu0 0.0
    %1791 = vmatpush2.msra.mxu0 0.0
    %1792 = vmatprep.subr.mxu0 0.0
    %1793 = vmatpush2.msra.mxu0 0.0
    %1794 = vmatprep.subr.mxu0 0.0
    %1795 = vmatpush2.msra.mxu0 0.0
    %1796 = vmatprep.subr.mxu0 0.0
    %1797 = vmatpush2.msra.mxu0 0.0
    %1798 = vmatprep.subr.mxu0 0.0
    %1799 = vmatpush2.msra.mxu0 0.0
    %1800 = vmatprep.subr.mxu0 0.0
    %1801 = vmatpush2.msra.mxu0 0.0
    %1802 = vmatprep.subr.mxu0 0.0
    %1803 = vmatpush2.msra.mxu0 0.0
    %1804 = vmatprep.subr.mxu0 0.0
    %1805 = vmatpush2.msra.mxu0 0.0
    %1806 = vmatprep.subr.mxu0 0.0
    %1807 = vmatpush2.msra.mxu0 0.0
    %1808 = vmatprep.subr.mxu0 0.0
    %1809 = vmatpush2.msra.mxu0 0.0
    %1810 = vmatprep.mubr.f32.mxu0 0.0
    %1811 = vmatmul.mubr.f32.gmra.mxu0 %v1744
    %v1812 = vpop.f32.mrf.mxu0
    %v1813 = vadd.f32 0.0, %v1812
    %v1814 = vpop.f32.mrf.mxu0
    %1815 = vdwg.mxu0
    %v1816 = vadd.f32 %v1743, %v1813
    %v1817 = vsub.f32 0.0, %v1816
    %v1818 = vmin.f32 %v1817, 80.0
    %v1819 = vmul.f32 %v1818, 1.442695
    %v1820 = vpow.pop %v1819
    %v1821 = vadd.f32 %v1820, 1.0
    %v1822 = vrcp.pop %v1821
    %v1823 = vtanh.pop %v1816
    %v1824 = vmul.f32 %v1822, %v1731
    %1826 = vrot.lane.b32.xlu0 %v1823, 32
    %v1827 = vpop.permute.xlu0 %1826
    %v1829 = vmul.f32 %v1822, %v1827
    %1831 = vrot.lane.b32.xlu0 %v1829, 32
    %v1832 = vpop.permute.xlu0 %1831
    %v1834 = vadd.f32 %v1824, %v1832
    %v1835 = vtanh.pop %v1834
    %1837 = vrot.lane.b32.xlu0 %v1835, 32
    %v1838 = vpop.permute.xlu0 %1837
    %v1840 = vmul.f32 %v1822, %v1838
    %1842 = vrot.lane.b32.xlu0 %v1840, 64
    %v1843 = vpop.permute.xlu0 %1842
    %1845 = vst.msk [vmem:[#allocation2 + $0x30] sm:$0xff] %vm85, %v1843
    %v1846 = vld [vmem:[#allocation4 + $0x38] sm:$0xff]
    %v1847 = vsel %vm85, %v1843, 0
    %1849 = vmatprep.subr.mxu0 0.0
    %1850 = vmatpush1.msra.mxu0 0.0
    %1851 = vmatprep.subr.mxu0 0.0
    %1852 = vmatpush1.msra.mxu0 0.0
    %1853 = vmatprep.subr.mxu0 0.0
    %1854 = vmatpush1.msra.mxu0 0.0
    %1855 = vmatprep.subr.mxu0 0.0
    %1856 = vmatpush1.msra.mxu0 0.0
    %1857 = vmatprep.subr.mxu0 0.0
    %1858 = vmatpush1.msra.mxu0 0.0
    %1859 = vmatprep.subr.mxu0 0.0
    %1860 = vmatpush1.msra.mxu0 0.0
    %1861 = vmatprep.subr.mxu0 0.0
    %1862 = vmatpush1.msra.mxu0 0.0
    %1863 = vmatprep.subr.mxu0 0.0
    %1864 = vmatpush1.msra.mxu0 0.0
    %1865 = vmatprep.subr.mxu0 0.0
    %1866 = vmatpush1.msra.mxu0 0.0
    %1867 = vmatprep.subr.mxu0 0.0
    %1868 = vmatpush1.msra.mxu0 0.0
    %1869 = vmatprep.subr.mxu0 0.0
    %1870 = vmatpush1.msra.mxu0 0.0
    %1871 = vmatprep.subr.mxu0 0.0
    %1872 = vmatpush1.msra.mxu0 0.0
    %1873 = vmatprep.subr.mxu0 0.0
    %1874 = vmatpush1.msra.mxu0 %v1126
    %1875 = vmatprep.subr.mxu0 0.0
    %1876 = vmatpush1.msra.mxu0 %v1125
    %1877 = vmatprep.subr.mxu0 0.0
    %1878 = vmatpush1.msra.mxu0 %v1124
    %1879 = vmatprep.subr.mxu0 0.0
    %1880 = vmatpush1.msra.mxu0 %v1123
    %1881 = vmatprep.subr.mxu0 0.0
    %1882 = vmatpush2.msra.mxu0 0.0
    %1883 = vmatprep.subr.mxu0 0.0
    %1884 = vmatpush2.msra.mxu0 0.0
    %1885 = vmatprep.subr.mxu0 0.0
    %1886 = vmatpush2.msra.mxu0 0.0
    %1887 = vmatprep.subr.mxu0 0.0
    %1888 = vmatpush2.msra.mxu0 0.0
    %1889 = vmatprep.subr.mxu0 0.0
    %1890 = vmatpush2.msra.mxu0 0.0
    %1891 = vmatprep.subr.mxu0 0.0
    %1892 = vmatpush2.msra.mxu0 0.0
    %1893 = vmatprep.subr.mxu0 0.0
    %1894 = vmatpush2.msra.mxu0 0.0
    %1895 = vmatprep.subr.mxu0 0.0
    %1896 = vmatpush2.msra.mxu0 0.0
    %1897 = vmatprep.subr.mxu0 0.0
    %1898 = vmatpush2.msra.mxu0 0.0
    %1899 = vmatprep.subr.mxu0 0.0
    %1900 = vmatpush2.msra.mxu0 0.0
    %1901 = vmatprep.subr.mxu0 0.0
    %1902 = vmatpush2.msra.mxu0 0.0
    %1903 = vmatprep.subr.mxu0 0.0
    %1904 = vmatpush2.msra.mxu0 0.0
    %1905 = vmatprep.subr.mxu0 0.0
    %1906 = vmatpush2.msra.mxu0 0.0
    %1907 = vmatprep.subr.mxu0 0.0
    %1908 = vmatpush2.msra.mxu0 0.0
    %1909 = vmatprep.subr.mxu0 0.0
    %1910 = vmatpush2.msra.mxu0 0.0
    %1911 = vmatprep.subr.mxu0 0.0
    %1912 = vmatpush2.msra.mxu0 0.0
    %1913 = vmatprep.mubr.f32.mxu0 0.0
    %1914 = vmatmul.mubr.f32.gmra.mxu0 %v1847
    %v1915 = vpop.f32.mrf.mxu0
    %v1916 = vadd.f32 0.0, %v1915
    %v1917 = vpop.f32.mrf.mxu0
    %1918 = vdwg.mxu0
    %v1919 = vadd.f32 %v1846, %v1916
    %v1920 = vsub.f32 0.0, %v1919
    %v1921 = vmin.f32 %v1920, 80.0
    %v1922 = vmul.f32 %v1921, 1.442695
    %v1923 = vpow.pop %v1922
    %v1924 = vadd.f32 %v1923, 1.0
    %v1925 = vrcp.pop %v1924
    %v1926 = vtanh.pop %v1919
    %v1927 = vmul.f32 %v1925, %v1834
    %1929 = vrot.lane.b32.xlu0 %v1926, 32
    %v1930 = vpop.permute.xlu0 %1929
    %v1932 = vmul.f32 %v1925, %v1930
    %1934 = vrot.lane.b32.xlu0 %v1932, 32
    %v1935 = vpop.permute.xlu0 %1934
    %v1937 = vadd.f32 %v1927, %v1935
    %v1938 = vtanh.pop %v1937
    %1940 = vrot.lane.b32.xlu0 %v1938, 32
    %v1941 = vpop.permute.xlu0 %1940
    %v1943 = vmul.f32 %v1925, %v1941
    %1945 = vrot.lane.b32.xlu0 %v1943, 64
    %v1946 = vpop.permute.xlu0 %1945
    %1948 = vst.msk [vmem:[#allocation2 + $0x38] sm:$0xff] %vm85, %v1946
    %v1949 = vld [vmem:[#allocation2] sm:$0xff]
    %v1950 = vld [vmem:[#allocation2 + $0x8] sm:$0xff]
    %v1951 = vld [vmem:[#allocation2 + $0x10] sm:$0xff]
    %v1952 = vld [vmem:[#allocation2 + $0x18] sm:$0xff]
    %v1953 = vld [vmem:[#allocation2 + $0x20] sm:$0xff]
    %v1954 = vld [vmem:[#allocation2 + $0x28] sm:$0xff]
    %v1955 = vld [vmem:[#allocation2 + $0x30] sm:$0xff]
    %v1956 = vld [vmem:[#allocation2 + $0x38] sm:$0xff]
    %s1957 = scalar_lea.vmem [#allocation5], 32
    %v1958 = vld [vmem:[%s1957] sm:$0xf]
    %v1959 = vld [vmem:[%s1957 + $0x4] sm:$0xf]
    %v1960 = vld [vmem:[%s1957 + $0x8] sm:$0xf]
    %v1961 = vld [vmem:[%s1957 + $0xc] sm:$0xf]
    %v1962 = vpack.c.bf16 %v1950, %v1949
    %v1963 = vpack.c.bf16 %v1952, %v1951
    %v1964 = vpack.c.bf16 %v1954, %v1953
    %v1965 = vpack.c.bf16 %v1956, %v1955
    %s1966 = scalar_lea.vmem %s4, 2
    %v1967 = vld [vmem:[%s1966] sm:$0x1]
    %v1969 = vlaneseq
    %v1970 = vshrl.u32 %v1969, 7
    %v1971 = vsub.s32 0, %v1970
    %v1972 = vrot.slane %v1967, %v1971
    %v1978 = vunpack.c.l.b16 %v1958
    %v1979 = vunpack.c.l.b16 %v1959
    %v1980 = vunpack.c.l.b16 %v1960
    %v1981 = vunpack.c.l.b16 %v1961
    %v1982 = vpack.c.b16 %v1979, %v1978
    %v1983 = vpack.c.b16 %v1981, %v1980
    %v1987 = vsel %vm85, %v1962, 0
    %v1990 = vsel %vm85, %v1963, 0
    %v1993 = vsel %vm85, %v1964, 0
    %v1996 = vsel %vm85, %v1965, 0
    %1998 = vmatprep.subr.bf16.mxu0 0
    %1999 = vmatpush1.bf16.msra.mxu0 0
    %2000 = vmatprep.subr.bf16.mxu0 0
    %2001 = vmatpush1.bf16.msra.mxu0 0
    %2002 = vmatprep.subr.bf16.mxu0 0
    %2003 = vmatpush1.bf16.msra.mxu0 0
    %2004 = vmatprep.subr.bf16.mxu0 0
    %2005 = vmatpush1.bf16.msra.mxu0 0
    %2006 = vmatprep.subr.bf16.mxu0 0
    %2007 = vmatpush1.bf16.msra.mxu0 0
    %2008 = vmatprep.subr.bf16.mxu0 0
    %2009 = vmatpush1.bf16.msra.mxu0 0
    %2010 = vmatprep.subr.bf16.mxu0 0
    %2011 = vmatpush1.bf16.msra.mxu0 %v1983
    %2012 = vmatprep.subr.bf16.mxu0 0
    %2013 = vmatpush1.bf16.msra.mxu0 %v1982
    %2014 = vmatprep.subr.bf16.mxu0 0
    %2015 = vmatpush2.bf16.msra.mxu0 0
    %2016 = vmatprep.subr.bf16.mxu0 0
    %2017 = vmatpush2.bf16.msra.mxu0 0
    %2018 = vmatprep.subr.bf16.mxu0 0
    %2019 = vmatpush2.bf16.msra.mxu0 0
    %2020 = vmatprep.subr.bf16.mxu0 0
    %2021 = vmatpush2.bf16.msra.mxu0 0
    %2022 = vmatprep.subr.bf16.mxu0 0
    %2023 = vmatpush2.bf16.msra.mxu0 0
    %2024 = vmatprep.subr.bf16.mxu0 0
    %2025 = vmatpush2.bf16.msra.mxu0 0
    %2026 = vmatprep.subr.bf16.mxu0 0
    %2027 = vmatpush2.bf16.msra.mxu0 0
    %2028 = vmatprep.subr.bf16.mxu0 0
    %2029 = vmatpush2.bf16.msra.mxu0 0
    %2030 = vmatprep.mubr.bf16.mxu0 0
    %2031 = vmatmul.mubr.bf16.gmra.mxu0 %v1987
    %v2032 = vpop.f32.mrf.mxu0
    %v2033 = vadd.f32 %v1972, %v2032
    %v2034 = vpop.f32.mrf.mxu0
    %v2035 = vpop.f32.mrf.mxu0
    %v2036 = vadd.f32 %v1972, %v2035
    %v2037 = vpop.f32.mrf.mxu0
    %2038 = vmatprep.mubr.bf16.mxu0 0
    %2039 = vmatmul.mubr.bf16.gmra.mxu0 %v1990
    %v2040 = vpop.f32.mrf.mxu0
    %v2041 = vadd.f32 %v1972, %v2040
    %v2042 = vpop.f32.mrf.mxu0
    %v2043 = vpop.f32.mrf.mxu0
    %v2044 = vadd.f32 %v1972, %v2043
    %v2045 = vpop.f32.mrf.mxu0
    %2046 = vmatprep.mubr.bf16.mxu0 0
    %2047 = vmatmul.mubr.bf16.gmra.mxu0 %v1993
    %v2048 = vpop.f32.mrf.mxu0
    %v2049 = vadd.f32 %v1972, %v2048
    %v2050 = vpop.f32.mrf.mxu0
    %v2051 = vpop.f32.mrf.mxu0
    %v2052 = vadd.f32 %v1972, %v2051
    %v2053 = vpop.f32.mrf.mxu0
    %2054 = vmatprep.mubr.bf16.mxu0 0
    %2055 = vmatmul.mubr.bf16.gmra.mxu0 %v1996
    %v2056 = vpop.f32.mrf.mxu0
    %v2057 = vadd.f32 %v1972, %v2056
    %v2058 = vpop.f32.mrf.mxu0
    %v2059 = vpop.f32.mrf.mxu0
    %v2060 = vadd.f32 %v1972, %v2059
    %v2061 = vpop.f32.mrf.mxu0
    %2062 = vdwg.mxu0
    %2063 = vst [vmem:[#allocation4] sm:$0xff] %v2033
    %2064 = vst [vmem:[#allocation4 + $0x8] sm:$0xff] %v2036
    %2065 = vst [vmem:[#allocation4 + $0x10] sm:$0xff] %v2041
    %2066 = vst [vmem:[#allocation4 + $0x18] sm:$0xff] %v2044
    %2067 = vst [vmem:[#allocation4 + $0x20] sm:$0xff] %v2049
    %2068 = vst [vmem:[#allocation4 + $0x28] sm:$0xff] %v2052
    %2069 = vst [vmem:[#allocation4 + $0x30] sm:$0xff] %v2057
    %2070 = vst [vmem:[#allocation4 + $0x38] sm:$0xff] %v2060
    %s2071 = scalar_lea.vmem %s3, 64
    %v2072 = vld [vmem:[%s2071] sm:$0xff]
    %v2073 = vld [vmem:[%s2071 + $0x8] sm:$0xff]
    %v2074 = vld [vmem:[%s2071 + $0x10] sm:$0xff]
    %v2075 = vld [vmem:[%s2071 + $0x18] sm:$0xff]
    %v2076 = vld [vmem:[#allocation4] sm:$0xff]
    %2077 = vmatprep.subr.mxu0 0.0
    %2078 = vmatpush1.msra.mxu0 0.0
    %2079 = vmatprep.subr.mxu0 0.0
    %2080 = vmatpush1.msra.mxu0 0.0
    %2081 = vmatprep.subr.mxu0 0.0
    %2082 = vmatpush1.msra.mxu0 0.0
    %2083 = vmatprep.subr.mxu0 0.0
    %2084 = vmatpush1.msra.mxu0 0.0
    %2085 = vmatprep.subr.mxu0 0.0
    %2086 = vmatpush1.msra.mxu0 0.0
    %2087 = vmatprep.subr.mxu0 0.0
    %2088 = vmatpush1.msra.mxu0 0.0
    %2089 = vmatprep.subr.mxu0 0.0
    %2090 = vmatpush1.msra.mxu0 0.0
    %2091 = vmatprep.subr.mxu0 0.0
    %2092 = vmatpush1.msra.mxu0 0.0
    %2093 = vmatprep.subr.mxu0 0.0
    %2094 = vmatpush1.msra.mxu0 0.0
    %2095 = vmatprep.subr.mxu0 0.0
    %2096 = vmatpush1.msra.mxu0 0.0
    %2097 = vmatprep.subr.mxu0 0.0
    %2098 = vmatpush1.msra.mxu0 0.0
    %2099 = vmatprep.subr.mxu0 0.0
    %2100 = vmatpush1.msra.mxu0 0.0
    %2101 = vmatprep.subr.mxu0 0.0
    %2102 = vmatpush1.msra.mxu0 %v2075
    %2103 = vmatprep.subr.mxu0 0.0
    %2104 = vmatpush1.msra.mxu0 %v2074
    %2105 = vmatprep.subr.mxu0 0.0
    %2106 = vmatpush1.msra.mxu0 %v2073
    %2107 = vmatprep.subr.mxu0 0.0
    %2108 = vmatpush1.msra.mxu0 %v2072
    %2109 = vmatprep.subr.mxu0 0.0
    %2110 = vmatpush2.msra.mxu0 0.0
    %2111 = vmatprep.subr.mxu0 0.0
    %2112 = vmatpush2.msra.mxu0 0.0
    %2113 = vmatprep.subr.mxu0 0.0
    %2114 = vmatpush2.msra.mxu0 0.0
    %2115 = vmatprep.subr.mxu0 0.0
    %2116 = vmatpush2.msra.mxu0 0.0
    %2117 = vmatprep.subr.mxu0 0.0
    %2118 = vmatpush2.msra.mxu0 0.0
    %2119 = vmatprep.subr.mxu0 0.0
    %2120 = vmatpush2.msra.mxu0 0.0
    %2121 = vmatprep.subr.mxu0 0.0
    %2122 = vmatpush2.msra.mxu0 0.0
    %2123 = vmatprep.subr.mxu0 0.0
    %2124 = vmatpush2.msra.mxu0 0.0
    %2125 = vmatprep.subr.mxu0 0.0
    %2126 = vmatpush2.msra.mxu0 0.0
    %2127 = vmatprep.subr.mxu0 0.0
    %2128 = vmatpush2.msra.mxu0 0.0
    %2129 = vmatprep.subr.mxu0 0.0
    %2130 = vmatpush2.msra.mxu0 0.0
    %2131 = vmatprep.subr.mxu0 0.0
    %2132 = vmatpush2.msra.mxu0 0.0
    %2133 = vmatprep.subr.mxu0 0.0
    %2134 = vmatpush2.msra.mxu0 0.0
    %2135 = vmatprep.subr.mxu0 0.0
    %2136 = vmatpush2.msra.mxu0 0.0
    %2137 = vmatprep.subr.mxu0 0.0
    %2138 = vmatpush2.msra.mxu0 0.0
    %2139 = vmatprep.subr.mxu0 0.0
    %2140 = vmatpush2.msra.mxu0 0.0
    %2141 = vmatprep.mubr.f32.mxu0 0.0
    %2142 = vmatmul.mubr.f32.gmra.mxu0 %v177
    %v2143 = vpop.f32.mrf.mxu0
    %v2144 = vadd.f32 0.0, %v2143
    %v2145 = vpop.f32.mrf.mxu0
    %2146 = vdwg.mxu0
    %v2147 = vadd.f32 %v2076, %v2144
    %v2148 = vsub.f32 0.0, %v2147
    %v2149 = vmin.f32 %v2148, 80.0
    %v2150 = vmul.f32 %v2149, 1.442695
    %v2151 = vpow.pop %v2150
    %v2152 = vadd.f32 %v2151, 1.0
    %v2153 = vrcp.pop %v2152
    %v2154 = vtanh.pop %v2147
    %v2155 = vmul.f32 %v2153, 0.0
    %2157 = vrot.lane.b32.xlu0 %v2154, 32
    %v2158 = vpop.permute.xlu0 %2157
    %v2160 = vmul.f32 %v2153, %v2158
    %2162 = vrot.lane.b32.xlu0 %v2160, 32
    %v2163 = vpop.permute.xlu0 %2162
    %v2165 = vadd.f32 %v2155, %v2163
    %v2166 = vtanh.pop %v2165
    %2168 = vrot.lane.b32.xlu0 %v2166, 32
    %v2169 = vpop.permute.xlu0 %2168
    %v2171 = vmul.f32 %v2153, %v2169
    %2173 = vrot.lane.b32.xlu0 %v2171, 64
    %v2174 = vpop.permute.xlu0 %2173
    %2176 = vst.msk [vmem:[#allocation3] sm:$0xff] %vm85, %v2174
    %v2177 = vld [vmem:[#allocation4 + $0x8] sm:$0xff]
    %v2178 = vsel %vm85, %v2174, 0
    %2180 = vmatprep.subr.mxu0 0.0
    %2181 = vmatpush1.msra.mxu0 0.0
    %2182 = vmatprep.subr.mxu0 0.0
    %2183 = vmatpush1.msra.mxu0 0.0
    %2184 = vmatprep.subr.mxu0 0.0
    %2185 = vmatpush1.msra.mxu0 0.0
    %2186 = vmatprep.subr.mxu0 0.0
    %2187 = vmatpush1.msra.mxu0 0.0
    %2188 = vmatprep.subr.mxu0 0.0
    %2189 = vmatpush1.msra.mxu0 0.0
    %2190 = vmatprep.subr.mxu0 0.0
    %2191 = vmatpush1.msra.mxu0 0.0
    %2192 = vmatprep.subr.mxu0 0.0
    %2193 = vmatpush1.msra.mxu0 0.0
    %2194 = vmatprep.subr.mxu0 0.0
    %2195 = vmatpush1.msra.mxu0 0.0
    %2196 = vmatprep.subr.mxu0 0.0
    %2197 = vmatpush1.msra.mxu0 0.0
    %2198 = vmatprep.subr.mxu0 0.0
    %2199 = vmatpush1.msra.mxu0 0.0
    %2200 = vmatprep.subr.mxu0 0.0
    %2201 = vmatpush1.msra.mxu0 0.0
    %2202 = vmatprep.subr.mxu0 0.0
    %2203 = vmatpush1.msra.mxu0 0.0
    %2204 = vmatprep.subr.mxu0 0.0
    %2205 = vmatpush1.msra.mxu0 %v2075
    %2206 = vmatprep.subr.mxu0 0.0
    %2207 = vmatpush1.msra.mxu0 %v2074
    %2208 = vmatprep.subr.mxu0 0.0
    %2209 = vmatpush1.msra.mxu0 %v2073
    %2210 = vmatprep.subr.mxu0 0.0
    %2211 = vmatpush1.msra.mxu0 %v2072
    %2212 = vmatprep.subr.mxu0 0.0
    %2213 = vmatpush2.msra.mxu0 0.0
    %2214 = vmatprep.subr.mxu0 0.0
    %2215 = vmatpush2.msra.mxu0 0.0
    %2216 = vmatprep.subr.mxu0 0.0
    %2217 = vmatpush2.msra.mxu0 0.0
    %2218 = vmatprep.subr.mxu0 0.0
    %2219 = vmatpush2.msra.mxu0 0.0
    %2220 = vmatprep.subr.mxu0 0.0
    %2221 = vmatpush2.msra.mxu0 0.0
    %2222 = vmatprep.subr.mxu0 0.0
    %2223 = vmatpush2.msra.mxu0 0.0
    %2224 = vmatprep.subr.mxu0 0.0
    %2225 = vmatpush2.msra.mxu0 0.0
    %2226 = vmatprep.subr.mxu0 0.0
    %2227 = vmatpush2.msra.mxu0 0.0
    %2228 = vmatprep.subr.mxu0 0.0
    %2229 = vmatpush2.msra.mxu0 0.0
    %2230 = vmatprep.subr.mxu0 0.0
    %2231 = vmatpush2.msra.mxu0 0.0
    %2232 = vmatprep.subr.mxu0 0.0
    %2233 = vmatpush2.msra.mxu0 0.0
    %2234 = vmatprep.subr.mxu0 0.0
    %2235 = vmatpush2.msra.mxu0 0.0
    %2236 = vmatprep.subr.mxu0 0.0
    %2237 = vmatpush2.msra.mxu0 0.0
    %2238 = vmatprep.subr.mxu0 0.0
    %2239 = vmatpush2.msra.mxu0 0.0
    %2240 = vmatprep.subr.mxu0 0.0
    %2241 = vmatpush2.msra.mxu0 0.0
    %2242 = vmatprep.subr.mxu0 0.0
    %2243 = vmatpush2.msra.mxu0 0.0
    %2244 = vmatprep.mubr.f32.mxu0 0.0
    %2245 = vmatmul.mubr.f32.gmra.mxu0 %v2178
    %v2246 = vpop.f32.mrf.mxu0
    %v2247 = vadd.f32 0.0, %v2246
    %v2248 = vpop.f32.mrf.mxu0
    %2249 = vdwg.mxu0
    %v2250 = vadd.f32 %v2177, %v2247
    %v2251 = vsub.f32 0.0, %v2250
    %v2252 = vmin.f32 %v2251, 80.0
    %v2253 = vmul.f32 %v2252, 1.442695
    %v2254 = vpow.pop %v2253
    %v2255 = vadd.f32 %v2254, 1.0
    %v2256 = vrcp.pop %v2255
    %v2257 = vtanh.pop %v2250
    %v2258 = vmul.f32 %v2256, %v2165
    %2260 = vrot.lane.b32.xlu0 %v2257, 32
    %v2261 = vpop.permute.xlu0 %2260
    %v2263 = vmul.f32 %v2256, %v2261
    %2265 = vrot.lane.b32.xlu0 %v2263, 32
    %v2266 = vpop.permute.xlu0 %2265
    %v2268 = vadd.f32 %v2258, %v2266
    %v2269 = vtanh.pop %v2268
    %2271 = vrot.lane.b32.xlu0 %v2269, 32
    %v2272 = vpop.permute.xlu0 %2271
    %v2274 = vmul.f32 %v2256, %v2272
    %2276 = vrot.lane.b32.xlu0 %v2274, 64
    %v2277 = vpop.permute.xlu0 %2276
    %2279 = vst.msk [vmem:[#allocation3 + $0x8] sm:$0xff] %vm85, %v2277
    %v2280 = vld [vmem:[#allocation4 + $0x10] sm:$0xff]
    %v2281 = vsel %vm85, %v2277, 0
    %2283 = vmatprep.subr.mxu0 0.0
    %2284 = vmatpush1.msra.mxu0 0.0
    %2285 = vmatprep.subr.mxu0 0.0
    %2286 = vmatpush1.msra.mxu0 0.0
    %2287 = vmatprep.subr.mxu0 0.0
    %2288 = vmatpush1.msra.mxu0 0.0
    %2289 = vmatprep.subr.mxu0 0.0
    %2290 = vmatpush1.msra.mxu0 0.0
    %2291 = vmatprep.subr.mxu0 0.0
    %2292 = vmatpush1.msra.mxu0 0.0
    %2293 = vmatprep.subr.mxu0 0.0
    %2294 = vmatpush1.msra.mxu0 0.0
    %2295 = vmatprep.subr.mxu0 0.0
    %2296 = vmatpush1.msra.mxu0 0.0
    %2297 = vmatprep.subr.mxu0 0.0
    %2298 = vmatpush1.msra.mxu0 0.0
    %2299 = vmatprep.subr.mxu0 0.0
    %2300 = vmatpush1.msra.mxu0 0.0
    %2301 = vmatprep.subr.mxu0 0.0
    %2302 = vmatpush1.msra.mxu0 0.0
    %2303 = vmatprep.subr.mxu0 0.0
    %2304 = vmatpush1.msra.mxu0 0.0
    %2305 = vmatprep.subr.mxu0 0.0
    %2306 = vmatpush1.msra.mxu0 0.0
    %2307 = vmatprep.subr.mxu0 0.0
    %2308 = vmatpush1.msra.mxu0 %v2075
    %2309 = vmatprep.subr.mxu0 0.0
    %2310 = vmatpush1.msra.mxu0 %v2074
    %2311 = vmatprep.subr.mxu0 0.0
    %2312 = vmatpush1.msra.mxu0 %v2073
    %2313 = vmatprep.subr.mxu0 0.0
    %2314 = vmatpush1.msra.mxu0 %v2072
    %2315 = vmatprep.subr.mxu0 0.0
    %2316 = vmatpush2.msra.mxu0 0.0
    %2317 = vmatprep.subr.mxu0 0.0
    %2318 = vmatpush2.msra.mxu0 0.0
    %2319 = vmatprep.subr.mxu0 0.0
    %2320 = vmatpush2.msra.mxu0 0.0
    %2321 = vmatprep.subr.mxu0 0.0
    %2322 = vmatpush2.msra.mxu0 0.0
    %2323 = vmatprep.subr.mxu0 0.0
    %2324 = vmatpush2.msra.mxu0 0.0
    %2325 = vmatprep.subr.mxu0 0.0
    %2326 = vmatpush2.msra.mxu0 0.0
    %2327 = vmatprep.subr.mxu0 0.0
    %2328 = vmatpush2.msra.mxu0 0.0
    %2329 = vmatprep.subr.mxu0 0.0
    %2330 = vmatpush2.msra.mxu0 0.0
    %2331 = vmatprep.subr.mxu0 0.0
    %2332 = vmatpush2.msra.mxu0 0.0
    %2333 = vmatprep.subr.mxu0 0.0
    %2334 = vmatpush2.msra.mxu0 0.0
    %2335 = vmatprep.subr.mxu0 0.0
    %2336 = vmatpush2.msra.mxu0 0.0
    %2337 = vmatprep.subr.mxu0 0.0
    %2338 = vmatpush2.msra.mxu0 0.0
    %2339 = vmatprep.subr.mxu0 0.0
    %2340 = vmatpush2.msra.mxu0 0.0
    %2341 = vmatprep.subr.mxu0 0.0
    %2342 = vmatpush2.msra.mxu0 0.0
    %2343 = vmatprep.subr.mxu0 0.0
    %2344 = vmatpush2.msra.mxu0 0.0
    %2345 = vmatprep.subr.mxu0 0.0
    %2346 = vmatpush2.msra.mxu0 0.0
    %2347 = vmatprep.mubr.f32.mxu0 0.0
    %2348 = vmatmul.mubr.f32.gmra.mxu0 %v2281
    %v2349 = vpop.f32.mrf.mxu0
    %v2350 = vadd.f32 0.0, %v2349
    %v2351 = vpop.f32.mrf.mxu0
    %2352 = vdwg.mxu0
    %v2353 = vadd.f32 %v2280, %v2350
    %v2354 = vsub.f32 0.0, %v2353
    %v2355 = vmin.f32 %v2354, 80.0
    %v2356 = vmul.f32 %v2355, 1.442695
    %v2357 = vpow.pop %v2356
    %v2358 = vadd.f32 %v2357, 1.0
    %v2359 = vrcp.pop %v2358
    %v2360 = vtanh.pop %v2353
    %v2361 = vmul.f32 %v2359, %v2268
    %2363 = vrot.lane.b32.xlu0 %v2360, 32
    %v2364 = vpop.permute.xlu0 %2363
    %v2366 = vmul.f32 %v2359, %v2364
    %2368 = vrot.lane.b32.xlu0 %v2366, 32
    %v2369 = vpop.permute.xlu0 %2368
    %v2371 = vadd.f32 %v2361, %v2369
    %v2372 = vtanh.pop %v2371
    %2374 = vrot.lane.b32.xlu0 %v2372, 32
    %v2375 = vpop.permute.xlu0 %2374
    %v2377 = vmul.f32 %v2359, %v2375
    %2379 = vrot.lane.b32.xlu0 %v2377, 64
    %v2380 = vpop.permute.xlu0 %2379
    %2382 = vst.msk [vmem:[#allocation3 + $0x10] sm:$0xff] %vm85, %v2380
    %v2383 = vld [vmem:[#allocation4 + $0x18] sm:$0xff]
    %v2384 = vsel %vm85, %v2380, 0
    %2386 = vmatprep.subr.mxu0 0.0
    %2387 = vmatpush1.msra.mxu0 0.0
    %2388 = vmatprep.subr.mxu0 0.0
    %2389 = vmatpush1.msra.mxu0 0.0
    %2390 = vmatprep.subr.mxu0 0.0
    %2391 = vmatpush1.msra.mxu0 0.0
    %2392 = vmatprep.subr.mxu0 0.0
    %2393 = vmatpush1.msra.mxu0 0.0
    %2394 = vmatprep.subr.mxu0 0.0
    %2395 = vmatpush1.msra.mxu0 0.0
    %2396 = vmatprep.subr.mxu0 0.0
    %2397 = vmatpush1.msra.mxu0 0.0
    %2398 = vmatprep.subr.mxu0 0.0
    %2399 = vmatpush1.msra.mxu0 0.0
    %2400 = vmatprep.subr.mxu0 0.0
    %2401 = vmatpush1.msra.mxu0 0.0
    %2402 = vmatprep.subr.mxu0 0.0
    %2403 = vmatpush1.msra.mxu0 0.0
    %2404 = vmatprep.subr.mxu0 0.0
    %2405 = vmatpush1.msra.mxu0 0.0
    %2406 = vmatprep.subr.mxu0 0.0
    %2407 = vmatpush1.msra.mxu0 0.0
    %2408 = vmatprep.subr.mxu0 0.0
    %2409 = vmatpush1.msra.mxu0 0.0
    %2410 = vmatprep.subr.mxu0 0.0
    %2411 = vmatpush1.msra.mxu0 %v2075
    %2412 = vmatprep.subr.mxu0 0.0
    %2413 = vmatpush1.msra.mxu0 %v2074
    %2414 = vmatprep.subr.mxu0 0.0
    %2415 = vmatpush1.msra.mxu0 %v2073
    %2416 = vmatprep.subr.mxu0 0.0
    %2417 = vmatpush1.msra.mxu0 %v2072
    %2418 = vmatprep.subr.mxu0 0.0
    %2419 = vmatpush2.msra.mxu0 0.0
    %2420 = vmatprep.subr.mxu0 0.0
    %2421 = vmatpush2.msra.mxu0 0.0
    %2422 = vmatprep.subr.mxu0 0.0
    %2423 = vmatpush2.msra.mxu0 0.0
    %2424 = vmatprep.subr.mxu0 0.0
    %2425 = vmatpush2.msra.mxu0 0.0
    %2426 = vmatprep.subr.mxu0 0.0
    %2427 = vmatpush2.msra.mxu0 0.0
    %2428 = vmatprep.subr.mxu0 0.0
    %2429 = vmatpush2.msra.mxu0 0.0
    %2430 = vmatprep.subr.mxu0 0.0
    %2431 = vmatpush2.msra.mxu0 0.0
    %2432 = vmatprep.subr.mxu0 0.0
    %2433 = vmatpush2.msra.mxu0 0.0
    %2434 = vmatprep.subr.mxu0 0.0
    %2435 = vmatpush2.msra.mxu0 0.0
    %2436 = vmatprep.subr.mxu0 0.0
    %2437 = vmatpush2.msra.mxu0 0.0
    %2438 = vmatprep.subr.mxu0 0.0
    %2439 = vmatpush2.msra.mxu0 0.0
    %2440 = vmatprep.subr.mxu0 0.0
    %2441 = vmatpush2.msra.mxu0 0.0
    %2442 = vmatprep.subr.mxu0 0.0
    %2443 = vmatpush2.msra.mxu0 0.0
    %2444 = vmatprep.subr.mxu0 0.0
    %2445 = vmatpush2.msra.mxu0 0.0
    %2446 = vmatprep.subr.mxu0 0.0
    %2447 = vmatpush2.msra.mxu0 0.0
    %2448 = vmatprep.subr.mxu0 0.0
    %2449 = vmatpush2.msra.mxu0 0.0
    %2450 = vmatprep.mubr.f32.mxu0 0.0
    %2451 = vmatmul.mubr.f32.gmra.mxu0 %v2384
    %v2452 = vpop.f32.mrf.mxu0
    %v2453 = vadd.f32 0.0, %v2452
    %v2454 = vpop.f32.mrf.mxu0
    %2455 = vdwg.mxu0
    %v2456 = vadd.f32 %v2383, %v2453
    %v2457 = vsub.f32 0.0, %v2456
    %v2458 = vmin.f32 %v2457, 80.0
    %v2459 = vmul.f32 %v2458, 1.442695
    %v2460 = vpow.pop %v2459
    %v2461 = vadd.f32 %v2460, 1.0
    %v2462 = vrcp.pop %v2461
    %v2463 = vtanh.pop %v2456
    %v2464 = vmul.f32 %v2462, %v2371
    %2466 = vrot.lane.b32.xlu0 %v2463, 32
    %v2467 = vpop.permute.xlu0 %2466
    %v2469 = vmul.f32 %v2462, %v2467
    %2471 = vrot.lane.b32.xlu0 %v2469, 32
    %v2472 = vpop.permute.xlu0 %2471
    %v2474 = vadd.f32 %v2464, %v2472
    %v2475 = vtanh.pop %v2474
    %2477 = vrot.lane.b32.xlu0 %v2475, 32
    %v2478 = vpop.permute.xlu0 %2477
    %v2480 = vmul.f32 %v2462, %v2478
    %2482 = vrot.lane.b32.xlu0 %v2480, 64
    %v2483 = vpop.permute.xlu0 %2482
    %2485 = vst.msk [vmem:[#allocation3 + $0x18] sm:$0xff] %vm85, %v2483
    %v2486 = vld [vmem:[#allocation4 + $0x20] sm:$0xff]
    %v2487 = vsel %vm85, %v2483, 0
    %2489 = vmatprep.subr.mxu0 0.0
    %2490 = vmatpush1.msra.mxu0 0.0
    %2491 = vmatprep.subr.mxu0 0.0
    %2492 = vmatpush1.msra.mxu0 0.0
    %2493 = vmatprep.subr.mxu0 0.0
    %2494 = vmatpush1.msra.mxu0 0.0
    %2495 = vmatprep.subr.mxu0 0.0
    %2496 = vmatpush1.msra.mxu0 0.0
    %2497 = vmatprep.subr.mxu0 0.0
    %2498 = vmatpush1.msra.mxu0 0.0
    %2499 = vmatprep.subr.mxu0 0.0
    %2500 = vmatpush1.msra.mxu0 0.0
    %2501 = vmatprep.subr.mxu0 0.0
    %2502 = vmatpush1.msra.mxu0 0.0
    %2503 = vmatprep.subr.mxu0 0.0
    %2504 = vmatpush1.msra.mxu0 0.0
    %2505 = vmatprep.subr.mxu0 0.0
    %2506 = vmatpush1.msra.mxu0 0.0
    %2507 = vmatprep.subr.mxu0 0.0
    %2508 = vmatpush1.msra.mxu0 0.0
    %2509 = vmatprep.subr.mxu0 0.0
    %2510 = vmatpush1.msra.mxu0 0.0
    %2511 = vmatprep.subr.mxu0 0.0
    %2512 = vmatpush1.msra.mxu0 0.0
    %2513 = vmatprep.subr.mxu0 0.0
    %2514 = vmatpush1.msra.mxu0 %v2075
    %2515 = vmatprep.subr.mxu0 0.0
    %2516 = vmatpush1.msra.mxu0 %v2074
    %2517 = vmatprep.subr.mxu0 0.0
    %2518 = vmatpush1.msra.mxu0 %v2073
    %2519 = vmatprep.subr.mxu0 0.0
    %2520 = vmatpush1.msra.mxu0 %v2072
    %2521 = vmatprep.subr.mxu0 0.0
    %2522 = vmatpush2.msra.mxu0 0.0
    %2523 = vmatprep.subr.mxu0 0.0
    %2524 = vmatpush2.msra.mxu0 0.0
    %2525 = vmatprep.subr.mxu0 0.0
    %2526 = vmatpush2.msra.mxu0 0.0
    %2527 = vmatprep.subr.mxu0 0.0
    %2528 = vmatpush2.msra.mxu0 0.0
    %2529 = vmatprep.subr.mxu0 0.0
    %2530 = vmatpush2.msra.mxu0 0.0
    %2531 = vmatprep.subr.mxu0 0.0
    %2532 = vmatpush2.msra.mxu0 0.0
    %2533 = vmatprep.subr.mxu0 0.0
    %2534 = vmatpush2.msra.mxu0 0.0
    %2535 = vmatprep.subr.mxu0 0.0
    %2536 = vmatpush2.msra.mxu0 0.0
    %2537 = vmatprep.subr.mxu0 0.0
    %2538 = vmatpush2.msra.mxu0 0.0
    %2539 = vmatprep.subr.mxu0 0.0
    %2540 = vmatpush2.msra.mxu0 0.0
    %2541 = vmatprep.subr.mxu0 0.0
    %2542 = vmatpush2.msra.mxu0 0.0
    %2543 = vmatprep.subr.mxu0 0.0
    %2544 = vmatpush2.msra.mxu0 0.0
    %2545 = vmatprep.subr.mxu0 0.0
    %2546 = vmatpush2.msra.mxu0 0.0
    %2547 = vmatprep.subr.mxu0 0.0
    %2548 = vmatpush2.msra.mxu0 0.0
    %2549 = vmatprep.subr.mxu0 0.0
    %2550 = vmatpush2.msra.mxu0 0.0
    %2551 = vmatprep.subr.mxu0 0.0
    %2552 = vmatpush2.msra.mxu0 0.0
    %2553 = vmatprep.mubr.f32.mxu0 0.0
    %2554 = vmatmul.mubr.f32.gmra.mxu0 %v2487
    %v2555 = vpop.f32.mrf.mxu0
    %v2556 = vadd.f32 0.0, %v2555
    %v2557 = vpop.f32.mrf.mxu0
    %2558 = vdwg.mxu0
    %v2559 = vadd.f32 %v2486, %v2556
    %v2560 = vsub.f32 0.0, %v2559
    %v2561 = vmin.f32 %v2560, 80.0
    %v2562 = vmul.f32 %v2561, 1.442695
    %v2563 = vpow.pop %v2562
    %v2564 = vadd.f32 %v2563, 1.0
    %v2565 = vrcp.pop %v2564
    %v2566 = vtanh.pop %v2559
    %v2567 = vmul.f32 %v2565, %v2474
    %2569 = vrot.lane.b32.xlu0 %v2566, 32
    %v2570 = vpop.permute.xlu0 %2569
    %v2572 = vmul.f32 %v2565, %v2570
    %2574 = vrot.lane.b32.xlu0 %v2572, 32
    %v2575 = vpop.permute.xlu0 %2574
    %v2577 = vadd.f32 %v2567, %v2575
    %v2578 = vtanh.pop %v2577
    %2580 = vrot.lane.b32.xlu0 %v2578, 32
    %v2581 = vpop.permute.xlu0 %2580
    %v2583 = vmul.f32 %v2565, %v2581
    %2585 = vrot.lane.b32.xlu0 %v2583, 64
    %v2586 = vpop.permute.xlu0 %2585
    %2588 = vst.msk [vmem:[#allocation3 + $0x20] sm:$0xff] %vm85, %v2586
    %v2589 = vld [vmem:[#allocation4 + $0x28] sm:$0xff]
    %v2590 = vsel %vm85, %v2586, 0
    %2592 = vmatprep.subr.mxu0 0.0
    %2593 = vmatpush1.msra.mxu0 0.0
    %2594 = vmatprep.subr.mxu0 0.0
    %2595 = vmatpush1.msra.mxu0 0.0
    %2596 = vmatprep.subr.mxu0 0.0
    %2597 = vmatpush1.msra.mxu0 0.0
    %2598 = vmatprep.subr.mxu0 0.0
    %2599 = vmatpush1.msra.mxu0 0.0
    %2600 = vmatprep.subr.mxu0 0.0
    %2601 = vmatpush1.msra.mxu0 0.0
    %2602 = vmatprep.subr.mxu0 0.0
    %2603 = vmatpush1.msra.mxu0 0.0
    %2604 = vmatprep.subr.mxu0 0.0
    %2605 = vmatpush1.msra.mxu0 0.0
    %2606 = vmatprep.subr.mxu0 0.0
    %2607 = vmatpush1.msra.mxu0 0.0
    %2608 = vmatprep.subr.mxu0 0.0
    %2609 = vmatpush1.msra.mxu0 0.0
    %2610 = vmatprep.subr.mxu0 0.0
    %2611 = vmatpush1.msra.mxu0 0.0
    %2612 = vmatprep.subr.mxu0 0.0
    %2613 = vmatpush1.msra.mxu0 0.0
    %2614 = vmatprep.subr.mxu0 0.0
    %2615 = vmatpush1.msra.mxu0 0.0
    %2616 = vmatprep.subr.mxu0 0.0
    %2617 = vmatpush1.msra.mxu0 %v2075
    %2618 = vmatprep.subr.mxu0 0.0
    %2619 = vmatpush1.msra.mxu0 %v2074
    %2620 = vmatprep.subr.mxu0 0.0
    %2621 = vmatpush1.msra.mxu0 %v2073
    %2622 = vmatprep.subr.mxu0 0.0
    %2623 = vmatpush1.msra.mxu0 %v2072
    %2624 = vmatprep.subr.mxu0 0.0
    %2625 = vmatpush2.msra.mxu0 0.0
    %2626 = vmatprep.subr.mxu0 0.0
    %2627 = vmatpush2.msra.mxu0 0.0
    %2628 = vmatprep.subr.mxu0 0.0
    %2629 = vmatpush2.msra.mxu0 0.0
    %2630 = vmatprep.subr.mxu0 0.0
    %2631 = vmatpush2.msra.mxu0 0.0
    %2632 = vmatprep.subr.mxu0 0.0
    %2633 = vmatpush2.msra.mxu0 0.0
    %2634 = vmatprep.subr.mxu0 0.0
    %2635 = vmatpush2.msra.mxu0 0.0
    %2636 = vmatprep.subr.mxu0 0.0
    %2637 = vmatpush2.msra.mxu0 0.0
    %2638 = vmatprep.subr.mxu0 0.0
    %2639 = vmatpush2.msra.mxu0 0.0
    %2640 = vmatprep.subr.mxu0 0.0
    %2641 = vmatpush2.msra.mxu0 0.0
    %2642 = vmatprep.subr.mxu0 0.0
    %2643 = vmatpush2.msra.mxu0 0.0
    %2644 = vmatprep.subr.mxu0 0.0
    %2645 = vmatpush2.msra.mxu0 0.0
    %2646 = vmatprep.subr.mxu0 0.0
    %2647 = vmatpush2.msra.mxu0 0.0
    %2648 = vmatprep.subr.mxu0 0.0
    %2649 = vmatpush2.msra.mxu0 0.0
    %2650 = vmatprep.subr.mxu0 0.0
    %2651 = vmatpush2.msra.mxu0 0.0
    %2652 = vmatprep.subr.mxu0 0.0
    %2653 = vmatpush2.msra.mxu0 0.0
    %2654 = vmatprep.subr.mxu0 0.0
    %2655 = vmatpush2.msra.mxu0 0.0
    %2656 = vmatprep.mubr.f32.mxu0 0.0
    %2657 = vmatmul.mubr.f32.gmra.mxu0 %v2590
    %v2658 = vpop.f32.mrf.mxu0
    %v2659 = vadd.f32 0.0, %v2658
    %v2660 = vpop.f32.mrf.mxu0
    %2661 = vdwg.mxu0
    %v2662 = vadd.f32 %v2589, %v2659
    %v2663 = vsub.f32 0.0, %v2662
    %v2664 = vmin.f32 %v2663, 80.0
    %v2665 = vmul.f32 %v2664, 1.442695
    %v2666 = vpow.pop %v2665
    %v2667 = vadd.f32 %v2666, 1.0
    %v2668 = vrcp.pop %v2667
    %v2669 = vtanh.pop %v2662
    %v2670 = vmul.f32 %v2668, %v2577
    %2672 = vrot.lane.b32.xlu0 %v2669, 32
    %v2673 = vpop.permute.xlu0 %2672
    %v2675 = vmul.f32 %v2668, %v2673
    %2677 = vrot.lane.b32.xlu0 %v2675, 32
    %v2678 = vpop.permute.xlu0 %2677
    %v2680 = vadd.f32 %v2670, %v2678
    %v2681 = vtanh.pop %v2680
    %2683 = vrot.lane.b32.xlu0 %v2681, 32
    %v2684 = vpop.permute.xlu0 %2683
    %v2686 = vmul.f32 %v2668, %v2684
    %2688 = vrot.lane.b32.xlu0 %v2686, 64
    %v2689 = vpop.permute.xlu0 %2688
    %2691 = vst.msk [vmem:[#allocation3 + $0x28] sm:$0xff] %vm85, %v2689
    %v2692 = vld [vmem:[#allocation4 + $0x30] sm:$0xff]
    %v2693 = vsel %vm85, %v2689, 0
    %2695 = vmatprep.subr.mxu0 0.0
    %2696 = vmatpush1.msra.mxu0 0.0
    %2697 = vmatprep.subr.mxu0 0.0
    %2698 = vmatpush1.msra.mxu0 0.0
    %2699 = vmatprep.subr.mxu0 0.0
    %2700 = vmatpush1.msra.mxu0 0.0
    %2701 = vmatprep.subr.mxu0 0.0
    %2702 = vmatpush1.msra.mxu0 0.0
    %2703 = vmatprep.subr.mxu0 0.0
    %2704 = vmatpush1.msra.mxu0 0.0
    %2705 = vmatprep.subr.mxu0 0.0
    %2706 = vmatpush1.msra.mxu0 0.0
    %2707 = vmatprep.subr.mxu0 0.0
    %2708 = vmatpush1.msra.mxu0 0.0
    %2709 = vmatprep.subr.mxu0 0.0
    %2710 = vmatpush1.msra.mxu0 0.0
    %2711 = vmatprep.subr.mxu0 0.0
    %2712 = vmatpush1.msra.mxu0 0.0
    %2713 = vmatprep.subr.mxu0 0.0
    %2714 = vmatpush1.msra.mxu0 0.0
    %2715 = vmatprep.subr.mxu0 0.0
    %2716 = vmatpush1.msra.mxu0 0.0
    %2717 = vmatprep.subr.mxu0 0.0
    %2718 = vmatpush1.msra.mxu0 0.0
    %2719 = vmatprep.subr.mxu0 0.0
    %2720 = vmatpush1.msra.mxu0 %v2075
    %2721 = vmatprep.subr.mxu0 0.0
    %2722 = vmatpush1.msra.mxu0 %v2074
    %2723 = vmatprep.subr.mxu0 0.0
    %2724 = vmatpush1.msra.mxu0 %v2073
    %2725 = vmatprep.subr.mxu0 0.0
    %2726 = vmatpush1.msra.mxu0 %v2072
    %2727 = vmatprep.subr.mxu0 0.0
    %2728 = vmatpush2.msra.mxu0 0.0
    %2729 = vmatprep.subr.mxu0 0.0
    %2730 = vmatpush2.msra.mxu0 0.0
    %2731 = vmatprep.subr.mxu0 0.0
    %2732 = vmatpush2.msra.mxu0 0.0
    %2733 = vmatprep.subr.mxu0 0.0
    %2734 = vmatpush2.msra.mxu0 0.0
    %2735 = vmatprep.subr.mxu0 0.0
    %2736 = vmatpush2.msra.mxu0 0.0
    %2737 = vmatprep.subr.mxu0 0.0
    %2738 = vmatpush2.msra.mxu0 0.0
    %2739 = vmatprep.subr.mxu0 0.0
    %2740 = vmatpush2.msra.mxu0 0.0
    %2741 = vmatprep.subr.mxu0 0.0
    %2742 = vmatpush2.msra.mxu0 0.0
    %2743 = vmatprep.subr.mxu0 0.0
    %2744 = vmatpush2.msra.mxu0 0.0
    %2745 = vmatprep.subr.mxu0 0.0
    %2746 = vmatpush2.msra.mxu0 0.0
    %2747 = vmatprep.subr.mxu0 0.0
    %2748 = vmatpush2.msra.mxu0 0.0
    %2749 = vmatprep.subr.mxu0 0.0
    %2750 = vmatpush2.msra.mxu0 0.0
    %2751 = vmatprep.subr.mxu0 0.0
    %2752 = vmatpush2.msra.mxu0 0.0
    %2753 = vmatprep.subr.mxu0 0.0
    %2754 = vmatpush2.msra.mxu0 0.0
    %2755 = vmatprep.subr.mxu0 0.0
    %2756 = vmatpush2.msra.mxu0 0.0
    %2757 = vmatprep.subr.mxu0 0.0
    %2758 = vmatpush2.msra.mxu0 0.0
    %2759 = vmatprep.mubr.f32.mxu0 0.0
    %2760 = vmatmul.mubr.f32.gmra.mxu0 %v2693
    %v2761 = vpop.f32.mrf.mxu0
    %v2762 = vadd.f32 0.0, %v2761
    %v2763 = vpop.f32.mrf.mxu0
    %2764 = vdwg.mxu0
    %v2765 = vadd.f32 %v2692, %v2762
    %v2766 = vsub.f32 0.0, %v2765
    %v2767 = vmin.f32 %v2766, 80.0
    %v2768 = vmul.f32 %v2767, 1.442695
    %v2769 = vpow.pop %v2768
    %v2770 = vadd.f32 %v2769, 1.0
    %v2771 = vrcp.pop %v2770
    %v2772 = vtanh.pop %v2765
    %v2773 = vmul.f32 %v2771, %v2680
    %2775 = vrot.lane.b32.xlu0 %v2772, 32
    %v2776 = vpop.permute.xlu0 %2775
    %v2778 = vmul.f32 %v2771, %v2776
    %2780 = vrot.lane.b32.xlu0 %v2778, 32
    %v2781 = vpop.permute.xlu0 %2780
    %v2783 = vadd.f32 %v2773, %v2781
    %v2784 = vtanh.pop %v2783
    %2786 = vrot.lane.b32.xlu0 %v2784, 32
    %v2787 = vpop.permute.xlu0 %2786
    %v2789 = vmul.f32 %v2771, %v2787
    %2791 = vrot.lane.b32.xlu0 %v2789, 64
    %v2792 = vpop.permute.xlu0 %2791
    %2794 = vst.msk [vmem:[#allocation3 + $0x30] sm:$0xff] %vm85, %v2792
    %v2795 = vld [vmem:[#allocation4 + $0x38] sm:$0xff]
    %v2796 = vsel %vm85, %v2792, 0
    %2798 = vmatprep.subr.mxu0 0.0
    %2799 = vmatpush1.msra.mxu0 0.0
    %2800 = vmatprep.subr.mxu0 0.0
    %2801 = vmatpush1.msra.mxu0 0.0
    %2802 = vmatprep.subr.mxu0 0.0
    %2803 = vmatpush1.msra.mxu0 0.0
    %2804 = vmatprep.subr.mxu0 0.0
    %2805 = vmatpush1.msra.mxu0 0.0
    %2806 = vmatprep.subr.mxu0 0.0
    %2807 = vmatpush1.msra.mxu0 0.0
    %2808 = vmatprep.subr.mxu0 0.0
    %2809 = vmatpush1.msra.mxu0 0.0
    %2810 = vmatprep.subr.mxu0 0.0
    %2811 = vmatpush1.msra.mxu0 0.0
    %2812 = vmatprep.subr.mxu0 0.0
    %2813 = vmatpush1.msra.mxu0 0.0
    %2814 = vmatprep.subr.mxu0 0.0
    %2815 = vmatpush1.msra.mxu0 0.0
    %2816 = vmatprep.subr.mxu0 0.0
    %2817 = vmatpush1.msra.mxu0 0.0
    %2818 = vmatprep.subr.mxu0 0.0
    %2819 = vmatpush1.msra.mxu0 0.0
    %2820 = vmatprep.subr.mxu0 0.0
    %2821 = vmatpush1.msra.mxu0 0.0
    %2822 = vmatprep.subr.mxu0 0.0
    %2823 = vmatpush1.msra.mxu0 %v2075
    %2824 = vmatprep.subr.mxu0 0.0
    %2825 = vmatpush1.msra.mxu0 %v2074
    %2826 = vmatprep.subr.mxu0 0.0
    %2827 = vmatpush1.msra.mxu0 %v2073
    %2828 = vmatprep.subr.mxu0 0.0
    %2829 = vmatpush1.msra.mxu0 %v2072
    %2830 = vmatprep.subr.mxu0 0.0
    %2831 = vmatpush2.msra.mxu0 0.0
    %2832 = vmatprep.subr.mxu0 0.0
    %2833 = vmatpush2.msra.mxu0 0.0
    %2834 = vmatprep.subr.mxu0 0.0
    %2835 = vmatpush2.msra.mxu0 0.0
    %2836 = vmatprep.subr.mxu0 0.0
    %2837 = vmatpush2.msra.mxu0 0.0
    %2838 = vmatprep.subr.mxu0 0.0
    %2839 = vmatpush2.msra.mxu0 0.0
    %2840 = vmatprep.subr.mxu0 0.0
    %2841 = vmatpush2.msra.mxu0 0.0
    %2842 = vmatprep.subr.mxu0 0.0
    %2843 = vmatpush2.msra.mxu0 0.0
    %2844 = vmatprep.subr.mxu0 0.0
    %2845 = vmatpush2.msra.mxu0 0.0
    %2846 = vmatprep.subr.mxu0 0.0
    %2847 = vmatpush2.msra.mxu0 0.0
    %2848 = vmatprep.subr.mxu0 0.0
    %2849 = vmatpush2.msra.mxu0 0.0
    %2850 = vmatprep.subr.mxu0 0.0
    %2851 = vmatpush2.msra.mxu0 0.0
    %2852 = vmatprep.subr.mxu0 0.0
    %2853 = vmatpush2.msra.mxu0 0.0
    %2854 = vmatprep.subr.mxu0 0.0
    %2855 = vmatpush2.msra.mxu0 0.0
    %2856 = vmatprep.subr.mxu0 0.0
    %2857 = vmatpush2.msra.mxu0 0.0
    %2858 = vmatprep.subr.mxu0 0.0
    %2859 = vmatpush2.msra.mxu0 0.0
    %2860 = vmatprep.subr.mxu0 0.0
    %2861 = vmatpush2.msra.mxu0 0.0
    %2862 = vmatprep.mubr.f32.mxu0 0.0
    %2863 = vmatmul.mubr.f32.gmra.mxu0 %v2796
    %v2864 = vpop.f32.mrf.mxu0
    %v2865 = vadd.f32 0.0, %v2864
    %v2866 = vpop.f32.mrf.mxu0
    %2867 = vdwg.mxu0
    %v2868 = vadd.f32 %v2795, %v2865
    %v2869 = vsub.f32 0.0, %v2868
    %v2870 = vmin.f32 %v2869, 80.0
    %v2871 = vmul.f32 %v2870, 1.442695
    %v2872 = vpow.pop %v2871
    %v2873 = vadd.f32 %v2872, 1.0
    %v2874 = vrcp.pop %v2873
    %v2875 = vtanh.pop %v2868
    %v2876 = vmul.f32 %v2874, %v2783
    %2878 = vrot.lane.b32.xlu0 %v2875, 32
    %v2879 = vpop.permute.xlu0 %2878
    %v2881 = vmul.f32 %v2874, %v2879
    %2883 = vrot.lane.b32.xlu0 %v2881, 32
    %v2884 = vpop.permute.xlu0 %2883
    %v2886 = vadd.f32 %v2876, %v2884
    %v2887 = vtanh.pop %v2886
    %2889 = vrot.lane.b32.xlu0 %v2887, 32
    %v2890 = vpop.permute.xlu0 %2889
    %v2892 = vmul.f32 %v2874, %v2890
    %2894 = vrot.lane.b32.xlu0 %v2892, 64
    %v2895 = vpop.permute.xlu0 %2894
    %2897 = vst.msk [vmem:[#allocation3 + $0x38] sm:$0xff] %vm85, %v2895
    %v2898 = vld [vmem:[#allocation3] sm:$0xff]
    %v2899 = vld [vmem:[#allocation3 + $0x8] sm:$0xff]
    %v2900 = vld [vmem:[#allocation3 + $0x10] sm:$0xff]
    %v2901 = vld [vmem:[#allocation3 + $0x18] sm:$0xff]
    %v2902 = vld [vmem:[#allocation3 + $0x20] sm:$0xff]
    %v2903 = vld [vmem:[#allocation3 + $0x28] sm:$0xff]
    %v2904 = vld [vmem:[#allocation3 + $0x30] sm:$0xff]
    %v2905 = vld [vmem:[#allocation3 + $0x38] sm:$0xff]
    %s2906 = scalar_lea.vmem [#allocation5], 48
    %v2907 = vld [vmem:[%s2906] sm:$0xf]
    %v2908 = vld [vmem:[%s2906 + $0x4] sm:$0xf]
    %v2909 = vld [vmem:[%s2906 + $0x8] sm:$0xf]
    %v2910 = vld [vmem:[%s2906 + $0xc] sm:$0xf]
    %v2911 = vpack.c.bf16 %v2899, %v2898
    %v2912 = vpack.c.bf16 %v2901, %v2900
    %v2913 = vpack.c.bf16 %v2903, %v2902
    %v2914 = vpack.c.bf16 %v2905, %v2904
    %s2915 = scalar_lea.vmem %s4, 3
    %v2916 = vld [vmem:[%s2915] sm:$0x1]
    %v2918 = vlaneseq
    %v2919 = vshrl.u32 %v2918, 7
    %v2920 = vsub.s32 0, %v2919
    %v2921 = vrot.slane %v2916, %v2920
    %v2927 = vunpack.c.l.b16 %v2907
    %v2928 = vunpack.c.l.b16 %v2908
    %v2929 = vunpack.c.l.b16 %v2909
    %v2930 = vunpack.c.l.b16 %v2910
    %v2931 = vpack.c.b16 %v2928, %v2927
    %v2932 = vpack.c.b16 %v2930, %v2929
    %v2936 = vsel %vm85, %v2911, 0
    %v2939 = vsel %vm85, %v2912, 0
    %v2942 = vsel %vm85, %v2913, 0
    %v2945 = vsel %vm85, %v2914, 0
    %2947 = vmatprep.subr.bf16.mxu0 0
    %2948 = vmatpush1.bf16.msra.mxu0 0
    %2949 = vmatprep.subr.bf16.mxu0 0
    %2950 = vmatpush1.bf16.msra.mxu0 0
    %2951 = vmatprep.subr.bf16.mxu0 0
    %2952 = vmatpush1.bf16.msra.mxu0 0
    %2953 = vmatprep.subr.bf16.mxu0 0
    %2954 = vmatpush1.bf16.msra.mxu0 0
    %2955 = vmatprep.subr.bf16.mxu0 0
    %2956 = vmatpush1.bf16.msra.mxu0 0
    %2957 = vmatprep.subr.bf16.mxu0 0
    %2958 = vmatpush1.bf16.msra.mxu0 0
    %2959 = vmatprep.subr.bf16.mxu0 0
    %2960 = vmatpush1.bf16.msra.mxu0 %v2932
    %2961 = vmatprep.subr.bf16.mxu0 0
    %2962 = vmatpush1.bf16.msra.mxu0 %v2931
    %2963 = vmatprep.subr.bf16.mxu0 0
    %2964 = vmatpush2.bf16.msra.mxu0 0
    %2965 = vmatprep.subr.bf16.mxu0 0
    %2966 = vmatpush2.bf16.msra.mxu0 0
    %2967 = vmatprep.subr.bf16.mxu0 0
    %2968 = vmatpush2.bf16.msra.mxu0 0
    %2969 = vmatprep.subr.bf16.mxu0 0
    %2970 = vmatpush2.bf16.msra.mxu0 0
    %2971 = vmatprep.subr.bf16.mxu0 0
    %2972 = vmatpush2.bf16.msra.mxu0 0
    %2973 = vmatprep.subr.bf16.mxu0 0
    %2974 = vmatpush2.bf16.msra.mxu0 0
    %2975 = vmatprep.subr.bf16.mxu0 0
    %2976 = vmatpush2.bf16.msra.mxu0 0
    %2977 = vmatprep.subr.bf16.mxu0 0
    %2978 = vmatpush2.bf16.msra.mxu0 0
    %2979 = vmatprep.mubr.bf16.mxu0 0
    %2980 = vmatmul.mubr.bf16.gmra.mxu0 %v2936
    %v2981 = vpop.f32.mrf.mxu0
    %v2982 = vadd.f32 %v2921, %v2981
    %v2983 = vpop.f32.mrf.mxu0
    %v2984 = vpop.f32.mrf.mxu0
    %v2985 = vadd.f32 %v2921, %v2984
    %v2986 = vpop.f32.mrf.mxu0
    %2987 = vmatprep.mubr.bf16.mxu0 0
    %2988 = vmatmul.mubr.bf16.gmra.mxu0 %v2939
    %v2989 = vpop.f32.mrf.mxu0
    %v2990 = vadd.f32 %v2921, %v2989
    %v2991 = vpop.f32.mrf.mxu0
    %v2992 = vpop.f32.mrf.mxu0
    %v2993 = vadd.f32 %v2921, %v2992
    %v2994 = vpop.f32.mrf.mxu0
    %2995 = vmatprep.mubr.bf16.mxu0 0
    %2996 = vmatmul.mubr.bf16.gmra.mxu0 %v2942
    %v2997 = vpop.f32.mrf.mxu0
    %v2998 = vadd.f32 %v2921, %v2997
    %v2999 = vpop.f32.mrf.mxu0
    %v3000 = vpop.f32.mrf.mxu0
    %v3001 = vadd.f32 %v2921, %v3000
    %v3002 = vpop.f32.mrf.mxu0
    %3003 = vmatprep.mubr.bf16.mxu0 0
    %3004 = vmatmul.mubr.bf16.gmra.mxu0 %v2945
    %v3005 = vpop.f32.mrf.mxu0
    %v3006 = vadd.f32 %v2921, %v3005
    %v3007 = vpop.f32.mrf.mxu0
    %v3008 = vpop.f32.mrf.mxu0
    %v3009 = vadd.f32 %v2921, %v3008
    %v3010 = vpop.f32.mrf.mxu0
    %3011 = vdwg.mxu0
    %3012 = vst [vmem:[#allocation4] sm:$0xff] %v2982
    %3013 = vst [vmem:[#allocation4 + $0x8] sm:$0xff] %v2985
    %3014 = vst [vmem:[#allocation4 + $0x10] sm:$0xff] %v2990
    %3015 = vst [vmem:[#allocation4 + $0x18] sm:$0xff] %v2993
    %3016 = vst [vmem:[#allocation4 + $0x20] sm:$0xff] %v2998
    %3017 = vst [vmem:[#allocation4 + $0x28] sm:$0xff] %v3001
    %3018 = vst [vmem:[#allocation4 + $0x30] sm:$0xff] %v3006
    %3019 = vst [vmem:[#allocation4 + $0x38] sm:$0xff] %v3009
    %s3020 = scalar_lea.vmem %s3, 96
    %v3021 = vld [vmem:[%s3020] sm:$0xff]
    %v3022 = vld [vmem:[%s3020 + $0x8] sm:$0xff]
    %v3023 = vld [vmem:[%s3020 + $0x10] sm:$0xff]
    %v3024 = vld [vmem:[%s3020 + $0x18] sm:$0xff]
    %v3025 = vld [vmem:[#allocation4] sm:$0xff]
    %3026 = vmatprep.subr.mxu0 0.0
    %3027 = vmatpush1.msra.mxu0 0.0
    %3028 = vmatprep.subr.mxu0 0.0
    %3029 = vmatpush1.msra.mxu0 0.0
    %3030 = vmatprep.subr.mxu0 0.0
    %3031 = vmatpush1.msra.mxu0 0.0
    %3032 = vmatprep.subr.mxu0 0.0
    %3033 = vmatpush1.msra.mxu0 0.0
    %3034 = vmatprep.subr.mxu0 0.0
    %3035 = vmatpush1.msra.mxu0 0.0
    %3036 = vmatprep.subr.mxu0 0.0
    %3037 = vmatpush1.msra.mxu0 0.0
    %3038 = vmatprep.subr.mxu0 0.0
    %3039 = vmatpush1.msra.mxu0 0.0
    %3040 = vmatprep.subr.mxu0 0.0
    %3041 = vmatpush1.msra.mxu0 0.0
    %3042 = vmatprep.subr.mxu0 0.0
    %3043 = vmatpush1.msra.mxu0 0.0
    %3044 = vmatprep.subr.mxu0 0.0
    %3045 = vmatpush1.msra.mxu0 0.0
    %3046 = vmatprep.subr.mxu0 0.0
    %3047 = vmatpush1.msra.mxu0 0.0
    %3048 = vmatprep.subr.mxu0 0.0
    %3049 = vmatpush1.msra.mxu0 0.0
    %3050 = vmatprep.subr.mxu0 0.0
    %3051 = vmatpush1.msra.mxu0 %v3024
    %3052 = vmatprep.subr.mxu0 0.0
    %3053 = vmatpush1.msra.mxu0 %v3023
    %3054 = vmatprep.subr.mxu0 0.0
    %3055 = vmatpush1.msra.mxu0 %v3022
    %3056 = vmatprep.subr.mxu0 0.0
    %3057 = vmatpush1.msra.mxu0 %v3021
    %3058 = vmatprep.subr.mxu0 0.0
    %3059 = vmatpush2.msra.mxu0 0.0
    %3060 = vmatprep.subr.mxu0 0.0
    %3061 = vmatpush2.msra.mxu0 0.0
    %3062 = vmatprep.subr.mxu0 0.0
    %3063 = vmatpush2.msra.mxu0 0.0
    %3064 = vmatprep.subr.mxu0 0.0
    %3065 = vmatpush2.msra.mxu0 0.0
    %3066 = vmatprep.subr.mxu0 0.0
    %3067 = vmatpush2.msra.mxu0 0.0
    %3068 = vmatprep.subr.mxu0 0.0
    %3069 = vmatpush2.msra.mxu0 0.0
    %3070 = vmatprep.subr.mxu0 0.0
    %3071 = vmatpush2.msra.mxu0 0.0
    %3072 = vmatprep.subr.mxu0 0.0
    %3073 = vmatpush2.msra.mxu0 0.0
    %3074 = vmatprep.subr.mxu0 0.0
    %3075 = vmatpush2.msra.mxu0 0.0
    %3076 = vmatprep.subr.mxu0 0.0
    %3077 = vmatpush2.msra.mxu0 0.0
    %3078 = vmatprep.subr.mxu0 0.0
    %3079 = vmatpush2.msra.mxu0 0.0
    %3080 = vmatprep.subr.mxu0 0.0
    %3081 = vmatpush2.msra.mxu0 0.0
    %3082 = vmatprep.subr.mxu0 0.0
    %3083 = vmatpush2.msra.mxu0 0.0
    %3084 = vmatprep.subr.mxu0 0.0
    %3085 = vmatpush2.msra.mxu0 0.0
    %3086 = vmatprep.subr.mxu0 0.0
    %3087 = vmatpush2.msra.mxu0 0.0
    %3088 = vmatprep.subr.mxu0 0.0
    %3089 = vmatpush2.msra.mxu0 0.0
    %3090 = vmatprep.mubr.f32.mxu0 0.0
    %3091 = vmatmul.mubr.f32.gmra.mxu0 %v177
    %v3092 = vpop.f32.mrf.mxu0
    %v3093 = vadd.f32 0.0, %v3092
    %v3094 = vpop.f32.mrf.mxu0
    %3095 = vdwg.mxu0
    %v3096 = vadd.f32 %v3025, %v3093
    %v3097 = vsub.f32 0.0, %v3096
    %v3098 = vmin.f32 %v3097, 80.0
    %v3099 = vmul.f32 %v3098, 1.442695
    %v3100 = vpow.pop %v3099
    %v3101 = vadd.f32 %v3100, 1.0
    %v3102 = vrcp.pop %v3101
    %v3103 = vtanh.pop %v3096
    %v3104 = vmul.f32 %v3102, 0.0
    %3106 = vrot.lane.b32.xlu0 %v3103, 32
    %v3107 = vpop.permute.xlu0 %3106
    %v3109 = vmul.f32 %v3102, %v3107
    %3111 = vrot.lane.b32.xlu0 %v3109, 32
    %v3112 = vpop.permute.xlu0 %3111
    %v3114 = vadd.f32 %v3104, %v3112
    %v3115 = vtanh.pop %v3114
    %3117 = vrot.lane.b32.xlu0 %v3115, 32
    %v3118 = vpop.permute.xlu0 %3117
    %v3120 = vmul.f32 %v3102, %v3118
    %3122 = vrot.lane.b32.xlu0 %v3120, 64
    %v3123 = vpop.permute.xlu0 %3122
    %3125 = vst.msk [vmem:[#allocation3] sm:$0xff] %vm85, %v3123
    %v3126 = vld [vmem:[#allocation4 + $0x8] sm:$0xff]
    %v3127 = vsel %vm85, %v3123, 0
    %3129 = vmatprep.subr.mxu0 0.0
    %3130 = vmatpush1.msra.mxu0 0.0
    %3131 = vmatprep.subr.mxu0 0.0
    %3132 = vmatpush1.msra.mxu0 0.0
    %3133 = vmatprep.subr.mxu0 0.0
    %3134 = vmatpush1.msra.mxu0 0.0
    %3135 = vmatprep.subr.mxu0 0.0
    %3136 = vmatpush1.msra.mxu0 0.0
    %3137 = vmatprep.subr.mxu0 0.0
    %3138 = vmatpush1.msra.mxu0 0.0
    %3139 = vmatprep.subr.mxu0 0.0
    %3140 = vmatpush1.msra.mxu0 0.0
    %3141 = vmatprep.subr.mxu0 0.0
    %3142 = vmatpush1.msra.mxu0 0.0
    %3143 = vmatprep.subr.mxu0 0.0
    %3144 = vmatpush1.msra.mxu0 0.0
    %3145 = vmatprep.subr.mxu0 0.0
    %3146 = vmatpush1.msra.mxu0 0.0
    %3147 = vmatprep.subr.mxu0 0.0
    %3148 = vmatpush1.msra.mxu0 0.0
    %3149 = vmatprep.subr.mxu0 0.0
    %3150 = vmatpush1.msra.mxu0 0.0
    %3151 = vmatprep.subr.mxu0 0.0
    %3152 = vmatpush1.msra.mxu0 0.0
    %3153 = vmatprep.subr.mxu0 0.0
    %3154 = vmatpush1.msra.mxu0 %v3024
    %3155 = vmatprep.subr.mxu0 0.0
    %3156 = vmatpush1.msra.mxu0 %v3023
    %3157 = vmatprep.subr.mxu0 0.0
    %3158 = vmatpush1.msra.mxu0 %v3022
    %3159 = vmatprep.subr.mxu0 0.0
    %3160 = vmatpush1.msra.mxu0 %v3021
    %3161 = vmatprep.subr.mxu0 0.0
    %3162 = vmatpush2.msra.mxu0 0.0
    %3163 = vmatprep.subr.mxu0 0.0
    %3164 = vmatpush2.msra.mxu0 0.0
    %3165 = vmatprep.subr.mxu0 0.0
    %3166 = vmatpush2.msra.mxu0 0.0
    %3167 = vmatprep.subr.mxu0 0.0
    %3168 = vmatpush2.msra.mxu0 0.0
    %3169 = vmatprep.subr.mxu0 0.0
    %3170 = vmatpush2.msra.mxu0 0.0
    %3171 = vmatprep.subr.mxu0 0.0
    %3172 = vmatpush2.msra.mxu0 0.0
    %3173 = vmatprep.subr.mxu0 0.0
    %3174 = vmatpush2.msra.mxu0 0.0
    %3175 = vmatprep.subr.mxu0 0.0
    %3176 = vmatpush2.msra.mxu0 0.0
    %3177 = vmatprep.subr.mxu0 0.0
    %3178 = vmatpush2.msra.mxu0 0.0
    %3179 = vmatprep.subr.mxu0 0.0
    %3180 = vmatpush2.msra.mxu0 0.0
    %3181 = vmatprep.subr.mxu0 0.0
    %3182 = vmatpush2.msra.mxu0 0.0
    %3183 = vmatprep.subr.mxu0 0.0
    %3184 = vmatpush2.msra.mxu0 0.0
    %3185 = vmatprep.subr.mxu0 0.0
    %3186 = vmatpush2.msra.mxu0 0.0
    %3187 = vmatprep.subr.mxu0 0.0
    %3188 = vmatpush2.msra.mxu0 0.0
    %3189 = vmatprep.subr.mxu0 0.0
    %3190 = vmatpush2.msra.mxu0 0.0
    %3191 = vmatprep.subr.mxu0 0.0
    %3192 = vmatpush2.msra.mxu0 0.0
    %3193 = vmatprep.mubr.f32.mxu0 0.0
    %3194 = vmatmul.mubr.f32.gmra.mxu0 %v3127
    %v3195 = vpop.f32.mrf.mxu0
    %v3196 = vadd.f32 0.0, %v3195
    %v3197 = vpop.f32.mrf.mxu0
    %3198 = vdwg.mxu0
    %v3199 = vadd.f32 %v3126, %v3196
    %v3200 = vsub.f32 0.0, %v3199
    %v3201 = vmin.f32 %v3200, 80.0
    %v3202 = vmul.f32 %v3201, 1.442695
    %v3203 = vpow.pop %v3202
    %v3204 = vadd.f32 %v3203, 1.0
    %v3205 = vrcp.pop %v3204
    %v3206 = vtanh.pop %v3199
    %v3207 = vmul.f32 %v3205, %v3114
    %3209 = vrot.lane.b32.xlu0 %v3206, 32
    %v3210 = vpop.permute.xlu0 %3209
    %v3212 = vmul.f32 %v3205, %v3210
    %3214 = vrot.lane.b32.xlu0 %v3212, 32
    %v3215 = vpop.permute.xlu0 %3214
    %v3217 = vadd.f32 %v3207, %v3215
    %v3218 = vtanh.pop %v3217
    %3220 = vrot.lane.b32.xlu0 %v3218, 32
    %v3221 = vpop.permute.xlu0 %3220
    %v3223 = vmul.f32 %v3205, %v3221
    %3225 = vrot.lane.b32.xlu0 %v3223, 64
    %v3226 = vpop.permute.xlu0 %3225
    %3228 = vst.msk [vmem:[#allocation3 + $0x8] sm:$0xff] %vm85, %v3226
    %v3229 = vld [vmem:[#allocation4 + $0x10] sm:$0xff]
    %v3230 = vsel %vm85, %v3226, 0
    %3232 = vmatprep.subr.mxu0 0.0
    %3233 = vmatpush1.msra.mxu0 0.0
    %3234 = vmatprep.subr.mxu0 0.0
    %3235 = vmatpush1.msra.mxu0 0.0
    %3236 = vmatprep.subr.mxu0 0.0
    %3237 = vmatpush1.msra.mxu0 0.0
    %3238 = vmatprep.subr.mxu0 0.0
    %3239 = vmatpush1.msra.mxu0 0.0
    %3240 = vmatprep.subr.mxu0 0.0
    %3241 = vmatpush1.msra.mxu0 0.0
    %3242 = vmatprep.subr.mxu0 0.0
    %3243 = vmatpush1.msra.mxu0 0.0
    %3244 = vmatprep.subr.mxu0 0.0
    %3245 = vmatpush1.msra.mxu0 0.0
    %3246 = vmatprep.subr.mxu0 0.0
    %3247 = vmatpush1.msra.mxu0 0.0
    %3248 = vmatprep.subr.mxu0 0.0
    %3249 = vmatpush1.msra.mxu0 0.0
    %3250 = vmatprep.subr.mxu0 0.0
    %3251 = vmatpush1.msra.mxu0 0.0
    %3252 = vmatprep.subr.mxu0 0.0
    %3253 = vmatpush1.msra.mxu0 0.0
    %3254 = vmatprep.subr.mxu0 0.0
    %3255 = vmatpush1.msra.mxu0 0.0
    %3256 = vmatprep.subr.mxu0 0.0
    %3257 = vmatpush1.msra.mxu0 %v3024
    %3258 = vmatprep.subr.mxu0 0.0
    %3259 = vmatpush1.msra.mxu0 %v3023
    %3260 = vmatprep.subr.mxu0 0.0
    %3261 = vmatpush1.msra.mxu0 %v3022
    %3262 = vmatprep.subr.mxu0 0.0
    %3263 = vmatpush1.msra.mxu0 %v3021
    %3264 = vmatprep.subr.mxu0 0.0
    %3265 = vmatpush2.msra.mxu0 0.0
    %3266 = vmatprep.subr.mxu0 0.0
    %3267 = vmatpush2.msra.mxu0 0.0
    %3268 = vmatprep.subr.mxu0 0.0
    %3269 = vmatpush2.msra.mxu0 0.0
    %3270 = vmatprep.subr.mxu0 0.0
    %3271 = vmatpush2.msra.mxu0 0.0
    %3272 = vmatprep.subr.mxu0 0.0
    %3273 = vmatpush2.msra.mxu0 0.0
    %3274 = vmatprep.subr.mxu0 0.0
    %3275 = vmatpush2.msra.mxu0 0.0
    %3276 = vmatprep.subr.mxu0 0.0
    %3277 = vmatpush2.msra.mxu0 0.0
    %3278 = vmatprep.subr.mxu0 0.0
    %3279 = vmatpush2.msra.mxu0 0.0
    %3280 = vmatprep.subr.mxu0 0.0
    %3281 = vmatpush2.msra.mxu0 0.0
    %3282 = vmatprep.subr.mxu0 0.0
    %3283 = vmatpush2.msra.mxu0 0.0
    %3284 = vmatprep.subr.mxu0 0.0
    %3285 = vmatpush2.msra.mxu0 0.0
    %3286 = vmatprep.subr.mxu0 0.0
    %3287 = vmatpush2.msra.mxu0 0.0
    %3288 = vmatprep.subr.mxu0 0.0
    %3289 = vmatpush2.msra.mxu0 0.0
    %3290 = vmatprep.subr.mxu0 0.0
    %3291 = vmatpush2.msra.mxu0 0.0
    %3292 = vmatprep.subr.mxu0 0.0
    %3293 = vmatpush2.msra.mxu0 0.0
    %3294 = vmatprep.subr.mxu0 0.0
    %3295 = vmatpush2.msra.mxu0 0.0
    %3296 = vmatprep.mubr.f32.mxu0 0.0
    %3297 = vmatmul.mubr.f32.gmra.mxu0 %v3230
    %v3298 = vpop.f32.mrf.mxu0
    %v3299 = vadd.f32 0.0, %v3298
    %v3300 = vpop.f32.mrf.mxu0
    %3301 = vdwg.mxu0
    %v3302 = vadd.f32 %v3229, %v3299
    %v3303 = vsub.f32 0.0, %v3302
    %v3304 = vmin.f32 %v3303, 80.0
    %v3305 = vmul.f32 %v3304, 1.442695
    %v3306 = vpow.pop %v3305
    %v3307 = vadd.f32 %v3306, 1.0
    %v3308 = vrcp.pop %v3307
    %v3309 = vtanh.pop %v3302
    %v3310 = vmul.f32 %v3308, %v3217
    %3312 = vrot.lane.b32.xlu0 %v3309, 32
    %v3313 = vpop.permute.xlu0 %3312
    %v3315 = vmul.f32 %v3308, %v3313
    %3317 = vrot.lane.b32.xlu0 %v3315, 32
    %v3318 = vpop.permute.xlu0 %3317
    %v3320 = vadd.f32 %v3310, %v3318
    %v3321 = vtanh.pop %v3320
    %3323 = vrot.lane.b32.xlu0 %v3321, 32
    %v3324 = vpop.permute.xlu0 %3323
    %v3326 = vmul.f32 %v3308, %v3324
    %3328 = vrot.lane.b32.xlu0 %v3326, 64
    %v3329 = vpop.permute.xlu0 %3328
    %3331 = vst.msk [vmem:[#allocation3 + $0x10] sm:$0xff] %vm85, %v3329
    %v3332 = vld [vmem:[#allocation4 + $0x18] sm:$0xff]
    %v3333 = vsel %vm85, %v3329, 0
    %3335 = vmatprep.subr.mxu0 0.0
    %3336 = vmatpush1.msra.mxu0 0.0
    %3337 = vmatprep.subr.mxu0 0.0
    %3338 = vmatpush1.msra.mxu0 0.0
    %3339 = vmatprep.subr.mxu0 0.0
    %3340 = vmatpush1.msra.mxu0 0.0
    %3341 = vmatprep.subr.mxu0 0.0
    %3342 = vmatpush1.msra.mxu0 0.0
    %3343 = vmatprep.subr.mxu0 0.0
    %3344 = vmatpush1.msra.mxu0 0.0
    %3345 = vmatprep.subr.mxu0 0.0
    %3346 = vmatpush1.msra.mxu0 0.0
    %3347 = vmatprep.subr.mxu0 0.0
    %3348 = vmatpush1.msra.mxu0 0.0
    %3349 = vmatprep.subr.mxu0 0.0
    %3350 = vmatpush1.msra.mxu0 0.0
    %3351 = vmatprep.subr.mxu0 0.0
    %3352 = vmatpush1.msra.mxu0 0.0
    %3353 = vmatprep.subr.mxu0 0.0
    %3354 = vmatpush1.msra.mxu0 0.0
    %3355 = vmatprep.subr.mxu0 0.0
    %3356 = vmatpush1.msra.mxu0 0.0
    %3357 = vmatprep.subr.mxu0 0.0
    %3358 = vmatpush1.msra.mxu0 0.0
    %3359 = vmatprep.subr.mxu0 0.0
    %3360 = vmatpush1.msra.mxu0 %v3024
    %3361 = vmatprep.subr.mxu0 0.0
    %3362 = vmatpush1.msra.mxu0 %v3023
    %3363 = vmatprep.subr.mxu0 0.0
    %3364 = vmatpush1.msra.mxu0 %v3022
    %3365 = vmatprep.subr.mxu0 0.0
    %3366 = vmatpush1.msra.mxu0 %v3021
    %3367 = vmatprep.subr.mxu0 0.0
    %3368 = vmatpush2.msra.mxu0 0.0
    %3369 = vmatprep.subr.mxu0 0.0
    %3370 = vmatpush2.msra.mxu0 0.0
    %3371 = vmatprep.subr.mxu0 0.0
    %3372 = vmatpush2.msra.mxu0 0.0
    %3373 = vmatprep.subr.mxu0 0.0
    %3374 = vmatpush2.msra.mxu0 0.0
    %3375 = vmatprep.subr.mxu0 0.0
    %3376 = vmatpush2.msra.mxu0 0.0
    %3377 = vmatprep.subr.mxu0 0.0
    %3378 = vmatpush2.msra.mxu0 0.0
    %3379 = vmatprep.subr.mxu0 0.0
    %3380 = vmatpush2.msra.mxu0 0.0
    %3381 = vmatprep.subr.mxu0 0.0
    %3382 = vmatpush2.msra.mxu0 0.0
    %3383 = vmatprep.subr.mxu0 0.0
    %3384 = vmatpush2.msra.mxu0 0.0
    %3385 = vmatprep.subr.mxu0 0.0
    %3386 = vmatpush2.msra.mxu0 0.0
    %3387 = vmatprep.subr.mxu0 0.0
    %3388 = vmatpush2.msra.mxu0 0.0
    %3389 = vmatprep.subr.mxu0 0.0
    %3390 = vmatpush2.msra.mxu0 0.0
    %3391 = vmatprep.subr.mxu0 0.0
    %3392 = vmatpush2.msra.mxu0 0.0
    %3393 = vmatprep.subr.mxu0 0.0
    %3394 = vmatpush2.msra.mxu0 0.0
    %3395 = vmatprep.subr.mxu0 0.0
    %3396 = vmatpush2.msra.mxu0 0.0
    %3397 = vmatprep.subr.mxu0 0.0
    %3398 = vmatpush2.msra.mxu0 0.0
    %3399 = vmatprep.mubr.f32.mxu0 0.0
    %3400 = vmatmul.mubr.f32.gmra.mxu0 %v3333
    %v3401 = vpop.f32.mrf.mxu0
    %v3402 = vadd.f32 0.0, %v3401
    %v3403 = vpop.f32.mrf.mxu0
    %3404 = vdwg.mxu0
    %v3405 = vadd.f32 %v3332, %v3402
    %v3406 = vsub.f32 0.0, %v3405
    %v3407 = vmin.f32 %v3406, 80.0
    %v3408 = vmul.f32 %v3407, 1.442695
    %v3409 = vpow.pop %v3408
    %v3410 = vadd.f32 %v3409, 1.0
    %v3411 = vrcp.pop %v3410
    %v3412 = vtanh.pop %v3405
    %v3413 = vmul.f32 %v3411, %v3320
    %3415 = vrot.lane.b32.xlu0 %v3412, 32
    %v3416 = vpop.permute.xlu0 %3415
    %v3418 = vmul.f32 %v3411, %v3416
    %3420 = vrot.lane.b32.xlu0 %v3418, 32
    %v3421 = vpop.permute.xlu0 %3420
    %v3423 = vadd.f32 %v3413, %v3421
    %v3424 = vtanh.pop %v3423
    %3426 = vrot.lane.b32.xlu0 %v3424, 32
    %v3427 = vpop.permute.xlu0 %3426
    %v3429 = vmul.f32 %v3411, %v3427
    %3431 = vrot.lane.b32.xlu0 %v3429, 64
    %v3432 = vpop.permute.xlu0 %3431
    %3434 = vst.msk [vmem:[#allocation3 + $0x18] sm:$0xff] %vm85, %v3432
    %v3435 = vld [vmem:[#allocation4 + $0x20] sm:$0xff]
    %v3436 = vsel %vm85, %v3432, 0
    %3438 = vmatprep.subr.mxu0 0.0
    %3439 = vmatpush1.msra.mxu0 0.0
    %3440 = vmatprep.subr.mxu0 0.0
    %3441 = vmatpush1.msra.mxu0 0.0
    %3442 = vmatprep.subr.mxu0 0.0
    %3443 = vmatpush1.msra.mxu0 0.0
    %3444 = vmatprep.subr.mxu0 0.0
    %3445 = vmatpush1.msra.mxu0 0.0
    %3446 = vmatprep.subr.mxu0 0.0
    %3447 = vmatpush1.msra.mxu0 0.0
    %3448 = vmatprep.subr.mxu0 0.0
    %3449 = vmatpush1.msra.mxu0 0.0
    %3450 = vmatprep.subr.mxu0 0.0
    %3451 = vmatpush1.msra.mxu0 0.0
    %3452 = vmatprep.subr.mxu0 0.0
    %3453 = vmatpush1.msra.mxu0 0.0
    %3454 = vmatprep.subr.mxu0 0.0
    %3455 = vmatpush1.msra.mxu0 0.0
    %3456 = vmatprep.subr.mxu0 0.0
    %3457 = vmatpush1.msra.mxu0 0.0
    %3458 = vmatprep.subr.mxu0 0.0
    %3459 = vmatpush1.msra.mxu0 0.0
    %3460 = vmatprep.subr.mxu0 0.0
    %3461 = vmatpush1.msra.mxu0 0.0
    %3462 = vmatprep.subr.mxu0 0.0
    %3463 = vmatpush1.msra.mxu0 %v3024
    %3464 = vmatprep.subr.mxu0 0.0
    %3465 = vmatpush1.msra.mxu0 %v3023
    %3466 = vmatprep.subr.mxu0 0.0
    %3467 = vmatpush1.msra.mxu0 %v3022
    %3468 = vmatprep.subr.mxu0 0.0
    %3469 = vmatpush1.msra.mxu0 %v3021
    %3470 = vmatprep.subr.mxu0 0.0
    %3471 = vmatpush2.msra.mxu0 0.0
    %3472 = vmatprep.subr.mxu0 0.0
    %3473 = vmatpush2.msra.mxu0 0.0
    %3474 = vmatprep.subr.mxu0 0.0
    %3475 = vmatpush2.msra.mxu0 0.0
    %3476 = vmatprep.subr.mxu0 0.0
    %3477 = vmatpush2.msra.mxu0 0.0
    %3478 = vmatprep.subr.mxu0 0.0
    %3479 = vmatpush2.msra.mxu0 0.0
    %3480 = vmatprep.subr.mxu0 0.0
    %3481 = vmatpush2.msra.mxu0 0.0
    %3482 = vmatprep.subr.mxu0 0.0
    %3483 = vmatpush2.msra.mxu0 0.0
    %3484 = vmatprep.subr.mxu0 0.0
    %3485 = vmatpush2.msra.mxu0 0.0
    %3486 = vmatprep.subr.mxu0 0.0
    %3487 = vmatpush2.msra.mxu0 0.0
    %3488 = vmatprep.subr.mxu0 0.0
    %3489 = vmatpush2.msra.mxu0 0.0
    %3490 = vmatprep.subr.mxu0 0.0
    %3491 = vmatpush2.msra.mxu0 0.0
    %3492 = vmatprep.subr.mxu0 0.0
    %3493 = vmatpush2.msra.mxu0 0.0
    %3494 = vmatprep.subr.mxu0 0.0
    %3495 = vmatpush2.msra.mxu0 0.0
    %3496 = vmatprep.subr.mxu0 0.0
    %3497 = vmatpush2.msra.mxu0 0.0
    %3498 = vmatprep.subr.mxu0 0.0
    %3499 = vmatpush2.msra.mxu0 0.0
    %3500 = vmatprep.subr.mxu0 0.0
    %3501 = vmatpush2.msra.mxu0 0.0
    %3502 = vmatprep.mubr.f32.mxu0 0.0
    %3503 = vmatmul.mubr.f32.gmra.mxu0 %v3436
    %v3504 = vpop.f32.mrf.mxu0
    %v3505 = vadd.f32 0.0, %v3504
    %v3506 = vpop.f32.mrf.mxu0
    %3507 = vdwg.mxu0
    %v3508 = vadd.f32 %v3435, %v3505
    %v3509 = vsub.f32 0.0, %v3508
    %v3510 = vmin.f32 %v3509, 80.0
    %v3511 = vmul.f32 %v3510, 1.442695
    %v3512 = vpow.pop %v3511
    %v3513 = vadd.f32 %v3512, 1.0
    %v3514 = vrcp.pop %v3513
    %v3515 = vtanh.pop %v3508
    %v3516 = vmul.f32 %v3514, %v3423
    %3518 = vrot.lane.b32.xlu0 %v3515, 32
    %v3519 = vpop.permute.xlu0 %3518
    %v3521 = vmul.f32 %v3514, %v3519
    %3523 = vrot.lane.b32.xlu0 %v3521, 32
    %v3524 = vpop.permute.xlu0 %3523
    %v3526 = vadd.f32 %v3516, %v3524
    %v3527 = vtanh.pop %v3526
    %3529 = vrot.lane.b32.xlu0 %v3527, 32
    %v3530 = vpop.permute.xlu0 %3529
    %v3532 = vmul.f32 %v3514, %v3530
    %3534 = vrot.lane.b32.xlu0 %v3532, 64
    %v3535 = vpop.permute.xlu0 %3534
    %3537 = vst.msk [vmem:[#allocation3 + $0x20] sm:$0xff] %vm85, %v3535
    %v3538 = vld [vmem:[#allocation4 + $0x28] sm:$0xff]
    %v3539 = vsel %vm85, %v3535, 0
    %3541 = vmatprep.subr.mxu0 0.0
    %3542 = vmatpush1.msra.mxu0 0.0
    %3543 = vmatprep.subr.mxu0 0.0
    %3544 = vmatpush1.msra.mxu0 0.0
    %3545 = vmatprep.subr.mxu0 0.0
    %3546 = vmatpush1.msra.mxu0 0.0
    %3547 = vmatprep.subr.mxu0 0.0
    %3548 = vmatpush1.msra.mxu0 0.0
    %3549 = vmatprep.subr.mxu0 0.0
    %3550 = vmatpush1.msra.mxu0 0.0
    %3551 = vmatprep.subr.mxu0 0.0
    %3552 = vmatpush1.msra.mxu0 0.0
    %3553 = vmatprep.subr.mxu0 0.0
    %3554 = vmatpush1.msra.mxu0 0.0
    %3555 = vmatprep.subr.mxu0 0.0
    %3556 = vmatpush1.msra.mxu0 0.0
    %3557 = vmatprep.subr.mxu0 0.0
    %3558 = vmatpush1.msra.mxu0 0.0
    %3559 = vmatprep.subr.mxu0 0.0
    %3560 = vmatpush1.msra.mxu0 0.0
    %3561 = vmatprep.subr.mxu0 0.0
    %3562 = vmatpush1.msra.mxu0 0.0
    %3563 = vmatprep.subr.mxu0 0.0
    %3564 = vmatpush1.msra.mxu0 0.0
    %3565 = vmatprep.subr.mxu0 0.0
    %3566 = vmatpush1.msra.mxu0 %v3024
    %3567 = vmatprep.subr.mxu0 0.0
    %3568 = vmatpush1.msra.mxu0 %v3023
    %3569 = vmatprep.subr.mxu0 0.0
    %3570 = vmatpush1.msra.mxu0 %v3022
    %3571 = vmatprep.subr.mxu0 0.0
    %3572 = vmatpush1.msra.mxu0 %v3021
    %3573 = vmatprep.subr.mxu0 0.0
    %3574 = vmatpush2.msra.mxu0 0.0
    %3575 = vmatprep.subr.mxu0 0.0
    %3576 = vmatpush2.msra.mxu0 0.0
    %3577 = vmatprep.subr.mxu0 0.0
    %3578 = vmatpush2.msra.mxu0 0.0
    %3579 = vmatprep.subr.mxu0 0.0
    %3580 = vmatpush2.msra.mxu0 0.0
    %3581 = vmatprep.subr.mxu0 0.0
    %3582 = vmatpush2.msra.mxu0 0.0
    %3583 = vmatprep.subr.mxu0 0.0
    %3584 = vmatpush2.msra.mxu0 0.0
    %3585 = vmatprep.subr.mxu0 0.0
    %3586 = vmatpush2.msra.mxu0 0.0
    %3587 = vmatprep.subr.mxu0 0.0
    %3588 = vmatpush2.msra.mxu0 0.0
    %3589 = vmatprep.subr.mxu0 0.0
    %3590 = vmatpush2.msra.mxu0 0.0
    %3591 = vmatprep.subr.mxu0 0.0
    %3592 = vmatpush2.msra.mxu0 0.0
    %3593 = vmatprep.subr.mxu0 0.0
    %3594 = vmatpush2.msra.mxu0 0.0
    %3595 = vmatprep.subr.mxu0 0.0
    %3596 = vmatpush2.msra.mxu0 0.0
    %3597 = vmatprep.subr.mxu0 0.0
    %3598 = vmatpush2.msra.mxu0 0.0
    %3599 = vmatprep.subr.mxu0 0.0
    %3600 = vmatpush2.msra.mxu0 0.0
    %3601 = vmatprep.subr.mxu0 0.0
    %3602 = vmatpush2.msra.mxu0 0.0
    %3603 = vmatprep.subr.mxu0 0.0
    %3604 = vmatpush2.msra.mxu0 0.0
    %3605 = vmatprep.mubr.f32.mxu0 0.0
    %3606 = vmatmul.mubr.f32.gmra.mxu0 %v3539
    %v3607 = vpop.f32.mrf.mxu0
    %v3608 = vadd.f32 0.0, %v3607
    %v3609 = vpop.f32.mrf.mxu0
    %3610 = vdwg.mxu0
    %v3611 = vadd.f32 %v3538, %v3608
    %v3612 = vsub.f32 0.0, %v3611
    %v3613 = vmin.f32 %v3612, 80.0
    %v3614 = vmul.f32 %v3613, 1.442695
    %v3615 = vpow.pop %v3614
    %v3616 = vadd.f32 %v3615, 1.0
    %v3617 = vrcp.pop %v3616
    %v3618 = vtanh.pop %v3611
    %v3619 = vmul.f32 %v3617, %v3526
    %3621 = vrot.lane.b32.xlu0 %v3618, 32
    %v3622 = vpop.permute.xlu0 %3621
    %v3624 = vmul.f32 %v3617, %v3622
    %3626 = vrot.lane.b32.xlu0 %v3624, 32
    %v3627 = vpop.permute.xlu0 %3626
    %v3629 = vadd.f32 %v3619, %v3627
    %v3630 = vtanh.pop %v3629
    %3632 = vrot.lane.b32.xlu0 %v3630, 32
    %v3633 = vpop.permute.xlu0 %3632
    %v3635 = vmul.f32 %v3617, %v3633
    %3637 = vrot.lane.b32.xlu0 %v3635, 64
    %v3638 = vpop.permute.xlu0 %3637
    %3640 = vst.msk [vmem:[#allocation3 + $0x28] sm:$0xff] %vm85, %v3638
    %v3641 = vld [vmem:[#allocation4 + $0x30] sm:$0xff]
    %v3642 = vsel %vm85, %v3638, 0
    %3644 = vmatprep.subr.mxu0 0.0
    %3645 = vmatpush1.msra.mxu0 0.0
    %3646 = vmatprep.subr.mxu0 0.0
    %3647 = vmatpush1.msra.mxu0 0.0
    %3648 = vmatprep.subr.mxu0 0.0
    %3649 = vmatpush1.msra.mxu0 0.0
    %3650 = vmatprep.subr.mxu0 0.0
    %3651 = vmatpush1.msra.mxu0 0.0
    %3652 = vmatprep.subr.mxu0 0.0
    %3653 = vmatpush1.msra.mxu0 0.0
    %3654 = vmatprep.subr.mxu0 0.0
    %3655 = vmatpush1.msra.mxu0 0.0
    %3656 = vmatprep.subr.mxu0 0.0
    %3657 = vmatpush1.msra.mxu0 0.0
    %3658 = vmatprep.subr.mxu0 0.0
    %3659 = vmatpush1.msra.mxu0 0.0
    %3660 = vmatprep.subr.mxu0 0.0
    %3661 = vmatpush1.msra.mxu0 0.0
    %3662 = vmatprep.subr.mxu0 0.0
    %3663 = vmatpush1.msra.mxu0 0.0
    %3664 = vmatprep.subr.mxu0 0.0
    %3665 = vmatpush1.msra.mxu0 0.0
    %3666 = vmatprep.subr.mxu0 0.0
    %3667 = vmatpush1.msra.mxu0 0.0
    %3668 = vmatprep.subr.mxu0 0.0
    %3669 = vmatpush1.msra.mxu0 %v3024
    %3670 = vmatprep.subr.mxu0 0.0
    %3671 = vmatpush1.msra.mxu0 %v3023
    %3672 = vmatprep.subr.mxu0 0.0
    %3673 = vmatpush1.msra.mxu0 %v3022
    %3674 = vmatprep.subr.mxu0 0.0
    %3675 = vmatpush1.msra.mxu0 %v3021
    %3676 = vmatprep.subr.mxu0 0.0
    %3677 = vmatpush2.msra.mxu0 0.0
    %3678 = vmatprep.subr.mxu0 0.0
    %3679 = vmatpush2.msra.mxu0 0.0
    %3680 = vmatprep.subr.mxu0 0.0
    %3681 = vmatpush2.msra.mxu0 0.0
    %3682 = vmatprep.subr.mxu0 0.0
    %3683 = vmatpush2.msra.mxu0 0.0
    %3684 = vmatprep.subr.mxu0 0.0
    %3685 = vmatpush2.msra.mxu0 0.0
    %3686 = vmatprep.subr.mxu0 0.0
    %3687 = vmatpush2.msra.mxu0 0.0
    %3688 = vmatprep.subr.mxu0 0.0
    %3689 = vmatpush2.msra.mxu0 0.0
    %3690 = vmatprep.subr.mxu0 0.0
    %3691 = vmatpush2.msra.mxu0 0.0
    %3692 = vmatprep.subr.mxu0 0.0
    %3693 = vmatpush2.msra.mxu0 0.0
    %3694 = vmatprep.subr.mxu0 0.0
    %3695 = vmatpush2.msra.mxu0 0.0
    %3696 = vmatprep.subr.mxu0 0.0
    %3697 = vmatpush2.msra.mxu0 0.0
    %3698 = vmatprep.subr.mxu0 0.0
    %3699 = vmatpush2.msra.mxu0 0.0
    %3700 = vmatprep.subr.mxu0 0.0
    %3701 = vmatpush2.msra.mxu0 0.0
    %3702 = vmatprep.subr.mxu0 0.0
    %3703 = vmatpush2.msra.mxu0 0.0
    %3704 = vmatprep.subr.mxu0 0.0
    %3705 = vmatpush2.msra.mxu0 0.0
    %3706 = vmatprep.subr.mxu0 0.0
    %3707 = vmatpush2.msra.mxu0 0.0
    %3708 = vmatprep.mubr.f32.mxu0 0.0
    %3709 = vmatmul.mubr.f32.gmra.mxu0 %v3642
    %v3710 = vpop.f32.mrf.mxu0
    %v3711 = vadd.f32 0.0, %v3710
    %v3712 = vpop.f32.mrf.mxu0
    %3713 = vdwg.mxu0
    %v3714 = vadd.f32 %v3641, %v3711
    %v3715 = vsub.f32 0.0, %v3714
    %v3716 = vmin.f32 %v3715, 80.0
    %v3717 = vmul.f32 %v3716, 1.442695
    %v3718 = vpow.pop %v3717
    %v3719 = vadd.f32 %v3718, 1.0
    %v3720 = vrcp.pop %v3719
    %v3721 = vtanh.pop %v3714
    %v3722 = vmul.f32 %v3720, %v3629
    %3724 = vrot.lane.b32.xlu0 %v3721, 32
    %v3725 = vpop.permute.xlu0 %3724
    %v3727 = vmul.f32 %v3720, %v3725
    %3729 = vrot.lane.b32.xlu0 %v3727, 32
    %v3730 = vpop.permute.xlu0 %3729
    %v3732 = vadd.f32 %v3722, %v3730
    %v3733 = vtanh.pop %v3732
    %3735 = vrot.lane.b32.xlu0 %v3733, 32
    %v3736 = vpop.permute.xlu0 %3735
    %v3738 = vmul.f32 %v3720, %v3736
    %3740 = vrot.lane.b32.xlu0 %v3738, 64
    %v3741 = vpop.permute.xlu0 %3740
    %3743 = vst.msk [vmem:[#allocation3 + $0x30] sm:$0xff] %vm85, %v3741
    %v3744 = vld [vmem:[#allocation4 + $0x38] sm:$0xff]
    %v3745 = vsel %vm85, %v3741, 0
    %3747 = vmatprep.subr.mxu0 0.0
    %3748 = vmatpush1.msra.mxu0 0.0
    %3749 = vmatprep.subr.mxu0 0.0
    %3750 = vmatpush1.msra.mxu0 0.0
    %3751 = vmatprep.subr.mxu0 0.0
    %3752 = vmatpush1.msra.mxu0 0.0
    %3753 = vmatprep.subr.mxu0 0.0
    %3754 = vmatpush1.msra.mxu0 0.0
    %3755 = vmatprep.subr.mxu0 0.0
    %3756 = vmatpush1.msra.mxu0 0.0
    %3757 = vmatprep.subr.mxu0 0.0
    %3758 = vmatpush1.msra.mxu0 0.0
    %3759 = vmatprep.subr.mxu0 0.0
    %3760 = vmatpush1.msra.mxu0 0.0
    %3761 = vmatprep.subr.mxu0 0.0
    %3762 = vmatpush1.msra.mxu0 0.0
    %3763 = vmatprep.subr.mxu0 0.0
    %3764 = vmatpush1.msra.mxu0 0.0
    %3765 = vmatprep.subr.mxu0 0.0
    %3766 = vmatpush1.msra.mxu0 0.0
    %3767 = vmatprep.subr.mxu0 0.0
    %3768 = vmatpush1.msra.mxu0 0.0
    %3769 = vmatprep.subr.mxu0 0.0
    %3770 = vmatpush1.msra.mxu0 0.0
    %3771 = vmatprep.subr.mxu0 0.0
    %3772 = vmatpush1.msra.mxu0 %v3024
    %3773 = vmatprep.subr.mxu0 0.0
    %3774 = vmatpush1.msra.mxu0 %v3023
    %3775 = vmatprep.subr.mxu0 0.0
    %3776 = vmatpush1.msra.mxu0 %v3022
    %3777 = vmatprep.subr.mxu0 0.0
    %3778 = vmatpush1.msra.mxu0 %v3021
    %3779 = vmatprep.subr.mxu0 0.0
    %3780 = vmatpush2.msra.mxu0 0.0
    %3781 = vmatprep.subr.mxu0 0.0
    %3782 = vmatpush2.msra.mxu0 0.0
    %3783 = vmatprep.subr.mxu0 0.0
    %3784 = vmatpush2.msra.mxu0 0.0
    %3785 = vmatprep.subr.mxu0 0.0
    %3786 = vmatpush2.msra.mxu0 0.0
    %3787 = vmatprep.subr.mxu0 0.0
    %3788 = vmatpush2.msra.mxu0 0.0
    %3789 = vmatprep.subr.mxu0 0.0
    %3790 = vmatpush2.msra.mxu0 0.0
    %3791 = vmatprep.subr.mxu0 0.0
    %3792 = vmatpush2.msra.mxu0 0.0
    %3793 = vmatprep.subr.mxu0 0.0
    %3794 = vmatpush2.msra.mxu0 0.0
    %3795 = vmatprep.subr.mxu0 0.0
    %3796 = vmatpush2.msra.mxu0 0.0
    %3797 = vmatprep.subr.mxu0 0.0
    %3798 = vmatpush2.msra.mxu0 0.0
    %3799 = vmatprep.subr.mxu0 0.0
    %3800 = vmatpush2.msra.mxu0 0.0
    %3801 = vmatprep.subr.mxu0 0.0
    %3802 = vmatpush2.msra.mxu0 0.0
    %3803 = vmatprep.subr.mxu0 0.0
    %3804 = vmatpush2.msra.mxu0 0.0
    %3805 = vmatprep.subr.mxu0 0.0
    %3806 = vmatpush2.msra.mxu0 0.0
    %3807 = vmatprep.subr.mxu0 0.0
    %3808 = vmatpush2.msra.mxu0 0.0
    %3809 = vmatprep.subr.mxu0 0.0
    %3810 = vmatpush2.msra.mxu0 0.0
    %3811 = vmatprep.mubr.f32.mxu0 0.0
    %3812 = vmatmul.mubr.f32.gmra.mxu0 %v3745
    %v3813 = vpop.f32.mrf.mxu0
    %v3814 = vadd.f32 0.0, %v3813
    %v3815 = vpop.f32.mrf.mxu0
    %3816 = vdwg.mxu0
    %v3817 = vadd.f32 %v3744, %v3814
    %v3818 = vsub.f32 0.0, %v3817
    %v3819 = vmin.f32 %v3818, 80.0
    %v3820 = vmul.f32 %v3819, 1.442695
    %v3821 = vpow.pop %v3820
    %v3822 = vadd.f32 %v3821, 1.0
    %v3823 = vrcp.pop %v3822
    %v3824 = vtanh.pop %v3817
    %v3825 = vmul.f32 %v3823, %v3732
    %3827 = vrot.lane.b32.xlu0 %v3824, 32
    %v3828 = vpop.permute.xlu0 %3827
    %v3830 = vmul.f32 %v3823, %v3828
    %3832 = vrot.lane.b32.xlu0 %v3830, 32
    %v3833 = vpop.permute.xlu0 %3832
    %v3835 = vadd.f32 %v3825, %v3833
    %v3836 = vtanh.pop %v3835
    %3838 = vrot.lane.b32.xlu0 %v3836, 32
    %v3839 = vpop.permute.xlu0 %3838
    %v3841 = vmul.f32 %v3823, %v3839
    %3843 = vrot.lane.b32.xlu0 %v3841, 64
    %v3844 = vpop.permute.xlu0 %3843
    %3846 = vst.msk [vmem:[#allocation3 + $0x38] sm:$0xff] %vm85, %v3844
    %v3847 = vld [vmem:[#allocation3] sm:$0xff]
    %v3848 = vld [vmem:[#allocation3 + $0x8] sm:$0xff]
    %v3849 = vld [vmem:[#allocation3 + $0x10] sm:$0xff]
    %v3850 = vld [vmem:[#allocation3 + $0x18] sm:$0xff]
    %v3851 = vld [vmem:[#allocation3 + $0x20] sm:$0xff]
    %v3852 = vld [vmem:[#allocation3 + $0x28] sm:$0xff]
    %v3853 = vld [vmem:[#allocation3 + $0x30] sm:$0xff]
    %v3854 = vld [vmem:[#allocation3 + $0x38] sm:$0xff]
    %v3855 = vld [vmem:[#allocation2] sm:$0xff]
    %v3856 = vld [vmem:[#allocation2 + $0x8] sm:$0xff]
    %v3857 = vld [vmem:[#allocation2 + $0x10] sm:$0xff]
    %v3858 = vld [vmem:[#allocation2 + $0x18] sm:$0xff]
    %v3859 = vld [vmem:[#allocation2 + $0x20] sm:$0xff]
    %v3860 = vld [vmem:[#allocation2 + $0x28] sm:$0xff]
    %v3861 = vld [vmem:[#allocation2 + $0x30] sm:$0xff]
    %v3862 = vld [vmem:[#allocation2 + $0x38] sm:$0xff]
    %v3863 = vadd.f32 %v3847, %v3855
    %v3864 = vadd.f32 %v3848, %v3856
    %v3865 = vadd.f32 %v3849, %v3857
    %v3866 = vadd.f32 %v3850, %v3858
    %v3867 = vadd.f32 %v3851, %v3859
    %v3868 = vadd.f32 %v3852, %v3860
    %v3869 = vadd.f32 %v3853, %v3861
    %v3870 = vadd.f32 %v3854, %v3862
    %3871 = vst.msk [vmem:[#allocation3] sm:$0xff] %vm85, %v3863
    %3872 = vst.msk [vmem:[#allocation3 + $0x8] sm:$0xff] %vm85, %v3864
    %3873 = vst.msk [vmem:[#allocation3 + $0x10] sm:$0xff] %vm85, %v3865
    %3874 = vst.msk [vmem:[#allocation3 + $0x18] sm:$0xff] %vm85, %v3866
    %3875 = vst.msk [vmem:[#allocation3 + $0x20] sm:$0xff] %vm85, %v3867
    %3876 = vst.msk [vmem:[#allocation3 + $0x28] sm:$0xff] %vm85, %v3868
    %3877 = vst.msk [vmem:[#allocation3 + $0x30] sm:$0xff] %vm85, %v3869
    %3878 = vst.msk [vmem:[#allocation3 + $0x38] sm:$0xff] %vm85, %v3870
    %v3879 = vld [vmem:[#allocation3] sm:$0xff]
    %v3880 = vld [vmem:[#allocation3 + $0x8] sm:$0xff]
    %v3881 = vld [vmem:[#allocation3 + $0x10] sm:$0xff]
    %v3882 = vld [vmem:[#allocation3 + $0x18] sm:$0xff]
    %v3883 = vld [vmem:[#allocation3 + $0x20] sm:$0xff]
    %v3884 = vld [vmem:[#allocation3 + $0x28] sm:$0xff]
    %v3885 = vld [vmem:[#allocation3 + $0x30] sm:$0xff]
    %v3886 = vld [vmem:[#allocation3 + $0x38] sm:$0xff]
    %s3887 = scalar_lea.vmem [#allocation5], 64
    %v3888 = vld [vmem:[%s3887] sm:$0xf]
    %v3889 = vld [vmem:[%s3887 + $0x4] sm:$0xf]
    %v3890 = vld [vmem:[%s3887 + $0x8] sm:$0xf]
    %v3891 = vld [vmem:[%s3887 + $0xc] sm:$0xf]
    %v3892 = vpack.c.bf16 %v3880, %v3879
    %v3893 = vpack.c.bf16 %v3882, %v3881
    %v3894 = vpack.c.bf16 %v3884, %v3883
    %v3895 = vpack.c.bf16 %v3886, %v3885
    %s3896 = scalar_lea.vmem %s4, 4
    %v3897 = vld [vmem:[%s3896] sm:$0x1]
    %v3899 = vlaneseq
    %v3900 = vshrl.u32 %v3899, 7
    %v3901 = vsub.s32 0, %v3900
    %v3902 = vrot.slane %v3897, %v3901
    %v3908 = vunpack.c.l.b16 %v3888
    %v3909 = vunpack.c.l.b16 %v3889
    %v3910 = vunpack.c.l.b16 %v3890
    %v3911 = vunpack.c.l.b16 %v3891
    %v3912 = vpack.c.b16 %v3909, %v3908
    %v3913 = vpack.c.b16 %v3911, %v3910
    %v3917 = vsel %vm85, %v3892, 0
    %v3920 = vsel %vm85, %v3893, 0
    %v3923 = vsel %vm85, %v3894, 0
    %v3926 = vsel %vm85, %v3895, 0
    %3928 = vmatprep.subr.bf16.mxu0 0
    %3929 = vmatpush1.bf16.msra.mxu0 0
    %3930 = vmatprep.subr.bf16.mxu0 0
    %3931 = vmatpush1.bf16.msra.mxu0 0
    %3932 = vmatprep.subr.bf16.mxu0 0
    %3933 = vmatpush1.bf16.msra.mxu0 0
    %3934 = vmatprep.subr.bf16.mxu0 0
    %3935 = vmatpush1.bf16.msra.mxu0 0
    %3936 = vmatprep.subr.bf16.mxu0 0
    %3937 = vmatpush1.bf16.msra.mxu0 0
    %3938 = vmatprep.subr.bf16.mxu0 0
    %3939 = vmatpush1.bf16.msra.mxu0 0
    %3940 = vmatprep.subr.bf16.mxu0 0
    %3941 = vmatpush1.bf16.msra.mxu0 %v3913
    %3942 = vmatprep.subr.bf16.mxu0 0
    %3943 = vmatpush1.bf16.msra.mxu0 %v3912
    %3944 = vmatprep.subr.bf16.mxu0 0
    %3945 = vmatpush2.bf16.msra.mxu0 0
    %3946 = vmatprep.subr.bf16.mxu0 0
    %3947 = vmatpush2.bf16.msra.mxu0 0
    %3948 = vmatprep.subr.bf16.mxu0 0
    %3949 = vmatpush2.bf16.msra.mxu0 0
    %3950 = vmatprep.subr.bf16.mxu0 0
    %3951 = vmatpush2.bf16.msra.mxu0 0
    %3952 = vmatprep.subr.bf16.mxu0 0
    %3953 = vmatpush2.bf16.msra.mxu0 0
    %3954 = vmatprep.subr.bf16.mxu0 0
    %3955 = vmatpush2.bf16.msra.mxu0 0
    %3956 = vmatprep.subr.bf16.mxu0 0
    %3957 = vmatpush2.bf16.msra.mxu0 0
    %3958 = vmatprep.subr.bf16.mxu0 0
    %3959 = vmatpush2.bf16.msra.mxu0 0
    %3960 = vmatprep.mubr.bf16.mxu0 0
    %3961 = vmatmul.mubr.bf16.gmra.mxu0 %v3917
    %v3962 = vpop.f32.mrf.mxu0
    %v3963 = vadd.f32 %v3902, %v3962
    %v3964 = vpop.f32.mrf.mxu0
    %v3965 = vpop.f32.mrf.mxu0
    %v3966 = vadd.f32 %v3902, %v3965
    %v3967 = vpop.f32.mrf.mxu0
    %3968 = vmatprep.mubr.bf16.mxu0 0
    %3969 = vmatmul.mubr.bf16.gmra.mxu0 %v3920
    %v3970 = vpop.f32.mrf.mxu0
    %v3971 = vadd.f32 %v3902, %v3970
    %v3972 = vpop.f32.mrf.mxu0
    %v3973 = vpop.f32.mrf.mxu0
    %v3974 = vadd.f32 %v3902, %v3973
    %v3975 = vpop.f32.mrf.mxu0
    %3976 = vmatprep.mubr.bf16.mxu0 0
    %3977 = vmatmul.mubr.bf16.gmra.mxu0 %v3923
    %v3978 = vpop.f32.mrf.mxu0
    %v3979 = vadd.f32 %v3902, %v3978
    %v3980 = vpop.f32.mrf.mxu0
    %v3981 = vpop.f32.mrf.mxu0
    %v3982 = vadd.f32 %v3902, %v3981
    %v3983 = vpop.f32.mrf.mxu0
    %3984 = vmatprep.mubr.bf16.mxu0 0
    %3985 = vmatmul.mubr.bf16.gmra.mxu0 %v3926
    %v3986 = vpop.f32.mrf.mxu0
    %v3987 = vadd.f32 %v3902, %v3986
    %v3988 = vpop.f32.mrf.mxu0
    %v3989 = vpop.f32.mrf.mxu0
    %v3990 = vadd.f32 %v3902, %v3989
    %v3991 = vpop.f32.mrf.mxu0
    %3992 = vdwg.mxu0
    %3993 = vst [vmem:[#allocation4] sm:$0xff] %v3963
    %3994 = vst [vmem:[#allocation4 + $0x8] sm:$0xff] %v3966
    %3995 = vst [vmem:[#allocation4 + $0x10] sm:$0xff] %v3971
    %3996 = vst [vmem:[#allocation4 + $0x18] sm:$0xff] %v3974
    %3997 = vst [vmem:[#allocation4 + $0x20] sm:$0xff] %v3979
    %3998 = vst [vmem:[#allocation4 + $0x28] sm:$0xff] %v3982
    %3999 = vst [vmem:[#allocation4 + $0x30] sm:$0xff] %v3987
    %4000 = vst [vmem:[#allocation4 + $0x38] sm:$0xff] %v3990
    %s4001 = scalar_lea.vmem %s3, 128
    %v4002 = vld [vmem:[%s4001] sm:$0xff]
    %v4003 = vld [vmem:[%s4001 + $0x8] sm:$0xff]
    %v4004 = vld [vmem:[%s4001 + $0x10] sm:$0xff]
    %v4005 = vld [vmem:[%s4001 + $0x18] sm:$0xff]
    %v4006 = vld [vmem:[#allocation4] sm:$0xff]
    %4007 = vmatprep.subr.mxu0 0.0
    %4008 = vmatpush1.msra.mxu0 0.0
    %4009 = vmatprep.subr.mxu0 0.0
    %4010 = vmatpush1.msra.mxu0 0.0
    %4011 = vmatprep.subr.mxu0 0.0
    %4012 = vmatpush1.msra.mxu0 0.0
    %4013 = vmatprep.subr.mxu0 0.0
    %4014 = vmatpush1.msra.mxu0 0.0
    %4015 = vmatprep.subr.mxu0 0.0
    %4016 = vmatpush1.msra.mxu0 0.0
    %4017 = vmatprep.subr.mxu0 0.0
    %4018 = vmatpush1.msra.mxu0 0.0
    %4019 = vmatprep.subr.mxu0 0.0
    %4020 = vmatpush1.msra.mxu0 0.0
    %4021 = vmatprep.subr.mxu0 0.0
    %4022 = vmatpush1.msra.mxu0 0.0
    %4023 = vmatprep.subr.mxu0 0.0
    %4024 = vmatpush1.msra.mxu0 0.0
    %4025 = vmatprep.subr.mxu0 0.0
    %4026 = vmatpush1.msra.mxu0 0.0
    %4027 = vmatprep.subr.mxu0 0.0
    %4028 = vmatpush1.msra.mxu0 0.0
    %4029 = vmatprep.subr.mxu0 0.0
    %4030 = vmatpush1.msra.mxu0 0.0
    %4031 = vmatprep.subr.mxu0 0.0
    %4032 = vmatpush1.msra.mxu0 %v4005
    %4033 = vmatprep.subr.mxu0 0.0
    %4034 = vmatpush1.msra.mxu0 %v4004
    %4035 = vmatprep.subr.mxu0 0.0
    %4036 = vmatpush1.msra.mxu0 %v4003
    %4037 = vmatprep.subr.mxu0 0.0
    %4038 = vmatpush1.msra.mxu0 %v4002
    %4039 = vmatprep.subr.mxu0 0.0
    %4040 = vmatpush2.msra.mxu0 0.0
    %4041 = vmatprep.subr.mxu0 0.0
    %4042 = vmatpush2.msra.mxu0 0.0
    %4043 = vmatprep.subr.mxu0 0.0
    %4044 = vmatpush2.msra.mxu0 0.0
    %4045 = vmatprep.subr.mxu0 0.0
    %4046 = vmatpush2.msra.mxu0 0.0
    %4047 = vmatprep.subr.mxu0 0.0
    %4048 = vmatpush2.msra.mxu0 0.0
    %4049 = vmatprep.subr.mxu0 0.0
    %4050 = vmatpush2.msra.mxu0 0.0
    %4051 = vmatprep.subr.mxu0 0.0
    %4052 = vmatpush2.msra.mxu0 0.0
    %4053 = vmatprep.subr.mxu0 0.0
    %4054 = vmatpush2.msra.mxu0 0.0
    %4055 = vmatprep.subr.mxu0 0.0
    %4056 = vmatpush2.msra.mxu0 0.0
    %4057 = vmatprep.subr.mxu0 0.0
    %4058 = vmatpush2.msra.mxu0 0.0
    %4059 = vmatprep.subr.mxu0 0.0
    %4060 = vmatpush2.msra.mxu0 0.0
    %4061 = vmatprep.subr.mxu0 0.0
    %4062 = vmatpush2.msra.mxu0 0.0
    %4063 = vmatprep.subr.mxu0 0.0
    %4064 = vmatpush2.msra.mxu0 0.0
    %4065 = vmatprep.subr.mxu0 0.0
    %4066 = vmatpush2.msra.mxu0 0.0
    %4067 = vmatprep.subr.mxu0 0.0
    %4068 = vmatpush2.msra.mxu0 0.0
    %4069 = vmatprep.subr.mxu0 0.0
    %4070 = vmatpush2.msra.mxu0 0.0
    %4071 = vmatprep.mubr.f32.mxu0 0.0
    %4072 = vmatmul.mubr.f32.gmra.mxu0 %v177
    %v4073 = vpop.f32.mrf.mxu0
    %v4074 = vadd.f32 0.0, %v4073
    %v4075 = vpop.f32.mrf.mxu0
    %4076 = vdwg.mxu0
    %v4077 = vadd.f32 %v4006, %v4074
    %v4078 = vsub.f32 0.0, %v4077
    %v4079 = vmin.f32 %v4078, 80.0
    %v4080 = vmul.f32 %v4079, 1.442695
    %v4081 = vpow.pop %v4080
    %v4082 = vadd.f32 %v4081, 1.0
    %v4083 = vrcp.pop %v4082
    %v4084 = vtanh.pop %v4077
    %v4085 = vmul.f32 %v4083, 0.0
    %4087 = vrot.lane.b32.xlu0 %v4084, 32
    %v4088 = vpop.permute.xlu0 %4087
    %v4090 = vmul.f32 %v4083, %v4088
    %4092 = vrot.lane.b32.xlu0 %v4090, 32
    %v4093 = vpop.permute.xlu0 %4092
    %v4095 = vadd.f32 %v4085, %v4093
    %v4096 = vtanh.pop %v4095
    %4098 = vrot.lane.b32.xlu0 %v4096, 32
    %v4099 = vpop.permute.xlu0 %4098
    %v4101 = vmul.f32 %v4083, %v4099
    %4103 = vrot.lane.b32.xlu0 %v4101, 64
    %v4104 = vpop.permute.xlu0 %4103
    %4106 = vst.msk [vmem:[#allocation2] sm:$0xff] %vm85, %v4104
    %v4107 = vld [vmem:[#allocation4 + $0x8] sm:$0xff]
    %v4108 = vsel %vm85, %v4104, 0
    %4110 = vmatprep.subr.mxu0 0.0
    %4111 = vmatpush1.msra.mxu0 0.0
    %4112 = vmatprep.subr.mxu0 0.0
    %4113 = vmatpush1.msra.mxu0 0.0
    %4114 = vmatprep.subr.mxu0 0.0
    %4115 = vmatpush1.msra.mxu0 0.0
    %4116 = vmatprep.subr.mxu0 0.0
    %4117 = vmatpush1.msra.mxu0 0.0
    %4118 = vmatprep.subr.mxu0 0.0
    %4119 = vmatpush1.msra.mxu0 0.0
    %4120 = vmatprep.subr.mxu0 0.0
    %4121 = vmatpush1.msra.mxu0 0.0
    %4122 = vmatprep.subr.mxu0 0.0
    %4123 = vmatpush1.msra.mxu0 0.0
    %4124 = vmatprep.subr.mxu0 0.0
    %4125 = vmatpush1.msra.mxu0 0.0
    %4126 = vmatprep.subr.mxu0 0.0
    %4127 = vmatpush1.msra.mxu0 0.0
    %4128 = vmatprep.subr.mxu0 0.0
    %4129 = vmatpush1.msra.mxu0 0.0
    %4130 = vmatprep.subr.mxu0 0.0
    %4131 = vmatpush1.msra.mxu0 0.0
    %4132 = vmatprep.subr.mxu0 0.0
    %4133 = vmatpush1.msra.mxu0 0.0
    %4134 = vmatprep.subr.mxu0 0.0
    %4135 = vmatpush1.msra.mxu0 %v4005
    %4136 = vmatprep.subr.mxu0 0.0
    %4137 = vmatpush1.msra.mxu0 %v4004
    %4138 = vmatprep.subr.mxu0 0.0
    %4139 = vmatpush1.msra.mxu0 %v4003
    %4140 = vmatprep.subr.mxu0 0.0
    %4141 = vmatpush1.msra.mxu0 %v4002
    %4142 = vmatprep.subr.mxu0 0.0
    %4143 = vmatpush2.msra.mxu0 0.0
    %4144 = vmatprep.subr.mxu0 0.0
    %4145 = vmatpush2.msra.mxu0 0.0
    %4146 = vmatprep.subr.mxu0 0.0
    %4147 = vmatpush2.msra.mxu0 0.0
    %4148 = vmatprep.subr.mxu0 0.0
    %4149 = vmatpush2.msra.mxu0 0.0
    %4150 = vmatprep.subr.mxu0 0.0
    %4151 = vmatpush2.msra.mxu0 0.0
    %4152 = vmatprep.subr.mxu0 0.0
    %4153 = vmatpush2.msra.mxu0 0.0
    %4154 = vmatprep.subr.mxu0 0.0
    %4155 = vmatpush2.msra.mxu0 0.0
    %4156 = vmatprep.subr.mxu0 0.0
    %4157 = vmatpush2.msra.mxu0 0.0
    %4158 = vmatprep.subr.mxu0 0.0
    %4159 = vmatpush2.msra.mxu0 0.0
    %4160 = vmatprep.subr.mxu0 0.0
    %4161 = vmatpush2.msra.mxu0 0.0
    %4162 = vmatprep.subr.mxu0 0.0
    %4163 = vmatpush2.msra.mxu0 0.0
    %4164 = vmatprep.subr.mxu0 0.0
    %4165 = vmatpush2.msra.mxu0 0.0
    %4166 = vmatprep.subr.mxu0 0.0
    %4167 = vmatpush2.msra.mxu0 0.0
    %4168 = vmatprep.subr.mxu0 0.0
    %4169 = vmatpush2.msra.mxu0 0.0
    %4170 = vmatprep.subr.mxu0 0.0
    %4171 = vmatpush2.msra.mxu0 0.0
    %4172 = vmatprep.subr.mxu0 0.0
    %4173 = vmatpush2.msra.mxu0 0.0
    %4174 = vmatprep.mubr.f32.mxu0 0.0
    %4175 = vmatmul.mubr.f32.gmra.mxu0 %v4108
    %v4176 = vpop.f32.mrf.mxu0
    %v4177 = vadd.f32 0.0, %v4176
    %v4178 = vpop.f32.mrf.mxu0
    %4179 = vdwg.mxu0
    %v4180 = vadd.f32 %v4107, %v4177
    %v4181 = vsub.f32 0.0, %v4180
    %v4182 = vmin.f32 %v4181, 80.0
    %v4183 = vmul.f32 %v4182, 1.442695
    %v4184 = vpow.pop %v4183
    %v4185 = vadd.f32 %v4184, 1.0
    %v4186 = vrcp.pop %v4185
    %v4187 = vtanh.pop %v4180
    %v4188 = vmul.f32 %v4186, %v4095
    %4190 = vrot.lane.b32.xlu0 %v4187, 32
    %v4191 = vpop.permute.xlu0 %4190
    %v4193 = vmul.f32 %v4186, %v4191
    %4195 = vrot.lane.b32.xlu0 %v4193, 32
    %v4196 = vpop.permute.xlu0 %4195
    %v4198 = vadd.f32 %v4188, %v4196
    %v4199 = vtanh.pop %v4198
    %4201 = vrot.lane.b32.xlu0 %v4199, 32
    %v4202 = vpop.permute.xlu0 %4201
    %v4204 = vmul.f32 %v4186, %v4202
    %4206 = vrot.lane.b32.xlu0 %v4204, 64
    %v4207 = vpop.permute.xlu0 %4206
    %4209 = vst.msk [vmem:[#allocation2 + $0x8] sm:$0xff] %vm85, %v4207
    %v4210 = vld [vmem:[#allocation4 + $0x10] sm:$0xff]
    %v4211 = vsel %vm85, %v4207, 0
    %4213 = vmatprep.subr.mxu0 0.0
    %4214 = vmatpush1.msra.mxu0 0.0
    %4215 = vmatprep.subr.mxu0 0.0
    %4216 = vmatpush1.msra.mxu0 0.0
    %4217 = vmatprep.subr.mxu0 0.0
    %4218 = vmatpush1.msra.mxu0 0.0
    %4219 = vmatprep.subr.mxu0 0.0
    %4220 = vmatpush1.msra.mxu0 0.0
    %4221 = vmatprep.subr.mxu0 0.0
    %4222 = vmatpush1.msra.mxu0 0.0
    %4223 = vmatprep.subr.mxu0 0.0
    %4224 = vmatpush1.msra.mxu0 0.0
    %4225 = vmatprep.subr.mxu0 0.0
    %4226 = vmatpush1.msra.mxu0 0.0
    %4227 = vmatprep.subr.mxu0 0.0
    %4228 = vmatpush1.msra.mxu0 0.0
    %4229 = vmatprep.subr.mxu0 0.0
    %4230 = vmatpush1.msra.mxu0 0.0
    %4231 = vmatprep.subr.mxu0 0.0
    %4232 = vmatpush1.msra.mxu0 0.0
    %4233 = vmatprep.subr.mxu0 0.0
    %4234 = vmatpush1.msra.mxu0 0.0
    %4235 = vmatprep.subr.mxu0 0.0
    %4236 = vmatpush1.msra.mxu0 0.0
    %4237 = vmatprep.subr.mxu0 0.0
    %4238 = vmatpush1.msra.mxu0 %v4005
    %4239 = vmatprep.subr.mxu0 0.0
    %4240 = vmatpush1.msra.mxu0 %v4004
    %4241 = vmatprep.subr.mxu0 0.0
    %4242 = vmatpush1.msra.mxu0 %v4003
    %4243 = vmatprep.subr.mxu0 0.0
    %4244 = vmatpush1.msra.mxu0 %v4002
    %4245 = vmatprep.subr.mxu0 0.0
    %4246 = vmatpush2.msra.mxu0 0.0
    %4247 = vmatprep.subr.mxu0 0.0
    %4248 = vmatpush2.msra.mxu0 0.0
    %4249 = vmatprep.subr.mxu0 0.0
    %4250 = vmatpush2.msra.mxu0 0.0
    %4251 = vmatprep.subr.mxu0 0.0
    %4252 = vmatpush2.msra.mxu0 0.0
    %4253 = vmatprep.subr.mxu0 0.0
    %4254 = vmatpush2.msra.mxu0 0.0
    %4255 = vmatprep.subr.mxu0 0.0
    %4256 = vmatpush2.msra.mxu0 0.0
    %4257 = vmatprep.subr.mxu0 0.0
    %4258 = vmatpush2.msra.mxu0 0.0
    %4259 = vmatprep.subr.mxu0 0.0
    %4260 = vmatpush2.msra.mxu0 0.0
    %4261 = vmatprep.subr.mxu0 0.0
    %4262 = vmatpush2.msra.mxu0 0.0
    %4263 = vmatprep.subr.mxu0 0.0
    %4264 = vmatpush2.msra.mxu0 0.0
    %4265 = vmatprep.subr.mxu0 0.0
    %4266 = vmatpush2.msra.mxu0 0.0
    %4267 = vmatprep.subr.mxu0 0.0
    %4268 = vmatpush2.msra.mxu0 0.0
    %4269 = vmatprep.subr.mxu0 0.0
    %4270 = vmatpush2.msra.mxu0 0.0
    %4271 = vmatprep.subr.mxu0 0.0
    %4272 = vmatpush2.msra.mxu0 0.0
    %4273 = vmatprep.subr.mxu0 0.0
    %4274 = vmatpush2.msra.mxu0 0.0
    %4275 = vmatprep.subr.mxu0 0.0
    %4276 = vmatpush2.msra.mxu0 0.0
    %4277 = vmatprep.mubr.f32.mxu0 0.0
    %4278 = vmatmul.mubr.f32.gmra.mxu0 %v4211
    %v4279 = vpop.f32.mrf.mxu0
    %v4280 = vadd.f32 0.0, %v4279
    %v4281 = vpop.f32.mrf.mxu0
    %4282 = vdwg.mxu0
    %v4283 = vadd.f32 %v4210, %v4280
    %v4284 = vsub.f32 0.0, %v4283
    %v4285 = vmin.f32 %v4284, 80.0
    %v4286 = vmul.f32 %v4285, 1.442695
    %v4287 = vpow.pop %v4286
    %v4288 = vadd.f32 %v4287, 1.0
    %v4289 = vrcp.pop %v4288
    %v4290 = vtanh.pop %v4283
    %v4291 = vmul.f32 %v4289, %v4198
    %4293 = vrot.lane.b32.xlu0 %v4290, 32
    %v4294 = vpop.permute.xlu0 %4293
    %v4296 = vmul.f32 %v4289, %v4294
    %4298 = vrot.lane.b32.xlu0 %v4296, 32
    %v4299 = vpop.permute.xlu0 %4298
    %v4301 = vadd.f32 %v4291, %v4299
    %v4302 = vtanh.pop %v4301
    %4304 = vrot.lane.b32.xlu0 %v4302, 32
    %v4305 = vpop.permute.xlu0 %4304
    %v4307 = vmul.f32 %v4289, %v4305
    %4309 = vrot.lane.b32.xlu0 %v4307, 64
    %v4310 = vpop.permute.xlu0 %4309
    %4312 = vst.msk [vmem:[#allocation2 + $0x10] sm:$0xff] %vm85, %v4310
    %v4313 = vld [vmem:[#allocation4 + $0x18] sm:$0xff]
    %v4314 = vsel %vm85, %v4310, 0
    %4316 = vmatprep.subr.mxu0 0.0
    %4317 = vmatpush1.msra.mxu0 0.0
    %4318 = vmatprep.subr.mxu0 0.0
    %4319 = vmatpush1.msra.mxu0 0.0
    %4320 = vmatprep.subr.mxu0 0.0
    %4321 = vmatpush1.msra.mxu0 0.0
    %4322 = vmatprep.subr.mxu0 0.0
    %4323 = vmatpush1.msra.mxu0 0.0
    %4324 = vmatprep.subr.mxu0 0.0
    %4325 = vmatpush1.msra.mxu0 0.0
    %4326 = vmatprep.subr.mxu0 0.0
    %4327 = vmatpush1.msra.mxu0 0.0
    %4328 = vmatprep.subr.mxu0 0.0
    %4329 = vmatpush1.msra.mxu0 0.0
    %4330 = vmatprep.subr.mxu0 0.0
    %4331 = vmatpush1.msra.mxu0 0.0
    %4332 = vmatprep.subr.mxu0 0.0
    %4333 = vmatpush1.msra.mxu0 0.0
    %4334 = vmatprep.subr.mxu0 0.0
    %4335 = vmatpush1.msra.mxu0 0.0
    %4336 = vmatprep.subr.mxu0 0.0
    %4337 = vmatpush1.msra.mxu0 0.0
    %4338 = vmatprep.subr.mxu0 0.0
    %4339 = vmatpush1.msra.mxu0 0.0
    %4340 = vmatprep.subr.mxu0 0.0
    %4341 = vmatpush1.msra.mxu0 %v4005
    %4342 = vmatprep.subr.mxu0 0.0
    %4343 = vmatpush1.msra.mxu0 %v4004
    %4344 = vmatprep.subr.mxu0 0.0
    %4345 = vmatpush1.msra.mxu0 %v4003
    %4346 = vmatprep.subr.mxu0 0.0
    %4347 = vmatpush1.msra.mxu0 %v4002
    %4348 = vmatprep.subr.mxu0 0.0
    %4349 = vmatpush2.msra.mxu0 0.0
    %4350 = vmatprep.subr.mxu0 0.0
    %4351 = vmatpush2.msra.mxu0 0.0
    %4352 = vmatprep.subr.mxu0 0.0
    %4353 = vmatpush2.msra.mxu0 0.0
    %4354 = vmatprep.subr.mxu0 0.0
    %4355 = vmatpush2.msra.mxu0 0.0
    %4356 = vmatprep.subr.mxu0 0.0
    %4357 = vmatpush2.msra.mxu0 0.0
    %4358 = vmatprep.subr.mxu0 0.0
    %4359 = vmatpush2.msra.mxu0 0.0
    %4360 = vmatprep.subr.mxu0 0.0
    %4361 = vmatpush2.msra.mxu0 0.0
    %4362 = vmatprep.subr.mxu0 0.0
    %4363 = vmatpush2.msra.mxu0 0.0
    %4364 = vmatprep.subr.mxu0 0.0
    %4365 = vmatpush2.msra.mxu0 0.0
    %4366 = vmatprep.subr.mxu0 0.0
    %4367 = vmatpush2.msra.mxu0 0.0
    %4368 = vmatprep.subr.mxu0 0.0
    %4369 = vmatpush2.msra.mxu0 0.0
    %4370 = vmatprep.subr.mxu0 0.0
    %4371 = vmatpush2.msra.mxu0 0.0
    %4372 = vmatprep.subr.mxu0 0.0
    %4373 = vmatpush2.msra.mxu0 0.0
    %4374 = vmatprep.subr.mxu0 0.0
    %4375 = vmatpush2.msra.mxu0 0.0
    %4376 = vmatprep.subr.mxu0 0.0
    %4377 = vmatpush2.msra.mxu0 0.0
    %4378 = vmatprep.subr.mxu0 0.0
    %4379 = vmatpush2.msra.mxu0 0.0
    %4380 = vmatprep.mubr.f32.mxu0 0.0
    %4381 = vmatmul.mubr.f32.gmra.mxu0 %v4314
    %v4382 = vpop.f32.mrf.mxu0
    %v4383 = vadd.f32 0.0, %v4382
    %v4384 = vpop.f32.mrf.mxu0
    %4385 = vdwg.mxu0
    %v4386 = vadd.f32 %v4313, %v4383
    %v4387 = vsub.f32 0.0, %v4386
    %v4388 = vmin.f32 %v4387, 80.0
    %v4389 = vmul.f32 %v4388, 1.442695
    %v4390 = vpow.pop %v4389
    %v4391 = vadd.f32 %v4390, 1.0
    %v4392 = vrcp.pop %v4391
    %v4393 = vtanh.pop %v4386
    %v4394 = vmul.f32 %v4392, %v4301
    %4396 = vrot.lane.b32.xlu0 %v4393, 32
    %v4397 = vpop.permute.xlu0 %4396
    %v4399 = vmul.f32 %v4392, %v4397
    %4401 = vrot.lane.b32.xlu0 %v4399, 32
    %v4402 = vpop.permute.xlu0 %4401
    %v4404 = vadd.f32 %v4394, %v4402
    %v4405 = vtanh.pop %v4404
    %4407 = vrot.lane.b32.xlu0 %v4405, 32
    %v4408 = vpop.permute.xlu0 %4407
    %v4410 = vmul.f32 %v4392, %v4408
    %4412 = vrot.lane.b32.xlu0 %v4410, 64
    %v4413 = vpop.permute.xlu0 %4412
    %4415 = vst.msk [vmem:[#allocation2 + $0x18] sm:$0xff] %vm85, %v4413
    %v4416 = vld [vmem:[#allocation4 + $0x20] sm:$0xff]
    %v4417 = vsel %vm85, %v4413, 0
    %4419 = vmatprep.subr.mxu0 0.0
    %4420 = vmatpush1.msra.mxu0 0.0
    %4421 = vmatprep.subr.mxu0 0.0
    %4422 = vmatpush1.msra.mxu0 0.0
    %4423 = vmatprep.subr.mxu0 0.0
    %4424 = vmatpush1.msra.mxu0 0.0
    %4425 = vmatprep.subr.mxu0 0.0
    %4426 = vmatpush1.msra.mxu0 0.0
    %4427 = vmatprep.subr.mxu0 0.0
    %4428 = vmatpush1.msra.mxu0 0.0
    %4429 = vmatprep.subr.mxu0 0.0
    %4430 = vmatpush1.msra.mxu0 0.0
    %4431 = vmatprep.subr.mxu0 0.0
    %4432 = vmatpush1.msra.mxu0 0.0
    %4433 = vmatprep.subr.mxu0 0.0
    %4434 = vmatpush1.msra.mxu0 0.0
    %4435 = vmatprep.subr.mxu0 0.0
    %4436 = vmatpush1.msra.mxu0 0.0
    %4437 = vmatprep.subr.mxu0 0.0
    %4438 = vmatpush1.msra.mxu0 0.0
    %4439 = vmatprep.subr.mxu0 0.0
    %4440 = vmatpush1.msra.mxu0 0.0
    %4441 = vmatprep.subr.mxu0 0.0
    %4442 = vmatpush1.msra.mxu0 0.0
    %4443 = vmatprep.subr.mxu0 0.0
    %4444 = vmatpush1.msra.mxu0 %v4005
    %4445 = vmatprep.subr.mxu0 0.0
    %4446 = vmatpush1.msra.mxu0 %v4004
    %4447 = vmatprep.subr.mxu0 0.0
    %4448 = vmatpush1.msra.mxu0 %v4003
    %4449 = vmatprep.subr.mxu0 0.0
    %4450 = vmatpush1.msra.mxu0 %v4002
    %4451 = vmatprep.subr.mxu0 0.0
    %4452 = vmatpush2.msra.mxu0 0.0
    %4453 = vmatprep.subr.mxu0 0.0
    %4454 = vmatpush2.msra.mxu0 0.0
    %4455 = vmatprep.subr.mxu0 0.0
    %4456 = vmatpush2.msra.mxu0 0.0
    %4457 = vmatprep.subr.mxu0 0.0
    %4458 = vmatpush2.msra.mxu0 0.0
    %4459 = vmatprep.subr.mxu0 0.0
    %4460 = vmatpush2.msra.mxu0 0.0
    %4461 = vmatprep.subr.mxu0 0.0
    %4462 = vmatpush2.msra.mxu0 0.0
    %4463 = vmatprep.subr.mxu0 0.0
    %4464 = vmatpush2.msra.mxu0 0.0
    %4465 = vmatprep.subr.mxu0 0.0
    %4466 = vmatpush2.msra.mxu0 0.0
    %4467 = vmatprep.subr.mxu0 0.0
    %4468 = vmatpush2.msra.mxu0 0.0
    %4469 = vmatprep.subr.mxu0 0.0
    %4470 = vmatpush2.msra.mxu0 0.0
    %4471 = vmatprep.subr.mxu0 0.0
    %4472 = vmatpush2.msra.mxu0 0.0
    %4473 = vmatprep.subr.mxu0 0.0
    %4474 = vmatpush2.msra.mxu0 0.0
    %4475 = vmatprep.subr.mxu0 0.0
    %4476 = vmatpush2.msra.mxu0 0.0
    %4477 = vmatprep.subr.mxu0 0.0
    %4478 = vmatpush2.msra.mxu0 0.0
    %4479 = vmatprep.subr.mxu0 0.0
    %4480 = vmatpush2.msra.mxu0 0.0
    %4481 = vmatprep.subr.mxu0 0.0
    %4482 = vmatpush2.msra.mxu0 0.0
    %4483 = vmatprep.mubr.f32.mxu0 0.0
    %4484 = vmatmul.mubr.f32.gmra.mxu0 %v4417
    %v4485 = vpop.f32.mrf.mxu0
    %v4486 = vadd.f32 0.0, %v4485
    %v4487 = vpop.f32.mrf.mxu0
    %4488 = vdwg.mxu0
    %v4489 = vadd.f32 %v4416, %v4486
    %v4490 = vsub.f32 0.0, %v4489
    %v4491 = vmin.f32 %v4490, 80.0
    %v4492 = vmul.f32 %v4491, 1.442695
    %v4493 = vpow.pop %v4492
    %v4494 = vadd.f32 %v4493, 1.0
    %v4495 = vrcp.pop %v4494
    %v4496 = vtanh.pop %v4489
    %v4497 = vmul.f32 %v4495, %v4404
    %4499 = vrot.lane.b32.xlu0 %v4496, 32
    %v4500 = vpop.permute.xlu0 %4499
    %v4502 = vmul.f32 %v4495, %v4500
    %4504 = vrot.lane.b32.xlu0 %v4502, 32
    %v4505 = vpop.permute.xlu0 %4504
    %v4507 = vadd.f32 %v4497, %v4505
    %v4508 = vtanh.pop %v4507
    %4510 = vrot.lane.b32.xlu0 %v4508, 32
    %v4511 = vpop.permute.xlu0 %4510
    %v4513 = vmul.f32 %v4495, %v4511
    %4515 = vrot.lane.b32.xlu0 %v4513, 64
    %v4516 = vpop.permute.xlu0 %4515
    %4518 = vst.msk [vmem:[#allocation2 + $0x20] sm:$0xff] %vm85, %v4516
    %v4519 = vld [vmem:[#allocation4 + $0x28] sm:$0xff]
    %v4520 = vsel %vm85, %v4516, 0
    %4522 = vmatprep.subr.mxu0 0.0
    %4523 = vmatpush1.msra.mxu0 0.0
    %4524 = vmatprep.subr.mxu0 0.0
    %4525 = vmatpush1.msra.mxu0 0.0
    %4526 = vmatprep.subr.mxu0 0.0
    %4527 = vmatpush1.msra.mxu0 0.0
    %4528 = vmatprep.subr.mxu0 0.0
    %4529 = vmatpush1.msra.mxu0 0.0
    %4530 = vmatprep.subr.mxu0 0.0
    %4531 = vmatpush1.msra.mxu0 0.0
    %4532 = vmatprep.subr.mxu0 0.0
    %4533 = vmatpush1.msra.mxu0 0.0
    %4534 = vmatprep.subr.mxu0 0.0
    %4535 = vmatpush1.msra.mxu0 0.0
    %4536 = vmatprep.subr.mxu0 0.0
    %4537 = vmatpush1.msra.mxu0 0.0
    %4538 = vmatprep.subr.mxu0 0.0
    %4539 = vmatpush1.msra.mxu0 0.0
    %4540 = vmatprep.subr.mxu0 0.0
    %4541 = vmatpush1.msra.mxu0 0.0
    %4542 = vmatprep.subr.mxu0 0.0
    %4543 = vmatpush1.msra.mxu0 0.0
    %4544 = vmatprep.subr.mxu0 0.0
    %4545 = vmatpush1.msra.mxu0 0.0
    %4546 = vmatprep.subr.mxu0 0.0
    %4547 = vmatpush1.msra.mxu0 %v4005
    %4548 = vmatprep.subr.mxu0 0.0
    %4549 = vmatpush1.msra.mxu0 %v4004
    %4550 = vmatprep.subr.mxu0 0.0
    %4551 = vmatpush1.msra.mxu0 %v4003
    %4552 = vmatprep.subr.mxu0 0.0
    %4553 = vmatpush1.msra.mxu0 %v4002
    %4554 = vmatprep.subr.mxu0 0.0
    %4555 = vmatpush2.msra.mxu0 0.0
    %4556 = vmatprep.subr.mxu0 0.0
    %4557 = vmatpush2.msra.mxu0 0.0
    %4558 = vmatprep.subr.mxu0 0.0
    %4559 = vmatpush2.msra.mxu0 0.0
    %4560 = vmatprep.subr.mxu0 0.0
    %4561 = vmatpush2.msra.mxu0 0.0
    %4562 = vmatprep.subr.mxu0 0.0
    %4563 = vmatpush2.msra.mxu0 0.0
    %4564 = vmatprep.subr.mxu0 0.0
    %4565 = vmatpush2.msra.mxu0 0.0
    %4566 = vmatprep.subr.mxu0 0.0
    %4567 = vmatpush2.msra.mxu0 0.0
    %4568 = vmatprep.subr.mxu0 0.0
    %4569 = vmatpush2.msra.mxu0 0.0
    %4570 = vmatprep.subr.mxu0 0.0
    %4571 = vmatpush2.msra.mxu0 0.0
    %4572 = vmatprep.subr.mxu0 0.0
    %4573 = vmatpush2.msra.mxu0 0.0
    %4574 = vmatprep.subr.mxu0 0.0
    %4575 = vmatpush2.msra.mxu0 0.0
    %4576 = vmatprep.subr.mxu0 0.0
    %4577 = vmatpush2.msra.mxu0 0.0
    %4578 = vmatprep.subr.mxu0 0.0
    %4579 = vmatpush2.msra.mxu0 0.0
    %4580 = vmatprep.subr.mxu0 0.0
    %4581 = vmatpush2.msra.mxu0 0.0
    %4582 = vmatprep.subr.mxu0 0.0
    %4583 = vmatpush2.msra.mxu0 0.0
    %4584 = vmatprep.subr.mxu0 0.0
    %4585 = vmatpush2.msra.mxu0 0.0
    %4586 = vmatprep.mubr.f32.mxu0 0.0
    %4587 = vmatmul.mubr.f32.gmra.mxu0 %v4520
    %v4588 = vpop.f32.mrf.mxu0
    %v4589 = vadd.f32 0.0, %v4588
    %v4590 = vpop.f32.mrf.mxu0
    %4591 = vdwg.mxu0
    %v4592 = vadd.f32 %v4519, %v4589
    %v4593 = vsub.f32 0.0, %v4592
    %v4594 = vmin.f32 %v4593, 80.0
    %v4595 = vmul.f32 %v4594, 1.442695
    %v4596 = vpow.pop %v4595
    %v4597 = vadd.f32 %v4596, 1.0
    %v4598 = vrcp.pop %v4597
    %v4599 = vtanh.pop %v4592
    %v4600 = vmul.f32 %v4598, %v4507
    %4602 = vrot.lane.b32.xlu0 %v4599, 32
    %v4603 = vpop.permute.xlu0 %4602
    %v4605 = vmul.f32 %v4598, %v4603
    %4607 = vrot.lane.b32.xlu0 %v4605, 32
    %v4608 = vpop.permute.xlu0 %4607
    %v4610 = vadd.f32 %v4600, %v4608
    %v4611 = vtanh.pop %v4610
    %4613 = vrot.lane.b32.xlu0 %v4611, 32
    %v4614 = vpop.permute.xlu0 %4613
    %v4616 = vmul.f32 %v4598, %v4614
    %4618 = vrot.lane.b32.xlu0 %v4616, 64
    %v4619 = vpop.permute.xlu0 %4618
    %4621 = vst.msk [vmem:[#allocation2 + $0x28] sm:$0xff] %vm85, %v4619
    %v4622 = vld [vmem:[#allocation4 + $0x30] sm:$0xff]
    %v4623 = vsel %vm85, %v4619, 0
    %4625 = vmatprep.subr.mxu0 0.0
    %4626 = vmatpush1.msra.mxu0 0.0
    %4627 = vmatprep.subr.mxu0 0.0
    %4628 = vmatpush1.msra.mxu0 0.0
    %4629 = vmatprep.subr.mxu0 0.0
    %4630 = vmatpush1.msra.mxu0 0.0
    %4631 = vmatprep.subr.mxu0 0.0
    %4632 = vmatpush1.msra.mxu0 0.0
    %4633 = vmatprep.subr.mxu0 0.0
    %4634 = vmatpush1.msra.mxu0 0.0
    %4635 = vmatprep.subr.mxu0 0.0
    %4636 = vmatpush1.msra.mxu0 0.0
    %4637 = vmatprep.subr.mxu0 0.0
    %4638 = vmatpush1.msra.mxu0 0.0
    %4639 = vmatprep.subr.mxu0 0.0
    %4640 = vmatpush1.msra.mxu0 0.0
    %4641 = vmatprep.subr.mxu0 0.0
    %4642 = vmatpush1.msra.mxu0 0.0
    %4643 = vmatprep.subr.mxu0 0.0
    %4644 = vmatpush1.msra.mxu0 0.0
    %4645 = vmatprep.subr.mxu0 0.0
    %4646 = vmatpush1.msra.mxu0 0.0
    %4647 = vmatprep.subr.mxu0 0.0
    %4648 = vmatpush1.msra.mxu0 0.0
    %4649 = vmatprep.subr.mxu0 0.0
    %4650 = vmatpush1.msra.mxu0 %v4005
    %4651 = vmatprep.subr.mxu0 0.0
    %4652 = vmatpush1.msra.mxu0 %v4004
    %4653 = vmatprep.subr.mxu0 0.0
    %4654 = vmatpush1.msra.mxu0 %v4003
    %4655 = vmatprep.subr.mxu0 0.0
    %4656 = vmatpush1.msra.mxu0 %v4002
    %4657 = vmatprep.subr.mxu0 0.0
    %4658 = vmatpush2.msra.mxu0 0.0
    %4659 = vmatprep.subr.mxu0 0.0
    %4660 = vmatpush2.msra.mxu0 0.0
    %4661 = vmatprep.subr.mxu0 0.0
    %4662 = vmatpush2.msra.mxu0 0.0
    %4663 = vmatprep.subr.mxu0 0.0
    %4664 = vmatpush2.msra.mxu0 0.0
    %4665 = vmatprep.subr.mxu0 0.0
    %4666 = vmatpush2.msra.mxu0 0.0
    %4667 = vmatprep.subr.mxu0 0.0
    %4668 = vmatpush2.msra.mxu0 0.0
    %4669 = vmatprep.subr.mxu0 0.0
    %4670 = vmatpush2.msra.mxu0 0.0
    %4671 = vmatprep.subr.mxu0 0.0
    %4672 = vmatpush2.msra.mxu0 0.0
    %4673 = vmatprep.subr.mxu0 0.0
    %4674 = vmatpush2.msra.mxu0 0.0
    %4675 = vmatprep.subr.mxu0 0.0
    %4676 = vmatpush2.msra.mxu0 0.0
    %4677 = vmatprep.subr.mxu0 0.0
    %4678 = vmatpush2.msra.mxu0 0.0
    %4679 = vmatprep.subr.mxu0 0.0
    %4680 = vmatpush2.msra.mxu0 0.0
    %4681 = vmatprep.subr.mxu0 0.0
    %4682 = vmatpush2.msra.mxu0 0.0
    %4683 = vmatprep.subr.mxu0 0.0
    %4684 = vmatpush2.msra.mxu0 0.0
    %4685 = vmatprep.subr.mxu0 0.0
    %4686 = vmatpush2.msra.mxu0 0.0
    %4687 = vmatprep.subr.mxu0 0.0
    %4688 = vmatpush2.msra.mxu0 0.0
    %4689 = vmatprep.mubr.f32.mxu0 0.0
    %4690 = vmatmul.mubr.f32.gmra.mxu0 %v4623
    %v4691 = vpop.f32.mrf.mxu0
    %v4692 = vadd.f32 0.0, %v4691
    %v4693 = vpop.f32.mrf.mxu0
    %4694 = vdwg.mxu0
    %v4695 = vadd.f32 %v4622, %v4692
    %v4696 = vsub.f32 0.0, %v4695
    %v4697 = vmin.f32 %v4696, 80.0
    %v4698 = vmul.f32 %v4697, 1.442695
    %v4699 = vpow.pop %v4698
    %v4700 = vadd.f32 %v4699, 1.0
    %v4701 = vrcp.pop %v4700
    %v4702 = vtanh.pop %v4695
    %v4703 = vmul.f32 %v4701, %v4610
    %4705 = vrot.lane.b32.xlu0 %v4702, 32
    %v4706 = vpop.permute.xlu0 %4705
    %v4708 = vmul.f32 %v4701, %v4706
    %4710 = vrot.lane.b32.xlu0 %v4708, 32
    %v4711 = vpop.permute.xlu0 %4710
    %v4713 = vadd.f32 %v4703, %v4711
    %v4714 = vtanh.pop %v4713
    %4716 = vrot.lane.b32.xlu0 %v4714, 32
    %v4717 = vpop.permute.xlu0 %4716
    %v4719 = vmul.f32 %v4701, %v4717
    %4721 = vrot.lane.b32.xlu0 %v4719, 64
    %v4722 = vpop.permute.xlu0 %4721
    %4724 = vst.msk [vmem:[#allocation2 + $0x30] sm:$0xff] %vm85, %v4722
    %v4725 = vld [vmem:[#allocation4 + $0x38] sm:$0xff]
    %v4726 = vsel %vm85, %v4722, 0
    %4728 = vmatprep.subr.mxu0 0.0
    %4729 = vmatpush1.msra.mxu0 0.0
    %4730 = vmatprep.subr.mxu0 0.0
    %4731 = vmatpush1.msra.mxu0 0.0
    %4732 = vmatprep.subr.mxu0 0.0
    %4733 = vmatpush1.msra.mxu0 0.0
    %4734 = vmatprep.subr.mxu0 0.0
    %4735 = vmatpush1.msra.mxu0 0.0
    %4736 = vmatprep.subr.mxu0 0.0
    %4737 = vmatpush1.msra.mxu0 0.0
    %4738 = vmatprep.subr.mxu0 0.0
    %4739 = vmatpush1.msra.mxu0 0.0
    %4740 = vmatprep.subr.mxu0 0.0
    %4741 = vmatpush1.msra.mxu0 0.0
    %4742 = vmatprep.subr.mxu0 0.0
    %4743 = vmatpush1.msra.mxu0 0.0
    %4744 = vmatprep.subr.mxu0 0.0
    %4745 = vmatpush1.msra.mxu0 0.0
    %4746 = vmatprep.subr.mxu0 0.0
    %4747 = vmatpush1.msra.mxu0 0.0
    %4748 = vmatprep.subr.mxu0 0.0
    %4749 = vmatpush1.msra.mxu0 0.0
    %4750 = vmatprep.subr.mxu0 0.0
    %4751 = vmatpush1.msra.mxu0 0.0
    %4752 = vmatprep.subr.mxu0 0.0
    %4753 = vmatpush1.msra.mxu0 %v4005
    %4754 = vmatprep.subr.mxu0 0.0
    %4755 = vmatpush1.msra.mxu0 %v4004
    %4756 = vmatprep.subr.mxu0 0.0
    %4757 = vmatpush1.msra.mxu0 %v4003
    %4758 = vmatprep.subr.mxu0 0.0
    %4759 = vmatpush1.msra.mxu0 %v4002
    %4760 = vmatprep.subr.mxu0 0.0
    %4761 = vmatpush2.msra.mxu0 0.0
    %4762 = vmatprep.subr.mxu0 0.0
    %4763 = vmatpush2.msra.mxu0 0.0
    %4764 = vmatprep.subr.mxu0 0.0
    %4765 = vmatpush2.msra.mxu0 0.0
    %4766 = vmatprep.subr.mxu0 0.0
    %4767 = vmatpush2.msra.mxu0 0.0
    %4768 = vmatprep.subr.mxu0 0.0
    %4769 = vmatpush2.msra.mxu0 0.0
    %4770 = vmatprep.subr.mxu0 0.0
    %4771 = vmatpush2.msra.mxu0 0.0
    %4772 = vmatprep.subr.mxu0 0.0
    %4773 = vmatpush2.msra.mxu0 0.0
    %4774 = vmatprep.subr.mxu0 0.0
    %4775 = vmatpush2.msra.mxu0 0.0
    %4776 = vmatprep.subr.mxu0 0.0
    %4777 = vmatpush2.msra.mxu0 0.0
    %4778 = vmatprep.subr.mxu0 0.0
    %4779 = vmatpush2.msra.mxu0 0.0
    %4780 = vmatprep.subr.mxu0 0.0
    %4781 = vmatpush2.msra.mxu0 0.0
    %4782 = vmatprep.subr.mxu0 0.0
    %4783 = vmatpush2.msra.mxu0 0.0
    %4784 = vmatprep.subr.mxu0 0.0
    %4785 = vmatpush2.msra.mxu0 0.0
    %4786 = vmatprep.subr.mxu0 0.0
    %4787 = vmatpush2.msra.mxu0 0.0
    %4788 = vmatprep.subr.mxu0 0.0
    %4789 = vmatpush2.msra.mxu0 0.0
    %4790 = vmatprep.subr.mxu0 0.0
    %4791 = vmatpush2.msra.mxu0 0.0
    %4792 = vmatprep.mubr.f32.mxu0 0.0
    %4793 = vmatmul.mubr.f32.gmra.mxu0 %v4726
    %v4794 = vpop.f32.mrf.mxu0
    %v4795 = vadd.f32 0.0, %v4794
    %v4796 = vpop.f32.mrf.mxu0
    %4797 = vdwg.mxu0
    %v4798 = vadd.f32 %v4725, %v4795
    %v4799 = vsub.f32 0.0, %v4798
    %v4800 = vmin.f32 %v4799, 80.0
    %v4801 = vmul.f32 %v4800, 1.442695
    %v4802 = vpow.pop %v4801
    %v4803 = vadd.f32 %v4802, 1.0
    %v4804 = vrcp.pop %v4803
    %v4805 = vtanh.pop %v4798
    %v4806 = vmul.f32 %v4804, %v4713
    %4808 = vrot.lane.b32.xlu0 %v4805, 32
    %v4809 = vpop.permute.xlu0 %4808
    %v4811 = vmul.f32 %v4804, %v4809
    %4813 = vrot.lane.b32.xlu0 %v4811, 32
    %v4814 = vpop.permute.xlu0 %4813
    %v4816 = vadd.f32 %v4806, %v4814
    %v4817 = vtanh.pop %v4816
    %4819 = vrot.lane.b32.xlu0 %v4817, 32
    %v4820 = vpop.permute.xlu0 %4819
    %v4822 = vmul.f32 %v4804, %v4820
    %4824 = vrot.lane.b32.xlu0 %v4822, 64
    %v4825 = vpop.permute.xlu0 %4824
    %4827 = vst.msk [vmem:[#allocation2 + $0x38] sm:$0xff] %vm85, %v4825
    %v4828 = vld [vmem:[#allocation2] sm:$0xff]
    %v4829 = vld [vmem:[#allocation2 + $0x8] sm:$0xff]
    %v4830 = vld [vmem:[#allocation2 + $0x10] sm:$0xff]
    %v4831 = vld [vmem:[#allocation2 + $0x18] sm:$0xff]
    %v4832 = vld [vmem:[#allocation2 + $0x20] sm:$0xff]
    %v4833 = vld [vmem:[#allocation2 + $0x28] sm:$0xff]
    %v4834 = vld [vmem:[#allocation2 + $0x30] sm:$0xff]
    %v4835 = vld [vmem:[#allocation2 + $0x38] sm:$0xff]
    %s4836 = scalar_lea.vmem [#allocation5], 80
    %v4837 = vld [vmem:[%s4836] sm:$0xf]
    %v4838 = vld [vmem:[%s4836 + $0x4] sm:$0xf]
    %v4839 = vld [vmem:[%s4836 + $0x8] sm:$0xf]
    %v4840 = vld [vmem:[%s4836 + $0xc] sm:$0xf]
    %v4841 = vpack.c.bf16 %v4829, %v4828
    %v4842 = vpack.c.bf16 %v4831, %v4830
    %v4843 = vpack.c.bf16 %v4833, %v4832
    %v4844 = vpack.c.bf16 %v4835, %v4834
    %s4845 = scalar_lea.vmem %s4, 5
    %v4846 = vld [vmem:[%s4845] sm:$0x1]
    %v4848 = vlaneseq
    %v4849 = vshrl.u32 %v4848, 7
    %v4850 = vsub.s32 0, %v4849
    %v4851 = vrot.slane %v4846, %v4850
    %v4857 = vunpack.c.l.b16 %v4837
    %v4858 = vunpack.c.l.b16 %v4838
    %v4859 = vunpack.c.l.b16 %v4839
    %v4860 = vunpack.c.l.b16 %v4840
    %v4861 = vpack.c.b16 %v4858, %v4857
    %v4862 = vpack.c.b16 %v4860, %v4859
    %v4866 = vsel %vm85, %v4841, 0
    %v4869 = vsel %vm85, %v4842, 0
    %v4872 = vsel %vm85, %v4843, 0
    %v4875 = vsel %vm85, %v4844, 0
    %4877 = vmatprep.subr.bf16.mxu0 0
    %4878 = vmatpush1.bf16.msra.mxu0 0
    %4879 = vmatprep.subr.bf16.mxu0 0
    %4880 = vmatpush1.bf16.msra.mxu0 0
    %4881 = vmatprep.subr.bf16.mxu0 0
    %4882 = vmatpush1.bf16.msra.mxu0 0
    %4883 = vmatprep.subr.bf16.mxu0 0
    %4884 = vmatpush1.bf16.msra.mxu0 0
    %4885 = vmatprep.subr.bf16.mxu0 0
    %4886 = vmatpush1.bf16.msra.mxu0 0
    %4887 = vmatprep.subr.bf16.mxu0 0
    %4888 = vmatpush1.bf16.msra.mxu0 0
    %4889 = vmatprep.subr.bf16.mxu0 0
    %4890 = vmatpush1.bf16.msra.mxu0 %v4862
    %4891 = vmatprep.subr.bf16.mxu0 0
    %4892 = vmatpush1.bf16.msra.mxu0 %v4861
    %4893 = vmatprep.subr.bf16.mxu0 0
    %4894 = vmatpush2.bf16.msra.mxu0 0
    %4895 = vmatprep.subr.bf16.mxu0 0
    %4896 = vmatpush2.bf16.msra.mxu0 0
    %4897 = vmatprep.subr.bf16.mxu0 0
    %4898 = vmatpush2.bf16.msra.mxu0 0
    %4899 = vmatprep.subr.bf16.mxu0 0
    %4900 = vmatpush2.bf16.msra.mxu0 0
    %4901 = vmatprep.subr.bf16.mxu0 0
    %4902 = vmatpush2.bf16.msra.mxu0 0
    %4903 = vmatprep.subr.bf16.mxu0 0
    %4904 = vmatpush2.bf16.msra.mxu0 0
    %4905 = vmatprep.subr.bf16.mxu0 0
    %4906 = vmatpush2.bf16.msra.mxu0 0
    %4907 = vmatprep.subr.bf16.mxu0 0
    %4908 = vmatpush2.bf16.msra.mxu0 0
    %4909 = vmatprep.mubr.bf16.mxu0 0
    %4910 = vmatmul.mubr.bf16.gmra.mxu0 %v4866
    %v4911 = vpop.f32.mrf.mxu0
    %v4912 = vadd.f32 %v4851, %v4911
    %v4913 = vpop.f32.mrf.mxu0
    %v4914 = vpop.f32.mrf.mxu0
    %v4915 = vadd.f32 %v4851, %v4914
    %v4916 = vpop.f32.mrf.mxu0
    %4917 = vmatprep.mubr.bf16.mxu0 0
    %4918 = vmatmul.mubr.bf16.gmra.mxu0 %v4869
    %v4919 = vpop.f32.mrf.mxu0
    %v4920 = vadd.f32 %v4851, %v4919
    %v4921 = vpop.f32.mrf.mxu0
    %v4922 = vpop.f32.mrf.mxu0
    %v4923 = vadd.f32 %v4851, %v4922
    %v4924 = vpop.f32.mrf.mxu0
    %4925 = vmatprep.mubr.bf16.mxu0 0
    %4926 = vmatmul.mubr.bf16.gmra.mxu0 %v4872
    %v4927 = vpop.f32.mrf.mxu0
    %v4928 = vadd.f32 %v4851, %v4927
    %v4929 = vpop.f32.mrf.mxu0
    %v4930 = vpop.f32.mrf.mxu0
    %v4931 = vadd.f32 %v4851, %v4930
    %v4932 = vpop.f32.mrf.mxu0
    %4933 = vmatprep.mubr.bf16.mxu0 0
    %4934 = vmatmul.mubr.bf16.gmra.mxu0 %v4875
    %v4935 = vpop.f32.mrf.mxu0
    %v4936 = vadd.f32 %v4851, %v4935
    %v4937 = vpop.f32.mrf.mxu0
    %v4938 = vpop.f32.mrf.mxu0
    %v4939 = vadd.f32 %v4851, %v4938
    %v4940 = vpop.f32.mrf.mxu0
    %4941 = vdwg.mxu0
    %4942 = vst [vmem:[#allocation4] sm:$0xff] %v4912
    %4943 = vst [vmem:[#allocation4 + $0x8] sm:$0xff] %v4915
    %4944 = vst [vmem:[#allocation4 + $0x10] sm:$0xff] %v4920
    %4945 = vst [vmem:[#allocation4 + $0x18] sm:$0xff] %v4923
    %4946 = vst [vmem:[#allocation4 + $0x20] sm:$0xff] %v4928
    %4947 = vst [vmem:[#allocation4 + $0x28] sm:$0xff] %v4931
    %4948 = vst [vmem:[#allocation4 + $0x30] sm:$0xff] %v4936
    %4949 = vst [vmem:[#allocation4 + $0x38] sm:$0xff] %v4939
    %s4950 = scalar_lea.vmem %s3, 160
    %v4951 = vld [vmem:[%s4950] sm:$0xff]
    %v4952 = vld [vmem:[%s4950 + $0x8] sm:$0xff]
    %v4953 = vld [vmem:[%s4950 + $0x10] sm:$0xff]
    %v4954 = vld [vmem:[%s4950 + $0x18] sm:$0xff]
    %v4955 = vld [vmem:[#allocation4] sm:$0xff]
    %4956 = vmatprep.subr.mxu0 0.0
    %4957 = vmatpush1.msra.mxu0 0.0
    %4958 = vmatprep.subr.mxu0 0.0
    %4959 = vmatpush1.msra.mxu0 0.0
    %4960 = vmatprep.subr.mxu0 0.0
    %4961 = vmatpush1.msra.mxu0 0.0
    %4962 = vmatprep.subr.mxu0 0.0
    %4963 = vmatpush1.msra.mxu0 0.0
    %4964 = vmatprep.subr.mxu0 0.0
    %4965 = vmatpush1.msra.mxu0 0.0
    %4966 = vmatprep.subr.mxu0 0.0
    %4967 = vmatpush1.msra.mxu0 0.0
    %4968 = vmatprep.subr.mxu0 0.0
    %4969 = vmatpush1.msra.mxu0 0.0
    %4970 = vmatprep.subr.mxu0 0.0
    %4971 = vmatpush1.msra.mxu0 0.0
    %4972 = vmatprep.subr.mxu0 0.0
    %4973 = vmatpush1.msra.mxu0 0.0
    %4974 = vmatprep.subr.mxu0 0.0
    %4975 = vmatpush1.msra.mxu0 0.0
    %4976 = vmatprep.subr.mxu0 0.0
    %4977 = vmatpush1.msra.mxu0 0.0
    %4978 = vmatprep.subr.mxu0 0.0
    %4979 = vmatpush1.msra.mxu0 0.0
    %4980 = vmatprep.subr.mxu0 0.0
    %4981 = vmatpush1.msra.mxu0 %v4954
    %4982 = vmatprep.subr.mxu0 0.0
    %4983 = vmatpush1.msra.mxu0 %v4953
    %4984 = vmatprep.subr.mxu0 0.0
    %4985 = vmatpush1.msra.mxu0 %v4952
    %4986 = vmatprep.subr.mxu0 0.0
    %4987 = vmatpush1.msra.mxu0 %v4951
    %4988 = vmatprep.subr.mxu0 0.0
    %4989 = vmatpush2.msra.mxu0 0.0
    %4990 = vmatprep.subr.mxu0 0.0
    %4991 = vmatpush2.msra.mxu0 0.0
    %4992 = vmatprep.subr.mxu0 0.0
    %4993 = vmatpush2.msra.mxu0 0.0
    %4994 = vmatprep.subr.mxu0 0.0
    %4995 = vmatpush2.msra.mxu0 0.0
    %4996 = vmatprep.subr.mxu0 0.0
    %4997 = vmatpush2.msra.mxu0 0.0
    %4998 = vmatprep.subr.mxu0 0.0
    %4999 = vmatpush2.msra.mxu0 0.0
    %5000 = vmatprep.subr.mxu0 0.0
    %5001 = vmatpush2.msra.mxu0 0.0
    %5002 = vmatprep.subr.mxu0 0.0
    %5003 = vmatpush2.msra.mxu0 0.0
    %5004 = vmatprep.subr.mxu0 0.0
    %5005 = vmatpush2.msra.mxu0 0.0
    %5006 = vmatprep.subr.mxu0 0.0
    %5007 = vmatpush2.msra.mxu0 0.0
    %5008 = vmatprep.subr.mxu0 0.0
    %5009 = vmatpush2.msra.mxu0 0.0
    %5010 = vmatprep.subr.mxu0 0.0
    %5011 = vmatpush2.msra.mxu0 0.0
    %5012 = vmatprep.subr.mxu0 0.0
    %5013 = vmatpush2.msra.mxu0 0.0
    %5014 = vmatprep.subr.mxu0 0.0
    %5015 = vmatpush2.msra.mxu0 0.0
    %5016 = vmatprep.subr.mxu0 0.0
    %5017 = vmatpush2.msra.mxu0 0.0
    %5018 = vmatprep.subr.mxu0 0.0
    %5019 = vmatpush2.msra.mxu0 0.0
    %5020 = vmatprep.mubr.f32.mxu0 0.0
    %5021 = vmatmul.mubr.f32.gmra.mxu0 %v177
    %v5022 = vpop.f32.mrf.mxu0
    %v5023 = vadd.f32 0.0, %v5022
    %v5024 = vpop.f32.mrf.mxu0
    %5025 = vdwg.mxu0
    %v5026 = vadd.f32 %v4955, %v5023
    %v5027 = vsub.f32 0.0, %v5026
    %v5028 = vmin.f32 %v5027, 80.0
    %v5029 = vmul.f32 %v5028, 1.442695
    %v5030 = vpow.pop %v5029
    %v5031 = vadd.f32 %v5030, 1.0
    %v5032 = vrcp.pop %v5031
    %v5033 = vtanh.pop %v5026
    %v5034 = vmul.f32 %v5032, 0.0
    %5036 = vrot.lane.b32.xlu0 %v5033, 32
    %v5037 = vpop.permute.xlu0 %5036
    %v5039 = vmul.f32 %v5032, %v5037
    %5041 = vrot.lane.b32.xlu0 %v5039, 32
    %v5042 = vpop.permute.xlu0 %5041
    %v5044 = vadd.f32 %v5034, %v5042
    %v5045 = vtanh.pop %v5044
    %5047 = vrot.lane.b32.xlu0 %v5045, 32
    %v5048 = vpop.permute.xlu0 %5047
    %v5050 = vmul.f32 %v5032, %v5048
    %5052 = vrot.lane.b32.xlu0 %v5050, 64
    %v5053 = vpop.permute.xlu0 %5052
    %5055 = vst.msk [vmem:[#allocation2] sm:$0xff] %vm85, %v5053
    %v5056 = vld [vmem:[#allocation4 + $0x8] sm:$0xff]
    %v5057 = vsel %vm85, %v5053, 0
    %5059 = vmatprep.subr.mxu0 0.0
    %5060 = vmatpush1.msra.mxu0 0.0
    %5061 = vmatprep.subr.mxu0 0.0
    %5062 = vmatpush1.msra.mxu0 0.0
    %5063 = vmatprep.subr.mxu0 0.0
    %5064 = vmatpush1.msra.mxu0 0.0
    %5065 = vmatprep.subr.mxu0 0.0
    %5066 = vmatpush1.msra.mxu0 0.0
    %5067 = vmatprep.subr.mxu0 0.0
    %5068 = vmatpush1.msra.mxu0 0.0
    %5069 = vmatprep.subr.mxu0 0.0
    %5070 = vmatpush1.msra.mxu0 0.0
    %5071 = vmatprep.subr.mxu0 0.0
    %5072 = vmatpush1.msra.mxu0 0.0
    %5073 = vmatprep.subr.mxu0 0.0
    %5074 = vmatpush1.msra.mxu0 0.0
    %5075 = vmatprep.subr.mxu0 0.0
    %5076 = vmatpush1.msra.mxu0 0.0
    %5077 = vmatprep.subr.mxu0 0.0
    %5078 = vmatpush1.msra.mxu0 0.0
    %5079 = vmatprep.subr.mxu0 0.0
    %5080 = vmatpush1.msra.mxu0 0.0
    %5081 = vmatprep.subr.mxu0 0.0
    %5082 = vmatpush1.msra.mxu0 0.0
    %5083 = vmatprep.subr.mxu0 0.0
    %5084 = vmatpush1.msra.mxu0 %v4954
    %5085 = vmatprep.subr.mxu0 0.0
    %5086 = vmatpush1.msra.mxu0 %v4953
    %5087 = vmatprep.subr.mxu0 0.0
    %5088 = vmatpush1.msra.mxu0 %v4952
    %5089 = vmatprep.subr.mxu0 0.0
    %5090 = vmatpush1.msra.mxu0 %v4951
    %5091 = vmatprep.subr.mxu0 0.0
    %5092 = vmatpush2.msra.mxu0 0.0
    %5093 = vmatprep.subr.mxu0 0.0
    %5094 = vmatpush2.msra.mxu0 0.0
    %5095 = vmatprep.subr.mxu0 0.0
    %5096 = vmatpush2.msra.mxu0 0.0
    %5097 = vmatprep.subr.mxu0 0.0
    %5098 = vmatpush2.msra.mxu0 0.0
    %5099 = vmatprep.subr.mxu0 0.0
    %5100 = vmatpush2.msra.mxu0 0.0
    %5101 = vmatprep.subr.mxu0 0.0
    %5102 = vmatpush2.msra.mxu0 0.0
    %5103 = vmatprep.subr.mxu0 0.0
    %5104 = vmatpush2.msra.mxu0 0.0
    %5105 = vmatprep.subr.mxu0 0.0
    %5106 = vmatpush2.msra.mxu0 0.0
    %5107 = vmatprep.subr.mxu0 0.0
    %5108 = vmatpush2.msra.mxu0 0.0
    %5109 = vmatprep.subr.mxu0 0.0
    %5110 = vmatpush2.msra.mxu0 0.0
    %5111 = vmatprep.subr.mxu0 0.0
    %5112 = vmatpush2.msra.mxu0 0.0
    %5113 = vmatprep.subr.mxu0 0.0
    %5114 = vmatpush2.msra.mxu0 0.0
    %5115 = vmatprep.subr.mxu0 0.0
    %5116 = vmatpush2.msra.mxu0 0.0
    %5117 = vmatprep.subr.mxu0 0.0
    %5118 = vmatpush2.msra.mxu0 0.0
    %5119 = vmatprep.subr.mxu0 0.0
    %5120 = vmatpush2.msra.mxu0 0.0
    %5121 = vmatprep.subr.mxu0 0.0
    %5122 = vmatpush2.msra.mxu0 0.0
    %5123 = vmatprep.mubr.f32.mxu0 0.0
    %5124 = vmatmul.mubr.f32.gmra.mxu0 %v5057
    %v5125 = vpop.f32.mrf.mxu0
    %v5126 = vadd.f32 0.0, %v5125
    %v5127 = vpop.f32.mrf.mxu0
    %5128 = vdwg.mxu0
    %v5129 = vadd.f32 %v5056, %v5126
    %v5130 = vsub.f32 0.0, %v5129
    %v5131 = vmin.f32 %v5130, 80.0
    %v5132 = vmul.f32 %v5131, 1.442695
    %v5133 = vpow.pop %v5132
    %v5134 = vadd.f32 %v5133, 1.0
    %v5135 = vrcp.pop %v5134
    %v5136 = vtanh.pop %v5129
    %v5137 = vmul.f32 %v5135, %v5044
    %5139 = vrot.lane.b32.xlu0 %v5136, 32
    %v5140 = vpop.permute.xlu0 %5139
    %v5142 = vmul.f32 %v5135, %v5140
    %5144 = vrot.lane.b32.xlu0 %v5142, 32
    %v5145 = vpop.permute.xlu0 %5144
    %v5147 = vadd.f32 %v5137, %v5145
    %v5148 = vtanh.pop %v5147
    %5150 = vrot.lane.b32.xlu0 %v5148, 32
    %v5151 = vpop.permute.xlu0 %5150
    %v5153 = vmul.f32 %v5135, %v5151
    %5155 = vrot.lane.b32.xlu0 %v5153, 64
    %v5156 = vpop.permute.xlu0 %5155
    %5158 = vst.msk [vmem:[#allocation2 + $0x8] sm:$0xff] %vm85, %v5156
    %v5159 = vld [vmem:[#allocation4 + $0x10] sm:$0xff]
    %v5160 = vsel %vm85, %v5156, 0
    %5162 = vmatprep.subr.mxu0 0.0
    %5163 = vmatpush1.msra.mxu0 0.0
    %5164 = vmatprep.subr.mxu0 0.0
    %5165 = vmatpush1.msra.mxu0 0.0
    %5166 = vmatprep.subr.mxu0 0.0
    %5167 = vmatpush1.msra.mxu0 0.0
    %5168 = vmatprep.subr.mxu0 0.0
    %5169 = vmatpush1.msra.mxu0 0.0
    %5170 = vmatprep.subr.mxu0 0.0
    %5171 = vmatpush1.msra.mxu0 0.0
    %5172 = vmatprep.subr.mxu0 0.0
    %5173 = vmatpush1.msra.mxu0 0.0
    %5174 = vmatprep.subr.mxu0 0.0
    %5175 = vmatpush1.msra.mxu0 0.0
    %5176 = vmatprep.subr.mxu0 0.0
    %5177 = vmatpush1.msra.mxu0 0.0
    %5178 = vmatprep.subr.mxu0 0.0
    %5179 = vmatpush1.msra.mxu0 0.0
    %5180 = vmatprep.subr.mxu0 0.0
    %5181 = vmatpush1.msra.mxu0 0.0
    %5182 = vmatprep.subr.mxu0 0.0
    %5183 = vmatpush1.msra.mxu0 0.0
    %5184 = vmatprep.subr.mxu0 0.0
    %5185 = vmatpush1.msra.mxu0 0.0
    %5186 = vmatprep.subr.mxu0 0.0
    %5187 = vmatpush1.msra.mxu0 %v4954
    %5188 = vmatprep.subr.mxu0 0.0
    %5189 = vmatpush1.msra.mxu0 %v4953
    %5190 = vmatprep.subr.mxu0 0.0
    %5191 = vmatpush1.msra.mxu0 %v4952
    %5192 = vmatprep.subr.mxu0 0.0
    %5193 = vmatpush1.msra.mxu0 %v4951
    %5194 = vmatprep.subr.mxu0 0.0
    %5195 = vmatpush2.msra.mxu0 0.0
    %5196 = vmatprep.subr.mxu0 0.0
    %5197 = vmatpush2.msra.mxu0 0.0
    %5198 = vmatprep.subr.mxu0 0.0
    %5199 = vmatpush2.msra.mxu0 0.0
    %5200 = vmatprep.subr.mxu0 0.0
    %5201 = vmatpush2.msra.mxu0 0.0
    %5202 = vmatprep.subr.mxu0 0.0
    %5203 = vmatpush2.msra.mxu0 0.0
    %5204 = vmatprep.subr.mxu0 0.0
    %5205 = vmatpush2.msra.mxu0 0.0
    %5206 = vmatprep.subr.mxu0 0.0
    %5207 = vmatpush2.msra.mxu0 0.0
    %5208 = vmatprep.subr.mxu0 0.0
    %5209 = vmatpush2.msra.mxu0 0.0
    %5210 = vmatprep.subr.mxu0 0.0
    %5211 = vmatpush2.msra.mxu0 0.0
    %5212 = vmatprep.subr.mxu0 0.0
    %5213 = vmatpush2.msra.mxu0 0.0
    %5214 = vmatprep.subr.mxu0 0.0
    %5215 = vmatpush2.msra.mxu0 0.0
    %5216 = vmatprep.subr.mxu0 0.0
    %5217 = vmatpush2.msra.mxu0 0.0
    %5218 = vmatprep.subr.mxu0 0.0
    %5219 = vmatpush2.msra.mxu0 0.0
    %5220 = vmatprep.subr.mxu0 0.0
    %5221 = vmatpush2.msra.mxu0 0.0
    %5222 = vmatprep.subr.mxu0 0.0
    %5223 = vmatpush2.msra.mxu0 0.0
    %5224 = vmatprep.subr.mxu0 0.0
    %5225 = vmatpush2.msra.mxu0 0.0
    %5226 = vmatprep.mubr.f32.mxu0 0.0
    %5227 = vmatmul.mubr.f32.gmra.mxu0 %v5160
    %v5228 = vpop.f32.mrf.mxu0
    %v5229 = vadd.f32 0.0, %v5228
    %v5230 = vpop.f32.mrf.mxu0
    %5231 = vdwg.mxu0
    %v5232 = vadd.f32 %v5159, %v5229
    %v5233 = vsub.f32 0.0, %v5232
    %v5234 = vmin.f32 %v5233, 80.0
    %v5235 = vmul.f32 %v5234, 1.442695
    %v5236 = vpow.pop %v5235
    %v5237 = vadd.f32 %v5236, 1.0
    %v5238 = vrcp.pop %v5237
    %v5239 = vtanh.pop %v5232
    %v5240 = vmul.f32 %v5238, %v5147
    %5242 = vrot.lane.b32.xlu0 %v5239, 32
    %v5243 = vpop.permute.xlu0 %5242
    %v5245 = vmul.f32 %v5238, %v5243
    %5247 = vrot.lane.b32.xlu0 %v5245, 32
    %v5248 = vpop.permute.xlu0 %5247
    %v5250 = vadd.f32 %v5240, %v5248
    %v5251 = vtanh.pop %v5250
    %5253 = vrot.lane.b32.xlu0 %v5251, 32
    %v5254 = vpop.permute.xlu0 %5253
    %v5256 = vmul.f32 %v5238, %v5254
    %5258 = vrot.lane.b32.xlu0 %v5256, 64
    %v5259 = vpop.permute.xlu0 %5258
    %5261 = vst.msk [vmem:[#allocation2 + $0x10] sm:$0xff] %vm85, %v5259
    %v5262 = vld [vmem:[#allocation4 + $0x18] sm:$0xff]
    %v5263 = vsel %vm85, %v5259, 0
    %5265 = vmatprep.subr.mxu0 0.0
    %5266 = vmatpush1.msra.mxu0 0.0
    %5267 = vmatprep.subr.mxu0 0.0
    %5268 = vmatpush1.msra.mxu0 0.0
    %5269 = vmatprep.subr.mxu0 0.0
    %5270 = vmatpush1.msra.mxu0 0.0
    %5271 = vmatprep.subr.mxu0 0.0
    %5272 = vmatpush1.msra.mxu0 0.0
    %5273 = vmatprep.subr.mxu0 0.0
    %5274 = vmatpush1.msra.mxu0 0.0
    %5275 = vmatprep.subr.mxu0 0.0
    %5276 = vmatpush1.msra.mxu0 0.0
    %5277 = vmatprep.subr.mxu0 0.0
    %5278 = vmatpush1.msra.mxu0 0.0
    %5279 = vmatprep.subr.mxu0 0.0
    %5280 = vmatpush1.msra.mxu0 0.0
    %5281 = vmatprep.subr.mxu0 0.0
    %5282 = vmatpush1.msra.mxu0 0.0
    %5283 = vmatprep.subr.mxu0 0.0
    %5284 = vmatpush1.msra.mxu0 0.0
    %5285 = vmatprep.subr.mxu0 0.0
    %5286 = vmatpush1.msra.mxu0 0.0
    %5287 = vmatprep.subr.mxu0 0.0
    %5288 = vmatpush1.msra.mxu0 0.0
    %5289 = vmatprep.subr.mxu0 0.0
    %5290 = vmatpush1.msra.mxu0 %v4954
    %5291 = vmatprep.subr.mxu0 0.0
    %5292 = vmatpush1.msra.mxu0 %v4953
    %5293 = vmatprep.subr.mxu0 0.0
    %5294 = vmatpush1.msra.mxu0 %v4952
    %5295 = vmatprep.subr.mxu0 0.0
    %5296 = vmatpush1.msra.mxu0 %v4951
    %5297 = vmatprep.subr.mxu0 0.0
    %5298 = vmatpush2.msra.mxu0 0.0
    %5299 = vmatprep.subr.mxu0 0.0
    %5300 = vmatpush2.msra.mxu0 0.0
    %5301 = vmatprep.subr.mxu0 0.0
    %5302 = vmatpush2.msra.mxu0 0.0
    %5303 = vmatprep.subr.mxu0 0.0
    %5304 = vmatpush2.msra.mxu0 0.0
    %5305 = vmatprep.subr.mxu0 0.0
    %5306 = vmatpush2.msra.mxu0 0.0
    %5307 = vmatprep.subr.mxu0 0.0
    %5308 = vmatpush2.msra.mxu0 0.0
    %5309 = vmatprep.subr.mxu0 0.0
    %5310 = vmatpush2.msra.mxu0 0.0
    %5311 = vmatprep.subr.mxu0 0.0
    %5312 = vmatpush2.msra.mxu0 0.0
    %5313 = vmatprep.subr.mxu0 0.0
    %5314 = vmatpush2.msra.mxu0 0.0
    %5315 = vmatprep.subr.mxu0 0.0
    %5316 = vmatpush2.msra.mxu0 0.0
    %5317 = vmatprep.subr.mxu0 0.0
    %5318 = vmatpush2.msra.mxu0 0.0
    %5319 = vmatprep.subr.mxu0 0.0
    %5320 = vmatpush2.msra.mxu0 0.0
    %5321 = vmatprep.subr.mxu0 0.0
    %5322 = vmatpush2.msra.mxu0 0.0
    %5323 = vmatprep.subr.mxu0 0.0
    %5324 = vmatpush2.msra.mxu0 0.0
    %5325 = vmatprep.subr.mxu0 0.0
    %5326 = vmatpush2.msra.mxu0 0.0
    %5327 = vmatprep.subr.mxu0 0.0
    %5328 = vmatpush2.msra.mxu0 0.0
    %5329 = vmatprep.mubr.f32.mxu0 0.0
    %5330 = vmatmul.mubr.f32.gmra.mxu0 %v5263
    %v5331 = vpop.f32.mrf.mxu0
    %v5332 = vadd.f32 0.0, %v5331
    %v5333 = vpop.f32.mrf.mxu0
    %5334 = vdwg.mxu0
    %v5335 = vadd.f32 %v5262, %v5332
    %v5336 = vsub.f32 0.0, %v5335
    %v5337 = vmin.f32 %v5336, 80.0
    %v5338 = vmul.f32 %v5337, 1.442695
    %v5339 = vpow.pop %v5338
    %v5340 = vadd.f32 %v5339, 1.0
    %v5341 = vrcp.pop %v5340
    %v5342 = vtanh.pop %v5335
    %v5343 = vmul.f32 %v5341, %v5250
    %5345 = vrot.lane.b32.xlu0 %v5342, 32
    %v5346 = vpop.permute.xlu0 %5345
    %v5348 = vmul.f32 %v5341, %v5346
    %5350 = vrot.lane.b32.xlu0 %v5348, 32
    %v5351 = vpop.permute.xlu0 %5350
    %v5353 = vadd.f32 %v5343, %v5351
    %v5354 = vtanh.pop %v5353
    %5356 = vrot.lane.b32.xlu0 %v5354, 32
    %v5357 = vpop.permute.xlu0 %5356
    %v5359 = vmul.f32 %v5341, %v5357
    %5361 = vrot.lane.b32.xlu0 %v5359, 64
    %v5362 = vpop.permute.xlu0 %5361
    %5364 = vst.msk [vmem:[#allocation2 + $0x18] sm:$0xff] %vm85, %v5362
    %v5365 = vld [vmem:[#allocation4 + $0x20] sm:$0xff]
    %v5366 = vsel %vm85, %v5362, 0
    %5368 = vmatprep.subr.mxu0 0.0
    %5369 = vmatpush1.msra.mxu0 0.0
    %5370 = vmatprep.subr.mxu0 0.0
    %5371 = vmatpush1.msra.mxu0 0.0
    %5372 = vmatprep.subr.mxu0 0.0
    %5373 = vmatpush1.msra.mxu0 0.0
    %5374 = vmatprep.subr.mxu0 0.0
    %5375 = vmatpush1.msra.mxu0 0.0
    %5376 = vmatprep.subr.mxu0 0.0
    %5377 = vmatpush1.msra.mxu0 0.0
    %5378 = vmatprep.subr.mxu0 0.0
    %5379 = vmatpush1.msra.mxu0 0.0
    %5380 = vmatprep.subr.mxu0 0.0
    %5381 = vmatpush1.msra.mxu0 0.0
    %5382 = vmatprep.subr.mxu0 0.0
    %5383 = vmatpush1.msra.mxu0 0.0
    %5384 = vmatprep.subr.mxu0 0.0
    %5385 = vmatpush1.msra.mxu0 0.0
    %5386 = vmatprep.subr.mxu0 0.0
    %5387 = vmatpush1.msra.mxu0 0.0
    %5388 = vmatprep.subr.mxu0 0.0
    %5389 = vmatpush1.msra.mxu0 0.0
    %5390 = vmatprep.subr.mxu0 0.0
    %5391 = vmatpush1.msra.mxu0 0.0
    %5392 = vmatprep.subr.mxu0 0.0
    %5393 = vmatpush1.msra.mxu0 %v4954
    %5394 = vmatprep.subr.mxu0 0.0
    %5395 = vmatpush1.msra.mxu0 %v4953
    %5396 = vmatprep.subr.mxu0 0.0
    %5397 = vmatpush1.msra.mxu0 %v4952
    %5398 = vmatprep.subr.mxu0 0.0
    %5399 = vmatpush1.msra.mxu0 %v4951
    %5400 = vmatprep.subr.mxu0 0.0
    %5401 = vmatpush2.msra.mxu0 0.0
    %5402 = vmatprep.subr.mxu0 0.0
    %5403 = vmatpush2.msra.mxu0 0.0
    %5404 = vmatprep.subr.mxu0 0.0
    %5405 = vmatpush2.msra.mxu0 0.0
    %5406 = vmatprep.subr.mxu0 0.0
    %5407 = vmatpush2.msra.mxu0 0.0
    %5408 = vmatprep.subr.mxu0 0.0
    %5409 = vmatpush2.msra.mxu0 0.0
    %5410 = vmatprep.subr.mxu0 0.0
    %5411 = vmatpush2.msra.mxu0 0.0
    %5412 = vmatprep.subr.mxu0 0.0
    %5413 = vmatpush2.msra.mxu0 0.0
    %5414 = vmatprep.subr.mxu0 0.0
    %5415 = vmatpush2.msra.mxu0 0.0
    %5416 = vmatprep.subr.mxu0 0.0
    %5417 = vmatpush2.msra.mxu0 0.0
    %5418 = vmatprep.subr.mxu0 0.0
    %5419 = vmatpush2.msra.mxu0 0.0
    %5420 = vmatprep.subr.mxu0 0.0
    %5421 = vmatpush2.msra.mxu0 0.0
    %5422 = vmatprep.subr.mxu0 0.0
    %5423 = vmatpush2.msra.mxu0 0.0
    %5424 = vmatprep.subr.mxu0 0.0
    %5425 = vmatpush2.msra.mxu0 0.0
    %5426 = vmatprep.subr.mxu0 0.0
    %5427 = vmatpush2.msra.mxu0 0.0
    %5428 = vmatprep.subr.mxu0 0.0
    %5429 = vmatpush2.msra.mxu0 0.0
    %5430 = vmatprep.subr.mxu0 0.0
    %5431 = vmatpush2.msra.mxu0 0.0
    %5432 = vmatprep.mubr.f32.mxu0 0.0
    %5433 = vmatmul.mubr.f32.gmra.mxu0 %v5366
    %v5434 = vpop.f32.mrf.mxu0
    %v5435 = vadd.f32 0.0, %v5434
    %v5436 = vpop.f32.mrf.mxu0
    %5437 = vdwg.mxu0
    %v5438 = vadd.f32 %v5365, %v5435
    %v5439 = vsub.f32 0.0, %v5438
    %v5440 = vmin.f32 %v5439, 80.0
    %v5441 = vmul.f32 %v5440, 1.442695
    %v5442 = vpow.pop %v5441
    %v5443 = vadd.f32 %v5442, 1.0
    %v5444 = vrcp.pop %v5443
    %v5445 = vtanh.pop %v5438
    %v5446 = vmul.f32 %v5444, %v5353
    %5448 = vrot.lane.b32.xlu0 %v5445, 32
    %v5449 = vpop.permute.xlu0 %5448
    %v5451 = vmul.f32 %v5444, %v5449
    %5453 = vrot.lane.b32.xlu0 %v5451, 32
    %v5454 = vpop.permute.xlu0 %5453
    %v5456 = vadd.f32 %v5446, %v5454
    %v5457 = vtanh.pop %v5456
    %5459 = vrot.lane.b32.xlu0 %v5457, 32
    %v5460 = vpop.permute.xlu0 %5459
    %v5462 = vmul.f32 %v5444, %v5460
    %5464 = vrot.lane.b32.xlu0 %v5462, 64
    %v5465 = vpop.permute.xlu0 %5464
    %5467 = vst.msk [vmem:[#allocation2 + $0x20] sm:$0xff] %vm85, %v5465
    %v5468 = vld [vmem:[#allocation4 + $0x28] sm:$0xff]
    %v5469 = vsel %vm85, %v5465, 0
    %5471 = vmatprep.subr.mxu0 0.0
    %5472 = vmatpush1.msra.mxu0 0.0
    %5473 = vmatprep.subr.mxu0 0.0
    %5474 = vmatpush1.msra.mxu0 0.0
    %5475 = vmatprep.subr.mxu0 0.0
    %5476 = vmatpush1.msra.mxu0 0.0
    %5477 = vmatprep.subr.mxu0 0.0
    %5478 = vmatpush1.msra.mxu0 0.0
    %5479 = vmatprep.subr.mxu0 0.0
    %5480 = vmatpush1.msra.mxu0 0.0
    %5481 = vmatprep.subr.mxu0 0.0
    %5482 = vmatpush1.msra.mxu0 0.0
    %5483 = vmatprep.subr.mxu0 0.0
    %5484 = vmatpush1.msra.mxu0 0.0
    %5485 = vmatprep.subr.mxu0 0.0
    %5486 = vmatpush1.msra.mxu0 0.0
    %5487 = vmatprep.subr.mxu0 0.0
    %5488 = vmatpush1.msra.mxu0 0.0
    %5489 = vmatprep.subr.mxu0 0.0
    %5490 = vmatpush1.msra.mxu0 0.0
    %5491 = vmatprep.subr.mxu0 0.0
    %5492 = vmatpush1.msra.mxu0 0.0
    %5493 = vmatprep.subr.mxu0 0.0
    %5494 = vmatpush1.msra.mxu0 0.0
    %5495 = vmatprep.subr.mxu0 0.0
    %5496 = vmatpush1.msra.mxu0 %v4954
    %5497 = vmatprep.subr.mxu0 0.0
    %5498 = vmatpush1.msra.mxu0 %v4953
    %5499 = vmatprep.subr.mxu0 0.0
    %5500 = vmatpush1.msra.mxu0 %v4952
    %5501 = vmatprep.subr.mxu0 0.0
    %5502 = vmatpush1.msra.mxu0 %v4951
    %5503 = vmatprep.subr.mxu0 0.0
    %5504 = vmatpush2.msra.mxu0 0.0
    %5505 = vmatprep.subr.mxu0 0.0
    %5506 = vmatpush2.msra.mxu0 0.0
    %5507 = vmatprep.subr.mxu0 0.0
    %5508 = vmatpush2.msra.mxu0 0.0
    %5509 = vmatprep.subr.mxu0 0.0
    %5510 = vmatpush2.msra.mxu0 0.0
    %5511 = vmatprep.subr.mxu0 0.0
    %5512 = vmatpush2.msra.mxu0 0.0
    %5513 = vmatprep.subr.mxu0 0.0
    %5514 = vmatpush2.msra.mxu0 0.0
    %5515 = vmatprep.subr.mxu0 0.0
    %5516 = vmatpush2.msra.mxu0 0.0
    %5517 = vmatprep.subr.mxu0 0.0
    %5518 = vmatpush2.msra.mxu0 0.0
    %5519 = vmatprep.subr.mxu0 0.0
    %5520 = vmatpush2.msra.mxu0 0.0
    %5521 = vmatprep.subr.mxu0 0.0
    %5522 = vmatpush2.msra.mxu0 0.0
    %5523 = vmatprep.subr.mxu0 0.0
    %5524 = vmatpush2.msra.mxu0 0.0
    %5525 = vmatprep.subr.mxu0 0.0
    %5526 = vmatpush2.msra.mxu0 0.0
    %5527 = vmatprep.subr.mxu0 0.0
    %5528 = vmatpush2.msra.mxu0 0.0
    %5529 = vmatprep.subr.mxu0 0.0
    %5530 = vmatpush2.msra.mxu0 0.0
    %5531 = vmatprep.subr.mxu0 0.0
    %5532 = vmatpush2.msra.mxu0 0.0
    %5533 = vmatprep.subr.mxu0 0.0
    %5534 = vmatpush2.msra.mxu0 0.0
    %5535 = vmatprep.mubr.f32.mxu0 0.0
    %5536 = vmatmul.mubr.f32.gmra.mxu0 %v5469
    %v5537 = vpop.f32.mrf.mxu0
    %v5538 = vadd.f32 0.0, %v5537
    %v5539 = vpop.f32.mrf.mxu0
    %5540 = vdwg.mxu0
    %v5541 = vadd.f32 %v5468, %v5538
    %v5542 = vsub.f32 0.0, %v5541
    %v5543 = vmin.f32 %v5542, 80.0
    %v5544 = vmul.f32 %v5543, 1.442695
    %v5545 = vpow.pop %v5544
    %v5546 = vadd.f32 %v5545, 1.0
    %v5547 = vrcp.pop %v5546
    %v5548 = vtanh.pop %v5541
    %v5549 = vmul.f32 %v5547, %v5456
    %5551 = vrot.lane.b32.xlu0 %v5548, 32
    %v5552 = vpop.permute.xlu0 %5551
    %v5554 = vmul.f32 %v5547, %v5552
    %5556 = vrot.lane.b32.xlu0 %v5554, 32
    %v5557 = vpop.permute.xlu0 %5556
    %v5559 = vadd.f32 %v5549, %v5557
    %v5560 = vtanh.pop %v5559
    %5562 = vrot.lane.b32.xlu0 %v5560, 32
    %v5563 = vpop.permute.xlu0 %5562
    %v5565 = vmul.f32 %v5547, %v5563
    %5567 = vrot.lane.b32.xlu0 %v5565, 64
    %v5568 = vpop.permute.xlu0 %5567
    %5570 = vst.msk [vmem:[#allocation2 + $0x28] sm:$0xff] %vm85, %v5568
    %v5571 = vld [vmem:[#allocation4 + $0x30] sm:$0xff]
    %v5572 = vsel %vm85, %v5568, 0
    %5574 = vmatprep.subr.mxu0 0.0
    %5575 = vmatpush1.msra.mxu0 0.0
    %5576 = vmatprep.subr.mxu0 0.0
    %5577 = vmatpush1.msra.mxu0 0.0
    %5578 = vmatprep.subr.mxu0 0.0
    %5579 = vmatpush1.msra.mxu0 0.0
    %5580 = vmatprep.subr.mxu0 0.0
    %5581 = vmatpush1.msra.mxu0 0.0
    %5582 = vmatprep.subr.mxu0 0.0
    %5583 = vmatpush1.msra.mxu0 0.0
    %5584 = vmatprep.subr.mxu0 0.0
    %5585 = vmatpush1.msra.mxu0 0.0
    %5586 = vmatprep.subr.mxu0 0.0
    %5587 = vmatpush1.msra.mxu0 0.0
    %5588 = vmatprep.subr.mxu0 0.0
    %5589 = vmatpush1.msra.mxu0 0.0
    %5590 = vmatprep.subr.mxu0 0.0
    %5591 = vmatpush1.msra.mxu0 0.0
    %5592 = vmatprep.subr.mxu0 0.0
    %5593 = vmatpush1.msra.mxu0 0.0
    %5594 = vmatprep.subr.mxu0 0.0
    %5595 = vmatpush1.msra.mxu0 0.0
    %5596 = vmatprep.subr.mxu0 0.0
    %5597 = vmatpush1.msra.mxu0 0.0
    %5598 = vmatprep.subr.mxu0 0.0
    %5599 = vmatpush1.msra.mxu0 %v4954
    %5600 = vmatprep.subr.mxu0 0.0
    %5601 = vmatpush1.msra.mxu0 %v4953
    %5602 = vmatprep.subr.mxu0 0.0
    %5603 = vmatpush1.msra.mxu0 %v4952
    %5604 = vmatprep.subr.mxu0 0.0
    %5605 = vmatpush1.msra.mxu0 %v4951
    %5606 = vmatprep.subr.mxu0 0.0
    %5607 = vmatpush2.msra.mxu0 0.0
    %5608 = vmatprep.subr.mxu0 0.0
    %5609 = vmatpush2.msra.mxu0 0.0
    %5610 = vmatprep.subr.mxu0 0.0
    %5611 = vmatpush2.msra.mxu0 0.0
    %5612 = vmatprep.subr.mxu0 0.0
    %5613 = vmatpush2.msra.mxu0 0.0
    %5614 = vmatprep.subr.mxu0 0.0
    %5615 = vmatpush2.msra.mxu0 0.0
    %5616 = vmatprep.subr.mxu0 0.0
    %5617 = vmatpush2.msra.mxu0 0.0
    %5618 = vmatprep.subr.mxu0 0.0
    %5619 = vmatpush2.msra.mxu0 0.0
    %5620 = vmatprep.subr.mxu0 0.0
    %5621 = vmatpush2.msra.mxu0 0.0
    %5622 = vmatprep.subr.mxu0 0.0
    %5623 = vmatpush2.msra.mxu0 0.0
    %5624 = vmatprep.subr.mxu0 0.0
    %5625 = vmatpush2.msra.mxu0 0.0
    %5626 = vmatprep.subr.mxu0 0.0
    %5627 = vmatpush2.msra.mxu0 0.0
    %5628 = vmatprep.subr.mxu0 0.0
    %5629 = vmatpush2.msra.mxu0 0.0
    %5630 = vmatprep.subr.mxu0 0.0
    %5631 = vmatpush2.msra.mxu0 0.0
    %5632 = vmatprep.subr.mxu0 0.0
    %5633 = vmatpush2.msra.mxu0 0.0
    %5634 = vmatprep.subr.mxu0 0.0
    %5635 = vmatpush2.msra.mxu0 0.0
    %5636 = vmatprep.subr.mxu0 0.0
    %5637 = vmatpush2.msra.mxu0 0.0
    %5638 = vmatprep.mubr.f32.mxu0 0.0
    %5639 = vmatmul.mubr.f32.gmra.mxu0 %v5572
    %v5640 = vpop.f32.mrf.mxu0
    %v5641 = vadd.f32 0.0, %v5640
    %v5642 = vpop.f32.mrf.mxu0
    %5643 = vdwg.mxu0
    %v5644 = vadd.f32 %v5571, %v5641
    %v5645 = vsub.f32 0.0, %v5644
    %v5646 = vmin.f32 %v5645, 80.0
    %v5647 = vmul.f32 %v5646, 1.442695
    %v5648 = vpow.pop %v5647
    %v5649 = vadd.f32 %v5648, 1.0
    %v5650 = vrcp.pop %v5649
    %v5651 = vtanh.pop %v5644
    %v5652 = vmul.f32 %v5650, %v5559
    %5654 = vrot.lane.b32.xlu0 %v5651, 32
    %v5655 = vpop.permute.xlu0 %5654
    %v5657 = vmul.f32 %v5650, %v5655
    %5659 = vrot.lane.b32.xlu0 %v5657, 32
    %v5660 = vpop.permute.xlu0 %5659
    %v5662 = vadd.f32 %v5652, %v5660
    %v5663 = vtanh.pop %v5662
    %5665 = vrot.lane.b32.xlu0 %v5663, 32
    %v5666 = vpop.permute.xlu0 %5665
    %v5668 = vmul.f32 %v5650, %v5666
    %5670 = vrot.lane.b32.xlu0 %v5668, 64
    %v5671 = vpop.permute.xlu0 %5670
    %5673 = vst.msk [vmem:[#allocation2 + $0x30] sm:$0xff] %vm85, %v5671
    %v5674 = vld [vmem:[#allocation4 + $0x38] sm:$0xff]
    %v5675 = vsel %vm85, %v5671, 0
    %5677 = vmatprep.subr.mxu0 0.0
    %5678 = vmatpush1.msra.mxu0 0.0
    %5679 = vmatprep.subr.mxu0 0.0
    %5680 = vmatpush1.msra.mxu0 0.0
    %5681 = vmatprep.subr.mxu0 0.0
    %5682 = vmatpush1.msra.mxu0 0.0
    %5683 = vmatprep.subr.mxu0 0.0
    %5684 = vmatpush1.msra.mxu0 0.0
    %5685 = vmatprep.subr.mxu0 0.0
    %5686 = vmatpush1.msra.mxu0 0.0
    %5687 = vmatprep.subr.mxu0 0.0
    %5688 = vmatpush1.msra.mxu0 0.0
    %5689 = vmatprep.subr.mxu0 0.0
    %5690 = vmatpush1.msra.mxu0 0.0
    %5691 = vmatprep.subr.mxu0 0.0
    %5692 = vmatpush1.msra.mxu0 0.0
    %5693 = vmatprep.subr.mxu0 0.0
    %5694 = vmatpush1.msra.mxu0 0.0
    %5695 = vmatprep.subr.mxu0 0.0
    %5696 = vmatpush1.msra.mxu0 0.0
    %5697 = vmatprep.subr.mxu0 0.0
    %5698 = vmatpush1.msra.mxu0 0.0
    %5699 = vmatprep.subr.mxu0 0.0
    %5700 = vmatpush1.msra.mxu0 0.0
    %5701 = vmatprep.subr.mxu0 0.0
    %5702 = vmatpush1.msra.mxu0 %v4954
    %5703 = vmatprep.subr.mxu0 0.0
    %5704 = vmatpush1.msra.mxu0 %v4953
    %5705 = vmatprep.subr.mxu0 0.0
    %5706 = vmatpush1.msra.mxu0 %v4952
    %5707 = vmatprep.subr.mxu0 0.0
    %5708 = vmatpush1.msra.mxu0 %v4951
    %5709 = vmatprep.subr.mxu0 0.0
    %5710 = vmatpush2.msra.mxu0 0.0
    %5711 = vmatprep.subr.mxu0 0.0
    %5712 = vmatpush2.msra.mxu0 0.0
    %5713 = vmatprep.subr.mxu0 0.0
    %5714 = vmatpush2.msra.mxu0 0.0
    %5715 = vmatprep.subr.mxu0 0.0
    %5716 = vmatpush2.msra.mxu0 0.0
    %5717 = vmatprep.subr.mxu0 0.0
    %5718 = vmatpush2.msra.mxu0 0.0
    %5719 = vmatprep.subr.mxu0 0.0
    %5720 = vmatpush2.msra.mxu0 0.0
    %5721 = vmatprep.subr.mxu0 0.0
    %5722 = vmatpush2.msra.mxu0 0.0
    %5723 = vmatprep.subr.mxu0 0.0
    %5724 = vmatpush2.msra.mxu0 0.0
    %5725 = vmatprep.subr.mxu0 0.0
    %5726 = vmatpush2.msra.mxu0 0.0
    %5727 = vmatprep.subr.mxu0 0.0
    %5728 = vmatpush2.msra.mxu0 0.0
    %5729 = vmatprep.subr.mxu0 0.0
    %5730 = vmatpush2.msra.mxu0 0.0
    %5731 = vmatprep.subr.mxu0 0.0
    %5732 = vmatpush2.msra.mxu0 0.0
    %5733 = vmatprep.subr.mxu0 0.0
    %5734 = vmatpush2.msra.mxu0 0.0
    %5735 = vmatprep.subr.mxu0 0.0
    %5736 = vmatpush2.msra.mxu0 0.0
    %5737 = vmatprep.subr.mxu0 0.0
    %5738 = vmatpush2.msra.mxu0 0.0
    %5739 = vmatprep.subr.mxu0 0.0
    %5740 = vmatpush2.msra.mxu0 0.0
    %5741 = vmatprep.mubr.f32.mxu0 0.0
    %5742 = vmatmul.mubr.f32.gmra.mxu0 %v5675
    %v5743 = vpop.f32.mrf.mxu0
    %v5744 = vadd.f32 0.0, %v5743
    %v5745 = vpop.f32.mrf.mxu0
    %5746 = vdwg.mxu0
    %v5747 = vadd.f32 %v5674, %v5744
    %v5748 = vsub.f32 0.0, %v5747
    %v5749 = vmin.f32 %v5748, 80.0
    %v5750 = vmul.f32 %v5749, 1.442695
    %v5751 = vpow.pop %v5750
    %v5752 = vadd.f32 %v5751, 1.0
    %v5753 = vrcp.pop %v5752
    %v5754 = vtanh.pop %v5747
    %v5755 = vmul.f32 %v5753, %v5662
    %5757 = vrot.lane.b32.xlu0 %v5754, 32
    %v5758 = vpop.permute.xlu0 %5757
    %v5760 = vmul.f32 %v5753, %v5758
    %5762 = vrot.lane.b32.xlu0 %v5760, 32
    %v5763 = vpop.permute.xlu0 %5762
    %v5765 = vadd.f32 %v5755, %v5763
    %v5766 = vtanh.pop %v5765
    %5768 = vrot.lane.b32.xlu0 %v5766, 32
    %v5769 = vpop.permute.xlu0 %5768
    %v5771 = vmul.f32 %v5753, %v5769
    %5773 = vrot.lane.b32.xlu0 %v5771, 64
    %v5774 = vpop.permute.xlu0 %5773
    %5776 = vst.msk [vmem:[#allocation2 + $0x38] sm:$0xff] %vm85, %v5774
    %v5777 = vld [vmem:[#allocation2] sm:$0xff]
    %v5778 = vld [vmem:[#allocation2 + $0x8] sm:$0xff]
    %v5779 = vld [vmem:[#allocation2 + $0x10] sm:$0xff]
    %v5780 = vld [vmem:[#allocation2 + $0x18] sm:$0xff]
    %v5781 = vld [vmem:[#allocation2 + $0x20] sm:$0xff]
    %v5782 = vld [vmem:[#allocation2 + $0x28] sm:$0xff]
    %v5783 = vld [vmem:[#allocation2 + $0x30] sm:$0xff]
    %v5784 = vld [vmem:[#allocation2 + $0x38] sm:$0xff]
    %v5785 = vld [vmem:[#allocation3] sm:$0xff]
    %v5786 = vld [vmem:[#allocation3 + $0x8] sm:$0xff]
    %v5787 = vld [vmem:[#allocation3 + $0x10] sm:$0xff]
    %v5788 = vld [vmem:[#allocation3 + $0x18] sm:$0xff]
    %v5789 = vld [vmem:[#allocation3 + $0x20] sm:$0xff]
    %v5790 = vld [vmem:[#allocation3 + $0x28] sm:$0xff]
    %v5791 = vld [vmem:[#allocation3 + $0x30] sm:$0xff]
    %v5792 = vld [vmem:[#allocation3 + $0x38] sm:$0xff]
    %v5793 = vadd.f32 %v5777, %v5785
    %v5794 = vadd.f32 %v5778, %v5786
    %v5795 = vadd.f32 %v5779, %v5787
    %v5796 = vadd.f32 %v5780, %v5788
    %v5797 = vadd.f32 %v5781, %v5789
    %v5798 = vadd.f32 %v5782, %v5790
    %v5799 = vadd.f32 %v5783, %v5791
    %v5800 = vadd.f32 %v5784, %v5792
    %5801 = vst.msk [vmem:[#allocation2] sm:$0xff] %vm85, %v5793
    %5802 = vst.msk [vmem:[#allocation2 + $0x8] sm:$0xff] %vm85, %v5794
    %5803 = vst.msk [vmem:[#allocation2 + $0x10] sm:$0xff] %vm85, %v5795
    %5804 = vst.msk [vmem:[#allocation2 + $0x18] sm:$0xff] %vm85, %v5796
    %5805 = vst.msk [vmem:[#allocation2 + $0x20] sm:$0xff] %vm85, %v5797
    %5806 = vst.msk [vmem:[#allocation2 + $0x28] sm:$0xff] %vm85, %v5798
    %5807 = vst.msk [vmem:[#allocation2 + $0x30] sm:$0xff] %vm85, %v5799
    %5808 = vst.msk [vmem:[#allocation2 + $0x38] sm:$0xff] %vm85, %v5800
    %v5809 = vld [vmem:[#allocation2] sm:$0xff]
    %v5810 = vld [vmem:[#allocation2 + $0x8] sm:$0xff]
    %v5811 = vld [vmem:[#allocation2 + $0x10] sm:$0xff]
    %v5812 = vld [vmem:[#allocation2 + $0x18] sm:$0xff]
    %v5813 = vld [vmem:[#allocation2 + $0x20] sm:$0xff]
    %v5814 = vld [vmem:[#allocation2 + $0x28] sm:$0xff]
    %v5815 = vld [vmem:[#allocation2 + $0x30] sm:$0xff]
    %v5816 = vld [vmem:[#allocation2 + $0x38] sm:$0xff]
    %v5817 = vpack.c.bf16 %v5810, %v5809
    %v5818 = vpack.c.bf16 %v5812, %v5811
    %v5819 = vpack.c.bf16 %v5814, %v5813
    %v5820 = vpack.c.bf16 %v5816, %v5815
    %v5821 = vld [vmem:[%s5] sm:$0xf]
    %v5822 = vld [vmem:[%s5 + $0x4] sm:$0xf]
    %v5823 = vld [vmem:[%s5 + $0x8] sm:$0xf]
    %v5824 = vld [vmem:[%s5 + $0xc] sm:$0xf]
    %v5825 = vld [vmem:[%s6] sm:$0x1]
    %v5827 = vlaneseq
    %v5828 = vshrl.u32 %v5827, 7
    %v5829 = vsub.s32 0, %v5828
    %v5830 = vrot.slane %v5825, %v5829
    %v5836 = vunpack.c.l.b16 %v5821
    %v5837 = vunpack.c.l.b16 %v5822
    %v5838 = vunpack.c.l.b16 %v5823
    %v5839 = vunpack.c.l.b16 %v5824
    %v5840 = vpack.c.b16 %v5837, %v5836
    %v5841 = vpack.c.b16 %v5839, %v5838
    %v5845 = vsel %vm85, %v5817, 0
    %v5848 = vsel %vm85, %v5818, 0
    %v5851 = vsel %vm85, %v5819, 0
    %v5854 = vsel %vm85, %v5820, 0
    %5856 = vmatprep.subr.bf16.mxu0 0
    %5857 = vmatpush1.bf16.msra.mxu0 0
    %5858 = vmatprep.subr.bf16.mxu0 0
    %5859 = vmatpush1.bf16.msra.mxu0 0
    %5860 = vmatprep.subr.bf16.mxu0 0
    %5861 = vmatpush1.bf16.msra.mxu0 0
    %5862 = vmatprep.subr.bf16.mxu0 0
    %5863 = vmatpush1.bf16.msra.mxu0 0
    %5864 = vmatprep.subr.bf16.mxu0 0
    %5865 = vmatpush1.bf16.msra.mxu0 0
    %5866 = vmatprep.subr.bf16.mxu0 0
    %5867 = vmatpush1.bf16.msra.mxu0 0
    %5868 = vmatprep.subr.bf16.mxu0 0
    %5869 = vmatpush1.bf16.msra.mxu0 %v5841
    %5870 = vmatprep.subr.bf16.mxu0 0
    %5871 = vmatpush1.bf16.msra.mxu0 %v5840
    %5872 = vmatprep.subr.bf16.mxu0 0
    %5873 = vmatpush2.bf16.msra.mxu0 0
    %5874 = vmatprep.subr.bf16.mxu0 0
    %5875 = vmatpush2.bf16.msra.mxu0 0
    %5876 = vmatprep.subr.bf16.mxu0 0
    %5877 = vmatpush2.bf16.msra.mxu0 0
    %5878 = vmatprep.subr.bf16.mxu0 0
    %5879 = vmatpush2.bf16.msra.mxu0 0
    %5880 = vmatprep.subr.bf16.mxu0 0
    %5881 = vmatpush2.bf16.msra.mxu0 0
    %5882 = vmatprep.subr.bf16.mxu0 0
    %5883 = vmatpush2.bf16.msra.mxu0 0
    %5884 = vmatprep.subr.bf16.mxu0 0
    %5885 = vmatpush2.bf16.msra.mxu0 0
    %5886 = vmatprep.subr.bf16.mxu0 0
    %5887 = vmatpush2.bf16.msra.mxu0 0
    %5888 = vmatprep.mubr.bf16.mxu0 0
    %5889 = vmatmul.mubr.bf16.gmra.mxu0 %v5845
    %v5890 = vpop.f32.mrf.mxu0
    %v5891 = vadd.f32 %v5830, %v5890
    %v5892 = vpop.f32.mrf.mxu0
    %v5893 = vpop.f32.mrf.mxu0
    %v5894 = vadd.f32 %v5830, %v5893
    %v5895 = vpop.f32.mrf.mxu0
    %5896 = vmatprep.mubr.bf16.mxu0 0
    %5897 = vmatmul.mubr.bf16.gmra.mxu0 %v5848
    %v5898 = vpop.f32.mrf.mxu0
    %v5899 = vadd.f32 %v5830, %v5898
    %v5900 = vpop.f32.mrf.mxu0
    %v5901 = vpop.f32.mrf.mxu0
    %v5902 = vadd.f32 %v5830, %v5901
    %v5903 = vpop.f32.mrf.mxu0
    %5904 = vmatprep.mubr.bf16.mxu0 0
    %5905 = vmatmul.mubr.bf16.gmra.mxu0 %v5851
    %v5906 = vpop.f32.mrf.mxu0
    %v5907 = vadd.f32 %v5830, %v5906
    %v5908 = vpop.f32.mrf.mxu0
    %v5909 = vpop.f32.mrf.mxu0
    %v5910 = vadd.f32 %v5830, %v5909
    %v5911 = vpop.f32.mrf.mxu0
    %5912 = vmatprep.mubr.bf16.mxu0 0
    %5913 = vmatmul.mubr.bf16.gmra.mxu0 %v5854
    %v5914 = vpop.f32.mrf.mxu0
    %v5915 = vadd.f32 %v5830, %v5914
    %v5916 = vpop.f32.mrf.mxu0
    %v5917 = vpop.f32.mrf.mxu0
    %v5918 = vadd.f32 %v5830, %v5917
    %v5919 = vpop.f32.mrf.mxu0
    %5920 = vdwg.mxu0
    %vm5921 = vcmp.gt.f32.partialorder %v5891, 0.0
    %vm5922 = vcmp.gt.f32.partialorder %v5894, 0.0
    %vm5923 = vcmp.gt.f32.partialorder %v5899, 0.0
    %vm5924 = vcmp.gt.f32.partialorder %v5902, 0.0
    %vm5925 = vcmp.gt.f32.partialorder %v5907, 0.0
    %vm5926 = vcmp.gt.f32.partialorder %v5910, 0.0
    %vm5927 = vcmp.gt.f32.partialorder %v5915, 0.0
    %vm5928 = vcmp.gt.f32.partialorder %v5918, 0.0
    %v5929 = vmin.f32 %v5891, 0.0
    %v5930 = vmin.f32 %v5894, 0.0
    %v5931 = vmin.f32 %v5899, 0.0
    %v5932 = vmin.f32 %v5902, 0.0
    %v5933 = vmin.f32 %v5907, 0.0
    %v5934 = vmin.f32 %v5910, 0.0
    %v5935 = vmin.f32 %v5915, 0.0
    %v5936 = vmin.f32 %v5918, 0.0
    %v5937 = vmul.f32 %v5929, 1.442695
    %v5938 = vpow.pop %v5937
    %v5939 = vmul.f32 %v5930, 1.442695
    %v5940 = vpow.pop %v5939
    %v5941 = vmul.f32 %v5931, 1.442695
    %v5942 = vpow.pop %v5941
    %v5943 = vmul.f32 %v5932, 1.442695
    %v5944 = vpow.pop %v5943
    %v5945 = vmul.f32 %v5933, 1.442695
    %v5946 = vpow.pop %v5945
    %v5947 = vmul.f32 %v5934, 1.442695
    %v5948 = vpow.pop %v5947
    %v5949 = vmul.f32 %v5935, 1.442695
    %v5950 = vpow.pop %v5949
    %v5951 = vmul.f32 %v5936, 1.442695
    %v5952 = vpow.pop %v5951
    %v5953 = vsub.f32 %v5938, 1.0
    %v5954 = vsub.f32 %v5940, 1.0
    %v5955 = vsub.f32 %v5942, 1.0
    %v5956 = vsub.f32 %v5944, 1.0
    %v5957 = vsub.f32 %v5946, 1.0
    %v5958 = vsub.f32 %v5948, 1.0
    %v5959 = vsub.f32 %v5950, 1.0
    %v5960 = vsub.f32 %v5952, 1.0
    %v5961 = vmul.f32 %v5953, 1.6732632
    %v5962 = vmul.f32 %v5954, 1.6732632
    %v5963 = vmul.f32 %v5955, 1.6732632
    %v5964 = vmul.f32 %v5956, 1.6732632
    %v5965 = vmul.f32 %v5957, 1.6732632
    %v5966 = vmul.f32 %v5958, 1.6732632
    %v5967 = vmul.f32 %v5959, 1.6732632
    %v5968 = vmul.f32 %v5960, 1.6732632
    %v5969 = vsel %vm5921, %v5891, %v5961
    %v5970 = vsel %vm5922, %v5894, %v5962
    %v5971 = vsel %vm5923, %v5899, %v5963
    %v5972 = vsel %vm5924, %v5902, %v5964
    %v5973 = vsel %vm5925, %v5907, %v5965
    %v5974 = vsel %vm5926, %v5910, %v5966
    %v5975 = vsel %vm5927, %v5915, %v5967
    %v5976 = vsel %vm5928, %v5918, %v5968
    %v5977 = vmul.f32 %v5969, 1.050701
    %v5978 = vmul.f32 %v5970, 1.050701
    %v5979 = vmul.f32 %v5971, 1.050701
    %v5980 = vmul.f32 %v5972, 1.050701
    %v5981 = vmul.f32 %v5973, 1.050701
    %v5982 = vmul.f32 %v5974, 1.050701
    %v5983 = vmul.f32 %v5975, 1.050701
    %v5984 = vmul.f32 %v5976, 1.050701
    %v5985 = vpack.c.bf16 %v5978, %v5977
    %v5986 = vpack.c.bf16 %v5980, %v5979
    %v5987 = vpack.c.bf16 %v5982, %v5981
    %v5988 = vpack.c.bf16 %v5984, %v5983
    %v5989 = vld [vmem:[%s9] sm:$0x1]
    %v5990 = vld [vmem:[%s1] sm:$0xff]
    %v5991 = vld [vmem:[%s8] sm:$0x1]
    %5993 = vset.pattern.permute.xlu0 0
    %5994 = vperm.xlu0 %5993, %v5990
    %v5995 = vpop.permute.xlu0 %5994
    %v5998 = vlaneseq
    %v5999 = vshrl.u32 %v5998, 7
    %v6000 = vsub.s32 0, %v5999
    %v6001 = vrot.slane %v5991, %v6000
    %v6003 = vmul.f32 %v5995, %v6001
    %v6005 = vlaneseq
    %v6006 = vshrl.u32 %v6005, 7
    %v6007 = vsub.s32 0, %v6006
    %v6008 = vrot.slane %v5989, %v6007
    %v6010 = vadd.f32 %v6008, %v6003
    %v6011 = vld [vmem:[%s7] sm:$0x3]
    %vm6012 = vcmask 31744
    %v6014 = vsel %vm6012, %v5985, 0
    %vm6016 = vcmask 1041408
    %v6018 = vsel %vm6016, %v6011, 0
    %6020 = vmatprep.subr.bf16.mxu0 0
    %6021 = vmatpush1.bf16.msra.mxu0 0
    %6022 = vmatprep.subr.bf16.mxu0 0
    %6023 = vmatpush1.bf16.msra.mxu0 0
    %6024 = vmatprep.subr.bf16.mxu0 0
    %6025 = vmatpush1.bf16.msra.mxu0 0
    %6026 = vmatprep.subr.bf16.mxu0 0
    %6027 = vmatpush1.bf16.msra.mxu0 0
    %6028 = vmatprep.subr.bf16.mxu0 0
    %6029 = vmatpush1.bf16.msra.mxu0 0
    %6030 = vmatprep.subr.bf16.mxu0 0
    %6031 = vmatpush1.bf16.msra.mxu0 0
    %6032 = vmatprep.subr.bf16.mxu0 0
    %6033 = vmatpush1.bf16.msra.mxu0 0
    %6034 = vmatprep.subr.bf16.mxu0 0
    %6035 = vmatpush1.bf16.msra.mxu0 %v6018
    %6036 = vmatprep.subr.bf16.mxu0 0
    %6037 = vmatpush2.bf16.msra.mxu0 0
    %6038 = vmatprep.subr.bf16.mxu0 0
    %6039 = vmatpush2.bf16.msra.mxu0 0
    %6040 = vmatprep.subr.bf16.mxu0 0
    %6041 = vmatpush2.bf16.msra.mxu0 0
    %6042 = vmatprep.subr.bf16.mxu0 0
    %6043 = vmatpush2.bf16.msra.mxu0 0
    %6044 = vmatprep.subr.bf16.mxu0 0
    %6045 = vmatpush2.bf16.msra.mxu0 0
    %6046 = vmatprep.subr.bf16.mxu0 0
    %6047 = vmatpush2.bf16.msra.mxu0 0
    %6048 = vmatprep.subr.bf16.mxu0 0
    %6049 = vmatpush2.bf16.msra.mxu0 0
    %6050 = vmatprep.subr.bf16.mxu0 0
    %6051 = vmatpush2.bf16.msra.mxu0 0
    %6052 = vmatprep.mubr.bf16.mxu0 0
    %6053 = vmatmul.mubr.bf16.gmra.mxu0 %v6014
    %v6054 = vpop.f32.mrf.mxu0
    %v6055 = vadd.f32 0.0, %v6054
    %v6056 = vpop.f32.mrf.mxu0
    %v6057 = vpop.f32.mrf.mxu0
    %v6058 = vpop.f32.mrf.mxu0
    %6059 = vdwg.mxu0
    %v6060 = vadd.f32 %v6010, %v6055
    %s6061 = scalar_lea.vmem %s7, 2
    %v6062 = vld [vmem:[%s6061] sm:$0x3]
    %v6064 = vrot.slane %v5985, 4
    %v6066 = vsel %vm6012, %v6064, 0
    %v6069 = vsel %vm6016, %v6062, 0
    %6071 = vmatprep.subr.bf16.mxu0 0
    %6072 = vmatpush1.bf16.msra.mxu0 0
    %6073 = vmatprep.subr.bf16.mxu0 0
    %6074 = vmatpush1.bf16.msra.mxu0 0
    %6075 = vmatprep.subr.bf16.mxu0 0
    %6076 = vmatpush1.bf16.msra.mxu0 0
    %6077 = vmatprep.subr.bf16.mxu0 0
    %6078 = vmatpush1.bf16.msra.mxu0 0
    %6079 = vmatprep.subr.bf16.mxu0 0
    %6080 = vmatpush1.bf16.msra.mxu0 0
    %6081 = vmatprep.subr.bf16.mxu0 0
    %6082 = vmatpush1.bf16.msra.mxu0 0
    %6083 = vmatprep.subr.bf16.mxu0 0
    %6084 = vmatpush1.bf16.msra.mxu0 0
    %6085 = vmatprep.subr.bf16.mxu0 0
    %6086 = vmatpush1.bf16.msra.mxu0 %v6069
    %6087 = vmatprep.subr.bf16.mxu0 0
    %6088 = vmatpush2.bf16.msra.mxu0 0
    %6089 = vmatprep.subr.bf16.mxu0 0
    %6090 = vmatpush2.bf16.msra.mxu0 0
    %6091 = vmatprep.subr.bf16.mxu0 0
    %6092 = vmatpush2.bf16.msra.mxu0 0
    %6093 = vmatprep.subr.bf16.mxu0 0
    %6094 = vmatpush2.bf16.msra.mxu0 0
    %6095 = vmatprep.subr.bf16.mxu0 0
    %6096 = vmatpush2.bf16.msra.mxu0 0
    %6097 = vmatprep.subr.bf16.mxu0 0
    %6098 = vmatpush2.bf16.msra.mxu0 0
    %6099 = vmatprep.subr.bf16.mxu0 0
    %6100 = vmatpush2.bf16.msra.mxu0 0
    %6101 = vmatprep.subr.bf16.mxu0 0
    %6102 = vmatpush2.bf16.msra.mxu0 0
    %6103 = vmatprep.mubr.bf16.mxu0 0
    %6104 = vmatmul.mubr.bf16.gmra.mxu0 %v6066
    %v6105 = vpop.f32.mrf.mxu0
    %v6106 = vadd.f32 0.0, %v6105
    %v6107 = vpop.f32.mrf.mxu0
    %v6108 = vpop.f32.mrf.mxu0
    %v6109 = vpop.f32.mrf.mxu0
    %6110 = vdwg.mxu0
    %v6111 = vadd.f32 %v6060, %v6106
    %s6112 = scalar_lea.vmem %s7, 4
    %v6113 = vld [vmem:[%s6112] sm:$0x3]
    %v6115 = vsel %vm6012, %v5986, 0
    %v6118 = vsel %vm6016, %v6113, 0
    %6120 = vmatprep.subr.bf16.mxu0 0
    %6121 = vmatpush1.bf16.msra.mxu0 0
    %6122 = vmatprep.subr.bf16.mxu0 0
    %6123 = vmatpush1.bf16.msra.mxu0 0
    %6124 = vmatprep.subr.bf16.mxu0 0
    %6125 = vmatpush1.bf16.msra.mxu0 0
    %6126 = vmatprep.subr.bf16.mxu0 0
    %6127 = vmatpush1.bf16.msra.mxu0 0
    %6128 = vmatprep.subr.bf16.mxu0 0
    %6129 = vmatpush1.bf16.msra.mxu0 0
    %6130 = vmatprep.subr.bf16.mxu0 0
    %6131 = vmatpush1.bf16.msra.mxu0 0
    %6132 = vmatprep.subr.bf16.mxu0 0
    %6133 = vmatpush1.bf16.msra.mxu0 0
    %6134 = vmatprep.subr.bf16.mxu0 0
    %6135 = vmatpush1.bf16.msra.mxu0 %v6118
    %6136 = vmatprep.subr.bf16.mxu0 0
    %6137 = vmatpush2.bf16.msra.mxu0 0
    %6138 = vmatprep.subr.bf16.mxu0 0
    %6139 = vmatpush2.bf16.msra.mxu0 0
    %6140 = vmatprep.subr.bf16.mxu0 0
    %6141 = vmatpush2.bf16.msra.mxu0 0
    %6142 = vmatprep.subr.bf16.mxu0 0
    %6143 = vmatpush2.bf16.msra.mxu0 0
    %6144 = vmatprep.subr.bf16.mxu0 0
    %6145 = vmatpush2.bf16.msra.mxu0 0
    %6146 = vmatprep.subr.bf16.mxu0 0
    %6147 = vmatpush2.bf16.msra.mxu0 0
    %6148 = vmatprep.subr.bf16.mxu0 0
    %6149 = vmatpush2.bf16.msra.mxu0 0
    %6150 = vmatprep.subr.bf16.mxu0 0
    %6151 = vmatpush2.bf16.msra.mxu0 0
    %6152 = vmatprep.mubr.bf16.mxu0 0
    %6153 = vmatmul.mubr.bf16.gmra.mxu0 %v6115
    %v6154 = vpop.f32.mrf.mxu0
    %v6155 = vadd.f32 0.0, %v6154
    %v6156 = vpop.f32.mrf.mxu0
    %v6157 = vpop.f32.mrf.mxu0
    %v6158 = vpop.f32.mrf.mxu0
    %6159 = vdwg.mxu0
    %v6160 = vadd.f32 %v6111, %v6155
    %s6161 = scalar_lea.vmem %s7, 6
    %v6162 = vld [vmem:[%s6161] sm:$0x3]
    %v6164 = vrot.slane %v5986, 4
    %v6166 = vsel %vm6012, %v6164, 0
    %v6169 = vsel %vm6016, %v6162, 0
    %6171 = vmatprep.subr.bf16.mxu0 0
    %6172 = vmatpush1.bf16.msra.mxu0 0
    %6173 = vmatprep.subr.bf16.mxu0 0
    %6174 = vmatpush1.bf16.msra.mxu0 0
    %6175 = vmatprep.subr.bf16.mxu0 0
    %6176 = vmatpush1.bf16.msra.mxu0 0
    %6177 = vmatprep.subr.bf16.mxu0 0
    %6178 = vmatpush1.bf16.msra.mxu0 0
    %6179 = vmatprep.subr.bf16.mxu0 0
    %6180 = vmatpush1.bf16.msra.mxu0 0
    %6181 = vmatprep.subr.bf16.mxu0 0
    %6182 = vmatpush1.bf16.msra.mxu0 0
    %6183 = vmatprep.subr.bf16.mxu0 0
    %6184 = vmatpush1.bf16.msra.mxu0 0
    %6185 = vmatprep.subr.bf16.mxu0 0
    %6186 = vmatpush1.bf16.msra.mxu0 %v6169
    %6187 = vmatprep.subr.bf16.mxu0 0
    %6188 = vmatpush2.bf16.msra.mxu0 0
    %6189 = vmatprep.subr.bf16.mxu0 0
    %6190 = vmatpush2.bf16.msra.mxu0 0
    %6191 = vmatprep.subr.bf16.mxu0 0
    %6192 = vmatpush2.bf16.msra.mxu0 0
    %6193 = vmatprep.subr.bf16.mxu0 0
    %6194 = vmatpush2.bf16.msra.mxu0 0
    %6195 = vmatprep.subr.bf16.mxu0 0
    %6196 = vmatpush2.bf16.msra.mxu0 0
    %6197 = vmatprep.subr.bf16.mxu0 0
    %6198 = vmatpush2.bf16.msra.mxu0 0
    %6199 = vmatprep.subr.bf16.mxu0 0
    %6200 = vmatpush2.bf16.msra.mxu0 0
    %6201 = vmatprep.subr.bf16.mxu0 0
    %6202 = vmatpush2.bf16.msra.mxu0 0
    %6203 = vmatprep.mubr.bf16.mxu0 0
    %6204 = vmatmul.mubr.bf16.gmra.mxu0 %v6166
    %v6205 = vpop.f32.mrf.mxu0
    %v6206 = vadd.f32 0.0, %v6205
    %v6207 = vpop.f32.mrf.mxu0
    %v6208 = vpop.f32.mrf.mxu0
    %v6209 = vpop.f32.mrf.mxu0
    %6210 = vdwg.mxu0
    %v6211 = vadd.f32 %v6160, %v6206
    %s6212 = scalar_lea.vmem %s7, 8
    %v6213 = vld [vmem:[%s6212] sm:$0x3]
    %v6215 = vsel %vm6012, %v5987, 0
    %v6218 = vsel %vm6016, %v6213, 0
    %6220 = vmatprep.subr.bf16.mxu0 0
    %6221 = vmatpush1.bf16.msra.mxu0 0
    %6222 = vmatprep.subr.bf16.mxu0 0
    %6223 = vmatpush1.bf16.msra.mxu0 0
    %6224 = vmatprep.subr.bf16.mxu0 0
    %6225 = vmatpush1.bf16.msra.mxu0 0
    %6226 = vmatprep.subr.bf16.mxu0 0
    %6227 = vmatpush1.bf16.msra.mxu0 0
    %6228 = vmatprep.subr.bf16.mxu0 0
    %6229 = vmatpush1.bf16.msra.mxu0 0
    %6230 = vmatprep.subr.bf16.mxu0 0
    %6231 = vmatpush1.bf16.msra.mxu0 0
    %6232 = vmatprep.subr.bf16.mxu0 0
    %6233 = vmatpush1.bf16.msra.mxu0 0
    %6234 = vmatprep.subr.bf16.mxu0 0
    %6235 = vmatpush1.bf16.msra.mxu0 %v6218
    %6236 = vmatprep.subr.bf16.mxu0 0
    %6237 = vmatpush2.bf16.msra.mxu0 0
    %6238 = vmatprep.subr.bf16.mxu0 0
    %6239 = vmatpush2.bf16.msra.mxu0 0
    %6240 = vmatprep.subr.bf16.mxu0 0
    %6241 = vmatpush2.bf16.msra.mxu0 0
    %6242 = vmatprep.subr.bf16.mxu0 0
    %6243 = vmatpush2.bf16.msra.mxu0 0
    %6244 = vmatprep.subr.bf16.mxu0 0
    %6245 = vmatpush2.bf16.msra.mxu0 0
    %6246 = vmatprep.subr.bf16.mxu0 0
    %6247 = vmatpush2.bf16.msra.mxu0 0
    %6248 = vmatprep.subr.bf16.mxu0 0
    %6249 = vmatpush2.bf16.msra.mxu0 0
    %6250 = vmatprep.subr.bf16.mxu0 0
    %6251 = vmatpush2.bf16.msra.mxu0 0
    %6252 = vmatprep.mubr.bf16.mxu0 0
    %6253 = vmatmul.mubr.bf16.gmra.mxu0 %v6215
    %v6254 = vpop.f32.mrf.mxu0
    %v6255 = vadd.f32 0.0, %v6254
    %v6256 = vpop.f32.mrf.mxu0
    %v6257 = vpop.f32.mrf.mxu0
    %v6258 = vpop.f32.mrf.mxu0
    %6259 = vdwg.mxu0
    %v6260 = vadd.f32 %v6211, %v6255
    %s6261 = scalar_lea.vmem %s7, 10
    %v6262 = vld [vmem:[%s6261] sm:$0x3]
    %v6264 = vrot.slane %v5987, 4
    %v6266 = vsel %vm6012, %v6264, 0
    %v6269 = vsel %vm6016, %v6262, 0
    %6271 = vmatprep.subr.bf16.mxu0 0
    %6272 = vmatpush1.bf16.msra.mxu0 0
    %6273 = vmatprep.subr.bf16.mxu0 0
    %6274 = vmatpush1.bf16.msra.mxu0 0
    %6275 = vmatprep.subr.bf16.mxu0 0
    %6276 = vmatpush1.bf16.msra.mxu0 0
    %6277 = vmatprep.subr.bf16.mxu0 0
    %6278 = vmatpush1.bf16.msra.mxu0 0
    %6279 = vmatprep.subr.bf16.mxu0 0
    %6280 = vmatpush1.bf16.msra.mxu0 0
    %6281 = vmatprep.subr.bf16.mxu0 0
    %6282 = vmatpush1.bf16.msra.mxu0 0
    %6283 = vmatprep.subr.bf16.mxu0 0
    %6284 = vmatpush1.bf16.msra.mxu0 0
    %6285 = vmatprep.subr.bf16.mxu0 0
    %6286 = vmatpush1.bf16.msra.mxu0 %v6269
    %6287 = vmatprep.subr.bf16.mxu0 0
    %6288 = vmatpush2.bf16.msra.mxu0 0
    %6289 = vmatprep.subr.bf16.mxu0 0
    %6290 = vmatpush2.bf16.msra.mxu0 0
    %6291 = vmatprep.subr.bf16.mxu0 0
    %6292 = vmatpush2.bf16.msra.mxu0 0
    %6293 = vmatprep.subr.bf16.mxu0 0
    %6294 = vmatpush2.bf16.msra.mxu0 0
    %6295 = vmatprep.subr.bf16.mxu0 0
    %6296 = vmatpush2.bf16.msra.mxu0 0
    %6297 = vmatprep.subr.bf16.mxu0 0
    %6298 = vmatpush2.bf16.msra.mxu0 0
    %6299 = vmatprep.subr.bf16.mxu0 0
    %6300 = vmatpush2.bf16.msra.mxu0 0
    %6301 = vmatprep.subr.bf16.mxu0 0
    %6302 = vmatpush2.bf16.msra.mxu0 0
    %6303 = vmatprep.mubr.bf16.mxu0 0
    %6304 = vmatmul.mubr.bf16.gmra.mxu0 %v6266
    %v6305 = vpop.f32.mrf.mxu0
    %v6306 = vadd.f32 0.0, %v6305
    %v6307 = vpop.f32.mrf.mxu0
    %v6308 = vpop.f32.mrf.mxu0
    %v6309 = vpop.f32.mrf.mxu0
    %6310 = vdwg.mxu0
    %v6311 = vadd.f32 %v6260, %v6306
    %s6312 = scalar_lea.vmem %s7, 12
    %v6313 = vld [vmem:[%s6312] sm:$0x3]
    %v6315 = vsel %vm6012, %v5988, 0
    %v6318 = vsel %vm6016, %v6313, 0
    %6320 = vmatprep.subr.bf16.mxu0 0
    %6321 = vmatpush1.bf16.msra.mxu0 0
    %6322 = vmatprep.subr.bf16.mxu0 0
    %6323 = vmatpush1.bf16.msra.mxu0 0
    %6324 = vmatprep.subr.bf16.mxu0 0
    %6325 = vmatpush1.bf16.msra.mxu0 0
    %6326 = vmatprep.subr.bf16.mxu0 0
    %6327 = vmatpush1.bf16.msra.mxu0 0
    %6328 = vmatprep.subr.bf16.mxu0 0
    %6329 = vmatpush1.bf16.msra.mxu0 0
    %6330 = vmatprep.subr.bf16.mxu0 0
    %6331 = vmatpush1.bf16.msra.mxu0 0
    %6332 = vmatprep.subr.bf16.mxu0 0
    %6333 = vmatpush1.bf16.msra.mxu0 0
    %6334 = vmatprep.subr.bf16.mxu0 0
    %6335 = vmatpush1.bf16.msra.mxu0 %v6318
    %6336 = vmatprep.subr.bf16.mxu0 0
    %6337 = vmatpush2.bf16.msra.mxu0 0
    %6338 = vmatprep.subr.bf16.mxu0 0
    %6339 = vmatpush2.bf16.msra.mxu0 0
    %6340 = vmatprep.subr.bf16.mxu0 0
    %6341 = vmatpush2.bf16.msra.mxu0 0
    %6342 = vmatprep.subr.bf16.mxu0 0
    %6343 = vmatpush2.bf16.msra.mxu0 0
    %6344 = vmatprep.subr.bf16.mxu0 0
    %6345 = vmatpush2.bf16.msra.mxu0 0
    %6346 = vmatprep.subr.bf16.mxu0 0
    %6347 = vmatpush2.bf16.msra.mxu0 0
    %6348 = vmatprep.subr.bf16.mxu0 0
    %6349 = vmatpush2.bf16.msra.mxu0 0
    %6350 = vmatprep.subr.bf16.mxu0 0
    %6351 = vmatpush2.bf16.msra.mxu0 0
    %6352 = vmatprep.mubr.bf16.mxu0 0
    %6353 = vmatmul.mubr.bf16.gmra.mxu0 %v6315
    %v6354 = vpop.f32.mrf.mxu0
    %v6355 = vadd.f32 0.0, %v6354
    %v6356 = vpop.f32.mrf.mxu0
    %v6357 = vpop.f32.mrf.mxu0
    %v6358 = vpop.f32.mrf.mxu0
    %6359 = vdwg.mxu0
    %v6360 = vadd.f32 %v6311, %v6355
    %s6361 = scalar_lea.vmem %s7, 14
    %v6362 = vld [vmem:[%s6361] sm:$0x3]
    %v6364 = vrot.slane %v5988, 4
    %v6366 = vsel %vm6012, %v6364, 0
    %v6369 = vsel %vm6016, %v6362, 0
    %6371 = vmatprep.subr.bf16.mxu0 0
    %6372 = vmatpush1.bf16.msra.mxu0 0
    %6373 = vmatprep.subr.bf16.mxu0 0
    %6374 = vmatpush1.bf16.msra.mxu0 0
    %6375 = vmatprep.subr.bf16.mxu0 0
    %6376 = vmatpush1.bf16.msra.mxu0 0
    %6377 = vmatprep.subr.bf16.mxu0 0
    %6378 = vmatpush1.bf16.msra.mxu0 0
    %6379 = vmatprep.subr.bf16.mxu0 0
    %6380 = vmatpush1.bf16.msra.mxu0 0
    %6381 = vmatprep.subr.bf16.mxu0 0
    %6382 = vmatpush1.bf16.msra.mxu0 0
    %6383 = vmatprep.subr.bf16.mxu0 0
    %6384 = vmatpush1.bf16.msra.mxu0 0
    %6385 = vmatprep.subr.bf16.mxu0 0
    %6386 = vmatpush1.bf16.msra.mxu0 %v6369
    %6387 = vmatprep.subr.bf16.mxu0 0
    %6388 = vmatpush2.bf16.msra.mxu0 0
    %6389 = vmatprep.subr.bf16.mxu0 0
    %6390 = vmatpush2.bf16.msra.mxu0 0
    %6391 = vmatprep.subr.bf16.mxu0 0
    %6392 = vmatpush2.bf16.msra.mxu0 0
    %6393 = vmatprep.subr.bf16.mxu0 0
    %6394 = vmatpush2.bf16.msra.mxu0 0
    %6395 = vmatprep.subr.bf16.mxu0 0
    %6396 = vmatpush2.bf16.msra.mxu0 0
    %6397 = vmatprep.subr.bf16.mxu0 0
    %6398 = vmatpush2.bf16.msra.mxu0 0
    %6399 = vmatprep.subr.bf16.mxu0 0
    %6400 = vmatpush2.bf16.msra.mxu0 0
    %6401 = vmatprep.subr.bf16.mxu0 0
    %6402 = vmatpush2.bf16.msra.mxu0 0
    %6403 = vmatprep.mubr.bf16.mxu0 0
    %6404 = vmatmul.mubr.bf16.gmra.mxu0 %v6366
    %v6405 = vpop.f32.mrf.mxu0
    %v6406 = vadd.f32 0.0, %v6405
    %v6407 = vpop.f32.mrf.mxu0
    %v6408 = vpop.f32.mrf.mxu0
    %v6409 = vpop.f32.mrf.mxu0
    %6410 = vdwg.mxu0
    %v6411 = vadd.f32 %v6360, %v6406
    %6412 = vst [vmem:[%s10] sm:$0xff] %v6411
    // Predicated region
    $region46: #{lstm_ff_out_forward.1} parent=1 // pred_check
      _
    $region47: #{lstm_ff_out_forward.1} parent=1 // pred_check_branch
      %6414 = sbr.rel (0) target = $region49
    $region48: #{lstm_ff_out_forward.1} parent=1 // pred_region
      _
    $region49: #{lstm_ff_out_forward.1} parent=1 // pred_fallthru
      _
    // Predicated region
    $region50: #{lstm_ff_out_forward.1} parent=1 // pred_check
      _
    $region51: #{lstm_ff_out_forward.1} parent=1 // pred_check_branch
      %6416 = sbr.rel (0) target = $region53
    $region52: #{lstm_ff_out_forward.1} parent=1 // pred_region
      _
    $region53: #{lstm_ff_out_forward.1} parent=1 // pred_fallthru
      _
    %6417 = vsyncpa [#allocation6], 1

</llo_original>
